<compile_context>
chip_gen: v5e
topology: v5e:2x2
jax: 0.10.0
libtpu: 0.0.40
codegen_flags: <defaults>
</compile_context>

<pallas_src>
import jax
import jax.numpy as jnp
from jax.experimental import pallas as pl
from jax.experimental.pallas import tpu as pltpu

# ---------------- hyper-parameters (ResidualCouplingBlock.__init__) ----------
CHANNELS = 8            # flow channels (must be even)
HIDDEN = 32             # hidden_channels of the WN encoder
KERNEL_SIZE = 5         # odd
DILATION_RATE = 1
N_LAYERS = 4
N_FLOWS = 4
GIN = 16                # gin_channels (speaker conditioning)
HC = CHANNELS // 2      # half_channels
PAD_MAX = max(DILATION_RATE ** i * (KERNEL_SIZE - 1) // 2 for i in range(N_LAYERS))

BATCH = 2
T_LEN = 128             # time steps (>=128 -> lane-dense)


# ----------------------------- Pallas kernel --------------------------------
def _fused_block_kernel(x_ref, mask_ref, gbias_ref,
                        pre_w_ref, pre_b_ref, in_w_ref,
                        rs_w_ref, rs_b_ref, skip_w_ref, skip_b_ref,
                        post_w_ref, post_b_ref, ind1_ref,
                        out_ref, xh_ref):
    """All N_FLOWS ResidualCouplingLayers (+ Flips folded into the packed weights) for
    one batch element.  Data refs are per-batch (C,T)/(1,T) tiles; weight refs full."""
    C, T = x_ref.shape
    H = HIDDEN
    f32, bf16 = jnp.float32, jnp.bfloat16

    s = x_ref[...]                                  # (C, T) running channel state (f32)
    mask = mask_ref[...]                            # (1, T)
    mask_h = jnp.broadcast_to(mask, (H, T))         # hoisted mask broadcasts
    mask_c = jnp.broadcast_to(mask, (C, T))

    # zero-haloed conv scratch: halo columns stay 0, interior rewritten each layer
    xh_ref[...] = jnp.zeros(xh_ref.shape, bf16)

    for f in range(N_FLOWS):                        # static unroll -> static ref views
        # pre 1x1 conv (cumulative Flip permutation folded into pre_w_full columns)
        h = (jnp.dot(pre_w_ref[f], s.astype(bf16), preferred_element_type=f32)
             + pre_b_ref[f]) * mask_h               # (H, T)

        xcur = h
        skip = None
        for i in range(N_LAYERS):
            dil = DILATION_RATE ** i
            pad = dil * (KERNEL_SIZE - 1) // 2
            # write the hidden state into the zero-haloed scratch, read K shifted taps
            xh_ref[:, PAD_MAX:PAD_MAX + T] = xcur.astype(bf16)
            base = PAD_MAX - pad
            taps = jnp.concatenate(
                [xh_ref[:, base + j * dil: base + j * dil + T]
                 for j in range(KERNEL_SIZE)], axis=0)              # (K*H, T) bf16

            li = f * N_LAYERS + i
            # one merged matmul for both gate halves; 0.5 (sigmoid half) is folded into
            # the packed weights / cond biases so the gate is a single tanh pass
            z = (jnp.dot(in_w_ref[f, i], taps, preferred_element_type=f32)
                 + gbias_ref[li])                                   # (2H, T)
            tz = jnp.tanh(z)
            acts = tz[:H] * (tz[H:] * 0.5 + 0.5)    # tanh(a) * sigmoid(b), exact rewrite
            acts_q = acts.astype(bf16)

            if i < N_LAYERS - 1:
                # merged res|skip matmul, split with a free sublane slice at H
                rs = (jnp.dot(rs_w_ref[f, i], acts_q, preferred_element_type=f32)
                      + rs_b_ref[f, i])                             # (2H, T)
                xcur = (xcur + rs[:H]) * mask_h
                sk = rs[H:]
            else:
                sk = (jnp.dot(skip_w_ref[f], acts_q, preferred_element_type=f32)
                      + skip_b_ref[f])                              # (H, T)
            skip = sk if skip is None else skip + sk

        out = skip * mask_h                          # WN returns output * x_mask

        # post 1x1 conv scattered onto the x1 storage rows (mean_only -> logs = 0)
        m_full = (jnp.dot(post_w_ref[f], out.astype(bf16), preferred_element_type=f32)
                  + post_b_ref[f]) * mask_c          # (C, T), zero rows at x0
        blend = 1.0 + ind1_ref[f] * (mask_c - 1.0)   # 1 on x0 rows, mask on x1 rows
        s = s * blend + m_full                       # x1 = m + x1 * mask ; x0 unchanged

    out_ref[...] = s.astype(out_ref.dtype)


# ------------------------------ packing (run ONCE) ----------------------------
def pack_params(params):
    """Fold the Flip channel permutations, build im2col in_layer weights with the 0.5
    sigmoid-half scale folded in, split res/skip, and cast MXU weights to bf16."""
    F, L, H, K, C = N_FLOWS, N_LAYERS, HIDDEN, KERNEL_SIZE, CHANNELS
    bf16, f32 = jnp.bfloat16, jnp.float32
    gate_scale = jnp.concatenate([jnp.ones((H,), f32), jnp.full((H,), 0.5, f32)])

    pre_w, pre_b, in_w, rs_w, rs_b = [], [], [], [], []
    skip_w, skip_b, post_w, post_b, ind1 = [], [], [], [], []
    cond_w, cond_b, in_b = [], [], []

    sigma = list(range(C))                # storage row of each logical channel
    for f in range(F):
        p = params[f]
        x0_idx = jnp.array(sigma[:HC], jnp.int32)
        x1_idx = jnp.array(sigma[HC:], jnp.int32)

        pre_w.append(jnp.zeros((H, C), f32).at[:, x0_idx].set(p['pre_w']))
        pre_b.append(p['pre_b'].reshape(H, 1))

        # im2col layout: (L, 2H, H, K) -> (L, 2H, K*H); fold 0.5 into sigmoid rows
        iw = jnp.transpose(p['in_w'], (0, 1, 3, 2)).reshape(L, 2 * H, K * H)
        in_w.append(iw * gate_scale[None, :, None])

        rs_w.append(p['rs_w'][:L - 1])                     # (L-1, 2H, H): res | skip
        rs_b.append(p['rs_b'][:L - 1][..., None])          # (L-1, 2H, 1)
        skip_w.append(p['rs_w'][L - 1, :H])                # (H, H): last layer skip only
        skip_b.append(p['rs_b'][L - 1, :H][:, None])       # (H, 1)

        post_w.append(jnp.zeros((C, H), f32).at[x1_idx].set(p['post_w']))
        post_b.append(jnp.zeros((C, 1), f32).at[x1_idx, 0].set(p['post_b']))
        ind1.append(jnp.zeros((C, 1), f32).at[x1_idx, 0].set(1.0))

        cond_w.append(p['cond_w']); cond_b.append(p['cond_b']); in_b.append(p['in_b'])
        sigma = sigma[::-1]                                 # modules.Flip()

    stk = lambda xs, dt=f32: jnp.stack(xs).astype(dt)
    return {
        'pre_w': stk(pre_w, bf16), 'pre_b': stk(pre_b),
        'in_w': stk(in_w, bf16),
        'rs_w': stk(rs_w, bf16), 'rs_b': stk(rs_b),
        'skip_w': stk(skip_w, bf16), 'skip_b': stk(skip_b),
        'post_w': stk(post_w, bf16), 'post_b': stk(post_b),
        'ind1': stk(ind1),
        'cond_w': stk(cond_w), 'cond_b': stk(cond_b), 'in_b': stk(in_b),
        'gate_scale': gate_scale,
        'final_perm': tuple(sigma),       # identity when n_flows is even
    }


def _cond_bias(g, packed):
    """cond_layer(g) + in_layer bias per (flow, layer); sigmoid half pre-scaled by 0.5
    to match the in-kernel sigmoid(x) = 0.5*(tanh(x/2)+1) rewrite."""
    B = g.shape[0]
    g2 = g[:, :, 0]                                                    # (B, GIN)
    ga = jnp.einsum('bg,fog->fbo', g2, packed['cond_w']) + packed['cond_b'][:, None]
    ga = ga.reshape(N_FLOWS, B, N_LAYERS, 2 * HIDDEN) + packed['in_b'][:, None]
    gb = jnp.transpose(ga, (1, 0, 2, 3)).reshape(B, N_FLOWS * N_LAYERS, 2 * HIDDEN)
    gb = gb * packed['gate_scale']
    return gb[..., None]                                               # (B, F*L, 2H, 1)


# ------------------------------ forward wrapper --------------------------------
def residual_coupling_block_forward(x, x_mask, g, packed, reverse=False):
    """ResidualCouplingBlock.forward (reverse=False path), fully fused.
    `packed` comes from pack_params() - build it once and cache it."""
    if reverse:
        # TODO(synk): reverse path (reversed flows, x1 = (x1 - m) * mask) not wired up.
        raise NotImplementedError
    B, C, T = x.shape
    gbias = _cond_bias(g, packed)

    data_spec = lambda c: pl.BlockSpec((None, c, T), lambda b: (b, 0, 0))
    gbias_spec = pl.BlockSpec((None, N_FLOWS * N_LAYERS, 2 * HIDDEN, 1),
                              lambda b: (b, 0, 0, 0))
    full = lambda a: pl.BlockSpec(a.shape, (lambda nd: (lambda b: (0,) * nd))(a.ndim))

    weights = [packed['pre_w'], packed['pre_b'], packed['in_w'],
               packed['rs_w'], packed['rs_b'], packed['skip_w'], packed['skip_b'],
               packed['post_w'], packed['post_b'], packed['ind1']]

    y = pl.pallas_call(
        _fused_block_kernel,
        out_shape=jax.ShapeDtypeStruct((B, C, T), x.dtype),
        grid=(B,),
        in_specs=[data_spec(C), data_spec(1), gbias_spec] + [full(w) for w in weights],
        out_specs=data_spec(C),
        scratch_shapes=[pltpu.VMEM((HIDDEN, T + 2 * PAD_MAX), jnp.bfloat16)],
        compiler_params=pltpu.CompilerParams(dimension_semantics=("parallel",)),
    )(x, x_mask, gbias, *weights)

    # residual channel permutation from the Flips (identity for even n_flows)
    if packed['final_perm'] != tuple(range(C)):
        y = jnp.take(y, jnp.asarray(packed['final_perm']), axis=1)
    return y


# ----------------------- plain-JAX reference (for checking) ------------------
def _ref_block(x, x_mask, g, params, mxu_bf16=False):
    """Channels-first reference mirroring the PyTorch module.  mxu_bf16=True applies
    the same bf16 quantization to every matmul operand that the kernel uses (with f32
    accumulation), for a tight numerical check of the kernel structure."""
    q = (lambda a: a.astype(jnp.bfloat16)) if mxu_bf16 else (lambda a: a)

    def mm(w, v):                                    # (O, I) x (B, I, T) -> (B, O, T)
        return jnp.einsum('oi,bit->bot', q(w), q(v),
                          preferred_element_type=jnp.float32)

    def coupling_layer(x0, x1, mask, p):
        B, _, T = x0.shape
        H = HIDDEN
        h = (mm(p['pre_w'], x0) + p['pre_b'][None, :, None]) * mask
        g_all = (jnp.einsum('og,bgt->bot', p['cond_w'], g)
                 + p['cond_b'][None, :, None])                      # (B, 2H*L, 1)
        xcur, out = h, jnp.zeros((B, H, T), jnp.float32)
        for i in range(N_LAYERS):
            dil = DILATION_RATE ** i
            pad = dil * (KERNEL_SIZE - 1) // 2
            xp = jnp.pad(xcur, ((0, 0), (0, 0), (pad, pad)))
            z = sum(mm(p['in_w'][i, :, :, j], xp[:, :, j * dil:j * dil + T])
                    for j in range(KERNEL_SIZE))
            z = z + p['in_b'][i][None, :, None] + g_all[:, i * 2 * H:(i + 1) * 2 * H]
            acts = jnp.tanh(z[:, :H]) * jax.nn.sigmoid(z[:, H:])
            rs = mm(p['rs_w'][i], acts) + p['rs_b'][i][None, :, None]
            if i < N_LAYERS - 1:
                xcur = (xcur + rs[:, :H]) * mask
                out = out + rs[:, H:]
            else:
                out = out + rs[:, :H]
        out = out * mask
        m = (mm(p['post_w'], out) + p['post_b'][None, :, None]) * mask
        return m + x1 * mask

    for f in range(N_FLOWS):
        p = params[f]
        x0, x1 = x[:, :HC], x[:, HC:]
        x1 = coupling_layer(x0, x1, x_mask, p)
        x = jnp.concatenate([x0, x1], axis=1)[:, ::-1]              # modules.Flip()
    return x


# ------------------------------ parameters -----------------------------------
def init_params(key):
    """Deterministic synthetic parameters in PyTorch Conv1d layouts (weight-norm folded
    into plain weights).  NOTE: PyTorch zero-inits the `post` conv; small random values
    are used here so the kernel path is actually exercised."""
    params = []
    s = 0.1
    for f in range(N_FLOWS):
        ks = jax.random.split(jax.random.fold_in(key, f), 10)
        n = lambda k, shp: jax.random.normal(k, shp, jnp.float32) * s
        params.append({
            'pre_w':  n(ks[0], (HIDDEN, HC)),                        # Conv1d(HC, H, 1)
            'pre_b':  n(ks[1], (HIDDEN,)),
            'cond_w': n(ks[2], (2 * HIDDEN * N_LAYERS, GIN)),        # Conv1d(GIN, 2HL, 1)
            'cond_b': n(ks[3], (2 * HIDDEN * N_LAYERS,)),
            'in_w':   n(ks[4], (N_LAYERS, 2 * HIDDEN, HIDDEN, KERNEL_SIZE)),
            'in_b':   n(ks[5], (N_LAYERS, 2 * HIDDEN)),
            'rs_w':   n(ks[6], (N_LAYERS, 2 * HIDDEN, HIDDEN)),      # last layer: [:H]
            'rs_b':   n(ks[7], (N_LAYERS, 2 * HIDDEN)),
            'post_w': n(ks[8], (HC, HIDDEN)),                        # Conv1d(H, HC, 1)
            'post_b': n(ks[9], (HC,)),
        })
    return params


# --------------------------------- main ---------------------------------------
if __name__ == "__main__":
    key = jax.random.PRNGKey(0)
    kx, kg, kp = jax.random.split(key, 3)

    x = jax.random.normal(kx, (BATCH, CHANNELS, T_LEN), jnp.float32)      # (B, C, T)
    g = jax.random.normal(kg, (BATCH, GIN, 1), jnp.float32)               # (B, GIN, 1)
    lengths = jnp.array([T_LEN, (2 * T_LEN) // 3], jnp.int32)
    t_idx = jnp.arange(T_LEN)[None, None, :]
    x_mask = (t_idx < lengths[:, None, None]).astype(jnp.float32)         # (B, 1, T)

    params = init_params(kp)
    packed = pack_params(params)          # packed ONCE, reused across forward calls

    y = residual_coupling_block_forward(x, x_mask, g, packed, reverse=False)
    y = jax.block_until_ready(y)

    # tight check vs. a reference using the same bf16 MXU-operand quantization
    y_ref_q = _ref_block(x, x_mask, g, params, mxu_bf16=True)
    err_q = float(jnp.max(jnp.abs(y - y_ref_q)))
    assert jnp.allclose(y, y_ref_q, atol=3e-3, rtol=3e-3), \
        f"max abs err vs bf16-matched ref {err_q}"

    # loose check vs. the full-f32 PyTorch-faithful reference (kernel uses bf16 MXU ops)
    y_ref = _ref_block(x, x_mask, g, params, mxu_bf16=False)
    err = float(jnp.max(jnp.abs(y - y_ref)))
    assert jnp.allclose(y, y_ref, atol=8e-2, rtol=8e-2), \
        f"max abs err vs f32 ref {err}"

    print("KERNEL_OK")
</pallas_src>

<mosaic_0001>
module attributes {stable_mosaic.version = 11 : i64} {
  func.func @_fused_block_kernel(%arg0: i32, %arg1: memref<1x8x128xf32, #tpu.memory_space<vmem>>, %arg2: memref<1x1x128xf32, #tpu.memory_space<vmem>>, %arg3: memref<1x16x64x1xf32, #tpu.memory_space<vmem>>, %arg4: memref<4x32x8xbf16, #tpu.memory_space<vmem>>, %arg5: memref<4x32x1xf32, #tpu.memory_space<vmem>>, %arg6: memref<4x4x64x160xbf16, #tpu.memory_space<vmem>>, %arg7: memref<4x3x64x32xbf16, #tpu.memory_space<vmem>>, %arg8: memref<4x3x64x1xf32, #tpu.memory_space<vmem>>, %arg9: memref<4x32x32xbf16, #tpu.memory_space<vmem>>, %arg10: memref<4x32x1xf32, #tpu.memory_space<vmem>>, %arg11: memref<4x8x32xbf16, #tpu.memory_space<vmem>>, %arg12: memref<4x8x1xf32, #tpu.memory_space<vmem>>, %arg13: memref<4x8x1xf32, #tpu.memory_space<vmem>>, %arg14: memref<1x8x128xf32, #tpu.memory_space<vmem>>, %arg15: memref<32x132xbf16, #tpu.memory_space<vmem>>) attributes {dimension_semantics = [#tpu.dimension_semantics<parallel>], iteration_bounds = array<i64: 2>, scalar_prefetch = 0 : i64, scratch_operands = 1 : i64, tpu.core_type = #tpu.core_type<tc>, window_params = [{transform_indices = @transform_0, window_bounds = array<i64: 1, 8, 128>}, {transform_indices = @transform_1, window_bounds = array<i64: 1, 1, 128>}, {transform_indices = @transform_2, window_bounds = array<i64: 1, 16, 64, 1>}, {pipeline_mode = #tpu.pipeline_mode<synchronous>, transform_indices = @transform_3, window_bounds = array<i64: 4, 32, 8>}, {pipeline_mode = #tpu.pipeline_mode<synchronous>, transform_indices = @transform_4, window_bounds = array<i64: 4, 32, 1>}, {pipeline_mode = #tpu.pipeline_mode<synchronous>, transform_indices = @transform_5, window_bounds = array<i64: 4, 4, 64, 160>}, {pipeline_mode = #tpu.pipeline_mode<synchronous>, transform_indices = @transform_6, window_bounds = array<i64: 4, 3, 64, 32>}, {pipeline_mode = #tpu.pipeline_mode<synchronous>, transform_indices = @transform_7, window_bounds = array<i64: 4, 3, 64, 1>}, {pipeline_mode = #tpu.pipeline_mode<synchronous>, transform_indices = @transform_8, window_bounds = array<i64: 4, 32, 32>}, {pipeline_mode = #tpu.pipeline_mode<synchronous>, transform_indices = @transform_9, window_bounds = array<i64: 4, 32, 1>}, {pipeline_mode = #tpu.pipeline_mode<synchronous>, transform_indices = @transform_10, window_bounds = array<i64: 4, 8, 32>}, {pipeline_mode = #tpu.pipeline_mode<synchronous>, transform_indices = @transform_11, window_bounds = array<i64: 4, 8, 1>}, {pipeline_mode = #tpu.pipeline_mode<synchronous>, transform_indices = @transform_12, window_bounds = array<i64: 4, 8, 1>}, {transform_indices = @transform_13, window_bounds = array<i64: 1, 8, 128>}]} {
    %c0 = arith.constant 0 : index
    %c0_0 = arith.constant 0 : index
    %c0_1 = arith.constant 0 : index
    %0 = vector.load %arg1[%c0, %c0_0, %c0_1] : memref<1x8x128xf32, #tpu.memory_space<vmem>>, vector<1x8x128xf32>
    %1 = vector.shape_cast %0 : vector<1x8x128xf32> to vector<8x128xf32>
    %c0_2 = arith.constant 0 : index
    %c0_3 = arith.constant 0 : index
    %c0_4 = arith.constant 0 : index
    %2 = vector.load %arg2[%c0_2, %c0_3, %c0_4] : memref<1x1x128xf32, #tpu.memory_space<vmem>>, vector<1x1x128xf32>
    %3 = vector.shape_cast %2 : vector<1x1x128xf32> to vector<1x128xf32>
    %4 = vector.shape_cast %3 : vector<1x128xf32> to vector<1x128xf32>
    %5 = vector.broadcast %4 : vector<1x128xf32> to vector<32x128xf32>
    %6 = vector.shape_cast %3 : vector<1x128xf32> to vector<1x128xf32>
    %7 = vector.broadcast %6 : vector<1x128xf32> to vector<8x128xf32>
    %cst = arith.constant 0.000000e+00 : bf16
    %8 = vector.broadcast %cst : bf16 to vector<32x132xbf16>
    %c0_5 = arith.constant 0 : index
    %c0_6 = arith.constant 0 : index
    %9 = vector.load %arg15[%c0_5, %c0_6] : memref<32x132xbf16, #tpu.memory_space<vmem>>, vector<32x132xbf16>
    tpu.vector_store %arg15[%c0_5, %c0_6], %8 {strides = array<i32>} : memref<32x132xbf16, #tpu.memory_space<vmem>>, vector<32x132xbf16>,
    %c0_7 = arith.constant 0 : index
    %c0_8 = arith.constant 0 : index
    %c0_9 = arith.constant 0 : index
    %10 = vector.load %arg4[%c0_7, %c0_8, %c0_9] : memref<4x32x8xbf16, #tpu.memory_space<vmem>>, vector<1x32x8xbf16>
    %11 = vector.shape_cast %10 : vector<1x32x8xbf16> to vector<32x8xbf16>
    %12 = arith.truncf %1 : vector<8x128xf32> to vector<8x128xbf16>
    %cst_10 = arith.constant dense<0.000000e+00> : vector<32x128xf32>
    %13 = tpu.matmul %11, %12, %cst_10 {dimension_numbers = #tpu.dot_dimension_numbers<[1], [0], [0], [1], [0, 0, 1, 1], [], []>} : vector<32x8xbf16>, vector<8x128xbf16>, vector<32x128xf32> -> vector<32x128xf32>
    %c0_11 = arith.constant 0 : index
    %c0_12 = arith.constant 0 : index
    %c0_13 = arith.constant 0 : index
    %14 = vector.load %arg5[%c0_11, %c0_12, %c0_13] : memref<4x32x1xf32, #tpu.memory_space<vmem>>, vector<1x32x1xf32>
    %15 = vector.shape_cast %14 : vector<1x32x1xf32> to vector<32x1xf32>
    %16 = vector.broadcast %15 : vector<32x1xf32> to vector<32x128xf32>
    %17 = arith.addf %13, %16 : vector<32x128xf32>
    %18 = arith.mulf %17, %5 : vector<32x128xf32>
    %19 = arith.truncf %18 : vector<32x128xf32> to vector<32x128xbf16>
    %c0_14 = arith.constant 0 : index
    %c2 = arith.constant 2 : index
    %20 = vector.load %arg15[%c0_14, %c2] : memref<32x132xbf16, #tpu.memory_space<vmem>>, vector<32x128xbf16>
    tpu.vector_store %arg15[%c0_14, %c2], %19 {strides = array<i32>} : memref<32x132xbf16, #tpu.memory_space<vmem>>, vector<32x128xbf16>,
    %c0_15 = arith.constant 0 : index
    %c0_16 = arith.constant 0 : index
    %21 = vector.load %arg15[%c0_15, %c0_16] : memref<32x132xbf16, #tpu.memory_space<vmem>>, vector<32x128xbf16>
    %c0_17 = arith.constant 0 : index
    %c1 = arith.constant 1 : index
    %22 = vector.load %arg15[%c0_17, %c1] : memref<32x132xbf16, #tpu.memory_space<vmem>>, vector<32x128xbf16>
    %c0_18 = arith.constant 0 : index
    %c2_19 = arith.constant 2 : index
    %23 = vector.load %arg15[%c0_18, %c2_19] : memref<32x132xbf16, #tpu.memory_space<vmem>>, vector<32x128xbf16>
    %c0_20 = arith.constant 0 : index
    %c3 = arith.constant 3 : index
    %24 = vector.load %arg15[%c0_20, %c3] : memref<32x132xbf16, #tpu.memory_space<vmem>>, vector<32x128xbf16>
    %c0_21 = arith.constant 0 : index
    %c4 = arith.constant 4 : index
    %25 = vector.load %arg15[%c0_21, %c4] : memref<32x132xbf16, #tpu.memory_space<vmem>>, vector<32x128xbf16>
    %26 = tpu.concatenate %21, %22, %23, %24, %25 in 0 : vector<32x128xbf16>, vector<32x128xbf16>, vector<32x128xbf16>, vector<32x128xbf16>, vector<32x128xbf16> -> vector<160x128xbf16>
    %c0_22 = arith.constant 0 : index
    %c0_23 = arith.constant 0 : index
    %c0_24 = arith.constant 0 : index
    %c0_25 = arith.constant 0 : index
    %27 = vector.load %arg6[%c0_22, %c0_23, %c0_24, %c0_25] : memref<4x4x64x160xbf16, #tpu.memory_space<vmem>>, vector<1x1x64x160xbf16>
    %28 = vector.shape_cast %27 : vector<1x1x64x160xbf16> to vector<64x160xbf16>
    %cst_26 = arith.constant dense<0.000000e+00> : vector<64x128xf32>
    %29 = tpu.matmul %28, %26, %cst_26 {dimension_numbers = #tpu.dot_dimension_numbers<[1], [0], [0], [1], [0, 0, 1, 1], [], []>} : vector<64x160xbf16>, vector<160x128xbf16>, vector<64x128xf32> -> vector<64x128xf32>
    %c0_27 = arith.constant 0 : index
    %c0_28 = arith.constant 0 : index
    %c0_29 = arith.constant 0 : index
    %c0_30 = arith.constant 0 : index
    %30 = vector.load %arg3[%c0_27, %c0_28, %c0_29, %c0_30] : memref<1x16x64x1xf32, #tpu.memory_space<vmem>>, vector<1x1x64x1xf32>
    %31 = vector.shape_cast %30 : vector<1x1x64x1xf32> to vector<64x1xf32>
    %32 = vector.broadcast %31 : vector<64x1xf32> to vector<64x128xf32>
    %33 = arith.addf %29, %32 : vector<64x128xf32>
    %34 = math.tanh %33 : vector<64x128xf32>
    %35 = vector.extract_strided_slice %34 {offsets = [0, 0], sizes = [32, 128], strides = [1, 1]} : vector<64x128xf32> to vector<32x128xf32>
    %36 = vector.extract_strided_slice %34 {offsets = [32, 0], sizes = [32, 128], strides = [1, 1]} : vector<64x128xf32> to vector<32x128xf32>
    %cst_31 = arith.constant 5.000000e-01 : f32
    %37 = vector.broadcast %cst_31 : f32 to vector<32x128xf32>
    %38 = arith.mulf %36, %37 : vector<32x128xf32>
    %cst_32 = arith.constant 5.000000e-01 : f32
    %39 = vector.broadcast %cst_32 : f32 to vector<32x128xf32>
    %40 = arith.addf %38, %39 : vector<32x128xf32>
    %41 = arith.mulf %35, %40 : vector<32x128xf32>
    %42 = arith.truncf %41 : vector<32x128xf32> to vector<32x128xbf16>
    %c0_33 = arith.constant 0 : index
    %c0_34 = arith.constant 0 : index
    %c0_35 = arith.constant 0 : index
    %c0_36 = arith.constant 0 : index
    %43 = vector.load %arg7[%c0_33, %c0_34, %c0_35, %c0_36] : memref<4x3x64x32xbf16, #tpu.memory_space<vmem>>, vector<1x1x64x32xbf16>
    %44 = vector.shape_cast %43 : vector<1x1x64x32xbf16> to vector<64x32xbf16>
    %cst_37 = arith.constant dense<0.000000e+00> : vector<64x128xf32>
    %45 = tpu.matmul %44, %42, %cst_37 {dimension_numbers = #tpu.dot_dimension_numbers<[1], [0], [0], [1], [0, 0, 1, 1], [], []>} : vector<64x32xbf16>, vector<32x128xbf16>, vector<64x128xf32> -> vector<64x128xf32>
    %c0_38 = arith.constant 0 : index
    %c0_39 = arith.constant 0 : index
    %c0_40 = arith.constant 0 : index
    %c0_41 = arith.constant 0 : index
    %46 = vector.load %arg8[%c0_38, %c0_39, %c0_40, %c0_41] : memref<4x3x64x1xf32, #tpu.memory_space<vmem>>, vector<1x1x64x1xf32>
    %47 = vector.shape_cast %46 : vector<1x1x64x1xf32> to vector<64x1xf32>
    %48 = vector.broadcast %47 : vector<64x1xf32> to vector<64x128xf32>
    %49 = arith.addf %45, %48 : vector<64x128xf32>
    %50 = vector.extract_strided_slice %49 {offsets = [0, 0], sizes = [32, 128], strides = [1, 1]} : vector<64x128xf32> to vector<32x128xf32>
    %51 = arith.addf %18, %50 : vector<32x128xf32>
    %52 = arith.mulf %51, %5 : vector<32x128xf32>
    %53 = vector.extract_strided_slice %49 {offsets = [32, 0], sizes = [32, 128], strides = [1, 1]} : vector<64x128xf32> to vector<32x128xf32>
    %54 = arith.truncf %52 : vector<32x128xf32> to vector<32x128xbf16>
    %c0_42 = arith.constant 0 : index
    %c2_43 = arith.constant 2 : index
    %55 = vector.load %arg15[%c0_42, %c2_43] : memref<32x132xbf16, #tpu.memory_space<vmem>>, vector<32x128xbf16>
    tpu.vector_store %arg15[%c0_42, %c2_43], %54 {strides = array<i32>} : memref<32x132xbf16, #tpu.memory_space<vmem>>, vector<32x128xbf16>,
    %c0_44 = arith.constant 0 : index
    %c0_45 = arith.constant 0 : index
    %56 = vector.load %arg15[%c0_44, %c0_45] : memref<32x132xbf16, #tpu.memory_space<vmem>>, vector<32x128xbf16>
    %c0_46 = arith.constant 0 : index
    %c1_47 = arith.constant 1 : index
    %57 = vector.load %arg15[%c0_46, %c1_47] : memref<32x132xbf16, #tpu.memory_space<vmem>>, vector<32x128xbf16>
    %c0_48 = arith.constant 0 : index
    %c2_49 = arith.constant 2 : index
    %58 = vector.load %arg15[%c0_48, %c2_49] : memref<32x132xbf16, #tpu.memory_space<vmem>>, vector<32x128xbf16>
    %c0_50 = arith.constant 0 : index
    %c3_51 = arith.constant 3 : index
    %59 = vector.load %arg15[%c0_50, %c3_51] : memref<32x132xbf16, #tpu.memory_space<vmem>>, vector<32x128xbf16>
    %c0_52 = arith.constant 0 : index
    %c4_53 = arith.constant 4 : index
    %60 = vector.load %arg15[%c0_52, %c4_53] : memref<32x132xbf16, #tpu.memory_space<vmem>>, vector<32x128xbf16>
    %61 = tpu.concatenate %56, %57, %58, %59, %60 in 0 : vector<32x128xbf16>, vector<32x128xbf16>, vector<32x128xbf16>, vector<32x128xbf16>, vector<32x128xbf16> -> vector<160x128xbf16>
    %c0_54 = arith.constant 0 : index
    %c1_55 = arith.constant 1 : index
    %c0_56 = arith.constant 0 : index
    %c0_57 = arith.constant 0 : index
    %62 = vector.load %arg6[%c0_54, %c1_55, %c0_56, %c0_57] : memref<4x4x64x160xbf16, #tpu.memory_space<vmem>>, vector<1x1x64x160xbf16>
    %63 = vector.shape_cast %62 : vector<1x1x64x160xbf16> to vector<64x160xbf16>
    %cst_58 = arith.constant dense<0.000000e+00> : vector<64x128xf32>
    %64 = tpu.matmul %63, %61, %cst_58 {dimension_numbers = #tpu.dot_dimension_numbers<[1], [0], [0], [1], [0, 0, 1, 1], [], []>} : vector<64x160xbf16>, vector<160x128xbf16>, vector<64x128xf32> -> vector<64x128xf32>
    %c0_59 = arith.constant 0 : index
    %c1_60 = arith.constant 1 : index
    %c0_61 = arith.constant 0 : index
    %c0_62 = arith.constant 0 : index
    %65 = vector.load %arg3[%c0_59, %c1_60, %c0_61, %c0_62] : memref<1x16x64x1xf32, #tpu.memory_space<vmem>>, vector<1x1x64x1xf32>
    %66 = vector.shape_cast %65 : vector<1x1x64x1xf32> to vector<64x1xf32>
    %67 = vector.broadcast %66 : vector<64x1xf32> to vector<64x128xf32>
    %68 = arith.addf %64, %67 : vector<64x128xf32>
    %69 = math.tanh %68 : vector<64x128xf32>
    %70 = vector.extract_strided_slice %69 {offsets = [0, 0], sizes = [32, 128], strides = [1, 1]} : vector<64x128xf32> to vector<32x128xf32>
    %71 = vector.extract_strided_slice %69 {offsets = [32, 0], sizes = [32, 128], strides = [1, 1]} : vector<64x128xf32> to vector<32x128xf32>
    %cst_63 = arith.constant 5.000000e-01 : f32
    %72 = vector.broadcast %cst_63 : f32 to vector<32x128xf32>
    %73 = arith.mulf %71, %72 : vector<32x128xf32>
    %cst_64 = arith.constant 5.000000e-01 : f32
    %74 = vector.broadcast %cst_64 : f32 to vector<32x128xf32>
    %75 = arith.addf %73, %74 : vector<32x128xf32>
    %76 = arith.mulf %70, %75 : vector<32x128xf32>
    %77 = arith.truncf %76 : vector<32x128xf32> to vector<32x128xbf16>
    %c0_65 = arith.constant 0 : index
    %c1_66 = arith.constant 1 : index
    %c0_67 = arith.constant 0 : index
    %c0_68 = arith.constant 0 : index
    %78 = vector.load %arg7[%c0_65, %c1_66, %c0_67, %c0_68] : memref<4x3x64x32xbf16, #tpu.memory_space<vmem>>, vector<1x1x64x32xbf16>
    %79 = vector.shape_cast %78 : vector<1x1x64x32xbf16> to vector<64x32xbf16>
    %cst_69 = arith.constant dense<0.000000e+00> : vector<64x128xf32>
    %80 = tpu.matmul %79, %77, %cst_69 {dimension_numbers = #tpu.dot_dimension_numbers<[1], [0], [0], [1], [0, 0, 1, 1], [], []>} : vector<64x32xbf16>, vector<32x128xbf16>, vector<64x128xf32> -> vector<64x128xf32>
    %c0_70 = arith.constant 0 : index
    %c1_71 = arith.constant 1 : index
    %c0_72 = arith.constant 0 : index
    %c0_73 = arith.constant 0 : index
    %81 = vector.load %arg8[%c0_70, %c1_71, %c0_72, %c0_73] : memref<4x3x64x1xf32, #tpu.memory_space<vmem>>, vector<1x1x64x1xf32>
    %82 = vector.shape_cast %81 : vector<1x1x64x1xf32> to vector<64x1xf32>
    %83 = vector.broadcast %82 : vector<64x1xf32> to vector<64x128xf32>
    %84 = arith.addf %80, %83 : vector<64x128xf32>
    %85 = vector.extract_strided_slice %84 {offsets = [0, 0], sizes = [32, 128], strides = [1, 1]} : vector<64x128xf32> to vector<32x128xf32>
    %86 = arith.addf %52, %85 : vector<32x128xf32>
    %87 = arith.mulf %86, %5 : vector<32x128xf32>
    %88 = vector.extract_strided_slice %84 {offsets = [32, 0], sizes = [32, 128], strides = [1, 1]} : vector<64x128xf32> to vector<32x128xf32>
    %89 = arith.addf %53, %88 : vector<32x128xf32>
    %90 = arith.truncf %87 : vector<32x128xf32> to vector<32x128xbf16>
    %c0_74 = arith.constant 0 : index
    %c2_75 = arith.constant 2 : index
    %91 = vector.load %arg15[%c0_74, %c2_75] : memref<32x132xbf16, #tpu.memory_space<vmem>>, vector<32x128xbf16>
    tpu.vector_store %arg15[%c0_74, %c2_75], %90 {strides = array<i32>} : memref<32x132xbf16, #tpu.memory_space<vmem>>, vector<32x128xbf16>,
    %c0_76 = arith.constant 0 : index
    %c0_77 = arith.constant 0 : index
    %92 = vector.load %arg15[%c0_76, %c0_77] : memref<32x132xbf16, #tpu.memory_space<vmem>>, vector<32x128xbf16>
    %c0_78 = arith.constant 0 : index
    %c1_79 = arith.constant 1 : index
    %93 = vector.load %arg15[%c0_78, %c1_79] : memref<32x132xbf16, #tpu.memory_space<vmem>>, vector<32x128xbf16>
    %c0_80 = arith.constant 0 : index
    %c2_81 = arith.constant 2 : index
    %94 = vector.load %arg15[%c0_80, %c2_81] : memref<32x132xbf16, #tpu.memory_space<vmem>>, vector<32x128xbf16>
    %c0_82 = arith.constant 0 : index
    %c3_83 = arith.constant 3 : index
    %95 = vector.load %arg15[%c0_82, %c3_83] : memref<32x132xbf16, #tpu.memory_space<vmem>>, vector<32x128xbf16>
    %c0_84 = arith.constant 0 : index
    %c4_85 = arith.constant 4 : index
    %96 = vector.load %arg15[%c0_84, %c4_85] : memref<32x132xbf16, #tpu.memory_space<vmem>>, vector<32x128xbf16>
    %97 = tpu.concatenate %92, %93, %94, %95, %96 in 0 : vector<32x128xbf16>, vector<32x128xbf16>, vector<32x128xbf16>, vector<32x128xbf16>, vector<32x128xbf16> -> vector<160x128xbf16>
    %c0_86 = arith.constant 0 : index
    %c2_87 = arith.constant 2 : index
    %c0_88 = arith.constant 0 : index
    %c0_89 = arith.constant 0 : index
    %98 = vector.load %arg6[%c0_86, %c2_87, %c0_88, %c0_89] : memref<4x4x64x160xbf16, #tpu.memory_space<vmem>>, vector<1x1x64x160xbf16>
    %99 = vector.shape_cast %98 : vector<1x1x64x160xbf16> to vector<64x160xbf16>
    %cst_90 = arith.constant dense<0.000000e+00> : vector<64x128xf32>
    %100 = tpu.matmul %99, %97, %cst_90 {dimension_numbers = #tpu.dot_dimension_numbers<[1], [0], [0], [1], [0, 0, 1, 1], [], []>} : vector<64x160xbf16>, vector<160x128xbf16>, vector<64x128xf32> -> vector<64x128xf32>
    %c0_91 = arith.constant 0 : index
    %c2_92 = arith.constant 2 : index
    %c0_93 = arith.constant 0 : index
    %c0_94 = arith.constant 0 : index
    %101 = vector.load %arg3[%c0_91, %c2_92, %c0_93, %c0_94] : memref<1x16x64x1xf32, #tpu.memory_space<vmem>>, vector<1x1x64x1xf32>
    %102 = vector.shape_cast %101 : vector<1x1x64x1xf32> to vector<64x1xf32>
    %103 = vector.broadcast %102 : vector<64x1xf32> to vector<64x128xf32>
    %104 = arith.addf %100, %103 : vector<64x128xf32>
    %105 = math.tanh %104 : vector<64x128xf32>
    %106 = vector.extract_strided_slice %105 {offsets = [0, 0], sizes = [32, 128], strides = [1, 1]} : vector<64x128xf32> to vector<32x128xf32>
    %107 = vector.extract_strided_slice %105 {offsets = [32, 0], sizes = [32, 128], strides = [1, 1]} : vector<64x128xf32> to vector<32x128xf32>
    %cst_95 = arith.constant 5.000000e-01 : f32
    %108 = vector.broadcast %cst_95 : f32 to vector<32x128xf32>
    %109 = arith.mulf %107, %108 : vector<32x128xf32>
    %cst_96 = arith.constant 5.000000e-01 : f32
    %110 = vector.broadcast %cst_96 : f32 to vector<32x128xf32>
    %111 = arith.addf %109, %110 : vector<32x128xf32>
    %112 = arith.mulf %106, %111 : vector<32x128xf32>
    %113 = arith.truncf %112 : vector<32x128xf32> to vector<32x128xbf16>
    %c0_97 = arith.constant 0 : index
    %c2_98 = arith.constant 2 : index
    %c0_99 = arith.constant 0 : index
    %c0_100 = arith.constant 0 : index
    %114 = vector.load %arg7[%c0_97, %c2_98, %c0_99, %c0_100] : memref<4x3x64x32xbf16, #tpu.memory_space<vmem>>, vector<1x1x64x32xbf16>
    %115 = vector.shape_cast %114 : vector<1x1x64x32xbf16> to vector<64x32xbf16>
    %cst_101 = arith.constant dense<0.000000e+00> : vector<64x128xf32>
    %116 = tpu.matmul %115, %113, %cst_101 {dimension_numbers = #tpu.dot_dimension_numbers<[1], [0], [0], [1], [0, 0, 1, 1], [], []>} : vector<64x32xbf16>, vector<32x128xbf16>, vector<64x128xf32> -> vector<64x128xf32>
    %c0_102 = arith.constant 0 : index
    %c2_103 = arith.constant 2 : index
    %c0_104 = arith.constant 0 : index
    %c0_105 = arith.constant 0 : index
    %117 = vector.load %arg8[%c0_102, %c2_103, %c0_104, %c0_105] : memref<4x3x64x1xf32, #tpu.memory_space<vmem>>, vector<1x1x64x1xf32>
    %118 = vector.shape_cast %117 : vector<1x1x64x1xf32> to vector<64x1xf32>
    %119 = vector.broadcast %118 : vector<64x1xf32> to vector<64x128xf32>
    %120 = arith.addf %116, %119 : vector<64x128xf32>
    %121 = vector.extract_strided_slice %120 {offsets = [0, 0], sizes = [32, 128], strides = [1, 1]} : vector<64x128xf32> to vector<32x128xf32>
    %122 = arith.addf %87, %121 : vector<32x128xf32>
    %123 = arith.mulf %122, %5 : vector<32x128xf32>
    %124 = vector.extract_strided_slice %120 {offsets = [32, 0], sizes = [32, 128], strides = [1, 1]} : vector<64x128xf32> to vector<32x128xf32>
    %125 = arith.addf %89, %124 : vector<32x128xf32>
    %126 = arith.truncf %123 : vector<32x128xf32> to vector<32x128xbf16>
    %c0_106 = arith.constant 0 : index
    %c2_107 = arith.constant 2 : index
    %127 = vector.load %arg15[%c0_106, %c2_107] : memref<32x132xbf16, #tpu.memory_space<vmem>>, vector<32x128xbf16>
    tpu.vector_store %arg15[%c0_106, %c2_107], %126 {strides = array<i32>} : memref<32x132xbf16, #tpu.memory_space<vmem>>, vector<32x128xbf16>,
    %c0_108 = arith.constant 0 : index
    %c0_109 = arith.constant 0 : index
    %128 = vector.load %arg15[%c0_108, %c0_109] : memref<32x132xbf16, #tpu.memory_space<vmem>>, vector<32x128xbf16>
    %c0_110 = arith.constant 0 : index
    %c1_111 = arith.constant 1 : index
    %129 = vector.load %arg15[%c0_110, %c1_111] : memref<32x132xbf16, #tpu.memory_space<vmem>>, vector<32x128xbf16>
    %c0_112 = arith.constant 0 : index
    %c2_113 = arith.constant 2 : index
    %130 = vector.load %arg15[%c0_112, %c2_113] : memref<32x132xbf16, #tpu.memory_space<vmem>>, vector<32x128xbf16>
    %c0_114 = arith.constant 0 : index
    %c3_115 = arith.constant 3 : index
    %131 = vector.load %arg15[%c0_114, %c3_115] : memref<32x132xbf16, #tpu.memory_space<vmem>>, vector<32x128xbf16>
    %c0_116 = arith.constant 0 : index
    %c4_117 = arith.constant 4 : index
    %132 = vector.load %arg15[%c0_116, %c4_117] : memref<32x132xbf16, #tpu.memory_space<vmem>>, vector<32x128xbf16>
    %133 = tpu.concatenate %128, %129, %130, %131, %132 in 0 : vector<32x128xbf16>, vector<32x128xbf16>, vector<32x128xbf16>, vector<32x128xbf16>, vector<32x128xbf16> -> vector<160x128xbf16>
    %c0_118 = arith.constant 0 : index
    %c3_119 = arith.constant 3 : index
    %c0_120 = arith.constant 0 : index
    %c0_121 = arith.constant 0 : index
    %134 = vector.load %arg6[%c0_118, %c3_119, %c0_120, %c0_121] : memref<4x4x64x160xbf16, #tpu.memory_space<vmem>>, vector<1x1x64x160xbf16>
    %135 = vector.shape_cast %134 : vector<1x1x64x160xbf16> to vector<64x160xbf16>
    %cst_122 = arith.constant dense<0.000000e+00> : vector<64x128xf32>
    %136 = tpu.matmul %135, %133, %cst_122 {dimension_numbers = #tpu.dot_dimension_numbers<[1], [0], [0], [1], [0, 0, 1, 1], [], []>} : vector<64x160xbf16>, vector<160x128xbf16>, vector<64x128xf32> -> vector<64x128xf32>
    %c0_123 = arith.constant 0 : index
    %c3_124 = arith.constant 3 : index
    %c0_125 = arith.constant 0 : index
    %c0_126 = arith.constant 0 : index
    %137 = vector.load %arg3[%c0_123, %c3_124, %c0_125, %c0_126] : memref<1x16x64x1xf32, #tpu.memory_space<vmem>>, vector<1x1x64x1xf32>
    %138 = vector.shape_cast %137 : vector<1x1x64x1xf32> to vector<64x1xf32>
    %139 = vector.broadcast %138 : vector<64x1xf32> to vector<64x128xf32>
    %140 = arith.addf %136, %139 : vector<64x128xf32>
    %141 = math.tanh %140 : vector<64x128xf32>
    %142 = vector.extract_strided_slice %141 {offsets = [0, 0], sizes = [32, 128], strides = [1, 1]} : vector<64x128xf32> to vector<32x128xf32>
    %143 = vector.extract_strided_slice %141 {offsets = [32, 0], sizes = [32, 128], strides = [1, 1]} : vector<64x128xf32> to vector<32x128xf32>
    %cst_127 = arith.constant 5.000000e-01 : f32
    %144 = vector.broadcast %cst_127 : f32 to vector<32x128xf32>
    %145 = arith.mulf %143, %144 : vector<32x128xf32>
    %cst_128 = arith.constant 5.000000e-01 : f32
    %146 = vector.broadcast %cst_128 : f32 to vector<32x128xf32>
    %147 = arith.addf %145, %146 : vector<32x128xf32>
    %148 = arith.mulf %142, %147 : vector<32x128xf32>
    %149 = arith.truncf %148 : vector<32x128xf32> to vector<32x128xbf16>
    %c0_129 = arith.constant 0 : index
    %c0_130 = arith.constant 0 : index
    %c0_131 = arith.constant 0 : index
    %150 = vector.load %arg9[%c0_129, %c0_130, %c0_131] : memref<4x32x32xbf16, #tpu.memory_space<vmem>>, vector<1x32x32xbf16>
    %151 = vector.shape_cast %150 : vector<1x32x32xbf16> to vector<32x32xbf16>
    %cst_132 = arith.constant dense<0.000000e+00> : vector<32x128xf32>
    %152 = tpu.matmul %151, %149, %cst_132 {dimension_numbers = #tpu.dot_dimension_numbers<[1], [0], [0], [1], [0, 0, 1, 1], [], []>} : vector<32x32xbf16>, vector<32x128xbf16>, vector<32x128xf32> -> vector<32x128xf32>
    %c0_133 = arith.constant 0 : index
    %c0_134 = arith.constant 0 : index
    %c0_135 = arith.constant 0 : index
    %153 = vector.load %arg10[%c0_133, %c0_134, %c0_135] : memref<4x32x1xf32, #tpu.memory_space<vmem>>, vector<1x32x1xf32>
    %154 = vector.shape_cast %153 : vector<1x32x1xf32> to vector<32x1xf32>
    %155 = vector.broadcast %154 : vector<32x1xf32> to vector<32x128xf32>
    %156 = arith.addf %152, %155 : vector<32x128xf32>
    %157 = arith.addf %125, %156 : vector<32x128xf32>
    %158 = arith.mulf %157, %5 : vector<32x128xf32>
    %c0_136 = arith.constant 0 : index
    %c0_137 = arith.constant 0 : index
    %c0_138 = arith.constant 0 : index
    %159 = vector.load %arg11[%c0_136, %c0_137, %c0_138] : memref<4x8x32xbf16, #tpu.memory_space<vmem>>, vector<1x8x32xbf16>
    %160 = vector.shape_cast %159 : vector<1x8x32xbf16> to vector<8x32xbf16>
    %161 = arith.truncf %158 : vector<32x128xf32> to vector<32x128xbf16>
    %cst_139 = arith.constant dense<0.000000e+00> : vector<8x128xf32>
    %162 = tpu.matmul %160, %161, %cst_139 {dimension_numbers = #tpu.dot_dimension_numbers<[1], [0], [0], [1], [0, 0, 1, 1], [], []>} : vector<8x32xbf16>, vector<32x128xbf16>, vector<8x128xf32> -> vector<8x128xf32>
    %c0_140 = arith.constant 0 : index
    %c0_141 = arith.constant 0 : index
    %c0_142 = arith.constant 0 : index
    %163 = vector.load %arg12[%c0_140, %c0_141, %c0_142] : memref<4x8x1xf32, #tpu.memory_space<vmem>>, vector<1x8x1xf32>
    %164 = vector.shape_cast %163 : vector<1x8x1xf32> to vector<8x1xf32>
    %165 = vector.broadcast %164 : vector<8x1xf32> to vector<8x128xf32>
    %166 = arith.addf %162, %165 : vector<8x128xf32>
    %167 = arith.mulf %166, %7 : vector<8x128xf32>
    %c0_143 = arith.constant 0 : index
    %c0_144 = arith.constant 0 : index
    %c0_145 = arith.constant 0 : index
    %168 = vector.load %arg13[%c0_143, %c0_144, %c0_145] : memref<4x8x1xf32, #tpu.memory_space<vmem>>, vector<1x8x1xf32>
    %169 = vector.shape_cast %168 : vector<1x8x1xf32> to vector<8x1xf32>
    %cst_146 = arith.constant 1.000000e+00 : f32
    %170 = vector.broadcast %cst_146 : f32 to vector<8x128xf32>
    %171 = arith.subf %7, %170 : vector<8x128xf32>
    %172 = vector.broadcast %169 : vector<8x1xf32> to vector<8x128xf32>
    %173 = arith.mulf %172, %171 : vector<8x128xf32>
    %cst_147 = arith.constant 1.000000e+00 : f32
    %174 = vector.broadcast %cst_147 : f32 to vector<8x128xf32>
    %175 = arith.addf %174, %173 : vector<8x128xf32>
    %176 = arith.mulf %1, %175 : vector<8x128xf32>
    %177 = arith.addf %176, %167 : vector<8x128xf32>
    %c1_148 = arith.constant 1 : index
    %c0_149 = arith.constant 0 : index
    %c0_150 = arith.constant 0 : index
    %178 = vector.load %arg4[%c1_148, %c0_149, %c0_150] : memref<4x32x8xbf16, #tpu.memory_space<vmem>>, vector<1x32x8xbf16>
    %179 = vector.shape_cast %178 : vector<1x32x8xbf16> to vector<32x8xbf16>
    %180 = arith.truncf %177 : vector<8x128xf32> to vector<8x128xbf16>
    %cst_151 = arith.constant dense<0.000000e+00> : vector<32x128xf32>
    %181 = tpu.matmul %179, %180, %cst_151 {dimension_numbers = #tpu.dot_dimension_numbers<[1], [0], [0], [1], [0, 0, 1, 1], [], []>} : vector<32x8xbf16>, vector<8x128xbf16>, vector<32x128xf32> -> vector<32x128xf32>
    %c1_152 = arith.constant 1 : index
    %c0_153 = arith.constant 0 : index
    %c0_154 = arith.constant 0 : index
    %182 = vector.load %arg5[%c1_152, %c0_153, %c0_154] : memref<4x32x1xf32, #tpu.memory_space<vmem>>, vector<1x32x1xf32>
    %183 = vector.shape_cast %182 : vector<1x32x1xf32> to vector<32x1xf32>
    %184 = vector.broadcast %183 : vector<32x1xf32> to vector<32x128xf32>
    %185 = arith.addf %181, %184 : vector<32x128xf32>
    %186 = arith.mulf %185, %5 : vector<32x128xf32>
    %187 = arith.truncf %186 : vector<32x128xf32> to vector<32x128xbf16>
    %c0_155 = arith.constant 0 : index
    %c2_156 = arith.constant 2 : index
    %188 = vector.load %arg15[%c0_155, %c2_156] : memref<32x132xbf16, #tpu.memory_space<vmem>>, vector<32x128xbf16>
    tpu.vector_store %arg15[%c0_155, %c2_156], %187 {strides = array<i32>} : memref<32x132xbf16, #tpu.memory_space<vmem>>, vector<32x128xbf16>,
    %c0_157 = arith.constant 0 : index
    %c0_158 = arith.constant 0 : index
    %189 = vector.load %arg15[%c0_157, %c0_158] : memref<32x132xbf16, #tpu.memory_space<vmem>>, vector<32x128xbf16>
    %c0_159 = arith.constant 0 : index
    %c1_160 = arith.constant 1 : index
    %190 = vector.load %arg15[%c0_159, %c1_160] : memref<32x132xbf16, #tpu.memory_space<vmem>>, vector<32x128xbf16>
    %c0_161 = arith.constant 0 : index
    %c2_162 = arith.constant 2 : index
    %191 = vector.load %arg15[%c0_161, %c2_162] : memref<32x132xbf16, #tpu.memory_space<vmem>>, vector<32x128xbf16>
    %c0_163 = arith.constant 0 : index
    %c3_164 = arith.constant 3 : index
    %192 = vector.load %arg15[%c0_163, %c3_164] : memref<32x132xbf16, #tpu.memory_space<vmem>>, vector<32x128xbf16>
    %c0_165 = arith.constant 0 : index
    %c4_166 = arith.constant 4 : index
    %193 = vector.load %arg15[%c0_165, %c4_166] : memref<32x132xbf16, #tpu.memory_space<vmem>>, vector<32x128xbf16>
    %194 = tpu.concatenate %189, %190, %191, %192, %193 in 0 : vector<32x128xbf16>, vector<32x128xbf16>, vector<32x128xbf16>, vector<32x128xbf16>, vector<32x128xbf16> -> vector<160x128xbf16>
    %c1_167 = arith.constant 1 : index
    %c0_168 = arith.constant 0 : index
    %c0_169 = arith.constant 0 : index
    %c0_170 = arith.constant 0 : index
    %195 = vector.load %arg6[%c1_167, %c0_168, %c0_169, %c0_170] : memref<4x4x64x160xbf16, #tpu.memory_space<vmem>>, vector<1x1x64x160xbf16>
    %196 = vector.shape_cast %195 : vector<1x1x64x160xbf16> to vector<64x160xbf16>
    %cst_171 = arith.constant dense<0.000000e+00> : vector<64x128xf32>
    %197 = tpu.matmul %196, %194, %cst_171 {dimension_numbers = #tpu.dot_dimension_numbers<[1], [0], [0], [1], [0, 0, 1, 1], [], []>} : vector<64x160xbf16>, vector<160x128xbf16>, vector<64x128xf32> -> vector<64x128xf32>
    %c0_172 = arith.constant 0 : index
    %c4_173 = arith.constant 4 : index
    %c0_174 = arith.constant 0 : index
    %c0_175 = arith.constant 0 : index
    %198 = vector.load %arg3[%c0_172, %c4_173, %c0_174, %c0_175] : memref<1x16x64x1xf32, #tpu.memory_space<vmem>>, vector<1x1x64x1xf32>
    %199 = vector.shape_cast %198 : vector<1x1x64x1xf32> to vector<64x1xf32>
    %200 = vector.broadcast %199 : vector<64x1xf32> to vector<64x128xf32>
    %201 = arith.addf %197, %200 : vector<64x128xf32>
    %202 = math.tanh %201 : vector<64x128xf32>
    %203 = vector.extract_strided_slice %202 {offsets = [0, 0], sizes = [32, 128], strides = [1, 1]} : vector<64x128xf32> to vector<32x128xf32>
    %204 = vector.extract_strided_slice %202 {offsets = [32, 0], sizes = [32, 128], strides = [1, 1]} : vector<64x128xf32> to vector<32x128xf32>
    %cst_176 = arith.constant 5.000000e-01 : f32
    %205 = vector.broadcast %cst_176 : f32 to vector<32x128xf32>
    %206 = arith.mulf %204, %205 : vector<32x128xf32>
    %cst_177 = arith.constant 5.000000e-01 : f32
    %207 = vector.broadcast %cst_177 : f32 to vector<32x128xf32>
    %208 = arith.addf %206, %207 : vector<32x128xf32>
    %209 = arith.mulf %203, %208 : vector<32x128xf32>
    %210 = arith.truncf %209 : vector<32x128xf32> to vector<32x128xbf16>
    %c1_178 = arith.constant 1 : index
    %c0_179 = arith.constant 0 : index
    %c0_180 = arith.constant 0 : index
    %c0_181 = arith.constant 0 : index
    %211 = vector.load %arg7[%c1_178, %c0_179, %c0_180, %c0_181] : memref<4x3x64x32xbf16, #tpu.memory_space<vmem>>, vector<1x1x64x32xbf16>
    %212 = vector.shape_cast %211 : vector<1x1x64x32xbf16> to vector<64x32xbf16>
    %cst_182 = arith.constant dense<0.000000e+00> : vector<64x128xf32>
    %213 = tpu.matmul %212, %210, %cst_182 {dimension_numbers = #tpu.dot_dimension_numbers<[1], [0], [0], [1], [0, 0, 1, 1], [], []>} : vector<64x32xbf16>, vector<32x128xbf16>, vector<64x128xf32> -> vector<64x128xf32>
    %c1_183 = arith.constant 1 : index
    %c0_184 = arith.constant 0 : index
    %c0_185 = arith.constant 0 : index
    %c0_186 = arith.constant 0 : index
    %214 = vector.load %arg8[%c1_183, %c0_184, %c0_185, %c0_186] : memref<4x3x64x1xf32, #tpu.memory_space<vmem>>, vector<1x1x64x1xf32>
    %215 = vector.shape_cast %214 : vector<1x1x64x1xf32> to vector<64x1xf32>
    %216 = vector.broadcast %215 : vector<64x1xf32> to vector<64x128xf32>
    %217 = arith.addf %213, %216 : vector<64x128xf32>
    %218 = vector.extract_strided_slice %217 {offsets = [0, 0], sizes = [32, 128], strides = [1, 1]} : vector<64x128xf32> to vector<32x128xf32>
    %219 = arith.addf %186, %218 : vector<32x128xf32>
    %220 = arith.mulf %219, %5 : vector<32x128xf32>
    %221 = vector.extract_strided_slice %217 {offsets = [32, 0], sizes = [32, 128], strides = [1, 1]} : vector<64x128xf32> to vector<32x128xf32>
    %222 = arith.truncf %220 : vector<32x128xf32> to vector<32x128xbf16>
    %c0_187 = arith.constant 0 : index
    %c2_188 = arith.constant 2 : index
    %223 = vector.load %arg15[%c0_187, %c2_188] : memref<32x132xbf16, #tpu.memory_space<vmem>>, vector<32x128xbf16>
    tpu.vector_store %arg15[%c0_187, %c2_188], %222 {strides = array<i32>} : memref<32x132xbf16, #tpu.memory_space<vmem>>, vector<32x128xbf16>,
    %c0_189 = arith.constant 0 : index
    %c0_190 = arith.constant 0 : index
    %224 = vector.load %arg15[%c0_189, %c0_190] : memref<32x132xbf16, #tpu.memory_space<vmem>>, vector<32x128xbf16>
    %c0_191 = arith.constant 0 : index
    %c1_192 = arith.constant 1 : index
    %225 = vector.load %arg15[%c0_191, %c1_192] : memref<32x132xbf16, #tpu.memory_space<vmem>>, vector<32x128xbf16>
    %c0_193 = arith.constant 0 : index
    %c2_194 = arith.constant 2 : index
    %226 = vector.load %arg15[%c0_193, %c2_194] : memref<32x132xbf16, #tpu.memory_space<vmem>>, vector<32x128xbf16>
    %c0_195 = arith.constant 0 : index
    %c3_196 = arith.constant 3 : index
    %227 = vector.load %arg15[%c0_195, %c3_196] : memref<32x132xbf16, #tpu.memory_space<vmem>>, vector<32x128xbf16>
    %c0_197 = arith.constant 0 : index
    %c4_198 = arith.constant 4 : index
    %228 = vector.load %arg15[%c0_197, %c4_198] : memref<32x132xbf16, #tpu.memory_space<vmem>>, vector<32x128xbf16>
    %229 = tpu.concatenate %224, %225, %226, %227, %228 in 0 : vector<32x128xbf16>, vector<32x128xbf16>, vector<32x128xbf16>, vector<32x128xbf16>, vector<32x128xbf16> -> vector<160x128xbf16>
    %c1_199 = arith.constant 1 : index
    %c1_200 = arith.constant 1 : index
    %c0_201 = arith.constant 0 : index
    %c0_202 = arith.constant 0 : index
    %230 = vector.load %arg6[%c1_199, %c1_200, %c0_201, %c0_202] : memref<4x4x64x160xbf16, #tpu.memory_space<vmem>>, vector<1x1x64x160xbf16>
    %231 = vector.shape_cast %230 : vector<1x1x64x160xbf16> to vector<64x160xbf16>
    %cst_203 = arith.constant dense<0.000000e+00> : vector<64x128xf32>
    %232 = tpu.matmul %231, %229, %cst_203 {dimension_numbers = #tpu.dot_dimension_numbers<[1], [0], [0], [1], [0, 0, 1, 1], [], []>} : vector<64x160xbf16>, vector<160x128xbf16>, vector<64x128xf32> -> vector<64x128xf32>
    %c0_204 = arith.constant 0 : index
    %c5 = arith.constant 5 : index
    %c0_205 = arith.constant 0 : index
    %c0_206 = arith.constant 0 : index
    %233 = vector.load %arg3[%c0_204, %c5, %c0_205, %c0_206] : memref<1x16x64x1xf32, #tpu.memory_space<vmem>>, vector<1x1x64x1xf32>
    %234 = vector.shape_cast %233 : vector<1x1x64x1xf32> to vector<64x1xf32>
    %235 = vector.broadcast %234 : vector<64x1xf32> to vector<64x128xf32>
    %236 = arith.addf %232, %235 : vector<64x128xf32>
    %237 = math.tanh %236 : vector<64x128xf32>
    %238 = vector.extract_strided_slice %237 {offsets = [0, 0], sizes = [32, 128], strides = [1, 1]} : vector<64x128xf32> to vector<32x128xf32>
    %239 = vector.extract_strided_slice %237 {offsets = [32, 0], sizes = [32, 128], strides = [1, 1]} : vector<64x128xf32> to vector<32x128xf32>
    %cst_207 = arith.constant 5.000000e-01 : f32
    %240 = vector.broadcast %cst_207 : f32 to vector<32x128xf32>
    %241 = arith.mulf %239, %240 : vector<32x128xf32>
    %cst_208 = arith.constant 5.000000e-01 : f32
    %242 = vector.broadcast %cst_208 : f32 to vector<32x128xf32>
    %243 = arith.addf %241, %242 : vector<32x128xf32>
    %244 = arith.mulf %238, %243 : vector<32x128xf32>
    %245 = arith.truncf %244 : vector<32x128xf32> to vector<32x128xbf16>
    %c1_209 = arith.constant 1 : index
    %c1_210 = arith.constant 1 : index
    %c0_211 = arith.constant 0 : index
    %c0_212 = arith.constant 0 : index
    %246 = vector.load %arg7[%c1_209, %c1_210, %c0_211, %c0_212] : memref<4x3x64x32xbf16, #tpu.memory_space<vmem>>, vector<1x1x64x32xbf16>
    %247 = vector.shape_cast %246 : vector<1x1x64x32xbf16> to vector<64x32xbf16>
    %cst_213 = arith.constant dense<0.000000e+00> : vector<64x128xf32>
    %248 = tpu.matmul %247, %245, %cst_213 {dimension_numbers = #tpu.dot_dimension_numbers<[1], [0], [0], [1], [0, 0, 1, 1], [], []>} : vector<64x32xbf16>, vector<32x128xbf16>, vector<64x128xf32> -> vector<64x128xf32>
    %c1_214 = arith.constant 1 : index
    %c1_215 = arith.constant 1 : index
    %c0_216 = arith.constant 0 : index
    %c0_217 = arith.constant 0 : index
    %249 = vector.load %arg8[%c1_214, %c1_215, %c0_216, %c0_217] : memref<4x3x64x1xf32, #tpu.memory_space<vmem>>, vector<1x1x64x1xf32>
    %250 = vector.shape_cast %249 : vector<1x1x64x1xf32> to vector<64x1xf32>
    %251 = vector.broadcast %250 : vector<64x1xf32> to vector<64x128xf32>
    %252 = arith.addf %248, %251 : vector<64x128xf32>
    %253 = vector.extract_strided_slice %252 {offsets = [0, 0], sizes = [32, 128], strides = [1, 1]} : vector<64x128xf32> to vector<32x128xf32>
    %254 = arith.addf %220, %253 : vector<32x128xf32>
    %255 = arith.mulf %254, %5 : vector<32x128xf32>
    %256 = vector.extract_strided_slice %252 {offsets = [32, 0], sizes = [32, 128], strides = [1, 1]} : vector<64x128xf32> to vector<32x128xf32>
    %257 = arith.addf %221, %256 : vector<32x128xf32>
    %258 = arith.truncf %255 : vector<32x128xf32> to vector<32x128xbf16>
    %c0_218 = arith.constant 0 : index
    %c2_219 = arith.constant 2 : index
    %259 = vector.load %arg15[%c0_218, %c2_219] : memref<32x132xbf16, #tpu.memory_space<vmem>>, vector<32x128xbf16>
    tpu.vector_store %arg15[%c0_218, %c2_219], %258 {strides = array<i32>} : memref<32x132xbf16, #tpu.memory_space<vmem>>, vector<32x128xbf16>,
    %c0_220 = arith.constant 0 : index
    %c0_221 = arith.constant 0 : index
    %260 = vector.load %arg15[%c0_220, %c0_221] : memref<32x132xbf16, #tpu.memory_space<vmem>>, vector<32x128xbf16>
    %c0_222 = arith.constant 0 : index
    %c1_223 = arith.constant 1 : index
    %261 = vector.load %arg15[%c0_222, %c1_223] : memref<32x132xbf16, #tpu.memory_space<vmem>>, vector<32x128xbf16>
    %c0_224 = arith.constant 0 : index
    %c2_225 = arith.constant 2 : index
    %262 = vector.load %arg15[%c0_224, %c2_225] : memref<32x132xbf16, #tpu.memory_space<vmem>>, vector<32x128xbf16>
    %c0_226 = arith.constant 0 : index
    %c3_227 = arith.constant 3 : index
    %263 = vector.load %arg15[%c0_226, %c3_227] : memref<32x132xbf16, #tpu.memory_space<vmem>>, vector<32x128xbf16>
    %c0_228 = arith.constant 0 : index
    %c4_229 = arith.constant 4 : index
    %264 = vector.load %arg15[%c0_228, %c4_229] : memref<32x132xbf16, #tpu.memory_space<vmem>>, vector<32x128xbf16>
    %265 = tpu.concatenate %260, %261, %262, %263, %264 in 0 : vector<32x128xbf16>, vector<32x128xbf16>, vector<32x128xbf16>, vector<32x128xbf16>, vector<32x128xbf16> -> vector<160x128xbf16>
    %c1_230 = arith.constant 1 : index
    %c2_231 = arith.constant 2 : index
    %c0_232 = arith.constant 0 : index
    %c0_233 = arith.constant 0 : index
    %266 = vector.load %arg6[%c1_230, %c2_231, %c0_232, %c0_233] : memref<4x4x64x160xbf16, #tpu.memory_space<vmem>>, vector<1x1x64x160xbf16>
    %267 = vector.shape_cast %266 : vector<1x1x64x160xbf16> to vector<64x160xbf16>
    %cst_234 = arith.constant dense<0.000000e+00> : vector<64x128xf32>
    %268 = tpu.matmul %267, %265, %cst_234 {dimension_numbers = #tpu.dot_dimension_numbers<[1], [0], [0], [1], [0, 0, 1, 1], [], []>} : vector<64x160xbf16>, vector<160x128xbf16>, vector<64x128xf32> -> vector<64x128xf32>
    %c0_235 = arith.constant 0 : index
    %c6 = arith.constant 6 : index
    %c0_236 = arith.constant 0 : index
    %c0_237 = arith.constant 0 : index
    %269 = vector.load %arg3[%c0_235, %c6, %c0_236, %c0_237] : memref<1x16x64x1xf32, #tpu.memory_space<vmem>>, vector<1x1x64x1xf32>
    %270 = vector.shape_cast %269 : vector<1x1x64x1xf32> to vector<64x1xf32>
    %271 = vector.broadcast %270 : vector<64x1xf32> to vector<64x128xf32>
    %272 = arith.addf %268, %271 : vector<64x128xf32>
    %273 = math.tanh %272 : vector<64x128xf32>
    %274 = vector.extract_strided_slice %273 {offsets = [0, 0], sizes = [32, 128], strides = [1, 1]} : vector<64x128xf32> to vector<32x128xf32>
    %275 = vector.extract_strided_slice %273 {offsets = [32, 0], sizes = [32, 128], strides = [1, 1]} : vector<64x128xf32> to vector<32x128xf32>
    %cst_238 = arith.constant 5.000000e-01 : f32
    %276 = vector.broadcast %cst_238 : f32 to vector<32x128xf32>
    %277 = arith.mulf %275, %276 : vector<32x128xf32>
    %cst_239 = arith.constant 5.000000e-01 : f32
    %278 = vector.broadcast %cst_239 : f32 to vector<32x128xf32>
    %279 = arith.addf %277, %278 : vector<32x128xf32>
    %280 = arith.mulf %274, %279 : vector<32x128xf32>
    %281 = arith.truncf %280 : vector<32x128xf32> to vector<32x128xbf16>
    %c1_240 = arith.constant 1 : index
    %c2_241 = arith.constant 2 : index
    %c0_242 = arith.constant 0 : index
    %c0_243 = arith.constant 0 : index
    %282 = vector.load %arg7[%c1_240, %c2_241, %c0_242, %c0_243] : memref<4x3x64x32xbf16, #tpu.memory_space<vmem>>, vector<1x1x64x32xbf16>
    %283 = vector.shape_cast %282 : vector<1x1x64x32xbf16> to vector<64x32xbf16>
    %cst_244 = arith.constant dense<0.000000e+00> : vector<64x128xf32>
    %284 = tpu.matmul %283, %281, %cst_244 {dimension_numbers = #tpu.dot_dimension_numbers<[1], [0], [0], [1], [0, 0, 1, 1], [], []>} : vector<64x32xbf16>, vector<32x128xbf16>, vector<64x128xf32> -> vector<64x128xf32>
    %c1_245 = arith.constant 1 : index
    %c2_246 = arith.constant 2 : index
    %c0_247 = arith.constant 0 : index
    %c0_248 = arith.constant 0 : index
    %285 = vector.load %arg8[%c1_245, %c2_246, %c0_247, %c0_248] : memref<4x3x64x1xf32, #tpu.memory_space<vmem>>, vector<1x1x64x1xf32>
    %286 = vector.shape_cast %285 : vector<1x1x64x1xf32> to vector<64x1xf32>
    %287 = vector.broadcast %286 : vector<64x1xf32> to vector<64x128xf32>
    %288 = arith.addf %284, %287 : vector<64x128xf32>
    %289 = vector.extract_strided_slice %288 {offsets = [0, 0], sizes = [32, 128], strides = [1, 1]} : vector<64x128xf32> to vector<32x128xf32>
    %290 = arith.addf %255, %289 : vector<32x128xf32>
    %291 = arith.mulf %290, %5 : vector<32x128xf32>
    %292 = vector.extract_strided_slice %288 {offsets = [32, 0], sizes = [32, 128], strides = [1, 1]} : vector<64x128xf32> to vector<32x128xf32>
    %293 = arith.addf %257, %292 : vector<32x128xf32>
    %294 = arith.truncf %291 : vector<32x128xf32> to vector<32x128xbf16>
    %c0_249 = arith.constant 0 : index
    %c2_250 = arith.constant 2 : index
    %295 = vector.load %arg15[%c0_249, %c2_250] : memref<32x132xbf16, #tpu.memory_space<vmem>>, vector<32x128xbf16>
    tpu.vector_store %arg15[%c0_249, %c2_250], %294 {strides = array<i32>} : memref<32x132xbf16, #tpu.memory_space<vmem>>, vector<32x128xbf16>,
    %c0_251 = arith.constant 0 : index
    %c0_252 = arith.constant 0 : index
    %296 = vector.load %arg15[%c0_251, %c0_252] : memref<32x132xbf16, #tpu.memory_space<vmem>>, vector<32x128xbf16>
    %c0_253 = arith.constant 0 : index
    %c1_254 = arith.constant 1 : index
    %297 = vector.load %arg15[%c0_253, %c1_254] : memref<32x132xbf16, #tpu.memory_space<vmem>>, vector<32x128xbf16>
    %c0_255 = arith.constant 0 : index
    %c2_256 = arith.constant 2 : index
    %298 = vector.load %arg15[%c0_255, %c2_256] : memref<32x132xbf16, #tpu.memory_space<vmem>>, vector<32x128xbf16>
    %c0_257 = arith.constant 0 : index
    %c3_258 = arith.constant 3 : index
    %299 = vector.load %arg15[%c0_257, %c3_258] : memref<32x132xbf16, #tpu.memory_space<vmem>>, vector<32x128xbf16>
    %c0_259 = arith.constant 0 : index
    %c4_260 = arith.constant 4 : index
    %300 = vector.load %arg15[%c0_259, %c4_260] : memref<32x132xbf16, #tpu.memory_space<vmem>>, vector<32x128xbf16>
    %301 = tpu.concatenate %296, %297, %298, %299, %300 in 0 : vector<32x128xbf16>, vector<32x128xbf16>, vector<32x128xbf16>, vector<32x128xbf16>, vector<32x128xbf16> -> vector<160x128xbf16>
    %c1_261 = arith.constant 1 : index
    %c3_262 = arith.constant 3 : index
    %c0_263 = arith.constant 0 : index
    %c0_264 = arith.constant 0 : index
    %302 = vector.load %arg6[%c1_261, %c3_262, %c0_263, %c0_264] : memref<4x4x64x160xbf16, #tpu.memory_space<vmem>>, vector<1x1x64x160xbf16>
    %303 = vector.shape_cast %302 : vector<1x1x64x160xbf16> to vector<64x160xbf16>
    %cst_265 = arith.constant dense<0.000000e+00> : vector<64x128xf32>
    %304 = tpu.matmul %303, %301, %cst_265 {dimension_numbers = #tpu.dot_dimension_numbers<[1], [0], [0], [1], [0, 0, 1, 1], [], []>} : vector<64x160xbf16>, vector<160x128xbf16>, vector<64x128xf32> -> vector<64x128xf32>
    %c0_266 = arith.constant 0 : index
    %c7 = arith.constant 7 : index
    %c0_267 = arith.constant 0 : index
    %c0_268 = arith.constant 0 : index
    %305 = vector.load %arg3[%c0_266, %c7, %c0_267, %c0_268] : memref<1x16x64x1xf32, #tpu.memory_space<vmem>>, vector<1x1x64x1xf32>
    %306 = vector.shape_cast %305 : vector<1x1x64x1xf32> to vector<64x1xf32>
    %307 = vector.broadcast %306 : vector<64x1xf32> to vector<64x128xf32>
    %308 = arith.addf %304, %307 : vector<64x128xf32>
    %309 = math.tanh %308 : vector<64x128xf32>
    %310 = vector.extract_strided_slice %309 {offsets = [0, 0], sizes = [32, 128], strides = [1, 1]} : vector<64x128xf32> to vector<32x128xf32>
    %311 = vector.extract_strided_slice %309 {offsets = [32, 0], sizes = [32, 128], strides = [1, 1]} : vector<64x128xf32> to vector<32x128xf32>
    %cst_269 = arith.constant 5.000000e-01 : f32
    %312 = vector.broadcast %cst_269 : f32 to vector<32x128xf32>
    %313 = arith.mulf %311, %312 : vector<32x128xf32>
    %cst_270 = arith.constant 5.000000e-01 : f32
    %314 = vector.broadcast %cst_270 : f32 to vector<32x128xf32>
    %315 = arith.addf %313, %314 : vector<32x128xf32>
    %316 = arith.mulf %310, %315 : vector<32x128xf32>
    %317 = arith.truncf %316 : vector<32x128xf32> to vector<32x128xbf16>
    %c1_271 = arith.constant 1 : index
    %c0_272 = arith.constant 0 : index
    %c0_273 = arith.constant 0 : index
    %318 = vector.load %arg9[%c1_271, %c0_272, %c0_273] : memref<4x32x32xbf16, #tpu.memory_space<vmem>>, vector<1x32x32xbf16>
    %319 = vector.shape_cast %318 : vector<1x32x32xbf16> to vector<32x32xbf16>
    %cst_274 = arith.constant dense<0.000000e+00> : vector<32x128xf32>
    %320 = tpu.matmul %319, %317, %cst_274 {dimension_numbers = #tpu.dot_dimension_numbers<[1], [0], [0], [1], [0, 0, 1, 1], [], []>} : vector<32x32xbf16>, vector<32x128xbf16>, vector<32x128xf32> -> vector<32x128xf32>
    %c1_275 = arith.constant 1 : index
    %c0_276 = arith.constant 0 : index
    %c0_277 = arith.constant 0 : index
    %321 = vector.load %arg10[%c1_275, %c0_276, %c0_277] : memref<4x32x1xf32, #tpu.memory_space<vmem>>, vector<1x32x1xf32>
    %322 = vector.shape_cast %321 : vector<1x32x1xf32> to vector<32x1xf32>
    %323 = vector.broadcast %322 : vector<32x1xf32> to vector<32x128xf32>
    %324 = arith.addf %320, %323 : vector<32x128xf32>
    %325 = arith.addf %293, %324 : vector<32x128xf32>
    %326 = arith.mulf %325, %5 : vector<32x128xf32>
    %c1_278 = arith.constant 1 : index
    %c0_279 = arith.constant 0 : index
    %c0_280 = arith.constant 0 : index
    %327 = vector.load %arg11[%c1_278, %c0_279, %c0_280] : memref<4x8x32xbf16, #tpu.memory_space<vmem>>, vector<1x8x32xbf16>
    %328 = vector.shape_cast %327 : vector<1x8x32xbf16> to vector<8x32xbf16>
    %329 = arith.truncf %326 : vector<32x128xf32> to vector<32x128xbf16>
    %cst_281 = arith.constant dense<0.000000e+00> : vector<8x128xf32>
    %330 = tpu.matmul %328, %329, %cst_281 {dimension_numbers = #tpu.dot_dimension_numbers<[1], [0], [0], [1], [0, 0, 1, 1], [], []>} : vector<8x32xbf16>, vector<32x128xbf16>, vector<8x128xf32> -> vector<8x128xf32>
    %c1_282 = arith.constant 1 : index
    %c0_283 = arith.constant 0 : index
    %c0_284 = arith.constant 0 : index
    %331 = vector.load %arg12[%c1_282, %c0_283, %c0_284] : memref<4x8x1xf32, #tpu.memory_space<vmem>>, vector<1x8x1xf32>
    %332 = vector.shape_cast %331 : vector<1x8x1xf32> to vector<8x1xf32>
    %333 = vector.broadcast %332 : vector<8x1xf32> to vector<8x128xf32>
    %334 = arith.addf %330, %333 : vector<8x128xf32>
    %335 = arith.mulf %334, %7 : vector<8x128xf32>
    %c1_285 = arith.constant 1 : index
    %c0_286 = arith.constant 0 : index
    %c0_287 = arith.constant 0 : index
    %336 = vector.load %arg13[%c1_285, %c0_286, %c0_287] : memref<4x8x1xf32, #tpu.memory_space<vmem>>, vector<1x8x1xf32>
    %337 = vector.shape_cast %336 : vector<1x8x1xf32> to vector<8x1xf32>
    %cst_288 = arith.constant 1.000000e+00 : f32
    %338 = vector.broadcast %cst_288 : f32 to vector<8x128xf32>
    %339 = arith.subf %7, %338 : vector<8x128xf32>
    %340 = vector.broadcast %337 : vector<8x1xf32> to vector<8x128xf32>
    %341 = arith.mulf %340, %339 : vector<8x128xf32>
    %cst_289 = arith.constant 1.000000e+00 : f32
    %342 = vector.broadcast %cst_289 : f32 to vector<8x128xf32>
    %343 = arith.addf %342, %341 : vector<8x128xf32>
    %344 = arith.mulf %177, %343 : vector<8x128xf32>
    %345 = arith.addf %344, %335 : vector<8x128xf32>
    %c2_290 = arith.constant 2 : index
    %c0_291 = arith.constant 0 : index
    %c0_292 = arith.constant 0 : index
    %346 = vector.load %arg4[%c2_290, %c0_291, %c0_292] : memref<4x32x8xbf16, #tpu.memory_space<vmem>>, vector<1x32x8xbf16>
    %347 = vector.shape_cast %346 : vector<1x32x8xbf16> to vector<32x8xbf16>
    %348 = arith.truncf %345 : vector<8x128xf32> to vector<8x128xbf16>
    %cst_293 = arith.constant dense<0.000000e+00> : vector<32x128xf32>
    %349 = tpu.matmul %347, %348, %cst_293 {dimension_numbers = #tpu.dot_dimension_numbers<[1], [0], [0], [1], [0, 0, 1, 1], [], []>} : vector<32x8xbf16>, vector<8x128xbf16>, vector<32x128xf32> -> vector<32x128xf32>
    %c2_294 = arith.constant 2 : index
    %c0_295 = arith.constant 0 : index
    %c0_296 = arith.constant 0 : index
    %350 = vector.load %arg5[%c2_294, %c0_295, %c0_296] : memref<4x32x1xf32, #tpu.memory_space<vmem>>, vector<1x32x1xf32>
    %351 = vector.shape_cast %350 : vector<1x32x1xf32> to vector<32x1xf32>
    %352 = vector.broadcast %351 : vector<32x1xf32> to vector<32x128xf32>
    %353 = arith.addf %349, %352 : vector<32x128xf32>
    %354 = arith.mulf %353, %5 : vector<32x128xf32>
    %355 = arith.truncf %354 : vector<32x128xf32> to vector<32x128xbf16>
    %c0_297 = arith.constant 0 : index
    %c2_298 = arith.constant 2 : index
    %356 = vector.load %arg15[%c0_297, %c2_298] : memref<32x132xbf16, #tpu.memory_space<vmem>>, vector<32x128xbf16>
    tpu.vector_store %arg15[%c0_297, %c2_298], %355 {strides = array<i32>} : memref<32x132xbf16, #tpu.memory_space<vmem>>, vector<32x128xbf16>,
    %c0_299 = arith.constant 0 : index
    %c0_300 = arith.constant 0 : index
    %357 = vector.load %arg15[%c0_299, %c0_300] : memref<32x132xbf16, #tpu.memory_space<vmem>>, vector<32x128xbf16>
    %c0_301 = arith.constant 0 : index
    %c1_302 = arith.constant 1 : index
    %358 = vector.load %arg15[%c0_301, %c1_302] : memref<32x132xbf16, #tpu.memory_space<vmem>>, vector<32x128xbf16>
    %c0_303 = arith.constant 0 : index
    %c2_304 = arith.constant 2 : index
    %359 = vector.load %arg15[%c0_303, %c2_304] : memref<32x132xbf16, #tpu.memory_space<vmem>>, vector<32x128xbf16>
    %c0_305 = arith.constant 0 : index
    %c3_306 = arith.constant 3 : index
    %360 = vector.load %arg15[%c0_305, %c3_306] : memref<32x132xbf16, #tpu.memory_space<vmem>>, vector<32x128xbf16>
    %c0_307 = arith.constant 0 : index
    %c4_308 = arith.constant 4 : index
    %361 = vector.load %arg15[%c0_307, %c4_308] : memref<32x132xbf16, #tpu.memory_space<vmem>>, vector<32x128xbf16>
    %362 = tpu.concatenate %357, %358, %359, %360, %361 in 0 : vector<32x128xbf16>, vector<32x128xbf16>, vector<32x128xbf16>, vector<32x128xbf16>, vector<32x128xbf16> -> vector<160x128xbf16>
    %c2_309 = arith.constant 2 : index
    %c0_310 = arith.constant 0 : index
    %c0_311 = arith.constant 0 : index
    %c0_312 = arith.constant 0 : index
    %363 = vector.load %arg6[%c2_309, %c0_310, %c0_311, %c0_312] : memref<4x4x64x160xbf16, #tpu.memory_space<vmem>>, vector<1x1x64x160xbf16>
    %364 = vector.shape_cast %363 : vector<1x1x64x160xbf16> to vector<64x160xbf16>
    %cst_313 = arith.constant dense<0.000000e+00> : vector<64x128xf32>
    %365 = tpu.matmul %364, %362, %cst_313 {dimension_numbers = #tpu.dot_dimension_numbers<[1], [0], [0], [1], [0, 0, 1, 1], [], []>} : vector<64x160xbf16>, vector<160x128xbf16>, vector<64x128xf32> -> vector<64x128xf32>
    %c0_314 = arith.constant 0 : index
    %c8 = arith.constant 8 : index
    %c0_315 = arith.constant 0 : index
    %c0_316 = arith.constant 0 : index
    %366 = vector.load %arg3[%c0_314, %c8, %c0_315, %c0_316] : memref<1x16x64x1xf32, #tpu.memory_space<vmem>>, vector<1x1x64x1xf32>
    %367 = vector.shape_cast %366 : vector<1x1x64x1xf32> to vector<64x1xf32>
    %368 = vector.broadcast %367 : vector<64x1xf32> to vector<64x128xf32>
    %369 = arith.addf %365, %368 : vector<64x128xf32>
    %370 = math.tanh %369 : vector<64x128xf32>
    %371 = vector.extract_strided_slice %370 {offsets = [0, 0], sizes = [32, 128], strides = [1, 1]} : vector<64x128xf32> to vector<32x128xf32>
    %372 = vector.extract_strided_slice %370 {offsets = [32, 0], sizes = [32, 128], strides = [1, 1]} : vector<64x128xf32> to vector<32x128xf32>
    %cst_317 = arith.constant 5.000000e-01 : f32
    %373 = vector.broadcast %cst_317 : f32 to vector<32x128xf32>
    %374 = arith.mulf %372, %373 : vector<32x128xf32>
    %cst_318 = arith.constant 5.000000e-01 : f32
    %375 = vector.broadcast %cst_318 : f32 to vector<32x128xf32>
    %376 = arith.addf %374, %375 : vector<32x128xf32>
    %377 = arith.mulf %371, %376 : vector<32x128xf32>
    %378 = arith.truncf %377 : vector<32x128xf32> to vector<32x128xbf16>
    %c2_319 = arith.constant 2 : index
    %c0_320 = arith.constant 0 : index
    %c0_321 = arith.constant 0 : index
    %c0_322 = arith.constant 0 : index
    %379 = vector.load %arg7[%c2_319, %c0_320, %c0_321, %c0_322] : memref<4x3x64x32xbf16, #tpu.memory_space<vmem>>, vector<1x1x64x32xbf16>
    %380 = vector.shape_cast %379 : vector<1x1x64x32xbf16> to vector<64x32xbf16>
    %cst_323 = arith.constant dense<0.000000e+00> : vector<64x128xf32>
    %381 = tpu.matmul %380, %378, %cst_323 {dimension_numbers = #tpu.dot_dimension_numbers<[1], [0], [0], [1], [0, 0, 1, 1], [], []>} : vector<64x32xbf16>, vector<32x128xbf16>, vector<64x128xf32> -> vector<64x128xf32>
    %c2_324 = arith.constant 2 : index
    %c0_325 = arith.constant 0 : index
    %c0_326 = arith.constant 0 : index
    %c0_327 = arith.constant 0 : index
    %382 = vector.load %arg8[%c2_324, %c0_325, %c0_326, %c0_327] : memref<4x3x64x1xf32, #tpu.memory_space<vmem>>, vector<1x1x64x1xf32>
    %383 = vector.shape_cast %382 : vector<1x1x64x1xf32> to vector<64x1xf32>
    %384 = vector.broadcast %383 : vector<64x1xf32> to vector<64x128xf32>
    %385 = arith.addf %381, %384 : vector<64x128xf32>
    %386 = vector.extract_strided_slice %385 {offsets = [0, 0], sizes = [32, 128], strides = [1, 1]} : vector<64x128xf32> to vector<32x128xf32>
    %387 = arith.addf %354, %386 : vector<32x128xf32>
    %388 = arith.mulf %387, %5 : vector<32x128xf32>
    %389 = vector.extract_strided_slice %385 {offsets = [32, 0], sizes = [32, 128], strides = [1, 1]} : vector<64x128xf32> to vector<32x128xf32>
    %390 = arith.truncf %388 : vector<32x128xf32> to vector<32x128xbf16>
    %c0_328 = arith.constant 0 : index
    %c2_329 = arith.constant 2 : index
    %391 = vector.load %arg15[%c0_328, %c2_329] : memref<32x132xbf16, #tpu.memory_space<vmem>>, vector<32x128xbf16>
    tpu.vector_store %arg15[%c0_328, %c2_329], %390 {strides = array<i32>} : memref<32x132xbf16, #tpu.memory_space<vmem>>, vector<32x128xbf16>,
    %c0_330 = arith.constant 0 : index
    %c0_331 = arith.constant 0 : index
    %392 = vector.load %arg15[%c0_330, %c0_331] : memref<32x132xbf16, #tpu.memory_space<vmem>>, vector<32x128xbf16>
    %c0_332 = arith.constant 0 : index
    %c1_333 = arith.constant 1 : index
    %393 = vector.load %arg15[%c0_332, %c1_333] : memref<32x132xbf16, #tpu.memory_space<vmem>>, vector<32x128xbf16>
    %c0_334 = arith.constant 0 : index
    %c2_335 = arith.constant 2 : index
    %394 = vector.load %arg15[%c0_334, %c2_335] : memref<32x132xbf16, #tpu.memory_space<vmem>>, vector<32x128xbf16>
    %c0_336 = arith.constant 0 : index
    %c3_337 = arith.constant 3 : index
    %395 = vector.load %arg15[%c0_336, %c3_337] : memref<32x132xbf16, #tpu.memory_space<vmem>>, vector<32x128xbf16>
    %c0_338 = arith.constant 0 : index
    %c4_339 = arith.constant 4 : index
    %396 = vector.load %arg15[%c0_338, %c4_339] : memref<32x132xbf16, #tpu.memory_space<vmem>>, vector<32x128xbf16>
    %397 = tpu.concatenate %392, %393, %394, %395, %396 in 0 : vector<32x128xbf16>, vector<32x128xbf16>, vector<32x128xbf16>, vector<32x128xbf16>, vector<32x128xbf16> -> vector<160x128xbf16>
    %c2_340 = arith.constant 2 : index
    %c1_341 = arith.constant 1 : index
    %c0_342 = arith.constant 0 : index
    %c0_343 = arith.constant 0 : index
    %398 = vector.load %arg6[%c2_340, %c1_341, %c0_342, %c0_343] : memref<4x4x64x160xbf16, #tpu.memory_space<vmem>>, vector<1x1x64x160xbf16>
    %399 = vector.shape_cast %398 : vector<1x1x64x160xbf16> to vector<64x160xbf16>
    %cst_344 = arith.constant dense<0.000000e+00> : vector<64x128xf32>
    %400 = tpu.matmul %399, %397, %cst_344 {dimension_numbers = #tpu.dot_dimension_numbers<[1], [0], [0], [1], [0, 0, 1, 1], [], []>} : vector<64x160xbf16>, vector<160x128xbf16>, vector<64x128xf32> -> vector<64x128xf32>
    %c0_345 = arith.constant 0 : index
    %c9 = arith.constant 9 : index
    %c0_346 = arith.constant 0 : index
    %c0_347 = arith.constant 0 : index
    %401 = vector.load %arg3[%c0_345, %c9, %c0_346, %c0_347] : memref<1x16x64x1xf32, #tpu.memory_space<vmem>>, vector<1x1x64x1xf32>
    %402 = vector.shape_cast %401 : vector<1x1x64x1xf32> to vector<64x1xf32>
    %403 = vector.broadcast %402 : vector<64x1xf32> to vector<64x128xf32>
    %404 = arith.addf %400, %403 : vector<64x128xf32>
    %405 = math.tanh %404 : vector<64x128xf32>
    %406 = vector.extract_strided_slice %405 {offsets = [0, 0], sizes = [32, 128], strides = [1, 1]} : vector<64x128xf32> to vector<32x128xf32>
    %407 = vector.extract_strided_slice %405 {offsets = [32, 0], sizes = [32, 128], strides = [1, 1]} : vector<64x128xf32> to vector<32x128xf32>
    %cst_348 = arith.constant 5.000000e-01 : f32
    %408 = vector.broadcast %cst_348 : f32 to vector<32x128xf32>
    %409 = arith.mulf %407, %408 : vector<32x128xf32>
    %cst_349 = arith.constant 5.000000e-01 : f32
    %410 = vector.broadcast %cst_349 : f32 to vector<32x128xf32>
    %411 = arith.addf %409, %410 : vector<32x128xf32>
    %412 = arith.mulf %406, %411 : vector<32x128xf32>
    %413 = arith.truncf %412 : vector<32x128xf32> to vector<32x128xbf16>
    %c2_350 = arith.constant 2 : index
    %c1_351 = arith.constant 1 : index
    %c0_352 = arith.constant 0 : index
    %c0_353 = arith.constant 0 : index
    %414 = vector.load %arg7[%c2_350, %c1_351, %c0_352, %c0_353] : memref<4x3x64x32xbf16, #tpu.memory_space<vmem>>, vector<1x1x64x32xbf16>
    %415 = vector.shape_cast %414 : vector<1x1x64x32xbf16> to vector<64x32xbf16>
    %cst_354 = arith.constant dense<0.000000e+00> : vector<64x128xf32>
    %416 = tpu.matmul %415, %413, %cst_354 {dimension_numbers = #tpu.dot_dimension_numbers<[1], [0], [0], [1], [0, 0, 1, 1], [], []>} : vector<64x32xbf16>, vector<32x128xbf16>, vector<64x128xf32> -> vector<64x128xf32>
    %c2_355 = arith.constant 2 : index
    %c1_356 = arith.constant 1 : index
    %c0_357 = arith.constant 0 : index
    %c0_358 = arith.constant 0 : index
    %417 = vector.load %arg8[%c2_355, %c1_356, %c0_357, %c0_358] : memref<4x3x64x1xf32, #tpu.memory_space<vmem>>, vector<1x1x64x1xf32>
    %418 = vector.shape_cast %417 : vector<1x1x64x1xf32> to vector<64x1xf32>
    %419 = vector.broadcast %418 : vector<64x1xf32> to vector<64x128xf32>
    %420 = arith.addf %416, %419 : vector<64x128xf32>
    %421 = vector.extract_strided_slice %420 {offsets = [0, 0], sizes = [32, 128], strides = [1, 1]} : vector<64x128xf32> to vector<32x128xf32>
    %422 = arith.addf %388, %421 : vector<32x128xf32>
    %423 = arith.mulf %422, %5 : vector<32x128xf32>
    %424 = vector.extract_strided_slice %420 {offsets = [32, 0], sizes = [32, 128], strides = [1, 1]} : vector<64x128xf32> to vector<32x128xf32>
    %425 = arith.addf %389, %424 : vector<32x128xf32>
    %426 = arith.truncf %423 : vector<32x128xf32> to vector<32x128xbf16>
    %c0_359 = arith.constant 0 : index
    %c2_360 = arith.constant 2 : index
    %427 = vector.load %arg15[%c0_359, %c2_360] : memref<32x132xbf16, #tpu.memory_space<vmem>>, vector<32x128xbf16>
    tpu.vector_store %arg15[%c0_359, %c2_360], %426 {strides = array<i32>} : memref<32x132xbf16, #tpu.memory_space<vmem>>, vector<32x128xbf16>,
    %c0_361 = arith.constant 0 : index
    %c0_362 = arith.constant 0 : index
    %428 = vector.load %arg15[%c0_361, %c0_362] : memref<32x132xbf16, #tpu.memory_space<vmem>>, vector<32x128xbf16>
    %c0_363 = arith.constant 0 : index
    %c1_364 = arith.constant 1 : index
    %429 = vector.load %arg15[%c0_363, %c1_364] : memref<32x132xbf16, #tpu.memory_space<vmem>>, vector<32x128xbf16>
    %c0_365 = arith.constant 0 : index
    %c2_366 = arith.constant 2 : index
    %430 = vector.load %arg15[%c0_365, %c2_366] : memref<32x132xbf16, #tpu.memory_space<vmem>>, vector<32x128xbf16>
    %c0_367 = arith.constant 0 : index
    %c3_368 = arith.constant 3 : index
    %431 = vector.load %arg15[%c0_367, %c3_368] : memref<32x132xbf16, #tpu.memory_space<vmem>>, vector<32x128xbf16>
    %c0_369 = arith.constant 0 : index
    %c4_370 = arith.constant 4 : index
    %432 = vector.load %arg15[%c0_369, %c4_370] : memref<32x132xbf16, #tpu.memory_space<vmem>>, vector<32x128xbf16>
    %433 = tpu.concatenate %428, %429, %430, %431, %432 in 0 : vector<32x128xbf16>, vector<32x128xbf16>, vector<32x128xbf16>, vector<32x128xbf16>, vector<32x128xbf16> -> vector<160x128xbf16>
    %c2_371 = arith.constant 2 : index
    %c2_372 = arith.constant 2 : index
    %c0_373 = arith.constant 0 : index
    %c0_374 = arith.constant 0 : index
    %434 = vector.load %arg6[%c2_371, %c2_372, %c0_373, %c0_374] : memref<4x4x64x160xbf16, #tpu.memory_space<vmem>>, vector<1x1x64x160xbf16>
    %435 = vector.shape_cast %434 : vector<1x1x64x160xbf16> to vector<64x160xbf16>
    %cst_375 = arith.constant dense<0.000000e+00> : vector<64x128xf32>
    %436 = tpu.matmul %435, %433, %cst_375 {dimension_numbers = #tpu.dot_dimension_numbers<[1], [0], [0], [1], [0, 0, 1, 1], [], []>} : vector<64x160xbf16>, vector<160x128xbf16>, vector<64x128xf32> -> vector<64x128xf32>
    %c0_376 = arith.constant 0 : index
    %c10 = arith.constant 10 : index
    %c0_377 = arith.constant 0 : index
    %c0_378 = arith.constant 0 : index
    %437 = vector.load %arg3[%c0_376, %c10, %c0_377, %c0_378] : memref<1x16x64x1xf32, #tpu.memory_space<vmem>>, vector<1x1x64x1xf32>
    %438 = vector.shape_cast %437 : vector<1x1x64x1xf32> to vector<64x1xf32>
    %439 = vector.broadcast %438 : vector<64x1xf32> to vector<64x128xf32>
    %440 = arith.addf %436, %439 : vector<64x128xf32>
    %441 = math.tanh %440 : vector<64x128xf32>
    %442 = vector.extract_strided_slice %441 {offsets = [0, 0], sizes = [32, 128], strides = [1, 1]} : vector<64x128xf32> to vector<32x128xf32>
    %443 = vector.extract_strided_slice %441 {offsets = [32, 0], sizes = [32, 128], strides = [1, 1]} : vector<64x128xf32> to vector<32x128xf32>
    %cst_379 = arith.constant 5.000000e-01 : f32
    %444 = vector.broadcast %cst_379 : f32 to vector<32x128xf32>
    %445 = arith.mulf %443, %444 : vector<32x128xf32>
    %cst_380 = arith.constant 5.000000e-01 : f32
    %446 = vector.broadcast %cst_380 : f32 to vector<32x128xf32>
    %447 = arith.addf %445, %446 : vector<32x128xf32>
    %448 = arith.mulf %442, %447 : vector<32x128xf32>
    %449 = arith.truncf %448 : vector<32x128xf32> to vector<32x128xbf16>
    %c2_381 = arith.constant 2 : index
    %c2_382 = arith.constant 2 : index
    %c0_383 = arith.constant 0 : index
    %c0_384 = arith.constant 0 : index
    %450 = vector.load %arg7[%c2_381, %c2_382, %c0_383, %c0_384] : memref<4x3x64x32xbf16, #tpu.memory_space<vmem>>, vector<1x1x64x32xbf16>
    %451 = vector.shape_cast %450 : vector<1x1x64x32xbf16> to vector<64x32xbf16>
    %cst_385 = arith.constant dense<0.000000e+00> : vector<64x128xf32>
    %452 = tpu.matmul %451, %449, %cst_385 {dimension_numbers = #tpu.dot_dimension_numbers<[1], [0], [0], [1], [0, 0, 1, 1], [], []>} : vector<64x32xbf16>, vector<32x128xbf16>, vector<64x128xf32> -> vector<64x128xf32>
    %c2_386 = arith.constant 2 : index
    %c2_387 = arith.constant 2 : index
    %c0_388 = arith.constant 0 : index
    %c0_389 = arith.constant 0 : index
    %453 = vector.load %arg8[%c2_386, %c2_387, %c0_388, %c0_389] : memref<4x3x64x1xf32, #tpu.memory_space<vmem>>, vector<1x1x64x1xf32>
    %454 = vector.shape_cast %453 : vector<1x1x64x1xf32> to vector<64x1xf32>
    %455 = vector.broadcast %454 : vector<64x1xf32> to vector<64x128xf32>
    %456 = arith.addf %452, %455 : vector<64x128xf32>
    %457 = vector.extract_strided_slice %456 {offsets = [0, 0], sizes = [32, 128], strides = [1, 1]} : vector<64x128xf32> to vector<32x128xf32>
    %458 = arith.addf %423, %457 : vector<32x128xf32>
    %459 = arith.mulf %458, %5 : vector<32x128xf32>
    %460 = vector.extract_strided_slice %456 {offsets = [32, 0], sizes = [32, 128], strides = [1, 1]} : vector<64x128xf32> to vector<32x128xf32>
    %461 = arith.addf %425, %460 : vector<32x128xf32>
    %462 = arith.truncf %459 : vector<32x128xf32> to vector<32x128xbf16>
    %c0_390 = arith.constant 0 : index
    %c2_391 = arith.constant 2 : index
    %463 = vector.load %arg15[%c0_390, %c2_391] : memref<32x132xbf16, #tpu.memory_space<vmem>>, vector<32x128xbf16>
    tpu.vector_store %arg15[%c0_390, %c2_391], %462 {strides = array<i32>} : memref<32x132xbf16, #tpu.memory_space<vmem>>, vector<32x128xbf16>,
    %c0_392 = arith.constant 0 : index
    %c0_393 = arith.constant 0 : index
    %464 = vector.load %arg15[%c0_392, %c0_393] : memref<32x132xbf16, #tpu.memory_space<vmem>>, vector<32x128xbf16>
    %c0_394 = arith.constant 0 : index
    %c1_395 = arith.constant 1 : index
    %465 = vector.load %arg15[%c0_394, %c1_395] : memref<32x132xbf16, #tpu.memory_space<vmem>>, vector<32x128xbf16>
    %c0_396 = arith.constant 0 : index
    %c2_397 = arith.constant 2 : index
    %466 = vector.load %arg15[%c0_396, %c2_397] : memref<32x132xbf16, #tpu.memory_space<vmem>>, vector<32x128xbf16>
    %c0_398 = arith.constant 0 : index
    %c3_399 = arith.constant 3 : index
    %467 = vector.load %arg15[%c0_398, %c3_399] : memref<32x132xbf16, #tpu.memory_space<vmem>>, vector<32x128xbf16>
    %c0_400 = arith.constant 0 : index
    %c4_401 = arith.constant 4 : index
    %468 = vector.load %arg15[%c0_400, %c4_401] : memref<32x132xbf16, #tpu.memory_space<vmem>>, vector<32x128xbf16>
    %469 = tpu.concatenate %464, %465, %466, %467, %468 in 0 : vector<32x128xbf16>, vector<32x128xbf16>, vector<32x128xbf16>, vector<32x128xbf16>, vector<32x128xbf16> -> vector<160x128xbf16>
    %c2_402 = arith.constant 2 : index
    %c3_403 = arith.constant 3 : index
    %c0_404 = arith.constant 0 : index
    %c0_405 = arith.constant 0 : index
    %470 = vector.load %arg6[%c2_402, %c3_403, %c0_404, %c0_405] : memref<4x4x64x160xbf16, #tpu.memory_space<vmem>>, vector<1x1x64x160xbf16>
    %471 = vector.shape_cast %470 : vector<1x1x64x160xbf16> to vector<64x160xbf16>
    %cst_406 = arith.constant dense<0.000000e+00> : vector<64x128xf32>
    %472 = tpu.matmul %471, %469, %cst_406 {dimension_numbers = #tpu.dot_dimension_numbers<[1], [0], [0], [1], [0, 0, 1, 1], [], []>} : vector<64x160xbf16>, vector<160x128xbf16>, vector<64x128xf32> -> vector<64x128xf32>
    %c0_407 = arith.constant 0 : index
    %c11 = arith.constant 11 : index
    %c0_408 = arith.constant 0 : index
    %c0_409 = arith.constant 0 : index
    %473 = vector.load %arg3[%c0_407, %c11, %c0_408, %c0_409] : memref<1x16x64x1xf32, #tpu.memory_space<vmem>>, vector<1x1x64x1xf32>
    %474 = vector.shape_cast %473 : vector<1x1x64x1xf32> to vector<64x1xf32>
    %475 = vector.broadcast %474 : vector<64x1xf32> to vector<64x128xf32>
    %476 = arith.addf %472, %475 : vector<64x128xf32>
    %477 = math.tanh %476 : vector<64x128xf32>
    %478 = vector.extract_strided_slice %477 {offsets = [0, 0], sizes = [32, 128], strides = [1, 1]} : vector<64x128xf32> to vector<32x128xf32>
    %479 = vector.extract_strided_slice %477 {offsets = [32, 0], sizes = [32, 128], strides = [1, 1]} : vector<64x128xf32> to vector<32x128xf32>
    %cst_410 = arith.constant 5.000000e-01 : f32
    %480 = vector.broadcast %cst_410 : f32 to vector<32x128xf32>
    %481 = arith.mulf %479, %480 : vector<32x128xf32>
    %cst_411 = arith.constant 5.000000e-01 : f32
    %482 = vector.broadcast %cst_411 : f32 to vector<32x128xf32>
    %483 = arith.addf %481, %482 : vector<32x128xf32>
    %484 = arith.mulf %478, %483 : vector<32x128xf32>
    %485 = arith.truncf %484 : vector<32x128xf32> to vector<32x128xbf16>
    %c2_412 = arith.constant 2 : index
    %c0_413 = arith.constant 0 : index
    %c0_414 = arith.constant 0 : index
    %486 = vector.load %arg9[%c2_412, %c0_413, %c0_414] : memref<4x32x32xbf16, #tpu.memory_space<vmem>>, vector<1x32x32xbf16>
    %487 = vector.shape_cast %486 : vector<1x32x32xbf16> to vector<32x32xbf16>
    %cst_415 = arith.constant dense<0.000000e+00> : vector<32x128xf32>
    %488 = tpu.matmul %487, %485, %cst_415 {dimension_numbers = #tpu.dot_dimension_numbers<[1], [0], [0], [1], [0, 0, 1, 1], [], []>} : vector<32x32xbf16>, vector<32x128xbf16>, vector<32x128xf32> -> vector<32x128xf32>
    %c2_416 = arith.constant 2 : index
    %c0_417 = arith.constant 0 : index
    %c0_418 = arith.constant 0 : index
    %489 = vector.load %arg10[%c2_416, %c0_417, %c0_418] : memref<4x32x1xf32, #tpu.memory_space<vmem>>, vector<1x32x1xf32>
    %490 = vector.shape_cast %489 : vector<1x32x1xf32> to vector<32x1xf32>
    %491 = vector.broadcast %490 : vector<32x1xf32> to vector<32x128xf32>
    %492 = arith.addf %488, %491 : vector<32x128xf32>
    %493 = arith.addf %461, %492 : vector<32x128xf32>
    %494 = arith.mulf %493, %5 : vector<32x128xf32>
    %c2_419 = arith.constant 2 : index
    %c0_420 = arith.constant 0 : index
    %c0_421 = arith.constant 0 : index
    %495 = vector.load %arg11[%c2_419, %c0_420, %c0_421] : memref<4x8x32xbf16, #tpu.memory_space<vmem>>, vector<1x8x32xbf16>
    %496 = vector.shape_cast %495 : vector<1x8x32xbf16> to vector<8x32xbf16>
    %497 = arith.truncf %494 : vector<32x128xf32> to vector<32x128xbf16>
    %cst_422 = arith.constant dense<0.000000e+00> : vector<8x128xf32>
    %498 = tpu.matmul %496, %497, %cst_422 {dimension_numbers = #tpu.dot_dimension_numbers<[1], [0], [0], [1], [0, 0, 1, 1], [], []>} : vector<8x32xbf16>, vector<32x128xbf16>, vector<8x128xf32> -> vector<8x128xf32>
    %c2_423 = arith.constant 2 : index
    %c0_424 = arith.constant 0 : index
    %c0_425 = arith.constant 0 : index
    %499 = vector.load %arg12[%c2_423, %c0_424, %c0_425] : memref<4x8x1xf32, #tpu.memory_space<vmem>>, vector<1x8x1xf32>
    %500 = vector.shape_cast %499 : vector<1x8x1xf32> to vector<8x1xf32>
    %501 = vector.broadcast %500 : vector<8x1xf32> to vector<8x128xf32>
    %502 = arith.addf %498, %501 : vector<8x128xf32>
    %503 = arith.mulf %502, %7 : vector<8x128xf32>
    %c2_426 = arith.constant 2 : index
    %c0_427 = arith.constant 0 : index
    %c0_428 = arith.constant 0 : index
    %504 = vector.load %arg13[%c2_426, %c0_427, %c0_428] : memref<4x8x1xf32, #tpu.memory_space<vmem>>, vector<1x8x1xf32>
    %505 = vector.shape_cast %504 : vector<1x8x1xf32> to vector<8x1xf32>
    %cst_429 = arith.constant 1.000000e+00 : f32
    %506 = vector.broadcast %cst_429 : f32 to vector<8x128xf32>
    %507 = arith.subf %7, %506 : vector<8x128xf32>
    %508 = vector.broadcast %505 : vector<8x1xf32> to vector<8x128xf32>
    %509 = arith.mulf %508, %507 : vector<8x128xf32>
    %cst_430 = arith.constant 1.000000e+00 : f32
    %510 = vector.broadcast %cst_430 : f32 to vector<8x128xf32>
    %511 = arith.addf %510, %509 : vector<8x128xf32>
    %512 = arith.mulf %345, %511 : vector<8x128xf32>
    %513 = arith.addf %512, %503 : vector<8x128xf32>
    %c3_431 = arith.constant 3 : index
    %c0_432 = arith.constant 0 : index
    %c0_433 = arith.constant 0 : index
    %514 = vector.load %arg4[%c3_431, %c0_432, %c0_433] : memref<4x32x8xbf16, #tpu.memory_space<vmem>>, vector<1x32x8xbf16>
    %515 = vector.shape_cast %514 : vector<1x32x8xbf16> to vector<32x8xbf16>
    %516 = arith.truncf %513 : vector<8x128xf32> to vector<8x128xbf16>
    %cst_434 = arith.constant dense<0.000000e+00> : vector<32x128xf32>
    %517 = tpu.matmul %515, %516, %cst_434 {dimension_numbers = #tpu.dot_dimension_numbers<[1], [0], [0], [1], [0, 0, 1, 1], [], []>} : vector<32x8xbf16>, vector<8x128xbf16>, vector<32x128xf32> -> vector<32x128xf32>
    %c3_435 = arith.constant 3 : index
    %c0_436 = arith.constant 0 : index
    %c0_437 = arith.constant 0 : index
    %518 = vector.load %arg5[%c3_435, %c0_436, %c0_437] : memref<4x32x1xf32, #tpu.memory_space<vmem>>, vector<1x32x1xf32>
    %519 = vector.shape_cast %518 : vector<1x32x1xf32> to vector<32x1xf32>
    %520 = vector.broadcast %519 : vector<32x1xf32> to vector<32x128xf32>
    %521 = arith.addf %517, %520 : vector<32x128xf32>
    %522 = arith.mulf %521, %5 : vector<32x128xf32>
    %523 = arith.truncf %522 : vector<32x128xf32> to vector<32x128xbf16>
    %c0_438 = arith.constant 0 : index
    %c2_439 = arith.constant 2 : index
    %524 = vector.load %arg15[%c0_438, %c2_439] : memref<32x132xbf16, #tpu.memory_space<vmem>>, vector<32x128xbf16>
    tpu.vector_store %arg15[%c0_438, %c2_439], %523 {strides = array<i32>} : memref<32x132xbf16, #tpu.memory_space<vmem>>, vector<32x128xbf16>,
    %c0_440 = arith.constant 0 : index
    %c0_441 = arith.constant 0 : index
    %525 = vector.load %arg15[%c0_440, %c0_441] : memref<32x132xbf16, #tpu.memory_space<vmem>>, vector<32x128xbf16>
    %c0_442 = arith.constant 0 : index
    %c1_443 = arith.constant 1 : index
    %526 = vector.load %arg15[%c0_442, %c1_443] : memref<32x132xbf16, #tpu.memory_space<vmem>>, vector<32x128xbf16>
    %c0_444 = arith.constant 0 : index
    %c2_445 = arith.constant 2 : index
    %527 = vector.load %arg15[%c0_444, %c2_445] : memref<32x132xbf16, #tpu.memory_space<vmem>>, vector<32x128xbf16>
    %c0_446 = arith.constant 0 : index
    %c3_447 = arith.constant 3 : index
    %528 = vector.load %arg15[%c0_446, %c3_447] : memref<32x132xbf16, #tpu.memory_space<vmem>>, vector<32x128xbf16>
    %c0_448 = arith.constant 0 : index
    %c4_449 = arith.constant 4 : index
    %529 = vector.load %arg15[%c0_448, %c4_449] : memref<32x132xbf16, #tpu.memory_space<vmem>>, vector<32x128xbf16>
    %530 = tpu.concatenate %525, %526, %527, %528, %529 in 0 : vector<32x128xbf16>, vector<32x128xbf16>, vector<32x128xbf16>, vector<32x128xbf16>, vector<32x128xbf16> -> vector<160x128xbf16>
    %c3_450 = arith.constant 3 : index
    %c0_451 = arith.constant 0 : index
    %c0_452 = arith.constant 0 : index
    %c0_453 = arith.constant 0 : index
    %531 = vector.load %arg6[%c3_450, %c0_451, %c0_452, %c0_453] : memref<4x4x64x160xbf16, #tpu.memory_space<vmem>>, vector<1x1x64x160xbf16>
    %532 = vector.shape_cast %531 : vector<1x1x64x160xbf16> to vector<64x160xbf16>
    %cst_454 = arith.constant dense<0.000000e+00> : vector<64x128xf32>
    %533 = tpu.matmul %532, %530, %cst_454 {dimension_numbers = #tpu.dot_dimension_numbers<[1], [0], [0], [1], [0, 0, 1, 1], [], []>} : vector<64x160xbf16>, vector<160x128xbf16>, vector<64x128xf32> -> vector<64x128xf32>
    %c0_455 = arith.constant 0 : index
    %c12 = arith.constant 12 : index
    %c0_456 = arith.constant 0 : index
    %c0_457 = arith.constant 0 : index
    %534 = vector.load %arg3[%c0_455, %c12, %c0_456, %c0_457] : memref<1x16x64x1xf32, #tpu.memory_space<vmem>>, vector<1x1x64x1xf32>
    %535 = vector.shape_cast %534 : vector<1x1x64x1xf32> to vector<64x1xf32>
    %536 = vector.broadcast %535 : vector<64x1xf32> to vector<64x128xf32>
    %537 = arith.addf %533, %536 : vector<64x128xf32>
    %538 = math.tanh %537 : vector<64x128xf32>
    %539 = vector.extract_strided_slice %538 {offsets = [0, 0], sizes = [32, 128], strides = [1, 1]} : vector<64x128xf32> to vector<32x128xf32>
    %540 = vector.extract_strided_slice %538 {offsets = [32, 0], sizes = [32, 128], strides = [1, 1]} : vector<64x128xf32> to vector<32x128xf32>
    %cst_458 = arith.constant 5.000000e-01 : f32
    %541 = vector.broadcast %cst_458 : f32 to vector<32x128xf32>
    %542 = arith.mulf %540, %541 : vector<32x128xf32>
    %cst_459 = arith.constant 5.000000e-01 : f32
    %543 = vector.broadcast %cst_459 : f32 to vector<32x128xf32>
    %544 = arith.addf %542, %543 : vector<32x128xf32>
    %545 = arith.mulf %539, %544 : vector<32x128xf32>
    %546 = arith.truncf %545 : vector<32x128xf32> to vector<32x128xbf16>
    %c3_460 = arith.constant 3 : index
    %c0_461 = arith.constant 0 : index
    %c0_462 = arith.constant 0 : index
    %c0_463 = arith.constant 0 : index
    %547 = vector.load %arg7[%c3_460, %c0_461, %c0_462, %c0_463] : memref<4x3x64x32xbf16, #tpu.memory_space<vmem>>, vector<1x1x64x32xbf16>
    %548 = vector.shape_cast %547 : vector<1x1x64x32xbf16> to vector<64x32xbf16>
    %cst_464 = arith.constant dense<0.000000e+00> : vector<64x128xf32>
    %549 = tpu.matmul %548, %546, %cst_464 {dimension_numbers = #tpu.dot_dimension_numbers<[1], [0], [0], [1], [0, 0, 1, 1], [], []>} : vector<64x32xbf16>, vector<32x128xbf16>, vector<64x128xf32> -> vector<64x128xf32>
    %c3_465 = arith.constant 3 : index
    %c0_466 = arith.constant 0 : index
    %c0_467 = arith.constant 0 : index
    %c0_468 = arith.constant 0 : index
    %550 = vector.load %arg8[%c3_465, %c0_466, %c0_467, %c0_468] : memref<4x3x64x1xf32, #tpu.memory_space<vmem>>, vector<1x1x64x1xf32>
    %551 = vector.shape_cast %550 : vector<1x1x64x1xf32> to vector<64x1xf32>
    %552 = vector.broadcast %551 : vector<64x1xf32> to vector<64x128xf32>
    %553 = arith.addf %549, %552 : vector<64x128xf32>
    %554 = vector.extract_strided_slice %553 {offsets = [0, 0], sizes = [32, 128], strides = [1, 1]} : vector<64x128xf32> to vector<32x128xf32>
    %555 = arith.addf %522, %554 : vector<32x128xf32>
    %556 = arith.mulf %555, %5 : vector<32x128xf32>
    %557 = vector.extract_strided_slice %553 {offsets = [32, 0], sizes = [32, 128], strides = [1, 1]} : vector<64x128xf32> to vector<32x128xf32>
    %558 = arith.truncf %556 : vector<32x128xf32> to vector<32x128xbf16>
    %c0_469 = arith.constant 0 : index
    %c2_470 = arith.constant 2 : index
    %559 = vector.load %arg15[%c0_469, %c2_470] : memref<32x132xbf16, #tpu.memory_space<vmem>>, vector<32x128xbf16>
    tpu.vector_store %arg15[%c0_469, %c2_470], %558 {strides = array<i32>} : memref<32x132xbf16, #tpu.memory_space<vmem>>, vector<32x128xbf16>,
    %c0_471 = arith.constant 0 : index
    %c0_472 = arith.constant 0 : index
    %560 = vector.load %arg15[%c0_471, %c0_472] : memref<32x132xbf16, #tpu.memory_space<vmem>>, vector<32x128xbf16>
    %c0_473 = arith.constant 0 : index
    %c1_474 = arith.constant 1 : index
    %561 = vector.load %arg15[%c0_473, %c1_474] : memref<32x132xbf16, #tpu.memory_space<vmem>>, vector<32x128xbf16>
    %c0_475 = arith.constant 0 : index
    %c2_476 = arith.constant 2 : index
    %562 = vector.load %arg15[%c0_475, %c2_476] : memref<32x132xbf16, #tpu.memory_space<vmem>>, vector<32x128xbf16>
    %c0_477 = arith.constant 0 : index
    %c3_478 = arith.constant 3 : index
    %563 = vector.load %arg15[%c0_477, %c3_478] : memref<32x132xbf16, #tpu.memory_space<vmem>>, vector<32x128xbf16>
    %c0_479 = arith.constant 0 : index
    %c4_480 = arith.constant 4 : index
    %564 = vector.load %arg15[%c0_479, %c4_480] : memref<32x132xbf16, #tpu.memory_space<vmem>>, vector<32x128xbf16>
    %565 = tpu.concatenate %560, %561, %562, %563, %564 in 0 : vector<32x128xbf16>, vector<32x128xbf16>, vector<32x128xbf16>, vector<32x128xbf16>, vector<32x128xbf16> -> vector<160x128xbf16>
    %c3_481 = arith.constant 3 : index
    %c1_482 = arith.constant 1 : index
    %c0_483 = arith.constant 0 : index
    %c0_484 = arith.constant 0 : index
    %566 = vector.load %arg6[%c3_481, %c1_482, %c0_483, %c0_484] : memref<4x4x64x160xbf16, #tpu.memory_space<vmem>>, vector<1x1x64x160xbf16>
    %567 = vector.shape_cast %566 : vector<1x1x64x160xbf16> to vector<64x160xbf16>
    %cst_485 = arith.constant dense<0.000000e+00> : vector<64x128xf32>
    %568 = tpu.matmul %567, %565, %cst_485 {dimension_numbers = #tpu.dot_dimension_numbers<[1], [0], [0], [1], [0, 0, 1, 1], [], []>} : vector<64x160xbf16>, vector<160x128xbf16>, vector<64x128xf32> -> vector<64x128xf32>
    %c0_486 = arith.constant 0 : index
    %c13 = arith.constant 13 : index
    %c0_487 = arith.constant 0 : index
    %c0_488 = arith.constant 0 : index
    %569 = vector.load %arg3[%c0_486, %c13, %c0_487, %c0_488] : memref<1x16x64x1xf32, #tpu.memory_space<vmem>>, vector<1x1x64x1xf32>
    %570 = vector.shape_cast %569 : vector<1x1x64x1xf32> to vector<64x1xf32>
    %571 = vector.broadcast %570 : vector<64x1xf32> to vector<64x128xf32>
    %572 = arith.addf %568, %571 : vector<64x128xf32>
    %573 = math.tanh %572 : vector<64x128xf32>
    %574 = vector.extract_strided_slice %573 {offsets = [0, 0], sizes = [32, 128], strides = [1, 1]} : vector<64x128xf32> to vector<32x128xf32>
    %575 = vector.extract_strided_slice %573 {offsets = [32, 0], sizes = [32, 128], strides = [1, 1]} : vector<64x128xf32> to vector<32x128xf32>
    %cst_489 = arith.constant 5.000000e-01 : f32
    %576 = vector.broadcast %cst_489 : f32 to vector<32x128xf32>
    %577 = arith.mulf %575, %576 : vector<32x128xf32>
    %cst_490 = arith.constant 5.000000e-01 : f32
    %578 = vector.broadcast %cst_490 : f32 to vector<32x128xf32>
    %579 = arith.addf %577, %578 : vector<32x128xf32>
    %580 = arith.mulf %574, %579 : vector<32x128xf32>
    %581 = arith.truncf %580 : vector<32x128xf32> to vector<32x128xbf16>
    %c3_491 = arith.constant 3 : index
    %c1_492 = arith.constant 1 : index
    %c0_493 = arith.constant 0 : index
    %c0_494 = arith.constant 0 : index
    %582 = vector.load %arg7[%c3_491, %c1_492, %c0_493, %c0_494] : memref<4x3x64x32xbf16, #tpu.memory_space<vmem>>, vector<1x1x64x32xbf16>
    %583 = vector.shape_cast %582 : vector<1x1x64x32xbf16> to vector<64x32xbf16>
    %cst_495 = arith.constant dense<0.000000e+00> : vector<64x128xf32>
    %584 = tpu.matmul %583, %581, %cst_495 {dimension_numbers = #tpu.dot_dimension_numbers<[1], [0], [0], [1], [0, 0, 1, 1], [], []>} : vector<64x32xbf16>, vector<32x128xbf16>, vector<64x128xf32> -> vector<64x128xf32>
    %c3_496 = arith.constant 3 : index
    %c1_497 = arith.constant 1 : index
    %c0_498 = arith.constant 0 : index
    %c0_499 = arith.constant 0 : index
    %585 = vector.load %arg8[%c3_496, %c1_497, %c0_498, %c0_499] : memref<4x3x64x1xf32, #tpu.memory_space<vmem>>, vector<1x1x64x1xf32>
    %586 = vector.shape_cast %585 : vector<1x1x64x1xf32> to vector<64x1xf32>
    %587 = vector.broadcast %586 : vector<64x1xf32> to vector<64x128xf32>
    %588 = arith.addf %584, %587 : vector<64x128xf32>
    %589 = vector.extract_strided_slice %588 {offsets = [0, 0], sizes = [32, 128], strides = [1, 1]} : vector<64x128xf32> to vector<32x128xf32>
    %590 = arith.addf %556, %589 : vector<32x128xf32>
    %591 = arith.mulf %590, %5 : vector<32x128xf32>
    %592 = vector.extract_strided_slice %588 {offsets = [32, 0], sizes = [32, 128], strides = [1, 1]} : vector<64x128xf32> to vector<32x128xf32>
    %593 = arith.addf %557, %592 : vector<32x128xf32>
    %594 = arith.truncf %591 : vector<32x128xf32> to vector<32x128xbf16>
    %c0_500 = arith.constant 0 : index
    %c2_501 = arith.constant 2 : index
    %595 = vector.load %arg15[%c0_500, %c2_501] : memref<32x132xbf16, #tpu.memory_space<vmem>>, vector<32x128xbf16>
    tpu.vector_store %arg15[%c0_500, %c2_501], %594 {strides = array<i32>} : memref<32x132xbf16, #tpu.memory_space<vmem>>, vector<32x128xbf16>,
    %c0_502 = arith.constant 0 : index
    %c0_503 = arith.constant 0 : index
    %596 = vector.load %arg15[%c0_502, %c0_503] : memref<32x132xbf16, #tpu.memory_space<vmem>>, vector<32x128xbf16>
    %c0_504 = arith.constant 0 : index
    %c1_505 = arith.constant 1 : index
    %597 = vector.load %arg15[%c0_504, %c1_505] : memref<32x132xbf16, #tpu.memory_space<vmem>>, vector<32x128xbf16>
    %c0_506 = arith.constant 0 : index
    %c2_507 = arith.constant 2 : index
    %598 = vector.load %arg15[%c0_506, %c2_507] : memref<32x132xbf16, #tpu.memory_space<vmem>>, vector<32x128xbf16>
    %c0_508 = arith.constant 0 : index
    %c3_509 = arith.constant 3 : index
    %599 = vector.load %arg15[%c0_508, %c3_509] : memref<32x132xbf16, #tpu.memory_space<vmem>>, vector<32x128xbf16>
    %c0_510 = arith.constant 0 : index
    %c4_511 = arith.constant 4 : index
    %600 = vector.load %arg15[%c0_510, %c4_511] : memref<32x132xbf16, #tpu.memory_space<vmem>>, vector<32x128xbf16>
    %601 = tpu.concatenate %596, %597, %598, %599, %600 in 0 : vector<32x128xbf16>, vector<32x128xbf16>, vector<32x128xbf16>, vector<32x128xbf16>, vector<32x128xbf16> -> vector<160x128xbf16>
    %c3_512 = arith.constant 3 : index
    %c2_513 = arith.constant 2 : index
    %c0_514 = arith.constant 0 : index
    %c0_515 = arith.constant 0 : index
    %602 = vector.load %arg6[%c3_512, %c2_513, %c0_514, %c0_515] : memref<4x4x64x160xbf16, #tpu.memory_space<vmem>>, vector<1x1x64x160xbf16>
    %603 = vector.shape_cast %602 : vector<1x1x64x160xbf16> to vector<64x160xbf16>
    %cst_516 = arith.constant dense<0.000000e+00> : vector<64x128xf32>
    %604 = tpu.matmul %603, %601, %cst_516 {dimension_numbers = #tpu.dot_dimension_numbers<[1], [0], [0], [1], [0, 0, 1, 1], [], []>} : vector<64x160xbf16>, vector<160x128xbf16>, vector<64x128xf32> -> vector<64x128xf32>
    %c0_517 = arith.constant 0 : index
    %c14 = arith.constant 14 : index
    %c0_518 = arith.constant 0 : index
    %c0_519 = arith.constant 0 : index
    %605 = vector.load %arg3[%c0_517, %c14, %c0_518, %c0_519] : memref<1x16x64x1xf32, #tpu.memory_space<vmem>>, vector<1x1x64x1xf32>
    %606 = vector.shape_cast %605 : vector<1x1x64x1xf32> to vector<64x1xf32>
    %607 = vector.broadcast %606 : vector<64x1xf32> to vector<64x128xf32>
    %608 = arith.addf %604, %607 : vector<64x128xf32>
    %609 = math.tanh %608 : vector<64x128xf32>
    %610 = vector.extract_strided_slice %609 {offsets = [0, 0], sizes = [32, 128], strides = [1, 1]} : vector<64x128xf32> to vector<32x128xf32>
    %611 = vector.extract_strided_slice %609 {offsets = [32, 0], sizes = [32, 128], strides = [1, 1]} : vector<64x128xf32> to vector<32x128xf32>
    %cst_520 = arith.constant 5.000000e-01 : f32
    %612 = vector.broadcast %cst_520 : f32 to vector<32x128xf32>
    %613 = arith.mulf %611, %612 : vector<32x128xf32>
    %cst_521 = arith.constant 5.000000e-01 : f32
    %614 = vector.broadcast %cst_521 : f32 to vector<32x128xf32>
    %615 = arith.addf %613, %614 : vector<32x128xf32>
    %616 = arith.mulf %610, %615 : vector<32x128xf32>
    %617 = arith.truncf %616 : vector<32x128xf32> to vector<32x128xbf16>
    %c3_522 = arith.constant 3 : index
    %c2_523 = arith.constant 2 : index
    %c0_524 = arith.constant 0 : index
    %c0_525 = arith.constant 0 : index
    %618 = vector.load %arg7[%c3_522, %c2_523, %c0_524, %c0_525] : memref<4x3x64x32xbf16, #tpu.memory_space<vmem>>, vector<1x1x64x32xbf16>
    %619 = vector.shape_cast %618 : vector<1x1x64x32xbf16> to vector<64x32xbf16>
    %cst_526 = arith.constant dense<0.000000e+00> : vector<64x128xf32>
    %620 = tpu.matmul %619, %617, %cst_526 {dimension_numbers = #tpu.dot_dimension_numbers<[1], [0], [0], [1], [0, 0, 1, 1], [], []>} : vector<64x32xbf16>, vector<32x128xbf16>, vector<64x128xf32> -> vector<64x128xf32>
    %c3_527 = arith.constant 3 : index
    %c2_528 = arith.constant 2 : index
    %c0_529 = arith.constant 0 : index
    %c0_530 = arith.constant 0 : index
    %621 = vector.load %arg8[%c3_527, %c2_528, %c0_529, %c0_530] : memref<4x3x64x1xf32, #tpu.memory_space<vmem>>, vector<1x1x64x1xf32>
    %622 = vector.shape_cast %621 : vector<1x1x64x1xf32> to vector<64x1xf32>
    %623 = vector.broadcast %622 : vector<64x1xf32> to vector<64x128xf32>
    %624 = arith.addf %620, %623 : vector<64x128xf32>
    %625 = vector.extract_strided_slice %624 {offsets = [0, 0], sizes = [32, 128], strides = [1, 1]} : vector<64x128xf32> to vector<32x128xf32>
    %626 = arith.addf %591, %625 : vector<32x128xf32>
    %627 = arith.mulf %626, %5 : vector<32x128xf32>
    %628 = vector.extract_strided_slice %624 {offsets = [32, 0], sizes = [32, 128], strides = [1, 1]} : vector<64x128xf32> to vector<32x128xf32>
    %629 = arith.addf %593, %628 : vector<32x128xf32>
    %630 = arith.truncf %627 : vector<32x128xf32> to vector<32x128xbf16>
    %c0_531 = arith.constant 0 : index
    %c2_532 = arith.constant 2 : index
    %631 = vector.load %arg15[%c0_531, %c2_532] : memref<32x132xbf16, #tpu.memory_space<vmem>>, vector<32x128xbf16>
    tpu.vector_store %arg15[%c0_531, %c2_532], %630 {strides = array<i32>} : memref<32x132xbf16, #tpu.memory_space<vmem>>, vector<32x128xbf16>,
    %c0_533 = arith.constant 0 : index
    %c0_534 = arith.constant 0 : index
    %632 = vector.load %arg15[%c0_533, %c0_534] : memref<32x132xbf16, #tpu.memory_space<vmem>>, vector<32x128xbf16>
    %c0_535 = arith.constant 0 : index
    %c1_536 = arith.constant 1 : index
    %633 = vector.load %arg15[%c0_535, %c1_536] : memref<32x132xbf16, #tpu.memory_space<vmem>>, vector<32x128xbf16>
    %c0_537 = arith.constant 0 : index
    %c2_538 = arith.constant 2 : index
    %634 = vector.load %arg15[%c0_537, %c2_538] : memref<32x132xbf16, #tpu.memory_space<vmem>>, vector<32x128xbf16>
    %c0_539 = arith.constant 0 : index
    %c3_540 = arith.constant 3 : index
    %635 = vector.load %arg15[%c0_539, %c3_540] : memref<32x132xbf16, #tpu.memory_space<vmem>>, vector<32x128xbf16>
    %c0_541 = arith.constant 0 : index
    %c4_542 = arith.constant 4 : index
    %636 = vector.load %arg15[%c0_541, %c4_542] : memref<32x132xbf16, #tpu.memory_space<vmem>>, vector<32x128xbf16>
    %637 = tpu.concatenate %632, %633, %634, %635, %636 in 0 : vector<32x128xbf16>, vector<32x128xbf16>, vector<32x128xbf16>, vector<32x128xbf16>, vector<32x128xbf16> -> vector<160x128xbf16>
    %c3_543 = arith.constant 3 : index
    %c3_544 = arith.constant 3 : index
    %c0_545 = arith.constant 0 : index
    %c0_546 = arith.constant 0 : index
    %638 = vector.load %arg6[%c3_543, %c3_544, %c0_545, %c0_546] : memref<4x4x64x160xbf16, #tpu.memory_space<vmem>>, vector<1x1x64x160xbf16>
    %639 = vector.shape_cast %638 : vector<1x1x64x160xbf16> to vector<64x160xbf16>
    %cst_547 = arith.constant dense<0.000000e+00> : vector<64x128xf32>
    %640 = tpu.matmul %639, %637, %cst_547 {dimension_numbers = #tpu.dot_dimension_numbers<[1], [0], [0], [1], [0, 0, 1, 1], [], []>} : vector<64x160xbf16>, vector<160x128xbf16>, vector<64x128xf32> -> vector<64x128xf32>
    %c0_548 = arith.constant 0 : index
    %c15 = arith.constant 15 : index
    %c0_549 = arith.constant 0 : index
    %c0_550 = arith.constant 0 : index
    %641 = vector.load %arg3[%c0_548, %c15, %c0_549, %c0_550] : memref<1x16x64x1xf32, #tpu.memory_space<vmem>>, vector<1x1x64x1xf32>
    %642 = vector.shape_cast %641 : vector<1x1x64x1xf32> to vector<64x1xf32>
    %643 = vector.broadcast %642 : vector<64x1xf32> to vector<64x128xf32>
    %644 = arith.addf %640, %643 : vector<64x128xf32>
    %645 = math.tanh %644 : vector<64x128xf32>
    %646 = vector.extract_strided_slice %645 {offsets = [0, 0], sizes = [32, 128], strides = [1, 1]} : vector<64x128xf32> to vector<32x128xf32>
    %647 = vector.extract_strided_slice %645 {offsets = [32, 0], sizes = [32, 128], strides = [1, 1]} : vector<64x128xf32> to vector<32x128xf32>
    %cst_551 = arith.constant 5.000000e-01 : f32
    %648 = vector.broadcast %cst_551 : f32 to vector<32x128xf32>
    %649 = arith.mulf %647, %648 : vector<32x128xf32>
    %cst_552 = arith.constant 5.000000e-01 : f32
    %650 = vector.broadcast %cst_552 : f32 to vector<32x128xf32>
    %651 = arith.addf %649, %650 : vector<32x128xf32>
    %652 = arith.mulf %646, %651 : vector<32x128xf32>
    %653 = arith.truncf %652 : vector<32x128xf32> to vector<32x128xbf16>
    %c3_553 = arith.constant 3 : index
    %c0_554 = arith.constant 0 : index
    %c0_555 = arith.constant 0 : index
    %654 = vector.load %arg9[%c3_553, %c0_554, %c0_555] : memref<4x32x32xbf16, #tpu.memory_space<vmem>>, vector<1x32x32xbf16>
    %655 = vector.shape_cast %654 : vector<1x32x32xbf16> to vector<32x32xbf16>
    %cst_556 = arith.constant dense<0.000000e+00> : vector<32x128xf32>
    %656 = tpu.matmul %655, %653, %cst_556 {dimension_numbers = #tpu.dot_dimension_numbers<[1], [0], [0], [1], [0, 0, 1, 1], [], []>} : vector<32x32xbf16>, vector<32x128xbf16>, vector<32x128xf32> -> vector<32x128xf32>
    %c3_557 = arith.constant 3 : index
    %c0_558 = arith.constant 0 : index
    %c0_559 = arith.constant 0 : index
    %657 = vector.load %arg10[%c3_557, %c0_558, %c0_559] : memref<4x32x1xf32, #tpu.memory_space<vmem>>, vector<1x32x1xf32>
    %658 = vector.shape_cast %657 : vector<1x32x1xf32> to vector<32x1xf32>
    %659 = vector.broadcast %658 : vector<32x1xf32> to vector<32x128xf32>
    %660 = arith.addf %656, %659 : vector<32x128xf32>
    %661 = arith.addf %629, %660 : vector<32x128xf32>
    %662 = arith.mulf %661, %5 : vector<32x128xf32>
    %c3_560 = arith.constant 3 : index
    %c0_561 = arith.constant 0 : index
    %c0_562 = arith.constant 0 : index
    %663 = vector.load %arg11[%c3_560, %c0_561, %c0_562] : memref<4x8x32xbf16, #tpu.memory_space<vmem>>, vector<1x8x32xbf16>
    %664 = vector.shape_cast %663 : vector<1x8x32xbf16> to vector<8x32xbf16>
    %665 = arith.truncf %662 : vector<32x128xf32> to vector<32x128xbf16>
    %cst_563 = arith.constant dense<0.000000e+00> : vector<8x128xf32>
    %666 = tpu.matmul %664, %665, %cst_563 {dimension_numbers = #tpu.dot_dimension_numbers<[1], [0], [0], [1], [0, 0, 1, 1], [], []>} : vector<8x32xbf16>, vector<32x128xbf16>, vector<8x128xf32> -> vector<8x128xf32>
    %c3_564 = arith.constant 3 : index
    %c0_565 = arith.constant 0 : index
    %c0_566 = arith.constant 0 : index
    %667 = vector.load %arg12[%c3_564, %c0_565, %c0_566] : memref<4x8x1xf32, #tpu.memory_space<vmem>>, vector<1x8x1xf32>
    %668 = vector.shape_cast %667 : vector<1x8x1xf32> to vector<8x1xf32>
    %669 = vector.broadcast %668 : vector<8x1xf32> to vector<8x128xf32>
    %670 = arith.addf %666, %669 : vector<8x128xf32>
    %671 = arith.mulf %670, %7 : vector<8x128xf32>
    %c3_567 = arith.constant 3 : index
    %c0_568 = arith.constant 0 : index
    %c0_569 = arith.constant 0 : index
    %672 = vector.load %arg13[%c3_567, %c0_568, %c0_569] : memref<4x8x1xf32, #tpu.memory_space<vmem>>, vector<1x8x1xf32>
    %673 = vector.shape_cast %672 : vector<1x8x1xf32> to vector<8x1xf32>
    %cst_570 = arith.constant 1.000000e+00 : f32
    %674 = vector.broadcast %cst_570 : f32 to vector<8x128xf32>
    %675 = arith.subf %7, %674 : vector<8x128xf32>
    %676 = vector.broadcast %673 : vector<8x1xf32> to vector<8x128xf32>
    %677 = arith.mulf %676, %675 : vector<8x128xf32>
    %cst_571 = arith.constant 1.000000e+00 : f32
    %678 = vector.broadcast %cst_571 : f32 to vector<8x128xf32>
    %679 = arith.addf %678, %677 : vector<8x128xf32>
    %680 = arith.mulf %513, %679 : vector<8x128xf32>
    %681 = arith.addf %680, %671 : vector<8x128xf32>
    %c0_572 = arith.constant 0 : index
    %c0_573 = arith.constant 0 : index
    %c0_574 = arith.constant 0 : index
    %682 = vector.load %arg14[%c0_572, %c0_573, %c0_574] : memref<1x8x128xf32, #tpu.memory_space<vmem>>, vector<1x8x128xf32>
    %683 = vector.shape_cast %682 : vector<1x8x128xf32> to vector<8x128xf32>
    %684 = vector.shape_cast %681 : vector<8x128xf32> to vector<1x8x128xf32>
    tpu.vector_store %arg14[%c0_572, %c0_573, %c0_574], %684 {strides = array<i32>} : memref<1x8x128xf32, #tpu.memory_space<vmem>>, vector<1x8x128xf32>,
    return
  }
  func.func @transform_0(%arg0: i32) -> (i32, i32, i32) {
    %c0_i32 = arith.constant 0 : i32
    %c0_i32_0 = arith.constant 0 : i32
    %c0_i32_1 = arith.constant 0 : i32
    return %arg0, %c0_i32, %c0_i32_0 : i32, i32, i32
  }
  func.func @transform_1(%arg0: i32) -> (i32, i32, i32) {
    %c0_i32 = arith.constant 0 : i32
    %c0_i32_0 = arith.constant 0 : i32
    %c0_i32_1 = arith.constant 0 : i32
    return %arg0, %c0_i32, %c0_i32_0 : i32, i32, i32
  }
  func.func @transform_2(%arg0: i32) -> (i32, i32, i32, i32) {
    %c0_i32 = arith.constant 0 : i32
    %c0_i32_0 = arith.constant 0 : i32
    %c0_i32_1 = arith.constant 0 : i32
    %c0_i32_2 = arith.constant 0 : i32
    return %arg0, %c0_i32, %c0_i32_0, %c0_i32_1 : i32, i32, i32, i32
  }
  func.func @transform_3(%arg0: i32) -> (i32, i32, i32) {
    %c0_i32 = arith.constant 0 : i32
    %c0_i32_0 = arith.constant 0 : i32
    %c0_i32_1 = arith.constant 0 : i32
    %c0_i32_2 = arith.constant 0 : i32
    return %c0_i32, %c0_i32_0, %c0_i32_1 : i32, i32, i32
  }
  func.func @transform_4(%arg0: i32) -> (i32, i32, i32) {
    %c0_i32 = arith.constant 0 : i32
    %c0_i32_0 = arith.constant 0 : i32
    %c0_i32_1 = arith.constant 0 : i32
    %c0_i32_2 = arith.constant 0 : i32
    return %c0_i32, %c0_i32_0, %c0_i32_1 : i32, i32, i32
  }
  func.func @transform_5(%arg0: i32) -> (i32, i32, i32, i32) {
    %c0_i32 = arith.constant 0 : i32
    %c0_i32_0 = arith.constant 0 : i32
    %c0_i32_1 = arith.constant 0 : i32
    %c0_i32_2 = arith.constant 0 : i32
    %c0_i32_3 = arith.constant 0 : i32
    return %c0_i32, %c0_i32_0, %c0_i32_1, %c0_i32_2 : i32, i32, i32, i32
  }
  func.func @transform_6(%arg0: i32) -> (i32, i32, i32, i32) {
    %c0_i32 = arith.constant 0 : i32
    %c0_i32_0 = arith.constant 0 : i32
    %c0_i32_1 = arith.constant 0 : i32
    %c0_i32_2 = arith.constant 0 : i32
    %c0_i32_3 = arith.constant 0 : i32
    return %c0_i32, %c0_i32_0, %c0_i32_1, %c0_i32_2 : i32, i32, i32, i32
  }
  func.func @transform_7(%arg0: i32) -> (i32, i32, i32, i32) {
    %c0_i32 = arith.constant 0 : i32
    %c0_i32_0 = arith.constant 0 : i32
    %c0_i32_1 = arith.constant 0 : i32
    %c0_i32_2 = arith.constant 0 : i32
    %c0_i32_3 = arith.constant 0 : i32
    return %c0_i32, %c0_i32_0, %c0_i32_1, %c0_i32_2 : i32, i32, i32, i32
  }
  func.func @transform_8(%arg0: i32) -> (i32, i32, i32) {
    %c0_i32 = arith.constant 0 : i32
    %c0_i32_0 = arith.constant 0 : i32
    %c0_i32_1 = arith.constant 0 : i32
    %c0_i32_2 = arith.constant 0 : i32
    return %c0_i32, %c0_i32_0, %c0_i32_1 : i32, i32, i32
  }
  func.func @transform_9(%arg0: i32) -> (i32, i32, i32) {
    %c0_i32 = arith.constant 0 : i32
    %c0_i32_0 = arith.constant 0 : i32
    %c0_i32_1 = arith.constant 0 : i32
    %c0_i32_2 = arith.constant 0 : i32
    return %c0_i32, %c0_i32_0, %c0_i32_1 : i32, i32, i32
  }
  func.func @transform_10(%arg0: i32) -> (i32, i32, i32) {
    %c0_i32 = arith.constant 0 : i32
    %c0_i32_0 = arith.constant 0 : i32
    %c0_i32_1 = arith.constant 0 : i32
    %c0_i32_2 = arith.constant 0 : i32
    return %c0_i32, %c0_i32_0, %c0_i32_1 : i32, i32, i32
  }
  func.func @transform_11(%arg0: i32) -> (i32, i32, i32) {
    %c0_i32 = arith.constant 0 : i32
    %c0_i32_0 = arith.constant 0 : i32
    %c0_i32_1 = arith.constant 0 : i32
    %c0_i32_2 = arith.constant 0 : i32
    return %c0_i32, %c0_i32_0, %c0_i32_1 : i32, i32, i32
  }
  func.func @transform_12(%arg0: i32) -> (i32, i32, i32) {
    %c0_i32 = arith.constant 0 : i32
    %c0_i32_0 = arith.constant 0 : i32
    %c0_i32_1 = arith.constant 0 : i32
    %c0_i32_2 = arith.constant 0 : i32
    return %c0_i32, %c0_i32_0, %c0_i32_1 : i32, i32, i32
  }
  func.func @transform_13(%arg0: i32) -> (i32, i32, i32) {
    %c0_i32 = arith.constant 0 : i32
    %c0_i32_0 = arith.constant 0 : i32
    %c0_i32_1 = arith.constant 0 : i32
    return %arg0, %c0_i32, %c0_i32_0 : i32, i32, i32
  }
}

</mosaic_0001>

<llo_original>
// kernel: tpu_custom_call.1
$region0: #{tpu_custom_call.1}
  #allocation0 [shape = 'u32[]', space=smem, size = 0x4, offset = 0x4, fixed_abs, tag = 'smem constant byte address 0x4 - core index']
  #allocation1 [shape = 'u32[72,128]{1,0:T(1,128)}', space=vmem, size = 0x9000, scoped, tag = 'internal scratch']
  #allocation2 [shape = 'bf16[32,132]{1,0:T(8,128)(2,1)}', space=vmem, size = 0x4000, scoped, tag = 'scratch operand']
  %s0 = inlined_call_operand.vmem [shape: f32[2,8,128], index: 0, kind: input, shape index: {}]
  %s1 = inlined_call_operand.vmem [shape: f32[2,1,128], index: 1, kind: input, shape index: {}]
  %s2 = inlined_call_operand.vmem [shape: f32[2,16,64,1], index: 2, kind: input, shape index: {}]
  %s3 = inlined_call_operand.vmem [shape: bf16[4,32,8], index: 3, kind: input, shape index: {}]
  %s4 = inlined_call_operand.vmem [shape: f32[4,32,1], index: 4, kind: input, shape index: {}]
  %s5 = inlined_call_operand.vmem [shape: bf16[4,4,64,160], index: 5, kind: input, shape index: {}]
  %s6 = inlined_call_operand.vmem [shape: bf16[4,3,64,32], index: 6, kind: input, shape index: {}]
  %s7 = inlined_call_operand.vmem [shape: f32[4,3,64,1], index: 7, kind: input, shape index: {}]
  %s8 = inlined_call_operand.vmem [shape: bf16[4,32,32], index: 8, kind: input, shape index: {}]
  %s9 = inlined_call_operand.vmem [shape: f32[4,32,1], index: 9, kind: input, shape index: {}]
  %s10 = inlined_call_operand.vmem [shape: bf16[4,8,32], index: 10, kind: input, shape index: {}]
  %s11 = inlined_call_operand.vmem [shape: f32[4,8,1], index: 11, kind: input, shape index: {}]
  %s12 = inlined_call_operand.vmem [shape: f32[4,8,1], index: 12, kind: input, shape index: {}]
  %s13 = inlined_call_operand.hbm [shape: f32[2,8,128], index: 13, kind: output, shape index: {}]
  %s14 = sld [smem:[#allocation0]]
  $region85: #{tpu_custom_call.1} parent=0
    _
  %s16 = ssub.s32 1, %s14
  %s17 = scalar_select 0, %s16, %s14
  $region1: #{tpu_custom_call.1} parent=0
    #allocation3 [shape = 'u8[8192]{0}', space=vmem, size = 0x2000, scoped, tag = 'output window, operand 0']
    #allocation4 [shape = 's32[2]{0}', space=sflag, size = 0x8, scoped, tag = 'scoped memory for tpu_custom_call.1']
    %18 = vsyncpa [#allocation4], 0
    %s19 = scalar_lea.sflag [#allocation4], 1
    %20 = vsyncpa %s19, 0
    loop: start=0, step=1, limit=4
    $region2: #{tpu_custom_call.1} parent=1 // loop_pre_header
      _
    $region3: #{tpu_custom_call.1} parent=1 // loop_header
      %s22 = sphi 0, %s26
      %p23 = scmp.ge.s32.totalorder %s22, 4
      %s32 = sphi 0, %s34
      %s35 = sphi 0, %s32
      %s36 = sphi 0, %s35
      %s52 = sphi 0, %s36
      %s58 = sphi 0, %s60
      %s61 = sphi 0, %s58
      %s62 = sphi 0, %s61
      %s78 = sphi 0, %s62
      %s84 = sphi 0, %s86
      %s87 = sphi 0, %s84
      %s88 = sphi 0, %s87
      %s104 = sphi 0, %s88
      %s108 = sphi 0, %s108
      %s110 = sphi 0, %s108
      %s111 = sphi 0, %s110
      %s125 = sphi 0, %s111
      %s129 = sphi 0, %s129
      %s131 = sphi 0, %s129
      %s132 = sphi 0, %s131
      %s146 = sphi 0, %s132
      %s150 = sphi 0, %s150
      %s152 = sphi 0, %s150
      %s153 = sphi 0, %s152
      %s167 = sphi 0, %s153
      %s171 = sphi 0, %s171
      %s173 = sphi 0, %s171
      %s174 = sphi 0, %s173
      %s188 = sphi 0, %s174
      %s192 = sphi 0, %s192
      %s194 = sphi 0, %s192
      %s195 = sphi 0, %s194
      %s209 = sphi 0, %s195
      %s213 = sphi 0, %s213
      %s215 = sphi 0, %s213
      %s216 = sphi 0, %s215
      %s230 = sphi 0, %s216
      %s234 = sphi 0, %s234
      %s236 = sphi 0, %s234
      %s237 = sphi 0, %s236
      %s251 = sphi 0, %s237
      %s255 = sphi 0, %s255
      %s257 = sphi 0, %s255
      %s258 = sphi 0, %s257
      %s272 = sphi 0, %s258
      %s276 = sphi 0, %s276
      %s278 = sphi 0, %s276
      %s279 = sphi 0, %s278
      %s293 = sphi 0, %s279
      %s297 = sphi 0, %s297
      %s299 = sphi 0, %s297
      %s300 = sphi 0, %s299
      %s314 = sphi 0, %s300
      %s320 = sphi 0, %s322
      %s323 = sphi 0, %s320
      %s324 = sphi 0, %s323
      %s340 = sphi 0, %s324
    $region4: #{tpu_custom_call.1} parent=1 // loop_header_branch
      %25 = sbr.rel (%p23) target = $region8
    $region5: #{tpu_custom_call.1} parent=1 // loop_body
      %s27 = ssub.s32 %s22, 1
      %s28 = ssub.s32 %s22, 2
      %s29 = sadd.s32 %s22, 1
      %s30 = ssub.s32 %s22, %s29
      %p31 = scmp.eq.s32.totalorder %s30, 0
      %s33 = sadd.s32 %s32, 1
      %s34 = scalar_select %p31, %s32, %s33
      %p37 = pneg %p31
      %p38 = scmp.eq.s32.totalorder %s22, 1
      %p39 = por %p37, %p38
      %p40 = scmp.ne.s32.totalorder %s32, %s35
      %p41 = scmp.eq.s32.totalorder %s22, 0
      %p42 = por %p40, %p41
      %p43 = scmp.ne.s32.totalorder %s32, %s35
      %p44 = scmp.eq.s32.totalorder %s27, 1
      %p45 = por %p43, %p44
      %p46 = scmp.ne.s32.totalorder %s35, %s36
      %p47 = scmp.eq.s32.totalorder %s27, 0
      %p48 = por %p46, %p47
      %p49 = scmp.ne.s32.totalorder %s35, %s36
      %p50 = scmp.eq.s32.totalorder %s28, 1
      %p51 = por %p49, %p50
      %p53 = scmp.ne.s32.totalorder %s36, %s52
      %p54 = scmp.eq.s32.totalorder %s28, 0
      %p55 = por %p53, %p54
      %s56 = ssub.s32 %s22, %s29
      %p57 = scmp.eq.s32.totalorder %s56, 0
      %s59 = sadd.s32 %s58, 1
      %s60 = scalar_select %p57, %s58, %s59
      %p63 = pneg %p57
      %p64 = scmp.eq.s32.totalorder %s22, 1
      %p65 = por %p63, %p64
      %p66 = scmp.ne.s32.totalorder %s58, %s61
      %p67 = scmp.eq.s32.totalorder %s22, 0
      %p68 = por %p66, %p67
      %p69 = scmp.ne.s32.totalorder %s58, %s61
      %p70 = scmp.eq.s32.totalorder %s27, 1
      %p71 = por %p69, %p70
      %p72 = scmp.ne.s32.totalorder %s61, %s62
      %p73 = scmp.eq.s32.totalorder %s27, 0
      %p74 = por %p72, %p73
      %p75 = scmp.ne.s32.totalorder %s61, %s62
      %p76 = scmp.eq.s32.totalorder %s28, 1
      %p77 = por %p75, %p76
      %p79 = scmp.ne.s32.totalorder %s62, %s78
      %p80 = scmp.eq.s32.totalorder %s28, 0
      %p81 = por %p79, %p80
      %s82 = ssub.s32 %s22, %s29
      %p83 = scmp.eq.s32.totalorder %s82, 0
      %s85 = sadd.s32 %s84, 1
      %s86 = scalar_select %p83, %s84, %s85
      %p89 = pneg %p83
      %p90 = scmp.eq.s32.totalorder %s22, 1
      %p91 = por %p89, %p90
      %p92 = scmp.ne.s32.totalorder %s84, %s87
      %p93 = scmp.eq.s32.totalorder %s22, 0
      %p94 = por %p92, %p93
      %p95 = scmp.ne.s32.totalorder %s84, %s87
      %p96 = scmp.eq.s32.totalorder %s27, 1
      %p97 = por %p95, %p96
      %p98 = scmp.ne.s32.totalorder %s87, %s88
      %p99 = scmp.eq.s32.totalorder %s27, 0
      %p100 = por %p98, %p99
      %p101 = scmp.ne.s32.totalorder %s87, %s88
      %p102 = scmp.eq.s32.totalorder %s28, 1
      %p103 = por %p101, %p102
      %p105 = scmp.ne.s32.totalorder %s88, %s104
      %p106 = scmp.eq.s32.totalorder %s28, 0
      %p107 = por %p105, %p106
      %s109 = sadd.s32 %s108, 1
      %p112 = scmp.eq.s32.totalorder %s22, 1
      %p113 = scmp.ne.s32.totalorder %s108, %s110
      %p114 = scmp.eq.s32.totalorder %s22, 0
      %p115 = por %p113, %p114
      %p116 = scmp.ne.s32.totalorder %s108, %s110
      %p117 = scmp.eq.s32.totalorder %s27, 1
      %p118 = por %p116, %p117
      %p119 = scmp.ne.s32.totalorder %s110, %s111
      %p120 = scmp.eq.s32.totalorder %s27, 0
      %p121 = por %p119, %p120
      %p122 = scmp.ne.s32.totalorder %s110, %s111
      %p123 = scmp.eq.s32.totalorder %s28, 1
      %p124 = por %p122, %p123
      %p126 = scmp.ne.s32.totalorder %s111, %s125
      %p127 = scmp.eq.s32.totalorder %s28, 0
      %p128 = por %p126, %p127
      %s130 = sadd.s32 %s129, 1
      %p133 = scmp.eq.s32.totalorder %s22, 1
      %p134 = scmp.ne.s32.totalorder %s129, %s131
      %p135 = scmp.eq.s32.totalorder %s22, 0
      %p136 = por %p134, %p135
      %p137 = scmp.ne.s32.totalorder %s129, %s131
      %p138 = scmp.eq.s32.totalorder %s27, 1
      %p139 = por %p137, %p138
      %p140 = scmp.ne.s32.totalorder %s131, %s132
      %p141 = scmp.eq.s32.totalorder %s27, 0
      %p142 = por %p140, %p141
      %p143 = scmp.ne.s32.totalorder %s131, %s132
      %p144 = scmp.eq.s32.totalorder %s28, 1
      %p145 = por %p143, %p144
      %p147 = scmp.ne.s32.totalorder %s132, %s146
      %p148 = scmp.eq.s32.totalorder %s28, 0
      %p149 = por %p147, %p148
      %s151 = sadd.s32 %s150, 1
      %p154 = scmp.eq.s32.totalorder %s22, 1
      %p155 = scmp.ne.s32.totalorder %s150, %s152
      %p156 = scmp.eq.s32.totalorder %s22, 0
      %p157 = por %p155, %p156
      %p158 = scmp.ne.s32.totalorder %s150, %s152
      %p159 = scmp.eq.s32.totalorder %s27, 1
      %p160 = por %p158, %p159
      %p161 = scmp.ne.s32.totalorder %s152, %s153
      %p162 = scmp.eq.s32.totalorder %s27, 0
      %p163 = por %p161, %p162
      %p164 = scmp.ne.s32.totalorder %s152, %s153
      %p165 = scmp.eq.s32.totalorder %s28, 1
      %p166 = por %p164, %p165
      %p168 = scmp.ne.s32.totalorder %s153, %s167
      %p169 = scmp.eq.s32.totalorder %s28, 0
      %p170 = por %p168, %p169
      %s172 = sadd.s32 %s171, 1
      %p175 = scmp.eq.s32.totalorder %s22, 1
      %p176 = scmp.ne.s32.totalorder %s171, %s173
      %p177 = scmp.eq.s32.totalorder %s22, 0
      %p178 = por %p176, %p177
      %p179 = scmp.ne.s32.totalorder %s171, %s173
      %p180 = scmp.eq.s32.totalorder %s27, 1
      %p181 = por %p179, %p180
      %p182 = scmp.ne.s32.totalorder %s173, %s174
      %p183 = scmp.eq.s32.totalorder %s27, 0
      %p184 = por %p182, %p183
      %p185 = scmp.ne.s32.totalorder %s173, %s174
      %p186 = scmp.eq.s32.totalorder %s28, 1
      %p187 = por %p185, %p186
      %p189 = scmp.ne.s32.totalorder %s174, %s188
      %p190 = scmp.eq.s32.totalorder %s28, 0
      %p191 = por %p189, %p190
      %s193 = sadd.s32 %s192, 1
      %p196 = scmp.eq.s32.totalorder %s22, 1
      %p197 = scmp.ne.s32.totalorder %s192, %s194
      %p198 = scmp.eq.s32.totalorder %s22, 0
      %p199 = por %p197, %p198
      %p200 = scmp.ne.s32.totalorder %s192, %s194
      %p201 = scmp.eq.s32.totalorder %s27, 1
      %p202 = por %p200, %p201
      %p203 = scmp.ne.s32.totalorder %s194, %s195
      %p204 = scmp.eq.s32.totalorder %s27, 0
      %p205 = por %p203, %p204
      %p206 = scmp.ne.s32.totalorder %s194, %s195
      %p207 = scmp.eq.s32.totalorder %s28, 1
      %p208 = por %p206, %p207
      %p210 = scmp.ne.s32.totalorder %s195, %s209
      %p211 = scmp.eq.s32.totalorder %s28, 0
      %p212 = por %p210, %p211
      %s214 = sadd.s32 %s213, 1
      %p217 = scmp.eq.s32.totalorder %s22, 1
      %p218 = scmp.ne.s32.totalorder %s213, %s215
      %p219 = scmp.eq.s32.totalorder %s22, 0
      %p220 = por %p218, %p219
      %p221 = scmp.ne.s32.totalorder %s213, %s215
      %p222 = scmp.eq.s32.totalorder %s27, 1
      %p223 = por %p221, %p222
      %p224 = scmp.ne.s32.totalorder %s215, %s216
      %p225 = scmp.eq.s32.totalorder %s27, 0
      %p226 = por %p224, %p225
      %p227 = scmp.ne.s32.totalorder %s215, %s216
      %p228 = scmp.eq.s32.totalorder %s28, 1
      %p229 = por %p227, %p228
      %p231 = scmp.ne.s32.totalorder %s216, %s230
      %p232 = scmp.eq.s32.totalorder %s28, 0
      %p233 = por %p231, %p232
      %s235 = sadd.s32 %s234, 1
      %p238 = scmp.eq.s32.totalorder %s22, 1
      %p239 = scmp.ne.s32.totalorder %s234, %s236
      %p240 = scmp.eq.s32.totalorder %s22, 0
      %p241 = por %p239, %p240
      %p242 = scmp.ne.s32.totalorder %s234, %s236
      %p243 = scmp.eq.s32.totalorder %s27, 1
      %p244 = por %p242, %p243
      %p245 = scmp.ne.s32.totalorder %s236, %s237
      %p246 = scmp.eq.s32.totalorder %s27, 0
      %p247 = por %p245, %p246
      %p248 = scmp.ne.s32.totalorder %s236, %s237
      %p249 = scmp.eq.s32.totalorder %s28, 1
      %p250 = por %p248, %p249
      %p252 = scmp.ne.s32.totalorder %s237, %s251
      %p253 = scmp.eq.s32.totalorder %s28, 0
      %p254 = por %p252, %p253
      %s256 = sadd.s32 %s255, 1
      %p259 = scmp.eq.s32.totalorder %s22, 1
      %p260 = scmp.ne.s32.totalorder %s255, %s257
      %p261 = scmp.eq.s32.totalorder %s22, 0
      %p262 = por %p260, %p261
      %p263 = scmp.ne.s32.totalorder %s255, %s257
      %p264 = scmp.eq.s32.totalorder %s27, 1
      %p265 = por %p263, %p264
      %p266 = scmp.ne.s32.totalorder %s257, %s258
      %p267 = scmp.eq.s32.totalorder %s27, 0
      %p268 = por %p266, %p267
      %p269 = scmp.ne.s32.totalorder %s257, %s258
      %p270 = scmp.eq.s32.totalorder %s28, 1
      %p271 = por %p269, %p270
      %p273 = scmp.ne.s32.totalorder %s258, %s272
      %p274 = scmp.eq.s32.totalorder %s28, 0
      %p275 = por %p273, %p274
      %s277 = sadd.s32 %s276, 1
      %p280 = scmp.eq.s32.totalorder %s22, 1
      %p281 = scmp.ne.s32.totalorder %s276, %s278
      %p282 = scmp.eq.s32.totalorder %s22, 0
      %p283 = por %p281, %p282
      %p284 = scmp.ne.s32.totalorder %s276, %s278
      %p285 = scmp.eq.s32.totalorder %s27, 1
      %p286 = por %p284, %p285
      %p287 = scmp.ne.s32.totalorder %s278, %s279
      %p288 = scmp.eq.s32.totalorder %s27, 0
      %p289 = por %p287, %p288
      %p290 = scmp.ne.s32.totalorder %s278, %s279
      %p291 = scmp.eq.s32.totalorder %s28, 1
      %p292 = por %p290, %p291
      %p294 = scmp.ne.s32.totalorder %s279, %s293
      %p295 = scmp.eq.s32.totalorder %s28, 0
      %p296 = por %p294, %p295
      %s298 = sadd.s32 %s297, 1
      %p301 = scmp.eq.s32.totalorder %s22, 1
      %p302 = scmp.ne.s32.totalorder %s297, %s299
      %p303 = scmp.eq.s32.totalorder %s22, 0
      %p304 = por %p302, %p303
      %p305 = scmp.ne.s32.totalorder %s297, %s299
      %p306 = scmp.eq.s32.totalorder %s27, 1
      %p307 = por %p305, %p306
      %p308 = scmp.ne.s32.totalorder %s299, %s300
      %p309 = scmp.eq.s32.totalorder %s27, 0
      %p310 = por %p308, %p309
      %p311 = scmp.ne.s32.totalorder %s299, %s300
      %p312 = scmp.eq.s32.totalorder %s28, 1
      %p313 = por %p311, %p312
      %p315 = scmp.ne.s32.totalorder %s300, %s314
      %p316 = scmp.eq.s32.totalorder %s28, 0
      %p317 = por %p315, %p316
      %s318 = ssub.s32 %s22, %s29
      %p319 = scmp.eq.s32.totalorder %s318, 0
      %s321 = sadd.s32 %s320, 1
      %s322 = scalar_select %p319, %s320, %s321
      %p325 = pneg %p319
      %p326 = scmp.eq.s32.totalorder %s22, 1
      %p327 = por %p325, %p326
      %p328 = scmp.ne.s32.totalorder %s320, %s323
      %p329 = scmp.eq.s32.totalorder %s22, 0
      %p330 = por %p328, %p329
      %p331 = scmp.ne.s32.totalorder %s320, %s323
      %p332 = scmp.eq.s32.totalorder %s27, 1
      %p333 = por %p331, %p332
      %p334 = scmp.ne.s32.totalorder %s323, %s324
      %p335 = scmp.eq.s32.totalorder %s27, 0
      %p336 = por %p334, %p335
      %p337 = scmp.ne.s32.totalorder %s323, %s324
      %p338 = scmp.eq.s32.totalorder %s28, 1
      %p339 = por %p337, %p338
      %p341 = scmp.ne.s32.totalorder %s324, %s340
      %p342 = scmp.eq.s32.totalorder %s28, 0
      %p343 = por %p341, %p342
      %p344 = scmp.le.s32.totalorder 1, %s22
      %p345 = scmp.lt.s32.totalorder %s22, 3
      %p346 = pnand %p344, %p345
      %p347 = pneg %p346
      // Predicated region
      $region9: #{tpu_custom_call.1} parent=5 // pred_check
        _
      $region10: #{tpu_custom_call.1} parent=5 // pred_check_branch
        %349 = sbr.rel (%p346) target = $region12
      $region11: #{tpu_custom_call.1} parent=5 // pred_region
        %s350 = ssub.s32 %s22, 1
        // Predicated region
        $region13: #{tpu_custom_call.1} parent=11 // pred_check
          %p351 = pneg %p121
        $region14: #{tpu_custom_call.1} parent=11 // pred_check_branch
          %353 = sbr.rel (%p351) target = $region16
        $region15: #{tpu_custom_call.1} parent=11 // pred_region
          _
        $region16: #{tpu_custom_call.1} parent=11 // pred_fallthru
          _
        // Predicated region
        $region17: #{tpu_custom_call.1} parent=11 // pred_check
          %p354 = pneg %p142
        $region18: #{tpu_custom_call.1} parent=11 // pred_check_branch
          %356 = sbr.rel (%p354) target = $region20
        $region19: #{tpu_custom_call.1} parent=11 // pred_region
          _
        $region20: #{tpu_custom_call.1} parent=11 // pred_fallthru
          _
        // Predicated region
        $region21: #{tpu_custom_call.1} parent=11 // pred_check
          %p357 = pneg %p163
        $region22: #{tpu_custom_call.1} parent=11 // pred_check_branch
          %359 = sbr.rel (%p357) target = $region24
        $region23: #{tpu_custom_call.1} parent=11 // pred_region
          _
        $region24: #{tpu_custom_call.1} parent=11 // pred_fallthru
          _
        // Predicated region
        $region25: #{tpu_custom_call.1} parent=11 // pred_check
          %p360 = pneg %p184
        $region26: #{tpu_custom_call.1} parent=11 // pred_check_branch
          %362 = sbr.rel (%p360) target = $region28
        $region27: #{tpu_custom_call.1} parent=11 // pred_region
          _
        $region28: #{tpu_custom_call.1} parent=11 // pred_fallthru
          _
        // Predicated region
        $region29: #{tpu_custom_call.1} parent=11 // pred_check
          %p363 = pneg %p205
        $region30: #{tpu_custom_call.1} parent=11 // pred_check_branch
          %365 = sbr.rel (%p363) target = $region32
        $region31: #{tpu_custom_call.1} parent=11 // pred_region
          _
        $region32: #{tpu_custom_call.1} parent=11 // pred_fallthru
          _
        // Predicated region
        $region33: #{tpu_custom_call.1} parent=11 // pred_check
          %p366 = pneg %p226
        $region34: #{tpu_custom_call.1} parent=11 // pred_check_branch
          %368 = sbr.rel (%p366) target = $region36
        $region35: #{tpu_custom_call.1} parent=11 // pred_region
          _
        $region36: #{tpu_custom_call.1} parent=11 // pred_fallthru
          _
        // Predicated region
        $region37: #{tpu_custom_call.1} parent=11 // pred_check
          %p369 = pneg %p247
        $region38: #{tpu_custom_call.1} parent=11 // pred_check_branch
          %371 = sbr.rel (%p369) target = $region40
        $region39: #{tpu_custom_call.1} parent=11 // pred_region
          _
        $region40: #{tpu_custom_call.1} parent=11 // pred_fallthru
          _
        // Predicated region
        $region41: #{tpu_custom_call.1} parent=11 // pred_check
          %p372 = pneg %p268
        $region42: #{tpu_custom_call.1} parent=11 // pred_check_branch
          %374 = sbr.rel (%p372) target = $region44
        $region43: #{tpu_custom_call.1} parent=11 // pred_region
          _
        $region44: #{tpu_custom_call.1} parent=11 // pred_fallthru
          _
        // Predicated region
        $region45: #{tpu_custom_call.1} parent=11 // pred_check
          %p375 = pneg %p289
        $region46: #{tpu_custom_call.1} parent=11 // pred_check_branch
          %377 = sbr.rel (%p375) target = $region48
        $region47: #{tpu_custom_call.1} parent=11 // pred_region
          _
        $region48: #{tpu_custom_call.1} parent=11 // pred_fallthru
          _
        // Predicated region
        $region49: #{tpu_custom_call.1} parent=11 // pred_check
          %p378 = pneg %p310
        $region50: #{tpu_custom_call.1} parent=11 // pred_check_branch
          %380 = sbr.rel (%p378) target = $region52
        $region51: #{tpu_custom_call.1} parent=11 // pred_region
          _
        $region52: #{tpu_custom_call.1} parent=11 // pred_fallthru
          _
      $region12: #{tpu_custom_call.1} parent=5 // pred_fallthru
        _
      %p381 = scmp.lt.s32.totalorder %s22, 2
      // Predicated region
      $region53: #{tpu_custom_call.1} parent=5 // pred_check
        %p382 = pneg %p381
      $region54: #{tpu_custom_call.1} parent=5 // pred_check_branch
        %384 = sbr.rel (%p382) target = $region56
      $region55: #{tpu_custom_call.1} parent=5 // pred_region
        // Predicated region
        $region57: #{tpu_custom_call.1} parent=55 // pred_check
          %p385 = pneg %p42
        $region58: #{tpu_custom_call.1} parent=55 // pred_check_branch
          %387 = sbr.rel (%p385) target = $region60
        $region59: #{tpu_custom_call.1} parent=55 // pred_region
          %p388 = scmp.lt.s32.totalorder %s22, 1
          %s389 = scalar_select %p388, %s22, 1
          %s390 = smul.addr %s389, 8
          %s391 = scalar_lea.vmem %s0, %s390
        $region60: #{tpu_custom_call.1} parent=55 // pred_fallthru
          _
        // Predicated region
        $region61: #{tpu_custom_call.1} parent=55 // pred_check
          %p392 = pneg %p68
        $region62: #{tpu_custom_call.1} parent=55 // pred_check_branch
          %394 = sbr.rel (%p392) target = $region64
        $region63: #{tpu_custom_call.1} parent=55 // pred_region
          %p395 = scmp.lt.s32.totalorder %s22, 1
          %s396 = scalar_select %p395, %s22, 1
          %s397 = scalar_lea.vmem %s1, %s396
        $region64: #{tpu_custom_call.1} parent=55 // pred_fallthru
          _
        // Predicated region
        $region65: #{tpu_custom_call.1} parent=55 // pred_check
          %p398 = pneg %p94
        $region66: #{tpu_custom_call.1} parent=55 // pred_check_branch
          %400 = sbr.rel (%p398) target = $region68
        $region67: #{tpu_custom_call.1} parent=55 // pred_region
          %p401 = scmp.lt.s32.totalorder %s22, 1
          %s402 = scalar_select %p401, %s22, 1
          %s403 = smul.addr %s402, 128
          %s404 = smul.addr %s403, 8
          %s405 = scalar_lea.vmem %s2, %s404
        $region68: #{tpu_custom_call.1} parent=55 // pred_fallthru
          _
      $region56: #{tpu_custom_call.1} parent=5 // pred_fallthru
        _
      %p406 = scmp.le.s32.totalorder 1, %s22
      %p407 = scmp.lt.s32.totalorder %s22, 3
      %p408 = pnand %p406, %p407
      %p409 = pneg %p408
      // Predicated region
      $region69: #{tpu_custom_call.1} parent=5 // pred_check
        _
      $region70: #{tpu_custom_call.1} parent=5 // pred_check_branch
        %411 = sbr.rel (%p408) target = $region72
      $region71: #{tpu_custom_call.1} parent=5 // pred_region
        %s412 = ssub.s32 %s22, 1
        %p413 = scmp.lt.s32.totalorder %s27, 1
        %s414 = scalar_select %p413, %s27, 1
        %s415 = smul.addr %s414, 8
        %s416 = scalar_lea.vmem %s0, %s415
        %p417 = pneg %p48
        %p418 = pneg %p45
        %p419 = scmp.lt.s32.totalorder %s27, 1
        %s420 = scalar_select %p419, %s27, 1
        %s421 = scalar_lea.vmem %s1, %s420
        %p422 = pneg %p74
        %p423 = pneg %p71
        %p424 = scmp.lt.s32.totalorder %s27, 1
        %s425 = scalar_select %p424, %s27, 1
        %s426 = smul.addr %s425, 128
        %s427 = smul.addr %s426, 8
        %s428 = scalar_lea.vmem %s2, %s427
        %p429 = pneg %p100
        %p430 = pneg %p97
        %p431 = pneg %p121
        %p432 = pneg %p118
        %p433 = pneg %p142
        %p434 = pneg %p139
        %p435 = pneg %p163
        %p436 = pneg %p160
        %p437 = pneg %p184
        %p438 = pneg %p181
        %p439 = pneg %p205
        %p440 = pneg %p202
        %p441 = pneg %p226
        %p442 = pneg %p223
        %p443 = pneg %p247
        %p444 = pneg %p244
        %p445 = pneg %p268
        %p446 = pneg %p265
        %p447 = pneg %p289
        %p448 = pneg %p286
        %p449 = pneg %p310
        %p450 = pneg %p307
        %p451 = pneg %p336
        %p452 = pneg %p333
        %s453 = sand.u32 %s323, 1
        %s454 = scalar_lea.sflag [#allocation4], %s453
        %s455 = sand.u32 %s323, 1
        %s456 = smul.addr %s455, 8
        %s457 = scalar_lea.vmem [#allocation3], %s456
        %p458 = scmp.lt.s32.totalorder %s27, 1
        %s459 = scalar_select %p458, %s27, 1
        %s460 = smul.addr %s459, 8
        %s461 = scalar_lea.vmem %s0, %s460
        %p462 = scmp.lt.s32.totalorder %s27, 1
        %s463 = scalar_select %p462, %s27, 1
        %s464 = scalar_lea.vmem %s1, %s463
        %p465 = scmp.lt.s32.totalorder %s27, 1
        %s466 = scalar_select %p465, %s27, 1
        %s467 = smul.addr %s466, 128
        %s468 = smul.addr %s467, 8
        %s469 = scalar_lea.vmem %s2, %s468
        %v471 = vld [vmem:[%s461] sm:$0xff]
        %v472 = vld [vmem:[%s464] sm:$0x1]
        %v474 = vperm.slane %v472, 0
        %vm476 = vcmask 1043456
        %vm477 = vcmask 31748
        %vm478 = vmor %vm477, %vm476
        %479 = vst.msk [vmem:[#allocation2] sm:$0xff] %vm478, 0
        %480 = vst.msk [vmem:[#allocation2 + $0x8] sm:$0xff] %vm478, 0
        %481 = vst.msk [vmem:[#allocation2 + $0x10] sm:$0xff] %vm478, 0
        %482 = vst.msk [vmem:[#allocation2 + $0x18] sm:$0xff] %vm478, 0
        %v483 = vld [vmem:[%s3] sm:$0xf]
        %v484 = vld [vmem:[%s3 + $0x4] sm:$0xf]
        %v485 = vld [vmem:[%s3 + $0x8] sm:$0xf]
        %v486 = vld [vmem:[%s3 + $0xc] sm:$0xf]
        %v487 = vpack.c.bf16 %v471, %v471
        %v488 = vld [vmem:[%s4] sm:$0xff]
        %v489 = vld [vmem:[%s4 + $0x8] sm:$0xff]
        %v490 = vld [vmem:[%s4 + $0x10] sm:$0xff]
        %v491 = vld [vmem:[%s4 + $0x18] sm:$0xff]
        %493 = vset.pattern.permute.xlu0 0
        %494 = vperm.xlu0 %493, %v488
        %v495 = vpop.permute.xlu0 %494
        %498 = vset.pattern.permute.xlu0 0
        %499 = vperm.xlu0 %498, %v489
        %v500 = vpop.permute.xlu0 %499
        %503 = vset.pattern.permute.xlu0 0
        %504 = vperm.xlu0 %503, %v490
        %v505 = vpop.permute.xlu0 %504
        %508 = vset.pattern.permute.xlu0 0
        %509 = vperm.xlu0 %508, %v491
        %v510 = vpop.permute.xlu0 %509
        %v516 = vunpack.c.l.b16 %v483
        %v517 = vunpack.c.l.b16 %v484
        %v518 = vunpack.c.l.b16 %v485
        %v519 = vunpack.c.l.b16 %v486
        %v520 = vpack.c.b16 %v517, %v516
        %v521 = vpack.c.b16 %v519, %v518
        %vm522 = vcmask 64512
        %v524 = vsel %vm522, %v520, 0
        %v527 = vsel %vm522, %v521, 0
        %v530 = vsel %vm476, %v487, 0
        %532 = vmatpush.bf16.msra.mxu0 0
        %533 = vmatpush.bf16.msra.mxu0 0
        %534 = vmatpush.bf16.msra.mxu0 0
        %535 = vmatpush.bf16.msra.mxu0 0
        %536 = vmatpush.bf16.msra.mxu0 0
        %537 = vmatpush.bf16.msra.mxu0 0
        %538 = vmatpush.bf16.msra.mxu0 0
        %539 = vmatpush.bf16.msra.mxu0 %v530
        %540 = vmatmul.bf16.gmra.mxu0 %v524
        %v541 = vpop.f32.mrf.mxu0
        %v542 = vadd.f32 %v495, %v541
        %v543 = vpop.f32.mrf.mxu0
        %v544 = vadd.f32 %v500, %v543
        %545 = vmatmul.bf16.gmra.mxu0 %v527
        %v546 = vpop.f32.mrf.mxu0
        %v547 = vadd.f32 %v505, %v546
        %v548 = vpop.f32.mrf.mxu0
        %v549 = vadd.f32 %v510, %v548
        %550 = vdwg.mxu0
        %v551 = vmul.f32 %v542, %v474
        %v552 = vmul.f32 %v544, %v474
        %v553 = vmul.f32 %v547, %v474
        %v554 = vmul.f32 %v549, %v474
        %v555 = vpack.c.bf16 %v551, %v551
        %v556 = vpack.c.bf16 %v552, %v552
        %v557 = vpack.c.bf16 %v553, %v553
        %v558 = vpack.c.bf16 %v554, %v554
        %563 = vrot.lane.b32.xlu0 %v555, 2
        %v564 = vpop.permute.xlu0 %563
        %565 = vrot.lane.b32.xlu0 %v556, 2
        %v566 = vpop.permute.xlu0 %565
        %567 = vrot.lane.b32.xlu0 %v557, 2
        %v568 = vpop.permute.xlu0 %567
        %569 = vrot.lane.b32.xlu0 %v558, 2
        %v570 = vpop.permute.xlu0 %569
        %v571 = vrot.slane %v564, 4
        %v572 = vrot.slane %v566, 4
        %v573 = vrot.slane %v568, 4
        %v574 = vrot.slane %v570, 4
        %vm575 = vcmask 15360
        %v576 = vsel %vm575, %v571, %v564
        %v577 = vsel %vm575, %v572, %v566
        %v578 = vsel %vm575, %v573, %v568
        %v579 = vsel %vm575, %v574, %v570
        %vm584 = vcmask 1043472
        %vm585 = vcmask 15364
        %vm586 = vmor %vm585, %vm584
        %587 = vst.msk [vmem:[#allocation2] sm:$0xff] %vm586, %v576
        %588 = vst.msk [vmem:[#allocation2 + $0x8] sm:$0xff] %vm586, %v577
        %589 = vst.msk [vmem:[#allocation2 + $0x10] sm:$0xff] %vm586, %v578
        %590 = vst.msk [vmem:[#allocation2 + $0x18] sm:$0xff] %vm586, %v579
        %v591 = vld [vmem:[#allocation2] sm:$0xf]
        %v592 = vld [vmem:[#allocation2 + $0x8] sm:$0xf]
        %v593 = vld [vmem:[#allocation2 + $0x10] sm:$0xf]
        %v594 = vld [vmem:[#allocation2 + $0x18] sm:$0xf]
        %v595 = vld [vmem:[#allocation2] sm:$0xff]
        %v596 = vld [vmem:[#allocation2 + $0x8] sm:$0xff]
        %v597 = vld [vmem:[#allocation2 + $0x10] sm:$0xff]
        %v598 = vld [vmem:[#allocation2 + $0x18] sm:$0xff]
        %v603 = vunpack.c.l.b16 %v591
        %v604 = vunpack.c.l.b16 %v592
        %v605 = vunpack.c.l.b16 %v593
        %v606 = vunpack.c.l.b16 %v594
        %v607 = vpack.c.b16 %v604, %v603
        %v608 = vpack.c.b16 %v606, %v605
        %v615 = vunpack.c.l.b16 %v595
        %v616 = vunpack.c.h.b16 %v595
        %v617 = vunpack.c.l.b16 %v596
        %v618 = vunpack.c.h.b16 %v596
        %v619 = vunpack.c.l.b16 %v597
        %v620 = vunpack.c.h.b16 %v597
        %v621 = vunpack.c.l.b16 %v598
        %v622 = vunpack.c.h.b16 %v598
        %v623 = vpack.c.b16 %v617, %v615
        %v624 = vpack.c.b16 %v618, %v616
        %v625 = vpack.c.b16 %v621, %v619
        %v626 = vpack.c.b16 %v622, %v620
        %627 = vrot.lane.b32.xlu0 %v623, 127
        %v628 = vpop.permute.xlu0 %627
        %629 = vrot.lane.b32.xlu0 %v624, 127
        %v630 = vpop.permute.xlu0 %629
        %631 = vrot.lane.b32.xlu0 %v625, 127
        %v632 = vpop.permute.xlu0 %631
        %633 = vrot.lane.b32.xlu0 %v626, 127
        %v634 = vpop.permute.xlu0 %633
        %vm635 = vcmask 1039360
        %v636 = vsel %vm635, %v628, %v630
        %v637 = vsel %vm635, %v632, %v634
        %640 = vrot.lane.b32.xlu0 %v623, 126
        %v641 = vpop.permute.xlu0 %640
        %642 = vrot.lane.b32.xlu0 %v624, 126
        %v643 = vpop.permute.xlu0 %642
        %644 = vrot.lane.b32.xlu0 %v625, 126
        %v645 = vpop.permute.xlu0 %644
        %646 = vrot.lane.b32.xlu0 %v626, 126
        %v647 = vpop.permute.xlu0 %646
        %vm648 = vcmask 1031168
        %v649 = vsel %vm648, %v641, %v643
        %v650 = vsel %vm648, %v645, %v647
        %653 = vrot.lane.b32.xlu0 %v623, 125
        %v654 = vpop.permute.xlu0 %653
        %655 = vrot.lane.b32.xlu0 %v624, 125
        %v656 = vpop.permute.xlu0 %655
        %657 = vrot.lane.b32.xlu0 %v625, 125
        %v658 = vpop.permute.xlu0 %657
        %659 = vrot.lane.b32.xlu0 %v626, 125
        %v660 = vpop.permute.xlu0 %659
        %vm661 = vcmask 1022976
        %v662 = vsel %vm661, %v654, %v656
        %v663 = vsel %vm661, %v658, %v660
        %666 = vrot.lane.b32.xlu0 %v623, 124
        %v667 = vpop.permute.xlu0 %666
        %668 = vrot.lane.b32.xlu0 %v624, 124
        %v669 = vpop.permute.xlu0 %668
        %670 = vrot.lane.b32.xlu0 %v625, 124
        %v671 = vpop.permute.xlu0 %670
        %672 = vrot.lane.b32.xlu0 %v626, 124
        %v673 = vpop.permute.xlu0 %672
        %vm674 = vcmask 1014784
        %v675 = vsel %vm674, %v667, %v669
        %v676 = vsel %vm674, %v671, %v673
        %v679 = vld [vmem:[%s5] sm:$0xff]
        %v680 = vld [vmem:[%s5 + $0x8] sm:$0xff]
        %v681 = vld [vmem:[%s5 + $0x10] sm:$0xff]
        %v682 = vld [vmem:[%s5 + $0x18] sm:$0xff]
        %v683 = vld [vmem:[%s5 + $0x20] sm:$0xff]
        %v684 = vld [vmem:[%s5 + $0x28] sm:$0xff]
        %v685 = vld [vmem:[%s5 + $0x30] sm:$0xff]
        %v686 = vld [vmem:[%s5 + $0x38] sm:$0xff]
        %v687 = vld [vmem:[%s469] sm:$0xff]
        %v688 = vld [vmem:[%s469 + $0x8] sm:$0xff]
        %v689 = vld [vmem:[%s469 + $0x10] sm:$0xff]
        %v690 = vld [vmem:[%s469 + $0x18] sm:$0xff]
        %v691 = vld [vmem:[%s469 + $0x20] sm:$0xff]
        %v692 = vld [vmem:[%s469 + $0x28] sm:$0xff]
        %v693 = vld [vmem:[%s469 + $0x30] sm:$0xff]
        %v694 = vld [vmem:[%s469 + $0x38] sm:$0xff]
        %696 = vset.pattern.permute.xlu0 0
        %697 = vperm.xlu0 %696, %v687
        %v698 = vpop.permute.xlu0 %697
        %701 = vset.pattern.permute.xlu0 0
        %702 = vperm.xlu0 %701, %v688
        %v703 = vpop.permute.xlu0 %702
        %706 = vset.pattern.permute.xlu0 0
        %707 = vperm.xlu0 %706, %v689
        %v708 = vpop.permute.xlu0 %707
        %711 = vset.pattern.permute.xlu0 0
        %712 = vperm.xlu0 %711, %v690
        %v713 = vpop.permute.xlu0 %712
        %716 = vset.pattern.permute.xlu0 0
        %717 = vperm.xlu0 %716, %v691
        %v718 = vpop.permute.xlu0 %717
        %721 = vset.pattern.permute.xlu0 0
        %722 = vperm.xlu0 %721, %v692
        %v723 = vpop.permute.xlu0 %722
        %726 = vset.pattern.permute.xlu0 0
        %727 = vperm.xlu0 %726, %v693
        %v728 = vpop.permute.xlu0 %727
        %731 = vset.pattern.permute.xlu0 0
        %732 = vperm.xlu0 %731, %v694
        %v733 = vpop.permute.xlu0 %732
        %v743 = vunpack.c.l.b16 %v679
        %v744 = vunpack.c.h.b16 %v679
        %v745 = vunpack.c.l.b16 %v680
        %v746 = vunpack.c.h.b16 %v680
        %v747 = vunpack.c.l.b16 %v681
        %v748 = vunpack.c.h.b16 %v681
        %v749 = vunpack.c.l.b16 %v682
        %v750 = vunpack.c.h.b16 %v682
        %v751 = vunpack.c.l.b16 %v683
        %v752 = vunpack.c.h.b16 %v683
        %v753 = vunpack.c.l.b16 %v684
        %v754 = vunpack.c.h.b16 %v684
        %v755 = vunpack.c.l.b16 %v685
        %v756 = vunpack.c.h.b16 %v685
        %v757 = vunpack.c.l.b16 %v686
        %v758 = vunpack.c.h.b16 %v686
        %v759 = vpack.c.b16 %v745, %v743
        %v760 = vpack.c.b16 %v746, %v744
        %v761 = vpack.c.b16 %v749, %v747
        %v762 = vpack.c.b16 %v750, %v748
        %v763 = vpack.c.b16 %v753, %v751
        %v764 = vpack.c.b16 %v754, %v752
        %v765 = vpack.c.b16 %v757, %v755
        %v766 = vpack.c.b16 %v758, %v756
        %vm771 = vcmask 261120
        %v773 = vsel %vm771, %v760, 0
        %v776 = vsel %vm771, %v762, 0
        %v779 = vsel %vm771, %v764, 0
        %v782 = vsel %vm771, %v766, 0
        %784 = vmatpush.bf16.msra.mxu0 %v663
        %785 = vmatpush.bf16.msra.mxu0 %v662
        %786 = vmatpush.bf16.msra.mxu0 %v650
        %787 = vmatpush.bf16.msra.mxu0 %v649
        %788 = vmatpush.bf16.msra.mxu0 %v637
        %789 = vmatpush.bf16.msra.mxu0 %v636
        %790 = vmatpush.bf16.msra.mxu0 %v608
        %791 = vmatpush.bf16.msra.mxu0 %v607
        %792 = vmatmul.bf16.gmra.mxu0 %v759
        %v793 = vpop.f32.mrf.mxu0
        %v794 = vadd.f32 %v698, %v793
        %v795 = vpop.f32.mrf.mxu0
        %v796 = vadd.f32 %v703, %v795
        %797 = vmatmul.bf16.gmra.mxu0 %v761
        %v798 = vpop.f32.mrf.mxu0
        %v799 = vadd.f32 %v708, %v798
        %v800 = vpop.f32.mrf.mxu0
        %v801 = vadd.f32 %v713, %v800
        %802 = vmatmul.bf16.gmra.mxu0 %v763
        %v803 = vpop.f32.mrf.mxu0
        %v804 = vadd.f32 %v718, %v803
        %v805 = vpop.f32.mrf.mxu0
        %v806 = vadd.f32 %v723, %v805
        %807 = vmatmul.bf16.gmra.mxu0 %v765
        %v808 = vpop.f32.mrf.mxu0
        %v809 = vadd.f32 %v728, %v808
        %v810 = vpop.f32.mrf.mxu0
        %v811 = vadd.f32 %v733, %v810
        %812 = vdwg.mxu0
        %813 = vmatpush.bf16.msra.mxu0 0
        %814 = vmatpush.bf16.msra.mxu0 0
        %815 = vmatpush.bf16.msra.mxu0 0
        %816 = vmatpush.bf16.msra.mxu0 0
        %817 = vmatpush.bf16.msra.mxu0 0
        %818 = vmatpush.bf16.msra.mxu0 0
        %819 = vmatpush.bf16.msra.mxu0 %v676
        %820 = vmatpush.bf16.msra.mxu0 %v675
        %821 = vmatmul.bf16.gmra.mxu0 %v773
        %v822 = vpop.f32.mrf.mxu0
        %v823 = vadd.f32 %v794, %v822
        %v824 = vpop.f32.mrf.mxu0
        %v825 = vadd.f32 %v796, %v824
        %826 = vmatmul.bf16.gmra.mxu0 %v776
        %v827 = vpop.f32.mrf.mxu0
        %v828 = vadd.f32 %v799, %v827
        %v829 = vpop.f32.mrf.mxu0
        %v830 = vadd.f32 %v801, %v829
        %831 = vmatmul.bf16.gmra.mxu0 %v779
        %v832 = vpop.f32.mrf.mxu0
        %v833 = vadd.f32 %v804, %v832
        %v834 = vpop.f32.mrf.mxu0
        %v835 = vadd.f32 %v806, %v834
        %836 = vmatmul.bf16.gmra.mxu0 %v782
        %v837 = vpop.f32.mrf.mxu0
        %v838 = vadd.f32 %v809, %v837
        %v839 = vpop.f32.mrf.mxu0
        %v840 = vadd.f32 %v811, %v839
        %841 = vdwg.mxu0
        %v842 = vtanh.pop %v823
        %v843 = vtanh.pop %v825
        %v844 = vtanh.pop %v828
        %v845 = vtanh.pop %v830
        %v846 = vtanh.pop %v833
        %v847 = vtanh.pop %v835
        %v848 = vtanh.pop %v838
        %v849 = vtanh.pop %v840
        %v850 = vmul.f32 %v846, 0.5
        %v851 = vmul.f32 %v847, 0.5
        %v852 = vmul.f32 %v848, 0.5
        %v853 = vmul.f32 %v849, 0.5
        %v854 = vadd.f32 %v850, 0.5
        %v855 = vadd.f32 %v851, 0.5
        %v856 = vadd.f32 %v852, 0.5
        %v857 = vadd.f32 %v853, 0.5
        %v858 = vmul.f32 %v842, %v854
        %v859 = vmul.f32 %v843, %v855
        %v860 = vmul.f32 %v844, %v856
        %v861 = vmul.f32 %v845, %v857
        %v862 = vpack.c.bf16 %v859, %v858
        %v863 = vpack.c.bf16 %v861, %v860
        %v864 = vld [vmem:[%s6] sm:$0xf]
        %v865 = vld [vmem:[%s6 + $0x4] sm:$0xf]
        %v866 = vld [vmem:[%s6 + $0x8] sm:$0xf]
        %v867 = vld [vmem:[%s6 + $0xc] sm:$0xf]
        %v868 = vld [vmem:[%s6 + $0x10] sm:$0xf]
        %v869 = vld [vmem:[%s6 + $0x14] sm:$0xf]
        %v870 = vld [vmem:[%s6 + $0x18] sm:$0xf]
        %v871 = vld [vmem:[%s6 + $0x1c] sm:$0xf]
        %v872 = vld [vmem:[%s7] sm:$0xff]
        %v873 = vld [vmem:[%s7 + $0x8] sm:$0xff]
        %v874 = vld [vmem:[%s7 + $0x10] sm:$0xff]
        %v875 = vld [vmem:[%s7 + $0x18] sm:$0xff]
        %v876 = vld [vmem:[%s7 + $0x20] sm:$0xff]
        %v877 = vld [vmem:[%s7 + $0x28] sm:$0xff]
        %v878 = vld [vmem:[%s7 + $0x30] sm:$0xff]
        %v879 = vld [vmem:[%s7 + $0x38] sm:$0xff]
        %881 = vset.pattern.permute.xlu0 0
        %882 = vperm.xlu0 %881, %v872
        %v883 = vpop.permute.xlu0 %882
        %886 = vset.pattern.permute.xlu0 0
        %887 = vperm.xlu0 %886, %v873
        %v888 = vpop.permute.xlu0 %887
        %891 = vset.pattern.permute.xlu0 0
        %892 = vperm.xlu0 %891, %v874
        %v893 = vpop.permute.xlu0 %892
        %896 = vset.pattern.permute.xlu0 0
        %897 = vperm.xlu0 %896, %v875
        %v898 = vpop.permute.xlu0 %897
        %901 = vset.pattern.permute.xlu0 0
        %902 = vperm.xlu0 %901, %v876
        %v903 = vpop.permute.xlu0 %902
        %906 = vset.pattern.permute.xlu0 0
        %907 = vperm.xlu0 %906, %v877
        %v908 = vpop.permute.xlu0 %907
        %911 = vset.pattern.permute.xlu0 0
        %912 = vperm.xlu0 %911, %v878
        %v913 = vpop.permute.xlu0 %912
        %916 = vset.pattern.permute.xlu0 0
        %917 = vperm.xlu0 %916, %v879
        %v918 = vpop.permute.xlu0 %917
        %v928 = vunpack.c.l.b16 %v864
        %v929 = vunpack.c.l.b16 %v865
        %v930 = vunpack.c.l.b16 %v866
        %v931 = vunpack.c.l.b16 %v867
        %v932 = vunpack.c.l.b16 %v868
        %v933 = vunpack.c.l.b16 %v869
        %v934 = vunpack.c.l.b16 %v870
        %v935 = vunpack.c.l.b16 %v871
        %v936 = vpack.c.b16 %v929, %v928
        %v937 = vpack.c.b16 %v931, %v930
        %v938 = vpack.c.b16 %v933, %v932
        %v939 = vpack.c.b16 %v935, %v934
        %v941 = vsel %vm771, %v936, 0
        %v944 = vsel %vm771, %v937, 0
        %v947 = vsel %vm771, %v938, 0
        %v950 = vsel %vm771, %v939, 0
        %952 = vmatpush.bf16.msra.mxu0 0
        %953 = vmatpush.bf16.msra.mxu0 0
        %954 = vmatpush.bf16.msra.mxu0 0
        %955 = vmatpush.bf16.msra.mxu0 0
        %956 = vmatpush.bf16.msra.mxu0 0
        %957 = vmatpush.bf16.msra.mxu0 0
        %958 = vmatpush.bf16.msra.mxu0 %v863
        %959 = vmatpush.bf16.msra.mxu0 %v862
        %960 = vmatmul.bf16.gmra.mxu0 %v941
        %v961 = vpop.f32.mrf.mxu0
        %v962 = vadd.f32 %v883, %v961
        %v963 = vpop.f32.mrf.mxu0
        %v964 = vadd.f32 %v888, %v963
        %965 = vmatmul.bf16.gmra.mxu0 %v944
        %v966 = vpop.f32.mrf.mxu0
        %v967 = vadd.f32 %v893, %v966
        %v968 = vpop.f32.mrf.mxu0
        %v969 = vadd.f32 %v898, %v968
        %970 = vmatmul.bf16.gmra.mxu0 %v947
        %v971 = vpop.f32.mrf.mxu0
        %v972 = vadd.f32 %v903, %v971
        %v973 = vpop.f32.mrf.mxu0
        %v974 = vadd.f32 %v908, %v973
        %975 = vmatmul.bf16.gmra.mxu0 %v950
        %v976 = vpop.f32.mrf.mxu0
        %v977 = vadd.f32 %v913, %v976
        %v978 = vpop.f32.mrf.mxu0
        %v979 = vadd.f32 %v918, %v978
        %980 = vdwg.mxu0
        %v981 = vadd.f32 %v551, %v962
        %v982 = vadd.f32 %v552, %v964
        %v983 = vadd.f32 %v553, %v967
        %v984 = vadd.f32 %v554, %v969
        %v985 = vmul.f32 %v981, %v474
        %v986 = vmul.f32 %v982, %v474
        %v987 = vmul.f32 %v983, %v474
        %v988 = vmul.f32 %v984, %v474
        %v989 = vpack.c.bf16 %v985, %v985
        %v990 = vpack.c.bf16 %v986, %v986
        %v991 = vpack.c.bf16 %v987, %v987
        %v992 = vpack.c.bf16 %v988, %v988
        %997 = vrot.lane.b32.xlu0 %v989, 2
        %v998 = vpop.permute.xlu0 %997
        %999 = vrot.lane.b32.xlu0 %v990, 2
        %v1000 = vpop.permute.xlu0 %999
        %1001 = vrot.lane.b32.xlu0 %v991, 2
        %v1002 = vpop.permute.xlu0 %1001
        %1003 = vrot.lane.b32.xlu0 %v992, 2
        %v1004 = vpop.permute.xlu0 %1003
        %v1005 = vrot.slane %v998, 4
        %v1006 = vrot.slane %v1000, 4
        %v1007 = vrot.slane %v1002, 4
        %v1008 = vrot.slane %v1004, 4
        %v1009 = vsel %vm575, %v1005, %v998
        %v1010 = vsel %vm575, %v1006, %v1000
        %v1011 = vsel %vm575, %v1007, %v1002
        %v1012 = vsel %vm575, %v1008, %v1004
        %1017 = vst.msk [vmem:[#allocation2] sm:$0xff] %vm586, %v1009
        %1018 = vst.msk [vmem:[#allocation2 + $0x8] sm:$0xff] %vm586, %v1010
        %1019 = vst.msk [vmem:[#allocation2 + $0x10] sm:$0xff] %vm586, %v1011
        %1020 = vst.msk [vmem:[#allocation2 + $0x18] sm:$0xff] %vm586, %v1012
        %v1021 = vld [vmem:[#allocation2] sm:$0xf]
        %v1022 = vld [vmem:[#allocation2 + $0x8] sm:$0xf]
        %v1023 = vld [vmem:[#allocation2 + $0x10] sm:$0xf]
        %v1024 = vld [vmem:[#allocation2 + $0x18] sm:$0xf]
        %v1025 = vld [vmem:[#allocation2] sm:$0xff]
        %v1026 = vld [vmem:[#allocation2 + $0x8] sm:$0xff]
        %v1027 = vld [vmem:[#allocation2 + $0x10] sm:$0xff]
        %v1028 = vld [vmem:[#allocation2 + $0x18] sm:$0xff]
        %v1033 = vunpack.c.l.b16 %v1021
        %v1034 = vunpack.c.l.b16 %v1022
        %v1035 = vunpack.c.l.b16 %v1023
        %v1036 = vunpack.c.l.b16 %v1024
        %v1037 = vpack.c.b16 %v1034, %v1033
        %v1038 = vpack.c.b16 %v1036, %v1035
        %v1045 = vunpack.c.l.b16 %v1025
        %v1046 = vunpack.c.h.b16 %v1025
        %v1047 = vunpack.c.l.b16 %v1026
        %v1048 = vunpack.c.h.b16 %v1026
        %v1049 = vunpack.c.l.b16 %v1027
        %v1050 = vunpack.c.h.b16 %v1027
        %v1051 = vunpack.c.l.b16 %v1028
        %v1052 = vunpack.c.h.b16 %v1028
        %v1053 = vpack.c.b16 %v1047, %v1045
        %v1054 = vpack.c.b16 %v1048, %v1046
        %v1055 = vpack.c.b16 %v1051, %v1049
        %v1056 = vpack.c.b16 %v1052, %v1050
        %1057 = vrot.lane.b32.xlu0 %v1053, 127
        %v1058 = vpop.permute.xlu0 %1057
        %1059 = vrot.lane.b32.xlu0 %v1054, 127
        %v1060 = vpop.permute.xlu0 %1059
        %1061 = vrot.lane.b32.xlu0 %v1055, 127
        %v1062 = vpop.permute.xlu0 %1061
        %1063 = vrot.lane.b32.xlu0 %v1056, 127
        %v1064 = vpop.permute.xlu0 %1063
        %v1065 = vsel %vm635, %v1058, %v1060
        %v1066 = vsel %vm635, %v1062, %v1064
        %1069 = vrot.lane.b32.xlu0 %v1053, 126
        %v1070 = vpop.permute.xlu0 %1069
        %1071 = vrot.lane.b32.xlu0 %v1054, 126
        %v1072 = vpop.permute.xlu0 %1071
        %1073 = vrot.lane.b32.xlu0 %v1055, 126
        %v1074 = vpop.permute.xlu0 %1073
        %1075 = vrot.lane.b32.xlu0 %v1056, 126
        %v1076 = vpop.permute.xlu0 %1075
        %v1077 = vsel %vm648, %v1070, %v1072
        %v1078 = vsel %vm648, %v1074, %v1076
        %1081 = vrot.lane.b32.xlu0 %v1053, 125
        %v1082 = vpop.permute.xlu0 %1081
        %1083 = vrot.lane.b32.xlu0 %v1054, 125
        %v1084 = vpop.permute.xlu0 %1083
        %1085 = vrot.lane.b32.xlu0 %v1055, 125
        %v1086 = vpop.permute.xlu0 %1085
        %1087 = vrot.lane.b32.xlu0 %v1056, 125
        %v1088 = vpop.permute.xlu0 %1087
        %v1089 = vsel %vm661, %v1082, %v1084
        %v1090 = vsel %vm661, %v1086, %v1088
        %1093 = vrot.lane.b32.xlu0 %v1053, 124
        %v1094 = vpop.permute.xlu0 %1093
        %1095 = vrot.lane.b32.xlu0 %v1054, 124
        %v1096 = vpop.permute.xlu0 %1095
        %1097 = vrot.lane.b32.xlu0 %v1055, 124
        %v1098 = vpop.permute.xlu0 %1097
        %1099 = vrot.lane.b32.xlu0 %v1056, 124
        %v1100 = vpop.permute.xlu0 %1099
        %v1101 = vsel %vm674, %v1094, %v1096
        %v1102 = vsel %vm674, %v1098, %v1100
        %s1105 = scalar_lea.vmem %s5, 64
        %v1106 = vld [vmem:[%s1105] sm:$0xff]
        %v1107 = vld [vmem:[%s1105 + $0x8] sm:$0xff]
        %v1108 = vld [vmem:[%s1105 + $0x10] sm:$0xff]
        %v1109 = vld [vmem:[%s1105 + $0x18] sm:$0xff]
        %v1110 = vld [vmem:[%s1105 + $0x20] sm:$0xff]
        %v1111 = vld [vmem:[%s1105 + $0x28] sm:$0xff]
        %v1112 = vld [vmem:[%s1105 + $0x30] sm:$0xff]
        %v1113 = vld [vmem:[%s1105 + $0x38] sm:$0xff]
        %s1114 = scalar_lea.vmem %s469, 64
        %v1115 = vld [vmem:[%s1114] sm:$0xff]
        %v1116 = vld [vmem:[%s1114 + $0x8] sm:$0xff]
        %v1117 = vld [vmem:[%s1114 + $0x10] sm:$0xff]
        %v1118 = vld [vmem:[%s1114 + $0x18] sm:$0xff]
        %v1119 = vld [vmem:[%s1114 + $0x20] sm:$0xff]
        %v1120 = vld [vmem:[%s1114 + $0x28] sm:$0xff]
        %v1121 = vld [vmem:[%s1114 + $0x30] sm:$0xff]
        %v1122 = vld [vmem:[%s1114 + $0x38] sm:$0xff]
        %1124 = vset.pattern.permute.xlu0 0
        %1125 = vperm.xlu0 %1124, %v1115
        %v1126 = vpop.permute.xlu0 %1125
        %1129 = vset.pattern.permute.xlu0 0
        %1130 = vperm.xlu0 %1129, %v1116
        %v1131 = vpop.permute.xlu0 %1130
        %1134 = vset.pattern.permute.xlu0 0
        %1135 = vperm.xlu0 %1134, %v1117
        %v1136 = vpop.permute.xlu0 %1135
        %1139 = vset.pattern.permute.xlu0 0
        %1140 = vperm.xlu0 %1139, %v1118
        %v1141 = vpop.permute.xlu0 %1140
        %1144 = vset.pattern.permute.xlu0 0
        %1145 = vperm.xlu0 %1144, %v1119
        %v1146 = vpop.permute.xlu0 %1145
        %1149 = vset.pattern.permute.xlu0 0
        %1150 = vperm.xlu0 %1149, %v1120
        %v1151 = vpop.permute.xlu0 %1150
        %1154 = vset.pattern.permute.xlu0 0
        %1155 = vperm.xlu0 %1154, %v1121
        %v1156 = vpop.permute.xlu0 %1155
        %1159 = vset.pattern.permute.xlu0 0
        %1160 = vperm.xlu0 %1159, %v1122
        %v1161 = vpop.permute.xlu0 %1160
        %v1171 = vunpack.c.l.b16 %v1106
        %v1172 = vunpack.c.h.b16 %v1106
        %v1173 = vunpack.c.l.b16 %v1107
        %v1174 = vunpack.c.h.b16 %v1107
        %v1175 = vunpack.c.l.b16 %v1108
        %v1176 = vunpack.c.h.b16 %v1108
        %v1177 = vunpack.c.l.b16 %v1109
        %v1178 = vunpack.c.h.b16 %v1109
        %v1179 = vunpack.c.l.b16 %v1110
        %v1180 = vunpack.c.h.b16 %v1110
        %v1181 = vunpack.c.l.b16 %v1111
        %v1182 = vunpack.c.h.b16 %v1111
        %v1183 = vunpack.c.l.b16 %v1112
        %v1184 = vunpack.c.h.b16 %v1112
        %v1185 = vunpack.c.l.b16 %v1113
        %v1186 = vunpack.c.h.b16 %v1113
        %v1187 = vpack.c.b16 %v1173, %v1171
        %v1188 = vpack.c.b16 %v1174, %v1172
        %v1189 = vpack.c.b16 %v1177, %v1175
        %v1190 = vpack.c.b16 %v1178, %v1176
        %v1191 = vpack.c.b16 %v1181, %v1179
        %v1192 = vpack.c.b16 %v1182, %v1180
        %v1193 = vpack.c.b16 %v1185, %v1183
        %v1194 = vpack.c.b16 %v1186, %v1184
        %v1200 = vsel %vm771, %v1188, 0
        %v1203 = vsel %vm771, %v1190, 0
        %v1206 = vsel %vm771, %v1192, 0
        %v1209 = vsel %vm771, %v1194, 0
        %1211 = vmatpush.bf16.msra.mxu0 %v1090
        %1212 = vmatpush.bf16.msra.mxu0 %v1089
        %1213 = vmatpush.bf16.msra.mxu0 %v1078
        %1214 = vmatpush.bf16.msra.mxu0 %v1077
        %1215 = vmatpush.bf16.msra.mxu0 %v1066
        %1216 = vmatpush.bf16.msra.mxu0 %v1065
        %1217 = vmatpush.bf16.msra.mxu0 %v1038
        %1218 = vmatpush.bf16.msra.mxu0 %v1037
        %1219 = vmatmul.bf16.gmra.mxu0 %v1187
        %v1220 = vpop.f32.mrf.mxu0
        %v1221 = vadd.f32 %v1126, %v1220
        %v1222 = vpop.f32.mrf.mxu0
        %v1223 = vadd.f32 %v1131, %v1222
        %1224 = vmatmul.bf16.gmra.mxu0 %v1189
        %v1225 = vpop.f32.mrf.mxu0
        %v1226 = vadd.f32 %v1136, %v1225
        %v1227 = vpop.f32.mrf.mxu0
        %v1228 = vadd.f32 %v1141, %v1227
        %1229 = vmatmul.bf16.gmra.mxu0 %v1191
        %v1230 = vpop.f32.mrf.mxu0
        %v1231 = vadd.f32 %v1146, %v1230
        %v1232 = vpop.f32.mrf.mxu0
        %v1233 = vadd.f32 %v1151, %v1232
        %1234 = vmatmul.bf16.gmra.mxu0 %v1193
        %v1235 = vpop.f32.mrf.mxu0
        %v1236 = vadd.f32 %v1156, %v1235
        %v1237 = vpop.f32.mrf.mxu0
        %v1238 = vadd.f32 %v1161, %v1237
        %1239 = vdwg.mxu0
        %1240 = vmatpush.bf16.msra.mxu0 0
        %1241 = vmatpush.bf16.msra.mxu0 0
        %1242 = vmatpush.bf16.msra.mxu0 0
        %1243 = vmatpush.bf16.msra.mxu0 0
        %1244 = vmatpush.bf16.msra.mxu0 0
        %1245 = vmatpush.bf16.msra.mxu0 0
        %1246 = vmatpush.bf16.msra.mxu0 %v1102
        %1247 = vmatpush.bf16.msra.mxu0 %v1101
        %1248 = vmatmul.bf16.gmra.mxu0 %v1200
        %v1249 = vpop.f32.mrf.mxu0
        %v1250 = vadd.f32 %v1221, %v1249
        %v1251 = vpop.f32.mrf.mxu0
        %v1252 = vadd.f32 %v1223, %v1251
        %1253 = vmatmul.bf16.gmra.mxu0 %v1203
        %v1254 = vpop.f32.mrf.mxu0
        %v1255 = vadd.f32 %v1226, %v1254
        %v1256 = vpop.f32.mrf.mxu0
        %v1257 = vadd.f32 %v1228, %v1256
        %1258 = vmatmul.bf16.gmra.mxu0 %v1206
        %v1259 = vpop.f32.mrf.mxu0
        %v1260 = vadd.f32 %v1231, %v1259
        %v1261 = vpop.f32.mrf.mxu0
        %v1262 = vadd.f32 %v1233, %v1261
        %1263 = vmatmul.bf16.gmra.mxu0 %v1209
        %v1264 = vpop.f32.mrf.mxu0
        %v1265 = vadd.f32 %v1236, %v1264
        %v1266 = vpop.f32.mrf.mxu0
        %v1267 = vadd.f32 %v1238, %v1266
        %1268 = vdwg.mxu0
        %v1269 = vtanh.pop %v1250
        %v1270 = vtanh.pop %v1252
        %v1271 = vtanh.pop %v1255
        %v1272 = vtanh.pop %v1257
        %v1273 = vtanh.pop %v1260
        %v1274 = vtanh.pop %v1262
        %v1275 = vtanh.pop %v1265
        %v1276 = vtanh.pop %v1267
        %v1277 = vmul.f32 %v1273, 0.5
        %v1278 = vmul.f32 %v1274, 0.5
        %v1279 = vmul.f32 %v1275, 0.5
        %v1280 = vmul.f32 %v1276, 0.5
        %v1281 = vadd.f32 %v1277, 0.5
        %v1282 = vadd.f32 %v1278, 0.5
        %v1283 = vadd.f32 %v1279, 0.5
        %v1284 = vadd.f32 %v1280, 0.5
        %v1285 = vmul.f32 %v1269, %v1281
        %v1286 = vmul.f32 %v1270, %v1282
        %v1287 = vmul.f32 %v1271, %v1283
        %v1288 = vmul.f32 %v1272, %v1284
        %v1289 = vpack.c.bf16 %v1286, %v1285
        %v1290 = vpack.c.bf16 %v1288, %v1287
        %s1291 = scalar_lea.vmem %s6, 32
        %v1292 = vld [vmem:[%s1291] sm:$0xf]
        %v1293 = vld [vmem:[%s1291 + $0x4] sm:$0xf]
        %v1294 = vld [vmem:[%s1291 + $0x8] sm:$0xf]
        %v1295 = vld [vmem:[%s1291 + $0xc] sm:$0xf]
        %v1296 = vld [vmem:[%s1291 + $0x10] sm:$0xf]
        %v1297 = vld [vmem:[%s1291 + $0x14] sm:$0xf]
        %v1298 = vld [vmem:[%s1291 + $0x18] sm:$0xf]
        %v1299 = vld [vmem:[%s1291 + $0x1c] sm:$0xf]
        %s1300 = scalar_lea.vmem %s7, 64
        %v1301 = vld [vmem:[%s1300] sm:$0xff]
        %v1302 = vld [vmem:[%s1300 + $0x8] sm:$0xff]
        %v1303 = vld [vmem:[%s1300 + $0x10] sm:$0xff]
        %v1304 = vld [vmem:[%s1300 + $0x18] sm:$0xff]
        %v1305 = vld [vmem:[%s1300 + $0x20] sm:$0xff]
        %v1306 = vld [vmem:[%s1300 + $0x28] sm:$0xff]
        %v1307 = vld [vmem:[%s1300 + $0x30] sm:$0xff]
        %v1308 = vld [vmem:[%s1300 + $0x38] sm:$0xff]
        %1310 = vset.pattern.permute.xlu0 0
        %1311 = vperm.xlu0 %1310, %v1301
        %v1312 = vpop.permute.xlu0 %1311
        %1315 = vset.pattern.permute.xlu0 0
        %1316 = vperm.xlu0 %1315, %v1302
        %v1317 = vpop.permute.xlu0 %1316
        %1320 = vset.pattern.permute.xlu0 0
        %1321 = vperm.xlu0 %1320, %v1303
        %v1322 = vpop.permute.xlu0 %1321
        %1325 = vset.pattern.permute.xlu0 0
        %1326 = vperm.xlu0 %1325, %v1304
        %v1327 = vpop.permute.xlu0 %1326
        %1330 = vset.pattern.permute.xlu0 0
        %1331 = vperm.xlu0 %1330, %v1305
        %v1332 = vpop.permute.xlu0 %1331
        %1335 = vset.pattern.permute.xlu0 0
        %1336 = vperm.xlu0 %1335, %v1306
        %v1337 = vpop.permute.xlu0 %1336
        %1340 = vset.pattern.permute.xlu0 0
        %1341 = vperm.xlu0 %1340, %v1307
        %v1342 = vpop.permute.xlu0 %1341
        %1345 = vset.pattern.permute.xlu0 0
        %1346 = vperm.xlu0 %1345, %v1308
        %v1347 = vpop.permute.xlu0 %1346
        %v1357 = vunpack.c.l.b16 %v1292
        %v1358 = vunpack.c.l.b16 %v1293
        %v1359 = vunpack.c.l.b16 %v1294
        %v1360 = vunpack.c.l.b16 %v1295
        %v1361 = vunpack.c.l.b16 %v1296
        %v1362 = vunpack.c.l.b16 %v1297
        %v1363 = vunpack.c.l.b16 %v1298
        %v1364 = vunpack.c.l.b16 %v1299
        %v1365 = vpack.c.b16 %v1358, %v1357
        %v1366 = vpack.c.b16 %v1360, %v1359
        %v1367 = vpack.c.b16 %v1362, %v1361
        %v1368 = vpack.c.b16 %v1364, %v1363
        %v1370 = vsel %vm771, %v1365, 0
        %v1373 = vsel %vm771, %v1366, 0
        %v1376 = vsel %vm771, %v1367, 0
        %v1379 = vsel %vm771, %v1368, 0
        %1381 = vmatpush.bf16.msra.mxu0 0
        %1382 = vmatpush.bf16.msra.mxu0 0
        %1383 = vmatpush.bf16.msra.mxu0 0
        %1384 = vmatpush.bf16.msra.mxu0 0
        %1385 = vmatpush.bf16.msra.mxu0 0
        %1386 = vmatpush.bf16.msra.mxu0 0
        %1387 = vmatpush.bf16.msra.mxu0 %v1290
        %1388 = vmatpush.bf16.msra.mxu0 %v1289
        %1389 = vmatmul.bf16.gmra.mxu0 %v1370
        %v1390 = vpop.f32.mrf.mxu0
        %v1391 = vadd.f32 %v1312, %v1390
        %v1392 = vpop.f32.mrf.mxu0
        %v1393 = vadd.f32 %v1317, %v1392
        %1394 = vmatmul.bf16.gmra.mxu0 %v1373
        %v1395 = vpop.f32.mrf.mxu0
        %v1396 = vadd.f32 %v1322, %v1395
        %v1397 = vpop.f32.mrf.mxu0
        %v1398 = vadd.f32 %v1327, %v1397
        %1399 = vmatmul.bf16.gmra.mxu0 %v1376
        %v1400 = vpop.f32.mrf.mxu0
        %v1401 = vadd.f32 %v1332, %v1400
        %v1402 = vpop.f32.mrf.mxu0
        %v1403 = vadd.f32 %v1337, %v1402
        %1404 = vmatmul.bf16.gmra.mxu0 %v1379
        %v1405 = vpop.f32.mrf.mxu0
        %v1406 = vadd.f32 %v1342, %v1405
        %v1407 = vpop.f32.mrf.mxu0
        %v1408 = vadd.f32 %v1347, %v1407
        %1409 = vdwg.mxu0
        %v1410 = vadd.f32 %v985, %v1391
        %v1411 = vadd.f32 %v986, %v1393
        %v1412 = vadd.f32 %v987, %v1396
        %v1413 = vadd.f32 %v988, %v1398
        %v1414 = vmul.f32 %v1410, %v474
        %v1415 = vmul.f32 %v1411, %v474
        %v1416 = vmul.f32 %v1412, %v474
        %v1417 = vmul.f32 %v1413, %v474
        %v1418 = vadd.f32 %v972, %v1401
        %v1419 = vadd.f32 %v974, %v1403
        %v1420 = vadd.f32 %v977, %v1406
        %v1421 = vadd.f32 %v979, %v1408
        %v1422 = vpack.c.bf16 %v1414, %v1414
        %v1423 = vpack.c.bf16 %v1415, %v1415
        %v1424 = vpack.c.bf16 %v1416, %v1416
        %v1425 = vpack.c.bf16 %v1417, %v1417
        %1430 = vrot.lane.b32.xlu0 %v1422, 2
        %v1431 = vpop.permute.xlu0 %1430
        %1432 = vrot.lane.b32.xlu0 %v1423, 2
        %v1433 = vpop.permute.xlu0 %1432
        %1434 = vrot.lane.b32.xlu0 %v1424, 2
        %v1435 = vpop.permute.xlu0 %1434
        %1436 = vrot.lane.b32.xlu0 %v1425, 2
        %v1437 = vpop.permute.xlu0 %1436
        %v1438 = vrot.slane %v1431, 4
        %v1439 = vrot.slane %v1433, 4
        %v1440 = vrot.slane %v1435, 4
        %v1441 = vrot.slane %v1437, 4
        %v1442 = vsel %vm575, %v1438, %v1431
        %v1443 = vsel %vm575, %v1439, %v1433
        %v1444 = vsel %vm575, %v1440, %v1435
        %v1445 = vsel %vm575, %v1441, %v1437
        %1450 = vst.msk [vmem:[#allocation2] sm:$0xff] %vm586, %v1442
        %1451 = vst.msk [vmem:[#allocation2 + $0x8] sm:$0xff] %vm586, %v1443
        %1452 = vst.msk [vmem:[#allocation2 + $0x10] sm:$0xff] %vm586, %v1444
        %1453 = vst.msk [vmem:[#allocation2 + $0x18] sm:$0xff] %vm586, %v1445
        %v1454 = vld [vmem:[#allocation2] sm:$0xf]
        %v1455 = vld [vmem:[#allocation2 + $0x8] sm:$0xf]
        %v1456 = vld [vmem:[#allocation2 + $0x10] sm:$0xf]
        %v1457 = vld [vmem:[#allocation2 + $0x18] sm:$0xf]
        %v1458 = vld [vmem:[#allocation2] sm:$0xff]
        %v1459 = vld [vmem:[#allocation2 + $0x8] sm:$0xff]
        %v1460 = vld [vmem:[#allocation2 + $0x10] sm:$0xff]
        %v1461 = vld [vmem:[#allocation2 + $0x18] sm:$0xff]
        %v1466 = vunpack.c.l.b16 %v1454
        %v1467 = vunpack.c.l.b16 %v1455
        %v1468 = vunpack.c.l.b16 %v1456
        %v1469 = vunpack.c.l.b16 %v1457
        %v1470 = vpack.c.b16 %v1467, %v1466
        %v1471 = vpack.c.b16 %v1469, %v1468
        %v1478 = vunpack.c.l.b16 %v1458
        %v1479 = vunpack.c.h.b16 %v1458
        %v1480 = vunpack.c.l.b16 %v1459
        %v1481 = vunpack.c.h.b16 %v1459
        %v1482 = vunpack.c.l.b16 %v1460
        %v1483 = vunpack.c.h.b16 %v1460
        %v1484 = vunpack.c.l.b16 %v1461
        %v1485 = vunpack.c.h.b16 %v1461
        %v1486 = vpack.c.b16 %v1480, %v1478
        %v1487 = vpack.c.b16 %v1481, %v1479
        %v1488 = vpack.c.b16 %v1484, %v1482
        %v1489 = vpack.c.b16 %v1485, %v1483
        %1490 = vrot.lane.b32.xlu0 %v1486, 127
        %v1491 = vpop.permute.xlu0 %1490
        %1492 = vrot.lane.b32.xlu0 %v1487, 127
        %v1493 = vpop.permute.xlu0 %1492
        %1494 = vrot.lane.b32.xlu0 %v1488, 127
        %v1495 = vpop.permute.xlu0 %1494
        %1496 = vrot.lane.b32.xlu0 %v1489, 127
        %v1497 = vpop.permute.xlu0 %1496
        %v1498 = vsel %vm635, %v1491, %v1493
        %v1499 = vsel %vm635, %v1495, %v1497
        %1502 = vrot.lane.b32.xlu0 %v1486, 126
        %v1503 = vpop.permute.xlu0 %1502
        %1504 = vrot.lane.b32.xlu0 %v1487, 126
        %v1505 = vpop.permute.xlu0 %1504
        %1506 = vrot.lane.b32.xlu0 %v1488, 126
        %v1507 = vpop.permute.xlu0 %1506
        %1508 = vrot.lane.b32.xlu0 %v1489, 126
        %v1509 = vpop.permute.xlu0 %1508
        %v1510 = vsel %vm648, %v1503, %v1505
        %v1511 = vsel %vm648, %v1507, %v1509
        %1514 = vrot.lane.b32.xlu0 %v1486, 125
        %v1515 = vpop.permute.xlu0 %1514
        %1516 = vrot.lane.b32.xlu0 %v1487, 125
        %v1517 = vpop.permute.xlu0 %1516
        %1518 = vrot.lane.b32.xlu0 %v1488, 125
        %v1519 = vpop.permute.xlu0 %1518
        %1520 = vrot.lane.b32.xlu0 %v1489, 125
        %v1521 = vpop.permute.xlu0 %1520
        %v1522 = vsel %vm661, %v1515, %v1517
        %v1523 = vsel %vm661, %v1519, %v1521
        %1526 = vrot.lane.b32.xlu0 %v1486, 124
        %v1527 = vpop.permute.xlu0 %1526
        %1528 = vrot.lane.b32.xlu0 %v1487, 124
        %v1529 = vpop.permute.xlu0 %1528
        %1530 = vrot.lane.b32.xlu0 %v1488, 124
        %v1531 = vpop.permute.xlu0 %1530
        %1532 = vrot.lane.b32.xlu0 %v1489, 124
        %v1533 = vpop.permute.xlu0 %1532
        %v1534 = vsel %vm674, %v1527, %v1529
        %v1535 = vsel %vm674, %v1531, %v1533
        %s1538 = scalar_lea.vmem %s5, 128
        %v1539 = vld [vmem:[%s1538] sm:$0xff]
        %v1540 = vld [vmem:[%s1538 + $0x8] sm:$0xff]
        %v1541 = vld [vmem:[%s1538 + $0x10] sm:$0xff]
        %v1542 = vld [vmem:[%s1538 + $0x18] sm:$0xff]
        %v1543 = vld [vmem:[%s1538 + $0x20] sm:$0xff]
        %v1544 = vld [vmem:[%s1538 + $0x28] sm:$0xff]
        %v1545 = vld [vmem:[%s1538 + $0x30] sm:$0xff]
        %v1546 = vld [vmem:[%s1538 + $0x38] sm:$0xff]
        %s1547 = scalar_lea.vmem %s469, 128
        %v1548 = vld [vmem:[%s1547] sm:$0xff]
        %v1549 = vld [vmem:[%s1547 + $0x8] sm:$0xff]
        %v1550 = vld [vmem:[%s1547 + $0x10] sm:$0xff]
        %v1551 = vld [vmem:[%s1547 + $0x18] sm:$0xff]
        %v1552 = vld [vmem:[%s1547 + $0x20] sm:$0xff]
        %v1553 = vld [vmem:[%s1547 + $0x28] sm:$0xff]
        %v1554 = vld [vmem:[%s1547 + $0x30] sm:$0xff]
        %v1555 = vld [vmem:[%s1547 + $0x38] sm:$0xff]
        %1557 = vset.pattern.permute.xlu0 0
        %1558 = vperm.xlu0 %1557, %v1548
        %v1559 = vpop.permute.xlu0 %1558
        %1562 = vset.pattern.permute.xlu0 0
        %1563 = vperm.xlu0 %1562, %v1549
        %v1564 = vpop.permute.xlu0 %1563
        %1567 = vset.pattern.permute.xlu0 0
        %1568 = vperm.xlu0 %1567, %v1550
        %v1569 = vpop.permute.xlu0 %1568
        %1572 = vset.pattern.permute.xlu0 0
        %1573 = vperm.xlu0 %1572, %v1551
        %v1574 = vpop.permute.xlu0 %1573
        %1577 = vset.pattern.permute.xlu0 0
        %1578 = vperm.xlu0 %1577, %v1552
        %v1579 = vpop.permute.xlu0 %1578
        %1582 = vset.pattern.permute.xlu0 0
        %1583 = vperm.xlu0 %1582, %v1553
        %v1584 = vpop.permute.xlu0 %1583
        %1587 = vset.pattern.permute.xlu0 0
        %1588 = vperm.xlu0 %1587, %v1554
        %v1589 = vpop.permute.xlu0 %1588
        %1592 = vset.pattern.permute.xlu0 0
        %1593 = vperm.xlu0 %1592, %v1555
        %v1594 = vpop.permute.xlu0 %1593
        %v1604 = vunpack.c.l.b16 %v1539
        %v1605 = vunpack.c.h.b16 %v1539
        %v1606 = vunpack.c.l.b16 %v1540
        %v1607 = vunpack.c.h.b16 %v1540
        %v1608 = vunpack.c.l.b16 %v1541
        %v1609 = vunpack.c.h.b16 %v1541
        %v1610 = vunpack.c.l.b16 %v1542
        %v1611 = vunpack.c.h.b16 %v1542
        %v1612 = vunpack.c.l.b16 %v1543
        %v1613 = vunpack.c.h.b16 %v1543
        %v1614 = vunpack.c.l.b16 %v1544
        %v1615 = vunpack.c.h.b16 %v1544
        %v1616 = vunpack.c.l.b16 %v1545
        %v1617 = vunpack.c.h.b16 %v1545
        %v1618 = vunpack.c.l.b16 %v1546
        %v1619 = vunpack.c.h.b16 %v1546
        %v1620 = vpack.c.b16 %v1606, %v1604
        %v1621 = vpack.c.b16 %v1607, %v1605
        %v1622 = vpack.c.b16 %v1610, %v1608
        %v1623 = vpack.c.b16 %v1611, %v1609
        %v1624 = vpack.c.b16 %v1614, %v1612
        %v1625 = vpack.c.b16 %v1615, %v1613
        %v1626 = vpack.c.b16 %v1618, %v1616
        %v1627 = vpack.c.b16 %v1619, %v1617
        %v1633 = vsel %vm771, %v1621, 0
        %v1636 = vsel %vm771, %v1623, 0
        %v1639 = vsel %vm771, %v1625, 0
        %v1642 = vsel %vm771, %v1627, 0
        %1644 = vmatpush.bf16.msra.mxu0 %v1523
        %1645 = vmatpush.bf16.msra.mxu0 %v1522
        %1646 = vmatpush.bf16.msra.mxu0 %v1511
        %1647 = vmatpush.bf16.msra.mxu0 %v1510
        %1648 = vmatpush.bf16.msra.mxu0 %v1499
        %1649 = vmatpush.bf16.msra.mxu0 %v1498
        %1650 = vmatpush.bf16.msra.mxu0 %v1471
        %1651 = vmatpush.bf16.msra.mxu0 %v1470
        %1652 = vmatmul.bf16.gmra.mxu0 %v1620
        %v1653 = vpop.f32.mrf.mxu0
        %v1654 = vadd.f32 %v1559, %v1653
        %v1655 = vpop.f32.mrf.mxu0
        %v1656 = vadd.f32 %v1564, %v1655
        %1657 = vmatmul.bf16.gmra.mxu0 %v1622
        %v1658 = vpop.f32.mrf.mxu0
        %v1659 = vadd.f32 %v1569, %v1658
        %v1660 = vpop.f32.mrf.mxu0
        %v1661 = vadd.f32 %v1574, %v1660
        %1662 = vmatmul.bf16.gmra.mxu0 %v1624
        %v1663 = vpop.f32.mrf.mxu0
        %v1664 = vadd.f32 %v1579, %v1663
        %v1665 = vpop.f32.mrf.mxu0
        %v1666 = vadd.f32 %v1584, %v1665
        %1667 = vmatmul.bf16.gmra.mxu0 %v1626
        %v1668 = vpop.f32.mrf.mxu0
        %v1669 = vadd.f32 %v1589, %v1668
        %v1670 = vpop.f32.mrf.mxu0
        %v1671 = vadd.f32 %v1594, %v1670
        %1672 = vdwg.mxu0
        %1673 = vmatpush.bf16.msra.mxu0 0
        %1674 = vmatpush.bf16.msra.mxu0 0
        %1675 = vmatpush.bf16.msra.mxu0 0
        %1676 = vmatpush.bf16.msra.mxu0 0
        %1677 = vmatpush.bf16.msra.mxu0 0
        %1678 = vmatpush.bf16.msra.mxu0 0
        %1679 = vmatpush.bf16.msra.mxu0 %v1535
        %1680 = vmatpush.bf16.msra.mxu0 %v1534
        %1681 = vmatmul.bf16.gmra.mxu0 %v1633
        %v1682 = vpop.f32.mrf.mxu0
        %v1683 = vadd.f32 %v1654, %v1682
        %v1684 = vpop.f32.mrf.mxu0
        %v1685 = vadd.f32 %v1656, %v1684
        %1686 = vmatmul.bf16.gmra.mxu0 %v1636
        %v1687 = vpop.f32.mrf.mxu0
        %v1688 = vadd.f32 %v1659, %v1687
        %v1689 = vpop.f32.mrf.mxu0
        %v1690 = vadd.f32 %v1661, %v1689
        %1691 = vmatmul.bf16.gmra.mxu0 %v1639
        %v1692 = vpop.f32.mrf.mxu0
        %v1693 = vadd.f32 %v1664, %v1692
        %v1694 = vpop.f32.mrf.mxu0
        %v1695 = vadd.f32 %v1666, %v1694
        %1696 = vmatmul.bf16.gmra.mxu0 %v1642
        %v1697 = vpop.f32.mrf.mxu0
        %v1698 = vadd.f32 %v1669, %v1697
        %v1699 = vpop.f32.mrf.mxu0
        %v1700 = vadd.f32 %v1671, %v1699
        %1701 = vdwg.mxu0
        %v1702 = vtanh.pop %v1683
        %v1703 = vtanh.pop %v1685
        %v1704 = vtanh.pop %v1688
        %v1705 = vtanh.pop %v1690
        %v1706 = vtanh.pop %v1693
        %v1707 = vtanh.pop %v1695
        %v1708 = vtanh.pop %v1698
        %v1709 = vtanh.pop %v1700
        %v1710 = vmul.f32 %v1706, 0.5
        %v1711 = vmul.f32 %v1707, 0.5
        %v1712 = vmul.f32 %v1708, 0.5
        %v1713 = vmul.f32 %v1709, 0.5
        %v1714 = vadd.f32 %v1710, 0.5
        %v1715 = vadd.f32 %v1711, 0.5
        %v1716 = vadd.f32 %v1712, 0.5
        %v1717 = vadd.f32 %v1713, 0.5
        %v1718 = vmul.f32 %v1702, %v1714
        %v1719 = vmul.f32 %v1703, %v1715
        %v1720 = vmul.f32 %v1704, %v1716
        %v1721 = vmul.f32 %v1705, %v1717
        %v1722 = vpack.c.bf16 %v1719, %v1718
        %v1723 = vpack.c.bf16 %v1721, %v1720
        %s1724 = scalar_lea.vmem %s6, 64
        %v1725 = vld [vmem:[%s1724] sm:$0xf]
        %v1726 = vld [vmem:[%s1724 + $0x4] sm:$0xf]
        %v1727 = vld [vmem:[%s1724 + $0x8] sm:$0xf]
        %v1728 = vld [vmem:[%s1724 + $0xc] sm:$0xf]
        %v1729 = vld [vmem:[%s1724 + $0x10] sm:$0xf]
        %v1730 = vld [vmem:[%s1724 + $0x14] sm:$0xf]
        %v1731 = vld [vmem:[%s1724 + $0x18] sm:$0xf]
        %v1732 = vld [vmem:[%s1724 + $0x1c] sm:$0xf]
        %s1733 = scalar_lea.vmem %s7, 128
        %v1734 = vld [vmem:[%s1733] sm:$0xff]
        %v1735 = vld [vmem:[%s1733 + $0x8] sm:$0xff]
        %v1736 = vld [vmem:[%s1733 + $0x10] sm:$0xff]
        %v1737 = vld [vmem:[%s1733 + $0x18] sm:$0xff]
        %v1738 = vld [vmem:[%s1733 + $0x20] sm:$0xff]
        %v1739 = vld [vmem:[%s1733 + $0x28] sm:$0xff]
        %v1740 = vld [vmem:[%s1733 + $0x30] sm:$0xff]
        %v1741 = vld [vmem:[%s1733 + $0x38] sm:$0xff]
        %1743 = vset.pattern.permute.xlu0 0
        %1744 = vperm.xlu0 %1743, %v1734
        %v1745 = vpop.permute.xlu0 %1744
        %1748 = vset.pattern.permute.xlu0 0
        %1749 = vperm.xlu0 %1748, %v1735
        %v1750 = vpop.permute.xlu0 %1749
        %1753 = vset.pattern.permute.xlu0 0
        %1754 = vperm.xlu0 %1753, %v1736
        %v1755 = vpop.permute.xlu0 %1754
        %1758 = vset.pattern.permute.xlu0 0
        %1759 = vperm.xlu0 %1758, %v1737
        %v1760 = vpop.permute.xlu0 %1759
        %1763 = vset.pattern.permute.xlu0 0
        %1764 = vperm.xlu0 %1763, %v1738
        %v1765 = vpop.permute.xlu0 %1764
        %1768 = vset.pattern.permute.xlu0 0
        %1769 = vperm.xlu0 %1768, %v1739
        %v1770 = vpop.permute.xlu0 %1769
        %1773 = vset.pattern.permute.xlu0 0
        %1774 = vperm.xlu0 %1773, %v1740
        %v1775 = vpop.permute.xlu0 %1774
        %1778 = vset.pattern.permute.xlu0 0
        %1779 = vperm.xlu0 %1778, %v1741
        %v1780 = vpop.permute.xlu0 %1779
        %v1790 = vunpack.c.l.b16 %v1725
        %v1791 = vunpack.c.l.b16 %v1726
        %v1792 = vunpack.c.l.b16 %v1727
        %v1793 = vunpack.c.l.b16 %v1728
        %v1794 = vunpack.c.l.b16 %v1729
        %v1795 = vunpack.c.l.b16 %v1730
        %v1796 = vunpack.c.l.b16 %v1731
        %v1797 = vunpack.c.l.b16 %v1732
        %v1798 = vpack.c.b16 %v1791, %v1790
        %v1799 = vpack.c.b16 %v1793, %v1792
        %v1800 = vpack.c.b16 %v1795, %v1794
        %v1801 = vpack.c.b16 %v1797, %v1796
        %v1803 = vsel %vm771, %v1798, 0
        %v1806 = vsel %vm771, %v1799, 0
        %v1809 = vsel %vm771, %v1800, 0
        %v1812 = vsel %vm771, %v1801, 0
        %1814 = vmatpush.bf16.msra.mxu0 0
        %1815 = vmatpush.bf16.msra.mxu0 0
        %1816 = vmatpush.bf16.msra.mxu0 0
        %1817 = vmatpush.bf16.msra.mxu0 0
        %1818 = vmatpush.bf16.msra.mxu0 0
        %1819 = vmatpush.bf16.msra.mxu0 0
        %1820 = vmatpush.bf16.msra.mxu0 %v1723
        %1821 = vmatpush.bf16.msra.mxu0 %v1722
        %1822 = vmatmul.bf16.gmra.mxu0 %v1803
        %v1823 = vpop.f32.mrf.mxu0
        %v1824 = vadd.f32 %v1745, %v1823
        %v1825 = vpop.f32.mrf.mxu0
        %v1826 = vadd.f32 %v1750, %v1825
        %1827 = vmatmul.bf16.gmra.mxu0 %v1806
        %v1828 = vpop.f32.mrf.mxu0
        %v1829 = vadd.f32 %v1755, %v1828
        %v1830 = vpop.f32.mrf.mxu0
        %v1831 = vadd.f32 %v1760, %v1830
        %1832 = vmatmul.bf16.gmra.mxu0 %v1809
        %v1833 = vpop.f32.mrf.mxu0
        %v1834 = vadd.f32 %v1765, %v1833
        %v1835 = vpop.f32.mrf.mxu0
        %v1836 = vadd.f32 %v1770, %v1835
        %1837 = vmatmul.bf16.gmra.mxu0 %v1812
        %v1838 = vpop.f32.mrf.mxu0
        %v1839 = vadd.f32 %v1775, %v1838
        %v1840 = vpop.f32.mrf.mxu0
        %v1841 = vadd.f32 %v1780, %v1840
        %1842 = vdwg.mxu0
        %v1843 = vadd.f32 %v1414, %v1824
        %v1844 = vadd.f32 %v1415, %v1826
        %v1845 = vadd.f32 %v1416, %v1829
        %v1846 = vadd.f32 %v1417, %v1831
        %v1847 = vmul.f32 %v1843, %v474
        %v1848 = vmul.f32 %v1844, %v474
        %v1849 = vmul.f32 %v1845, %v474
        %v1850 = vmul.f32 %v1846, %v474
        %v1851 = vadd.f32 %v1418, %v1834
        %v1852 = vadd.f32 %v1419, %v1836
        %v1853 = vadd.f32 %v1420, %v1839
        %v1854 = vadd.f32 %v1421, %v1841
        %v1855 = vpack.c.bf16 %v1847, %v1847
        %v1856 = vpack.c.bf16 %v1848, %v1848
        %v1857 = vpack.c.bf16 %v1849, %v1849
        %v1858 = vpack.c.bf16 %v1850, %v1850
        %1863 = vrot.lane.b32.xlu0 %v1855, 2
        %v1864 = vpop.permute.xlu0 %1863
        %1865 = vrot.lane.b32.xlu0 %v1856, 2
        %v1866 = vpop.permute.xlu0 %1865
        %1867 = vrot.lane.b32.xlu0 %v1857, 2
        %v1868 = vpop.permute.xlu0 %1867
        %1869 = vrot.lane.b32.xlu0 %v1858, 2
        %v1870 = vpop.permute.xlu0 %1869
        %v1871 = vrot.slane %v1864, 4
        %v1872 = vrot.slane %v1866, 4
        %v1873 = vrot.slane %v1868, 4
        %v1874 = vrot.slane %v1870, 4
        %v1875 = vsel %vm575, %v1871, %v1864
        %v1876 = vsel %vm575, %v1872, %v1866
        %v1877 = vsel %vm575, %v1873, %v1868
        %v1878 = vsel %vm575, %v1874, %v1870
        %1883 = vst.msk [vmem:[#allocation2] sm:$0xff] %vm586, %v1875
        %1884 = vst.msk [vmem:[#allocation2 + $0x8] sm:$0xff] %vm586, %v1876
        %1885 = vst.msk [vmem:[#allocation2 + $0x10] sm:$0xff] %vm586, %v1877
        %1886 = vst.msk [vmem:[#allocation2 + $0x18] sm:$0xff] %vm586, %v1878
        %v1887 = vld [vmem:[#allocation2] sm:$0xf]
        %v1888 = vld [vmem:[#allocation2 + $0x8] sm:$0xf]
        %v1889 = vld [vmem:[#allocation2 + $0x10] sm:$0xf]
        %v1890 = vld [vmem:[#allocation2 + $0x18] sm:$0xf]
        %v1891 = vld [vmem:[#allocation2] sm:$0xff]
        %v1892 = vld [vmem:[#allocation2 + $0x8] sm:$0xff]
        %v1893 = vld [vmem:[#allocation2 + $0x10] sm:$0xff]
        %v1894 = vld [vmem:[#allocation2 + $0x18] sm:$0xff]
        %v1899 = vunpack.c.l.b16 %v1887
        %v1900 = vunpack.c.l.b16 %v1888
        %v1901 = vunpack.c.l.b16 %v1889
        %v1902 = vunpack.c.l.b16 %v1890
        %v1903 = vpack.c.b16 %v1900, %v1899
        %v1904 = vpack.c.b16 %v1902, %v1901
        %v1911 = vunpack.c.l.b16 %v1891
        %v1912 = vunpack.c.h.b16 %v1891
        %v1913 = vunpack.c.l.b16 %v1892
        %v1914 = vunpack.c.h.b16 %v1892
        %v1915 = vunpack.c.l.b16 %v1893
        %v1916 = vunpack.c.h.b16 %v1893
        %v1917 = vunpack.c.l.b16 %v1894
        %v1918 = vunpack.c.h.b16 %v1894
        %v1919 = vpack.c.b16 %v1913, %v1911
        %v1920 = vpack.c.b16 %v1914, %v1912
        %v1921 = vpack.c.b16 %v1917, %v1915
        %v1922 = vpack.c.b16 %v1918, %v1916
        %1923 = vrot.lane.b32.xlu0 %v1919, 127
        %v1924 = vpop.permute.xlu0 %1923
        %1925 = vrot.lane.b32.xlu0 %v1920, 127
        %v1926 = vpop.permute.xlu0 %1925
        %1927 = vrot.lane.b32.xlu0 %v1921, 127
        %v1928 = vpop.permute.xlu0 %1927
        %1929 = vrot.lane.b32.xlu0 %v1922, 127
        %v1930 = vpop.permute.xlu0 %1929
        %v1931 = vsel %vm635, %v1924, %v1926
        %v1932 = vsel %vm635, %v1928, %v1930
        %1935 = vrot.lane.b32.xlu0 %v1919, 126
        %v1936 = vpop.permute.xlu0 %1935
        %1937 = vrot.lane.b32.xlu0 %v1920, 126
        %v1938 = vpop.permute.xlu0 %1937
        %1939 = vrot.lane.b32.xlu0 %v1921, 126
        %v1940 = vpop.permute.xlu0 %1939
        %1941 = vrot.lane.b32.xlu0 %v1922, 126
        %v1942 = vpop.permute.xlu0 %1941
        %v1943 = vsel %vm648, %v1936, %v1938
        %v1944 = vsel %vm648, %v1940, %v1942
        %1947 = vrot.lane.b32.xlu0 %v1919, 125
        %v1948 = vpop.permute.xlu0 %1947
        %1949 = vrot.lane.b32.xlu0 %v1920, 125
        %v1950 = vpop.permute.xlu0 %1949
        %1951 = vrot.lane.b32.xlu0 %v1921, 125
        %v1952 = vpop.permute.xlu0 %1951
        %1953 = vrot.lane.b32.xlu0 %v1922, 125
        %v1954 = vpop.permute.xlu0 %1953
        %v1955 = vsel %vm661, %v1948, %v1950
        %v1956 = vsel %vm661, %v1952, %v1954
        %1959 = vrot.lane.b32.xlu0 %v1919, 124
        %v1960 = vpop.permute.xlu0 %1959
        %1961 = vrot.lane.b32.xlu0 %v1920, 124
        %v1962 = vpop.permute.xlu0 %1961
        %1963 = vrot.lane.b32.xlu0 %v1921, 124
        %v1964 = vpop.permute.xlu0 %1963
        %1965 = vrot.lane.b32.xlu0 %v1922, 124
        %v1966 = vpop.permute.xlu0 %1965
        %v1967 = vsel %vm674, %v1960, %v1962
        %v1968 = vsel %vm674, %v1964, %v1966
        %s1971 = scalar_lea.vmem %s5, 192
        %v1972 = vld [vmem:[%s1971] sm:$0xff]
        %v1973 = vld [vmem:[%s1971 + $0x8] sm:$0xff]
        %v1974 = vld [vmem:[%s1971 + $0x10] sm:$0xff]
        %v1975 = vld [vmem:[%s1971 + $0x18] sm:$0xff]
        %v1976 = vld [vmem:[%s1971 + $0x20] sm:$0xff]
        %v1977 = vld [vmem:[%s1971 + $0x28] sm:$0xff]
        %v1978 = vld [vmem:[%s1971 + $0x30] sm:$0xff]
        %v1979 = vld [vmem:[%s1971 + $0x38] sm:$0xff]
        %s1980 = scalar_lea.vmem %s469, 192
        %v1981 = vld [vmem:[%s1980] sm:$0xff]
        %v1982 = vld [vmem:[%s1980 + $0x8] sm:$0xff]
        %v1983 = vld [vmem:[%s1980 + $0x10] sm:$0xff]
        %v1984 = vld [vmem:[%s1980 + $0x18] sm:$0xff]
        %v1985 = vld [vmem:[%s1980 + $0x20] sm:$0xff]
        %v1986 = vld [vmem:[%s1980 + $0x28] sm:$0xff]
        %v1987 = vld [vmem:[%s1980 + $0x30] sm:$0xff]
        %v1988 = vld [vmem:[%s1980 + $0x38] sm:$0xff]
        %1990 = vset.pattern.permute.xlu0 0
        %1991 = vperm.xlu0 %1990, %v1981
        %v1992 = vpop.permute.xlu0 %1991
        %1995 = vset.pattern.permute.xlu0 0
        %1996 = vperm.xlu0 %1995, %v1982
        %v1997 = vpop.permute.xlu0 %1996
        %2000 = vset.pattern.permute.xlu0 0
        %2001 = vperm.xlu0 %2000, %v1983
        %v2002 = vpop.permute.xlu0 %2001
        %2005 = vset.pattern.permute.xlu0 0
        %2006 = vperm.xlu0 %2005, %v1984
        %v2007 = vpop.permute.xlu0 %2006
        %2010 = vset.pattern.permute.xlu0 0
        %2011 = vperm.xlu0 %2010, %v1985
        %v2012 = vpop.permute.xlu0 %2011
        %2015 = vset.pattern.permute.xlu0 0
        %2016 = vperm.xlu0 %2015, %v1986
        %v2017 = vpop.permute.xlu0 %2016
        %2020 = vset.pattern.permute.xlu0 0
        %2021 = vperm.xlu0 %2020, %v1987
        %v2022 = vpop.permute.xlu0 %2021
        %2025 = vset.pattern.permute.xlu0 0
        %2026 = vperm.xlu0 %2025, %v1988
        %v2027 = vpop.permute.xlu0 %2026
        %v2037 = vunpack.c.l.b16 %v1972
        %v2038 = vunpack.c.h.b16 %v1972
        %v2039 = vunpack.c.l.b16 %v1973
        %v2040 = vunpack.c.h.b16 %v1973
        %v2041 = vunpack.c.l.b16 %v1974
        %v2042 = vunpack.c.h.b16 %v1974
        %v2043 = vunpack.c.l.b16 %v1975
        %v2044 = vunpack.c.h.b16 %v1975
        %v2045 = vunpack.c.l.b16 %v1976
        %v2046 = vunpack.c.h.b16 %v1976
        %v2047 = vunpack.c.l.b16 %v1977
        %v2048 = vunpack.c.h.b16 %v1977
        %v2049 = vunpack.c.l.b16 %v1978
        %v2050 = vunpack.c.h.b16 %v1978
        %v2051 = vunpack.c.l.b16 %v1979
        %v2052 = vunpack.c.h.b16 %v1979
        %v2053 = vpack.c.b16 %v2039, %v2037
        %v2054 = vpack.c.b16 %v2040, %v2038
        %v2055 = vpack.c.b16 %v2043, %v2041
        %v2056 = vpack.c.b16 %v2044, %v2042
        %v2057 = vpack.c.b16 %v2047, %v2045
        %v2058 = vpack.c.b16 %v2048, %v2046
        %v2059 = vpack.c.b16 %v2051, %v2049
        %v2060 = vpack.c.b16 %v2052, %v2050
        %v2066 = vsel %vm771, %v2054, 0
        %v2069 = vsel %vm771, %v2056, 0
        %v2072 = vsel %vm771, %v2058, 0
        %v2075 = vsel %vm771, %v2060, 0
        %2077 = vmatpush.bf16.msra.mxu0 %v1956
        %2078 = vmatpush.bf16.msra.mxu0 %v1955
        %2079 = vmatpush.bf16.msra.mxu0 %v1944
        %2080 = vmatpush.bf16.msra.mxu0 %v1943
        %2081 = vmatpush.bf16.msra.mxu0 %v1932
        %2082 = vmatpush.bf16.msra.mxu0 %v1931
        %2083 = vmatpush.bf16.msra.mxu0 %v1904
        %2084 = vmatpush.bf16.msra.mxu0 %v1903
        %2085 = vmatmul.bf16.gmra.mxu0 %v2053
        %v2086 = vpop.f32.mrf.mxu0
        %v2087 = vadd.f32 %v1992, %v2086
        %v2088 = vpop.f32.mrf.mxu0
        %v2089 = vadd.f32 %v1997, %v2088
        %2090 = vmatmul.bf16.gmra.mxu0 %v2055
        %v2091 = vpop.f32.mrf.mxu0
        %v2092 = vadd.f32 %v2002, %v2091
        %v2093 = vpop.f32.mrf.mxu0
        %v2094 = vadd.f32 %v2007, %v2093
        %2095 = vmatmul.bf16.gmra.mxu0 %v2057
        %v2096 = vpop.f32.mrf.mxu0
        %v2097 = vadd.f32 %v2012, %v2096
        %v2098 = vpop.f32.mrf.mxu0
        %v2099 = vadd.f32 %v2017, %v2098
        %2100 = vmatmul.bf16.gmra.mxu0 %v2059
        %v2101 = vpop.f32.mrf.mxu0
        %v2102 = vadd.f32 %v2022, %v2101
        %v2103 = vpop.f32.mrf.mxu0
        %v2104 = vadd.f32 %v2027, %v2103
        %2105 = vdwg.mxu0
        %2106 = vmatpush.bf16.msra.mxu0 0
        %2107 = vmatpush.bf16.msra.mxu0 0
        %2108 = vmatpush.bf16.msra.mxu0 0
        %2109 = vmatpush.bf16.msra.mxu0 0
        %2110 = vmatpush.bf16.msra.mxu0 0
        %2111 = vmatpush.bf16.msra.mxu0 0
        %2112 = vmatpush.bf16.msra.mxu0 %v1968
        %2113 = vmatpush.bf16.msra.mxu0 %v1967
        %2114 = vmatmul.bf16.gmra.mxu0 %v2066
        %v2115 = vpop.f32.mrf.mxu0
        %v2116 = vadd.f32 %v2087, %v2115
        %v2117 = vpop.f32.mrf.mxu0
        %v2118 = vadd.f32 %v2089, %v2117
        %2119 = vmatmul.bf16.gmra.mxu0 %v2069
        %v2120 = vpop.f32.mrf.mxu0
        %v2121 = vadd.f32 %v2092, %v2120
        %v2122 = vpop.f32.mrf.mxu0
        %v2123 = vadd.f32 %v2094, %v2122
        %2124 = vmatmul.bf16.gmra.mxu0 %v2072
        %v2125 = vpop.f32.mrf.mxu0
        %v2126 = vadd.f32 %v2097, %v2125
        %v2127 = vpop.f32.mrf.mxu0
        %v2128 = vadd.f32 %v2099, %v2127
        %2129 = vmatmul.bf16.gmra.mxu0 %v2075
        %v2130 = vpop.f32.mrf.mxu0
        %v2131 = vadd.f32 %v2102, %v2130
        %v2132 = vpop.f32.mrf.mxu0
        %v2133 = vadd.f32 %v2104, %v2132
        %2134 = vdwg.mxu0
        %v2135 = vtanh.pop %v2116
        %v2136 = vtanh.pop %v2118
        %v2137 = vtanh.pop %v2121
        %v2138 = vtanh.pop %v2123
        %v2139 = vtanh.pop %v2126
        %v2140 = vtanh.pop %v2128
        %v2141 = vtanh.pop %v2131
        %v2142 = vtanh.pop %v2133
        %v2143 = vmul.f32 %v2139, 0.5
        %v2144 = vmul.f32 %v2140, 0.5
        %v2145 = vmul.f32 %v2141, 0.5
        %v2146 = vmul.f32 %v2142, 0.5
        %v2147 = vadd.f32 %v2143, 0.5
        %v2148 = vadd.f32 %v2144, 0.5
        %v2149 = vadd.f32 %v2145, 0.5
        %v2150 = vadd.f32 %v2146, 0.5
        %v2151 = vmul.f32 %v2135, %v2147
        %v2152 = vmul.f32 %v2136, %v2148
        %v2153 = vmul.f32 %v2137, %v2149
        %v2154 = vmul.f32 %v2138, %v2150
        %v2155 = vpack.c.bf16 %v2152, %v2151
        %v2156 = vpack.c.bf16 %v2154, %v2153
        %v2157 = vld [vmem:[%s8] sm:$0xf]
        %v2158 = vld [vmem:[%s8 + $0x4] sm:$0xf]
        %v2159 = vld [vmem:[%s8 + $0x8] sm:$0xf]
        %v2160 = vld [vmem:[%s8 + $0xc] sm:$0xf]
        %v2161 = vld [vmem:[%s9] sm:$0xff]
        %v2162 = vld [vmem:[%s9 + $0x8] sm:$0xff]
        %v2163 = vld [vmem:[%s9 + $0x10] sm:$0xff]
        %v2164 = vld [vmem:[%s9 + $0x18] sm:$0xff]
        %2166 = vset.pattern.permute.xlu0 0
        %2167 = vperm.xlu0 %2166, %v2161
        %v2168 = vpop.permute.xlu0 %2167
        %2171 = vset.pattern.permute.xlu0 0
        %2172 = vperm.xlu0 %2171, %v2162
        %v2173 = vpop.permute.xlu0 %2172
        %2176 = vset.pattern.permute.xlu0 0
        %2177 = vperm.xlu0 %2176, %v2163
        %v2178 = vpop.permute.xlu0 %2177
        %2181 = vset.pattern.permute.xlu0 0
        %2182 = vperm.xlu0 %2181, %v2164
        %v2183 = vpop.permute.xlu0 %2182
        %v2189 = vunpack.c.l.b16 %v2157
        %v2190 = vunpack.c.l.b16 %v2158
        %v2191 = vunpack.c.l.b16 %v2159
        %v2192 = vunpack.c.l.b16 %v2160
        %v2193 = vpack.c.b16 %v2190, %v2189
        %v2194 = vpack.c.b16 %v2192, %v2191
        %v2196 = vsel %vm771, %v2193, 0
        %v2199 = vsel %vm771, %v2194, 0
        %2201 = vmatpush.bf16.msra.mxu0 0
        %2202 = vmatpush.bf16.msra.mxu0 0
        %2203 = vmatpush.bf16.msra.mxu0 0
        %2204 = vmatpush.bf16.msra.mxu0 0
        %2205 = vmatpush.bf16.msra.mxu0 0
        %2206 = vmatpush.bf16.msra.mxu0 0
        %2207 = vmatpush.bf16.msra.mxu0 %v2156
        %2208 = vmatpush.bf16.msra.mxu0 %v2155
        %2209 = vmatmul.bf16.gmra.mxu0 %v2196
        %v2210 = vpop.f32.mrf.mxu0
        %v2211 = vadd.f32 %v2168, %v2210
        %v2212 = vpop.f32.mrf.mxu0
        %v2213 = vadd.f32 %v2173, %v2212
        %2214 = vmatmul.bf16.gmra.mxu0 %v2199
        %v2215 = vpop.f32.mrf.mxu0
        %v2216 = vadd.f32 %v2178, %v2215
        %v2217 = vpop.f32.mrf.mxu0
        %v2218 = vadd.f32 %v2183, %v2217
        %2219 = vdwg.mxu0
        %v2220 = vadd.f32 %v1851, %v2211
        %v2221 = vadd.f32 %v1852, %v2213
        %v2222 = vadd.f32 %v1853, %v2216
        %v2223 = vadd.f32 %v1854, %v2218
        %v2224 = vmul.f32 %v2220, %v474
        %v2225 = vmul.f32 %v2221, %v474
        %v2226 = vmul.f32 %v2222, %v474
        %v2227 = vmul.f32 %v2223, %v474
        %v2228 = vld [vmem:[%s10] sm:$0xf]
        %v2229 = vpack.c.bf16 %v2225, %v2224
        %v2230 = vpack.c.bf16 %v2227, %v2226
        %v2231 = vld [vmem:[%s11] sm:$0xff]
        %2233 = vset.pattern.permute.xlu0 0
        %2234 = vperm.xlu0 %2233, %v2231
        %v2235 = vpop.permute.xlu0 %2234
        %v2238 = vsel %vm771, %v2228, 0
        %2240 = vmatpush.bf16.msra.mxu0 0
        %2241 = vmatpush.bf16.msra.mxu0 0
        %2242 = vmatpush.bf16.msra.mxu0 0
        %2243 = vmatpush.bf16.msra.mxu0 0
        %2244 = vmatpush.bf16.msra.mxu0 0
        %2245 = vmatpush.bf16.msra.mxu0 0
        %2246 = vmatpush.bf16.msra.mxu0 %v2230
        %2247 = vmatpush.bf16.msra.mxu0 %v2229
        %2248 = vmatmul.bf16.gmra.mxu0 %v2238
        %v2249 = vpop.f32.mrf.mxu0
        %v2250 = vadd.f32 %v2235, %v2249
        %v2251 = vpop.f32.mrf.mxu0
        %2252 = vdwg.mxu0
        %v2253 = vmul.f32 %v2250, %v474
        %v2254 = vld [vmem:[%s12] sm:$0xff]
        %v2255 = vsub.f32 %v474, 1.0
        %2257 = vset.pattern.permute.xlu0 0
        %2258 = vperm.xlu0 %2257, %v2254
        %v2259 = vpop.permute.xlu0 %2258
        %v2261 = vmul.f32 %v2259, %v2255
        %v2262 = vadd.f32 %v2261, 1.0
        %v2263 = vmul.f32 %v471, %v2262
        %v2264 = vadd.f32 %v2263, %v2253
        %s2265 = scalar_lea.vmem %s3, 16
        %v2266 = vld [vmem:[%s2265] sm:$0xf]
        %v2267 = vld [vmem:[%s2265 + $0x4] sm:$0xf]
        %v2268 = vld [vmem:[%s2265 + $0x8] sm:$0xf]
        %v2269 = vld [vmem:[%s2265 + $0xc] sm:$0xf]
        %v2270 = vpack.c.bf16 %v2264, %v2264
        %s2271 = scalar_lea.vmem %s4, 32
        %v2272 = vld [vmem:[%s2271] sm:$0xff]
        %v2273 = vld [vmem:[%s2271 + $0x8] sm:$0xff]
        %v2274 = vld [vmem:[%s2271 + $0x10] sm:$0xff]
        %v2275 = vld [vmem:[%s2271 + $0x18] sm:$0xff]
        %2277 = vset.pattern.permute.xlu0 0
        %2278 = vperm.xlu0 %2277, %v2272
        %v2279 = vpop.permute.xlu0 %2278
        %2282 = vset.pattern.permute.xlu0 0
        %2283 = vperm.xlu0 %2282, %v2273
        %v2284 = vpop.permute.xlu0 %2283
        %2287 = vset.pattern.permute.xlu0 0
        %2288 = vperm.xlu0 %2287, %v2274
        %v2289 = vpop.permute.xlu0 %2288
        %2292 = vset.pattern.permute.xlu0 0
        %2293 = vperm.xlu0 %2292, %v2275
        %v2294 = vpop.permute.xlu0 %2293
        %v2300 = vunpack.c.l.b16 %v2266
        %v2301 = vunpack.c.l.b16 %v2267
        %v2302 = vunpack.c.l.b16 %v2268
        %v2303 = vunpack.c.l.b16 %v2269
        %v2304 = vpack.c.b16 %v2301, %v2300
        %v2305 = vpack.c.b16 %v2303, %v2302
        %v2307 = vsel %vm522, %v2304, 0
        %v2310 = vsel %vm522, %v2305, 0
        %v2313 = vsel %vm476, %v2270, 0
        %2315 = vmatpush.bf16.msra.mxu0 0
        %2316 = vmatpush.bf16.msra.mxu0 0
        %2317 = vmatpush.bf16.msra.mxu0 0
        %2318 = vmatpush.bf16.msra.mxu0 0
        %2319 = vmatpush.bf16.msra.mxu0 0
        %2320 = vmatpush.bf16.msra.mxu0 0
        %2321 = vmatpush.bf16.msra.mxu0 0
        %2322 = vmatpush.bf16.msra.mxu0 %v2313
        %2323 = vmatmul.bf16.gmra.mxu0 %v2307
        %v2324 = vpop.f32.mrf.mxu0
        %v2325 = vadd.f32 %v2279, %v2324
        %v2326 = vpop.f32.mrf.mxu0
        %v2327 = vadd.f32 %v2284, %v2326
        %2328 = vmatmul.bf16.gmra.mxu0 %v2310
        %v2329 = vpop.f32.mrf.mxu0
        %v2330 = vadd.f32 %v2289, %v2329
        %v2331 = vpop.f32.mrf.mxu0
        %v2332 = vadd.f32 %v2294, %v2331
        %2333 = vdwg.mxu0
        %v2334 = vmul.f32 %v2325, %v474
        %v2335 = vmul.f32 %v2327, %v474
        %v2336 = vmul.f32 %v2330, %v474
        %v2337 = vmul.f32 %v2332, %v474
        %v2338 = vpack.c.bf16 %v2334, %v2334
        %v2339 = vpack.c.bf16 %v2335, %v2335
        %v2340 = vpack.c.bf16 %v2336, %v2336
        %v2341 = vpack.c.bf16 %v2337, %v2337
        %2346 = vrot.lane.b32.xlu0 %v2338, 2
        %v2347 = vpop.permute.xlu0 %2346
        %2348 = vrot.lane.b32.xlu0 %v2339, 2
        %v2349 = vpop.permute.xlu0 %2348
        %2350 = vrot.lane.b32.xlu0 %v2340, 2
        %v2351 = vpop.permute.xlu0 %2350
        %2352 = vrot.lane.b32.xlu0 %v2341, 2
        %v2353 = vpop.permute.xlu0 %2352
        %v2354 = vrot.slane %v2347, 4
        %v2355 = vrot.slane %v2349, 4
        %v2356 = vrot.slane %v2351, 4
        %v2357 = vrot.slane %v2353, 4
        %v2358 = vsel %vm575, %v2354, %v2347
        %v2359 = vsel %vm575, %v2355, %v2349
        %v2360 = vsel %vm575, %v2356, %v2351
        %v2361 = vsel %vm575, %v2357, %v2353
        %2366 = vst.msk [vmem:[#allocation2] sm:$0xff] %vm586, %v2358
        %2367 = vst.msk [vmem:[#allocation2 + $0x8] sm:$0xff] %vm586, %v2359
        %2368 = vst.msk [vmem:[#allocation2 + $0x10] sm:$0xff] %vm586, %v2360
        %2369 = vst.msk [vmem:[#allocation2 + $0x18] sm:$0xff] %vm586, %v2361
        %v2370 = vld [vmem:[#allocation2] sm:$0xf]
        %v2371 = vld [vmem:[#allocation2 + $0x8] sm:$0xf]
        %v2372 = vld [vmem:[#allocation2 + $0x10] sm:$0xf]
        %v2373 = vld [vmem:[#allocation2 + $0x18] sm:$0xf]
        %v2374 = vld [vmem:[#allocation2] sm:$0xff]
        %v2375 = vld [vmem:[#allocation2 + $0x8] sm:$0xff]
        %v2376 = vld [vmem:[#allocation2 + $0x10] sm:$0xff]
        %v2377 = vld [vmem:[#allocation2 + $0x18] sm:$0xff]
        %v2382 = vunpack.c.l.b16 %v2370
        %v2383 = vunpack.c.l.b16 %v2371
        %v2384 = vunpack.c.l.b16 %v2372
        %v2385 = vunpack.c.l.b16 %v2373
        %v2386 = vpack.c.b16 %v2383, %v2382
        %v2387 = vpack.c.b16 %v2385, %v2384
        %v2394 = vunpack.c.l.b16 %v2374
        %v2395 = vunpack.c.h.b16 %v2374
        %v2396 = vunpack.c.l.b16 %v2375
        %v2397 = vunpack.c.h.b16 %v2375
        %v2398 = vunpack.c.l.b16 %v2376
        %v2399 = vunpack.c.h.b16 %v2376
        %v2400 = vunpack.c.l.b16 %v2377
        %v2401 = vunpack.c.h.b16 %v2377
        %v2402 = vpack.c.b16 %v2396, %v2394
        %v2403 = vpack.c.b16 %v2397, %v2395
        %v2404 = vpack.c.b16 %v2400, %v2398
        %v2405 = vpack.c.b16 %v2401, %v2399
        %2406 = vrot.lane.b32.xlu0 %v2402, 127
        %v2407 = vpop.permute.xlu0 %2406
        %2408 = vrot.lane.b32.xlu0 %v2403, 127
        %v2409 = vpop.permute.xlu0 %2408
        %2410 = vrot.lane.b32.xlu0 %v2404, 127
        %v2411 = vpop.permute.xlu0 %2410
        %2412 = vrot.lane.b32.xlu0 %v2405, 127
        %v2413 = vpop.permute.xlu0 %2412
        %v2414 = vsel %vm635, %v2407, %v2409
        %v2415 = vsel %vm635, %v2411, %v2413
        %2418 = vrot.lane.b32.xlu0 %v2402, 126
        %v2419 = vpop.permute.xlu0 %2418
        %2420 = vrot.lane.b32.xlu0 %v2403, 126
        %v2421 = vpop.permute.xlu0 %2420
        %2422 = vrot.lane.b32.xlu0 %v2404, 126
        %v2423 = vpop.permute.xlu0 %2422
        %2424 = vrot.lane.b32.xlu0 %v2405, 126
        %v2425 = vpop.permute.xlu0 %2424
        %v2426 = vsel %vm648, %v2419, %v2421
        %v2427 = vsel %vm648, %v2423, %v2425
        %2430 = vrot.lane.b32.xlu0 %v2402, 125
        %v2431 = vpop.permute.xlu0 %2430
        %2432 = vrot.lane.b32.xlu0 %v2403, 125
        %v2433 = vpop.permute.xlu0 %2432
        %2434 = vrot.lane.b32.xlu0 %v2404, 125
        %v2435 = vpop.permute.xlu0 %2434
        %2436 = vrot.lane.b32.xlu0 %v2405, 125
        %v2437 = vpop.permute.xlu0 %2436
        %v2438 = vsel %vm661, %v2431, %v2433
        %v2439 = vsel %vm661, %v2435, %v2437
        %2442 = vrot.lane.b32.xlu0 %v2402, 124
        %v2443 = vpop.permute.xlu0 %2442
        %2444 = vrot.lane.b32.xlu0 %v2403, 124
        %v2445 = vpop.permute.xlu0 %2444
        %2446 = vrot.lane.b32.xlu0 %v2404, 124
        %v2447 = vpop.permute.xlu0 %2446
        %2448 = vrot.lane.b32.xlu0 %v2405, 124
        %v2449 = vpop.permute.xlu0 %2448
        %v2450 = vsel %vm674, %v2443, %v2445
        %v2451 = vsel %vm674, %v2447, %v2449
        %s2454 = scalar_lea.vmem %s5, 256
        %v2455 = vld [vmem:[%s2454] sm:$0xff]
        %v2456 = vld [vmem:[%s2454 + $0x8] sm:$0xff]
        %v2457 = vld [vmem:[%s2454 + $0x10] sm:$0xff]
        %v2458 = vld [vmem:[%s2454 + $0x18] sm:$0xff]
        %v2459 = vld [vmem:[%s2454 + $0x20] sm:$0xff]
        %v2460 = vld [vmem:[%s2454 + $0x28] sm:$0xff]
        %v2461 = vld [vmem:[%s2454 + $0x30] sm:$0xff]
        %v2462 = vld [vmem:[%s2454 + $0x38] sm:$0xff]
        %s2463 = scalar_lea.vmem %s469, 256
        %v2464 = vld [vmem:[%s2463] sm:$0xff]
        %v2465 = vld [vmem:[%s2463 + $0x8] sm:$0xff]
        %v2466 = vld [vmem:[%s2463 + $0x10] sm:$0xff]
        %v2467 = vld [vmem:[%s2463 + $0x18] sm:$0xff]
        %v2468 = vld [vmem:[%s2463 + $0x20] sm:$0xff]
        %v2469 = vld [vmem:[%s2463 + $0x28] sm:$0xff]
        %v2470 = vld [vmem:[%s2463 + $0x30] sm:$0xff]
        %v2471 = vld [vmem:[%s2463 + $0x38] sm:$0xff]
        %2473 = vset.pattern.permute.xlu0 0
        %2474 = vperm.xlu0 %2473, %v2464
        %v2475 = vpop.permute.xlu0 %2474
        %2478 = vset.pattern.permute.xlu0 0
        %2479 = vperm.xlu0 %2478, %v2465
        %v2480 = vpop.permute.xlu0 %2479
        %2483 = vset.pattern.permute.xlu0 0
        %2484 = vperm.xlu0 %2483, %v2466
        %v2485 = vpop.permute.xlu0 %2484
        %2488 = vset.pattern.permute.xlu0 0
        %2489 = vperm.xlu0 %2488, %v2467
        %v2490 = vpop.permute.xlu0 %2489
        %2493 = vset.pattern.permute.xlu0 0
        %2494 = vperm.xlu0 %2493, %v2468
        %v2495 = vpop.permute.xlu0 %2494
        %2498 = vset.pattern.permute.xlu0 0
        %2499 = vperm.xlu0 %2498, %v2469
        %v2500 = vpop.permute.xlu0 %2499
        %2503 = vset.pattern.permute.xlu0 0
        %2504 = vperm.xlu0 %2503, %v2470
        %v2505 = vpop.permute.xlu0 %2504
        %2508 = vset.pattern.permute.xlu0 0
        %2509 = vperm.xlu0 %2508, %v2471
        %v2510 = vpop.permute.xlu0 %2509
        %v2520 = vunpack.c.l.b16 %v2455
        %v2521 = vunpack.c.h.b16 %v2455
        %v2522 = vunpack.c.l.b16 %v2456
        %v2523 = vunpack.c.h.b16 %v2456
        %v2524 = vunpack.c.l.b16 %v2457
        %v2525 = vunpack.c.h.b16 %v2457
        %v2526 = vunpack.c.l.b16 %v2458
        %v2527 = vunpack.c.h.b16 %v2458
        %v2528 = vunpack.c.l.b16 %v2459
        %v2529 = vunpack.c.h.b16 %v2459
        %v2530 = vunpack.c.l.b16 %v2460
        %v2531 = vunpack.c.h.b16 %v2460
        %v2532 = vunpack.c.l.b16 %v2461
        %v2533 = vunpack.c.h.b16 %v2461
        %v2534 = vunpack.c.l.b16 %v2462
        %v2535 = vunpack.c.h.b16 %v2462
        %v2536 = vpack.c.b16 %v2522, %v2520
        %v2537 = vpack.c.b16 %v2523, %v2521
        %v2538 = vpack.c.b16 %v2526, %v2524
        %v2539 = vpack.c.b16 %v2527, %v2525
        %v2540 = vpack.c.b16 %v2530, %v2528
        %v2541 = vpack.c.b16 %v2531, %v2529
        %v2542 = vpack.c.b16 %v2534, %v2532
        %v2543 = vpack.c.b16 %v2535, %v2533
        %v2549 = vsel %vm771, %v2537, 0
        %v2552 = vsel %vm771, %v2539, 0
        %v2555 = vsel %vm771, %v2541, 0
        %v2558 = vsel %vm771, %v2543, 0
        %2560 = vmatpush.bf16.msra.mxu0 %v2439
        %2561 = vmatpush.bf16.msra.mxu0 %v2438
        %2562 = vmatpush.bf16.msra.mxu0 %v2427
        %2563 = vmatpush.bf16.msra.mxu0 %v2426
        %2564 = vmatpush.bf16.msra.mxu0 %v2415
        %2565 = vmatpush.bf16.msra.mxu0 %v2414
        %2566 = vmatpush.bf16.msra.mxu0 %v2387
        %2567 = vmatpush.bf16.msra.mxu0 %v2386
        %2568 = vmatmul.bf16.gmra.mxu0 %v2536
        %v2569 = vpop.f32.mrf.mxu0
        %v2570 = vadd.f32 %v2475, %v2569
        %v2571 = vpop.f32.mrf.mxu0
        %v2572 = vadd.f32 %v2480, %v2571
        %2573 = vmatmul.bf16.gmra.mxu0 %v2538
        %v2574 = vpop.f32.mrf.mxu0
        %v2575 = vadd.f32 %v2485, %v2574
        %v2576 = vpop.f32.mrf.mxu0
        %v2577 = vadd.f32 %v2490, %v2576
        %2578 = vmatmul.bf16.gmra.mxu0 %v2540
        %v2579 = vpop.f32.mrf.mxu0
        %v2580 = vadd.f32 %v2495, %v2579
        %v2581 = vpop.f32.mrf.mxu0
        %v2582 = vadd.f32 %v2500, %v2581
        %2583 = vmatmul.bf16.gmra.mxu0 %v2542
        %v2584 = vpop.f32.mrf.mxu0
        %v2585 = vadd.f32 %v2505, %v2584
        %v2586 = vpop.f32.mrf.mxu0
        %v2587 = vadd.f32 %v2510, %v2586
        %2588 = vdwg.mxu0
        %2589 = vmatpush.bf16.msra.mxu0 0
        %2590 = vmatpush.bf16.msra.mxu0 0
        %2591 = vmatpush.bf16.msra.mxu0 0
        %2592 = vmatpush.bf16.msra.mxu0 0
        %2593 = vmatpush.bf16.msra.mxu0 0
        %2594 = vmatpush.bf16.msra.mxu0 0
        %2595 = vmatpush.bf16.msra.mxu0 %v2451
        %2596 = vmatpush.bf16.msra.mxu0 %v2450
        %2597 = vmatmul.bf16.gmra.mxu0 %v2549
        %v2598 = vpop.f32.mrf.mxu0
        %v2599 = vadd.f32 %v2570, %v2598
        %v2600 = vpop.f32.mrf.mxu0
        %v2601 = vadd.f32 %v2572, %v2600
        %2602 = vmatmul.bf16.gmra.mxu0 %v2552
        %v2603 = vpop.f32.mrf.mxu0
        %v2604 = vadd.f32 %v2575, %v2603
        %v2605 = vpop.f32.mrf.mxu0
        %v2606 = vadd.f32 %v2577, %v2605
        %2607 = vmatmul.bf16.gmra.mxu0 %v2555
        %v2608 = vpop.f32.mrf.mxu0
        %v2609 = vadd.f32 %v2580, %v2608
        %v2610 = vpop.f32.mrf.mxu0
        %v2611 = vadd.f32 %v2582, %v2610
        %2612 = vmatmul.bf16.gmra.mxu0 %v2558
        %v2613 = vpop.f32.mrf.mxu0
        %v2614 = vadd.f32 %v2585, %v2613
        %v2615 = vpop.f32.mrf.mxu0
        %v2616 = vadd.f32 %v2587, %v2615
        %2617 = vdwg.mxu0
        %v2618 = vtanh.pop %v2599
        %v2619 = vtanh.pop %v2601
        %v2620 = vtanh.pop %v2604
        %v2621 = vtanh.pop %v2606
        %v2622 = vtanh.pop %v2609
        %v2623 = vtanh.pop %v2611
        %v2624 = vtanh.pop %v2614
        %v2625 = vtanh.pop %v2616
        %v2626 = vmul.f32 %v2622, 0.5
        %v2627 = vmul.f32 %v2623, 0.5
        %v2628 = vmul.f32 %v2624, 0.5
        %v2629 = vmul.f32 %v2625, 0.5
        %v2630 = vadd.f32 %v2626, 0.5
        %v2631 = vadd.f32 %v2627, 0.5
        %v2632 = vadd.f32 %v2628, 0.5
        %v2633 = vadd.f32 %v2629, 0.5
        %v2634 = vmul.f32 %v2618, %v2630
        %v2635 = vmul.f32 %v2619, %v2631
        %v2636 = vmul.f32 %v2620, %v2632
        %v2637 = vmul.f32 %v2621, %v2633
        %v2638 = vpack.c.bf16 %v2635, %v2634
        %v2639 = vpack.c.bf16 %v2637, %v2636
        %s2640 = scalar_lea.vmem %s6, 96
        %v2641 = vld [vmem:[%s2640] sm:$0xf]
        %v2642 = vld [vmem:[%s2640 + $0x4] sm:$0xf]
        %v2643 = vld [vmem:[%s2640 + $0x8] sm:$0xf]
        %v2644 = vld [vmem:[%s2640 + $0xc] sm:$0xf]
        %v2645 = vld [vmem:[%s2640 + $0x10] sm:$0xf]
        %v2646 = vld [vmem:[%s2640 + $0x14] sm:$0xf]
        %v2647 = vld [vmem:[%s2640 + $0x18] sm:$0xf]
        %v2648 = vld [vmem:[%s2640 + $0x1c] sm:$0xf]
        %s2649 = scalar_lea.vmem %s7, 192
        %v2650 = vld [vmem:[%s2649] sm:$0xff]
        %v2651 = vld [vmem:[%s2649 + $0x8] sm:$0xff]
        %v2652 = vld [vmem:[%s2649 + $0x10] sm:$0xff]
        %v2653 = vld [vmem:[%s2649 + $0x18] sm:$0xff]
        %v2654 = vld [vmem:[%s2649 + $0x20] sm:$0xff]
        %v2655 = vld [vmem:[%s2649 + $0x28] sm:$0xff]
        %v2656 = vld [vmem:[%s2649 + $0x30] sm:$0xff]
        %v2657 = vld [vmem:[%s2649 + $0x38] sm:$0xff]
        %2659 = vset.pattern.permute.xlu0 0
        %2660 = vperm.xlu0 %2659, %v2650
        %v2661 = vpop.permute.xlu0 %2660
        %2664 = vset.pattern.permute.xlu0 0
        %2665 = vperm.xlu0 %2664, %v2651
        %v2666 = vpop.permute.xlu0 %2665
        %2669 = vset.pattern.permute.xlu0 0
        %2670 = vperm.xlu0 %2669, %v2652
        %v2671 = vpop.permute.xlu0 %2670
        %2674 = vset.pattern.permute.xlu0 0
        %2675 = vperm.xlu0 %2674, %v2653
        %v2676 = vpop.permute.xlu0 %2675
        %2679 = vset.pattern.permute.xlu0 0
        %2680 = vperm.xlu0 %2679, %v2654
        %v2681 = vpop.permute.xlu0 %2680
        %2684 = vset.pattern.permute.xlu0 0
        %2685 = vperm.xlu0 %2684, %v2655
        %v2686 = vpop.permute.xlu0 %2685
        %2689 = vset.pattern.permute.xlu0 0
        %2690 = vperm.xlu0 %2689, %v2656
        %v2691 = vpop.permute.xlu0 %2690
        %2694 = vset.pattern.permute.xlu0 0
        %2695 = vperm.xlu0 %2694, %v2657
        %v2696 = vpop.permute.xlu0 %2695
        %v2706 = vunpack.c.l.b16 %v2641
        %v2707 = vunpack.c.l.b16 %v2642
        %v2708 = vunpack.c.l.b16 %v2643
        %v2709 = vunpack.c.l.b16 %v2644
        %v2710 = vunpack.c.l.b16 %v2645
        %v2711 = vunpack.c.l.b16 %v2646
        %v2712 = vunpack.c.l.b16 %v2647
        %v2713 = vunpack.c.l.b16 %v2648
        %v2714 = vpack.c.b16 %v2707, %v2706
        %v2715 = vpack.c.b16 %v2709, %v2708
        %v2716 = vpack.c.b16 %v2711, %v2710
        %v2717 = vpack.c.b16 %v2713, %v2712
        %v2719 = vsel %vm771, %v2714, 0
        %v2722 = vsel %vm771, %v2715, 0
        %v2725 = vsel %vm771, %v2716, 0
        %v2728 = vsel %vm771, %v2717, 0
        %2730 = vmatpush.bf16.msra.mxu0 0
        %2731 = vmatpush.bf16.msra.mxu0 0
        %2732 = vmatpush.bf16.msra.mxu0 0
        %2733 = vmatpush.bf16.msra.mxu0 0
        %2734 = vmatpush.bf16.msra.mxu0 0
        %2735 = vmatpush.bf16.msra.mxu0 0
        %2736 = vmatpush.bf16.msra.mxu0 %v2639
        %2737 = vmatpush.bf16.msra.mxu0 %v2638
        %2738 = vmatmul.bf16.gmra.mxu0 %v2719
        %v2739 = vpop.f32.mrf.mxu0
        %v2740 = vadd.f32 %v2661, %v2739
        %v2741 = vpop.f32.mrf.mxu0
        %v2742 = vadd.f32 %v2666, %v2741
        %2743 = vmatmul.bf16.gmra.mxu0 %v2722
        %v2744 = vpop.f32.mrf.mxu0
        %v2745 = vadd.f32 %v2671, %v2744
        %v2746 = vpop.f32.mrf.mxu0
        %v2747 = vadd.f32 %v2676, %v2746
        %2748 = vmatmul.bf16.gmra.mxu0 %v2725
        %v2749 = vpop.f32.mrf.mxu0
        %v2750 = vadd.f32 %v2681, %v2749
        %v2751 = vpop.f32.mrf.mxu0
        %v2752 = vadd.f32 %v2686, %v2751
        %2753 = vmatmul.bf16.gmra.mxu0 %v2728
        %v2754 = vpop.f32.mrf.mxu0
        %v2755 = vadd.f32 %v2691, %v2754
        %v2756 = vpop.f32.mrf.mxu0
        %v2757 = vadd.f32 %v2696, %v2756
        %2758 = vdwg.mxu0
        %v2759 = vadd.f32 %v2334, %v2740
        %v2760 = vadd.f32 %v2335, %v2742
        %v2761 = vadd.f32 %v2336, %v2745
        %v2762 = vadd.f32 %v2337, %v2747
        %v2763 = vmul.f32 %v2759, %v474
        %v2764 = vmul.f32 %v2760, %v474
        %v2765 = vmul.f32 %v2761, %v474
        %v2766 = vmul.f32 %v2762, %v474
        %v2767 = vpack.c.bf16 %v2763, %v2763
        %v2768 = vpack.c.bf16 %v2764, %v2764
        %v2769 = vpack.c.bf16 %v2765, %v2765
        %v2770 = vpack.c.bf16 %v2766, %v2766
        %2775 = vrot.lane.b32.xlu0 %v2767, 2
        %v2776 = vpop.permute.xlu0 %2775
        %2777 = vrot.lane.b32.xlu0 %v2768, 2
        %v2778 = vpop.permute.xlu0 %2777
        %2779 = vrot.lane.b32.xlu0 %v2769, 2
        %v2780 = vpop.permute.xlu0 %2779
        %2781 = vrot.lane.b32.xlu0 %v2770, 2
        %v2782 = vpop.permute.xlu0 %2781
        %v2783 = vrot.slane %v2776, 4
        %v2784 = vrot.slane %v2778, 4
        %v2785 = vrot.slane %v2780, 4
        %v2786 = vrot.slane %v2782, 4
        %v2787 = vsel %vm575, %v2783, %v2776
        %v2788 = vsel %vm575, %v2784, %v2778
        %v2789 = vsel %vm575, %v2785, %v2780
        %v2790 = vsel %vm575, %v2786, %v2782
        %2795 = vst.msk [vmem:[#allocation2] sm:$0xff] %vm586, %v2787
        %2796 = vst.msk [vmem:[#allocation2 + $0x8] sm:$0xff] %vm586, %v2788
        %2797 = vst.msk [vmem:[#allocation2 + $0x10] sm:$0xff] %vm586, %v2789
        %2798 = vst.msk [vmem:[#allocation2 + $0x18] sm:$0xff] %vm586, %v2790
        %v2799 = vld [vmem:[#allocation2] sm:$0xf]
        %v2800 = vld [vmem:[#allocation2 + $0x8] sm:$0xf]
        %v2801 = vld [vmem:[#allocation2 + $0x10] sm:$0xf]
        %v2802 = vld [vmem:[#allocation2 + $0x18] sm:$0xf]
        %v2803 = vld [vmem:[#allocation2] sm:$0xff]
        %v2804 = vld [vmem:[#allocation2 + $0x8] sm:$0xff]
        %v2805 = vld [vmem:[#allocation2 + $0x10] sm:$0xff]
        %v2806 = vld [vmem:[#allocation2 + $0x18] sm:$0xff]
        %v2811 = vunpack.c.l.b16 %v2799
        %v2812 = vunpack.c.l.b16 %v2800
        %v2813 = vunpack.c.l.b16 %v2801
        %v2814 = vunpack.c.l.b16 %v2802
        %v2815 = vpack.c.b16 %v2812, %v2811
        %v2816 = vpack.c.b16 %v2814, %v2813
        %v2823 = vunpack.c.l.b16 %v2803
        %v2824 = vunpack.c.h.b16 %v2803
        %v2825 = vunpack.c.l.b16 %v2804
        %v2826 = vunpack.c.h.b16 %v2804
        %v2827 = vunpack.c.l.b16 %v2805
        %v2828 = vunpack.c.h.b16 %v2805
        %v2829 = vunpack.c.l.b16 %v2806
        %v2830 = vunpack.c.h.b16 %v2806
        %v2831 = vpack.c.b16 %v2825, %v2823
        %v2832 = vpack.c.b16 %v2826, %v2824
        %v2833 = vpack.c.b16 %v2829, %v2827
        %v2834 = vpack.c.b16 %v2830, %v2828
        %2835 = vrot.lane.b32.xlu0 %v2831, 127
        %v2836 = vpop.permute.xlu0 %2835
        %2837 = vrot.lane.b32.xlu0 %v2832, 127
        %v2838 = vpop.permute.xlu0 %2837
        %2839 = vrot.lane.b32.xlu0 %v2833, 127
        %v2840 = vpop.permute.xlu0 %2839
        %2841 = vrot.lane.b32.xlu0 %v2834, 127
        %v2842 = vpop.permute.xlu0 %2841
        %v2843 = vsel %vm635, %v2836, %v2838
        %v2844 = vsel %vm635, %v2840, %v2842
        %2847 = vrot.lane.b32.xlu0 %v2831, 126
        %v2848 = vpop.permute.xlu0 %2847
        %2849 = vrot.lane.b32.xlu0 %v2832, 126
        %v2850 = vpop.permute.xlu0 %2849
        %2851 = vrot.lane.b32.xlu0 %v2833, 126
        %v2852 = vpop.permute.xlu0 %2851
        %2853 = vrot.lane.b32.xlu0 %v2834, 126
        %v2854 = vpop.permute.xlu0 %2853
        %v2855 = vsel %vm648, %v2848, %v2850
        %v2856 = vsel %vm648, %v2852, %v2854
        %2859 = vrot.lane.b32.xlu0 %v2831, 125
        %v2860 = vpop.permute.xlu0 %2859
        %2861 = vrot.lane.b32.xlu0 %v2832, 125
        %v2862 = vpop.permute.xlu0 %2861
        %2863 = vrot.lane.b32.xlu0 %v2833, 125
        %v2864 = vpop.permute.xlu0 %2863
        %2865 = vrot.lane.b32.xlu0 %v2834, 125
        %v2866 = vpop.permute.xlu0 %2865
        %v2867 = vsel %vm661, %v2860, %v2862
        %v2868 = vsel %vm661, %v2864, %v2866
        %2871 = vrot.lane.b32.xlu0 %v2831, 124
        %v2872 = vpop.permute.xlu0 %2871
        %2873 = vrot.lane.b32.xlu0 %v2832, 124
        %v2874 = vpop.permute.xlu0 %2873
        %2875 = vrot.lane.b32.xlu0 %v2833, 124
        %v2876 = vpop.permute.xlu0 %2875
        %2877 = vrot.lane.b32.xlu0 %v2834, 124
        %v2878 = vpop.permute.xlu0 %2877
        %v2879 = vsel %vm674, %v2872, %v2874
        %v2880 = vsel %vm674, %v2876, %v2878
        %s2883 = scalar_lea.vmem %s5, 320
        %v2884 = vld [vmem:[%s2883] sm:$0xff]
        %v2885 = vld [vmem:[%s2883 + $0x8] sm:$0xff]
        %v2886 = vld [vmem:[%s2883 + $0x10] sm:$0xff]
        %v2887 = vld [vmem:[%s2883 + $0x18] sm:$0xff]
        %v2888 = vld [vmem:[%s2883 + $0x20] sm:$0xff]
        %v2889 = vld [vmem:[%s2883 + $0x28] sm:$0xff]
        %v2890 = vld [vmem:[%s2883 + $0x30] sm:$0xff]
        %v2891 = vld [vmem:[%s2883 + $0x38] sm:$0xff]
        %s2892 = scalar_lea.vmem %s469, 320
        %v2893 = vld [vmem:[%s2892] sm:$0xff]
        %v2894 = vld [vmem:[%s2892 + $0x8] sm:$0xff]
        %v2895 = vld [vmem:[%s2892 + $0x10] sm:$0xff]
        %v2896 = vld [vmem:[%s2892 + $0x18] sm:$0xff]
        %v2897 = vld [vmem:[%s2892 + $0x20] sm:$0xff]
        %v2898 = vld [vmem:[%s2892 + $0x28] sm:$0xff]
        %v2899 = vld [vmem:[%s2892 + $0x30] sm:$0xff]
        %v2900 = vld [vmem:[%s2892 + $0x38] sm:$0xff]
        %2902 = vset.pattern.permute.xlu0 0
        %2903 = vperm.xlu0 %2902, %v2893
        %v2904 = vpop.permute.xlu0 %2903
        %2907 = vset.pattern.permute.xlu0 0
        %2908 = vperm.xlu0 %2907, %v2894
        %v2909 = vpop.permute.xlu0 %2908
        %2912 = vset.pattern.permute.xlu0 0
        %2913 = vperm.xlu0 %2912, %v2895
        %v2914 = vpop.permute.xlu0 %2913
        %2917 = vset.pattern.permute.xlu0 0
        %2918 = vperm.xlu0 %2917, %v2896
        %v2919 = vpop.permute.xlu0 %2918
        %2922 = vset.pattern.permute.xlu0 0
        %2923 = vperm.xlu0 %2922, %v2897
        %v2924 = vpop.permute.xlu0 %2923
        %2927 = vset.pattern.permute.xlu0 0
        %2928 = vperm.xlu0 %2927, %v2898
        %v2929 = vpop.permute.xlu0 %2928
        %2932 = vset.pattern.permute.xlu0 0
        %2933 = vperm.xlu0 %2932, %v2899
        %v2934 = vpop.permute.xlu0 %2933
        %2937 = vset.pattern.permute.xlu0 0
        %2938 = vperm.xlu0 %2937, %v2900
        %v2939 = vpop.permute.xlu0 %2938
        %v2949 = vunpack.c.l.b16 %v2884
        %v2950 = vunpack.c.h.b16 %v2884
        %v2951 = vunpack.c.l.b16 %v2885
        %v2952 = vunpack.c.h.b16 %v2885
        %v2953 = vunpack.c.l.b16 %v2886
        %v2954 = vunpack.c.h.b16 %v2886
        %v2955 = vunpack.c.l.b16 %v2887
        %v2956 = vunpack.c.h.b16 %v2887
        %v2957 = vunpack.c.l.b16 %v2888
        %v2958 = vunpack.c.h.b16 %v2888
        %v2959 = vunpack.c.l.b16 %v2889
        %v2960 = vunpack.c.h.b16 %v2889
        %v2961 = vunpack.c.l.b16 %v2890
        %v2962 = vunpack.c.h.b16 %v2890
        %v2963 = vunpack.c.l.b16 %v2891
        %v2964 = vunpack.c.h.b16 %v2891
        %v2965 = vpack.c.b16 %v2951, %v2949
        %v2966 = vpack.c.b16 %v2952, %v2950
        %v2967 = vpack.c.b16 %v2955, %v2953
        %v2968 = vpack.c.b16 %v2956, %v2954
        %v2969 = vpack.c.b16 %v2959, %v2957
        %v2970 = vpack.c.b16 %v2960, %v2958
        %v2971 = vpack.c.b16 %v2963, %v2961
        %v2972 = vpack.c.b16 %v2964, %v2962
        %v2978 = vsel %vm771, %v2966, 0
        %v2981 = vsel %vm771, %v2968, 0
        %v2984 = vsel %vm771, %v2970, 0
        %v2987 = vsel %vm771, %v2972, 0
        %2989 = vmatpush.bf16.msra.mxu0 %v2868
        %2990 = vmatpush.bf16.msra.mxu0 %v2867
        %2991 = vmatpush.bf16.msra.mxu0 %v2856
        %2992 = vmatpush.bf16.msra.mxu0 %v2855
        %2993 = vmatpush.bf16.msra.mxu0 %v2844
        %2994 = vmatpush.bf16.msra.mxu0 %v2843
        %2995 = vmatpush.bf16.msra.mxu0 %v2816
        %2996 = vmatpush.bf16.msra.mxu0 %v2815
        %2997 = vmatmul.bf16.gmra.mxu0 %v2965
        %v2998 = vpop.f32.mrf.mxu0
        %v2999 = vadd.f32 %v2904, %v2998
        %v3000 = vpop.f32.mrf.mxu0
        %v3001 = vadd.f32 %v2909, %v3000
        %3002 = vmatmul.bf16.gmra.mxu0 %v2967
        %v3003 = vpop.f32.mrf.mxu0
        %v3004 = vadd.f32 %v2914, %v3003
        %v3005 = vpop.f32.mrf.mxu0
        %v3006 = vadd.f32 %v2919, %v3005
        %3007 = vmatmul.bf16.gmra.mxu0 %v2969
        %v3008 = vpop.f32.mrf.mxu0
        %v3009 = vadd.f32 %v2924, %v3008
        %v3010 = vpop.f32.mrf.mxu0
        %v3011 = vadd.f32 %v2929, %v3010
        %3012 = vmatmul.bf16.gmra.mxu0 %v2971
        %v3013 = vpop.f32.mrf.mxu0
        %v3014 = vadd.f32 %v2934, %v3013
        %v3015 = vpop.f32.mrf.mxu0
        %v3016 = vadd.f32 %v2939, %v3015
        %3017 = vdwg.mxu0
        %3018 = vmatpush.bf16.msra.mxu0 0
        %3019 = vmatpush.bf16.msra.mxu0 0
        %3020 = vmatpush.bf16.msra.mxu0 0
        %3021 = vmatpush.bf16.msra.mxu0 0
        %3022 = vmatpush.bf16.msra.mxu0 0
        %3023 = vmatpush.bf16.msra.mxu0 0
        %3024 = vmatpush.bf16.msra.mxu0 %v2880
        %3025 = vmatpush.bf16.msra.mxu0 %v2879
        %3026 = vmatmul.bf16.gmra.mxu0 %v2978
        %v3027 = vpop.f32.mrf.mxu0
        %v3028 = vadd.f32 %v2999, %v3027
        %v3029 = vpop.f32.mrf.mxu0
        %v3030 = vadd.f32 %v3001, %v3029
        %3031 = vmatmul.bf16.gmra.mxu0 %v2981
        %v3032 = vpop.f32.mrf.mxu0
        %v3033 = vadd.f32 %v3004, %v3032
        %v3034 = vpop.f32.mrf.mxu0
        %v3035 = vadd.f32 %v3006, %v3034
        %3036 = vmatmul.bf16.gmra.mxu0 %v2984
        %v3037 = vpop.f32.mrf.mxu0
        %v3038 = vadd.f32 %v3009, %v3037
        %v3039 = vpop.f32.mrf.mxu0
        %v3040 = vadd.f32 %v3011, %v3039
        %3041 = vmatmul.bf16.gmra.mxu0 %v2987
        %v3042 = vpop.f32.mrf.mxu0
        %v3043 = vadd.f32 %v3014, %v3042
        %v3044 = vpop.f32.mrf.mxu0
        %v3045 = vadd.f32 %v3016, %v3044
        %3046 = vdwg.mxu0
        %v3047 = vtanh.pop %v3028
        %v3048 = vtanh.pop %v3030
        %v3049 = vtanh.pop %v3033
        %v3050 = vtanh.pop %v3035
        %v3051 = vtanh.pop %v3038
        %v3052 = vtanh.pop %v3040
        %v3053 = vtanh.pop %v3043
        %v3054 = vtanh.pop %v3045
        %v3055 = vmul.f32 %v3051, 0.5
        %v3056 = vmul.f32 %v3052, 0.5
        %v3057 = vmul.f32 %v3053, 0.5
        %v3058 = vmul.f32 %v3054, 0.5
        %v3059 = vadd.f32 %v3055, 0.5
        %v3060 = vadd.f32 %v3056, 0.5
        %v3061 = vadd.f32 %v3057, 0.5
        %v3062 = vadd.f32 %v3058, 0.5
        %v3063 = vmul.f32 %v3047, %v3059
        %v3064 = vmul.f32 %v3048, %v3060
        %v3065 = vmul.f32 %v3049, %v3061
        %v3066 = vmul.f32 %v3050, %v3062
        %v3067 = vpack.c.bf16 %v3064, %v3063
        %v3068 = vpack.c.bf16 %v3066, %v3065
        %s3069 = scalar_lea.vmem %s6, 128
        %v3070 = vld [vmem:[%s3069] sm:$0xf]
        %v3071 = vld [vmem:[%s3069 + $0x4] sm:$0xf]
        %v3072 = vld [vmem:[%s3069 + $0x8] sm:$0xf]
        %v3073 = vld [vmem:[%s3069 + $0xc] sm:$0xf]
        %v3074 = vld [vmem:[%s3069 + $0x10] sm:$0xf]
        %v3075 = vld [vmem:[%s3069 + $0x14] sm:$0xf]
        %v3076 = vld [vmem:[%s3069 + $0x18] sm:$0xf]
        %v3077 = vld [vmem:[%s3069 + $0x1c] sm:$0xf]
        %s3078 = scalar_lea.vmem %s7, 256
        %v3079 = vld [vmem:[%s3078] sm:$0xff]
        %v3080 = vld [vmem:[%s3078 + $0x8] sm:$0xff]
        %v3081 = vld [vmem:[%s3078 + $0x10] sm:$0xff]
        %v3082 = vld [vmem:[%s3078 + $0x18] sm:$0xff]
        %v3083 = vld [vmem:[%s3078 + $0x20] sm:$0xff]
        %v3084 = vld [vmem:[%s3078 + $0x28] sm:$0xff]
        %v3085 = vld [vmem:[%s3078 + $0x30] sm:$0xff]
        %v3086 = vld [vmem:[%s3078 + $0x38] sm:$0xff]
        %3088 = vset.pattern.permute.xlu0 0
        %3089 = vperm.xlu0 %3088, %v3079
        %v3090 = vpop.permute.xlu0 %3089
        %3093 = vset.pattern.permute.xlu0 0
        %3094 = vperm.xlu0 %3093, %v3080
        %v3095 = vpop.permute.xlu0 %3094
        %3098 = vset.pattern.permute.xlu0 0
        %3099 = vperm.xlu0 %3098, %v3081
        %v3100 = vpop.permute.xlu0 %3099
        %3103 = vset.pattern.permute.xlu0 0
        %3104 = vperm.xlu0 %3103, %v3082
        %v3105 = vpop.permute.xlu0 %3104
        %3108 = vset.pattern.permute.xlu0 0
        %3109 = vperm.xlu0 %3108, %v3083
        %v3110 = vpop.permute.xlu0 %3109
        %3113 = vset.pattern.permute.xlu0 0
        %3114 = vperm.xlu0 %3113, %v3084
        %v3115 = vpop.permute.xlu0 %3114
        %3118 = vset.pattern.permute.xlu0 0
        %3119 = vperm.xlu0 %3118, %v3085
        %v3120 = vpop.permute.xlu0 %3119
        %3123 = vset.pattern.permute.xlu0 0
        %3124 = vperm.xlu0 %3123, %v3086
        %v3125 = vpop.permute.xlu0 %3124
        %v3135 = vunpack.c.l.b16 %v3070
        %v3136 = vunpack.c.l.b16 %v3071
        %v3137 = vunpack.c.l.b16 %v3072
        %v3138 = vunpack.c.l.b16 %v3073
        %v3139 = vunpack.c.l.b16 %v3074
        %v3140 = vunpack.c.l.b16 %v3075
        %v3141 = vunpack.c.l.b16 %v3076
        %v3142 = vunpack.c.l.b16 %v3077
        %v3143 = vpack.c.b16 %v3136, %v3135
        %v3144 = vpack.c.b16 %v3138, %v3137
        %v3145 = vpack.c.b16 %v3140, %v3139
        %v3146 = vpack.c.b16 %v3142, %v3141
        %v3148 = vsel %vm771, %v3143, 0
        %v3151 = vsel %vm771, %v3144, 0
        %v3154 = vsel %vm771, %v3145, 0
        %v3157 = vsel %vm771, %v3146, 0
        %3159 = vmatpush.bf16.msra.mxu0 0
        %3160 = vmatpush.bf16.msra.mxu0 0
        %3161 = vmatpush.bf16.msra.mxu0 0
        %3162 = vmatpush.bf16.msra.mxu0 0
        %3163 = vmatpush.bf16.msra.mxu0 0
        %3164 = vmatpush.bf16.msra.mxu0 0
        %3165 = vmatpush.bf16.msra.mxu0 %v3068
        %3166 = vmatpush.bf16.msra.mxu0 %v3067
        %3167 = vmatmul.bf16.gmra.mxu0 %v3148
        %v3168 = vpop.f32.mrf.mxu0
        %v3169 = vadd.f32 %v3090, %v3168
        %v3170 = vpop.f32.mrf.mxu0
        %v3171 = vadd.f32 %v3095, %v3170
        %3172 = vmatmul.bf16.gmra.mxu0 %v3151
        %v3173 = vpop.f32.mrf.mxu0
        %v3174 = vadd.f32 %v3100, %v3173
        %v3175 = vpop.f32.mrf.mxu0
        %v3176 = vadd.f32 %v3105, %v3175
        %3177 = vmatmul.bf16.gmra.mxu0 %v3154
        %v3178 = vpop.f32.mrf.mxu0
        %v3179 = vadd.f32 %v3110, %v3178
        %v3180 = vpop.f32.mrf.mxu0
        %v3181 = vadd.f32 %v3115, %v3180
        %3182 = vmatmul.bf16.gmra.mxu0 %v3157
        %v3183 = vpop.f32.mrf.mxu0
        %v3184 = vadd.f32 %v3120, %v3183
        %v3185 = vpop.f32.mrf.mxu0
        %v3186 = vadd.f32 %v3125, %v3185
        %3187 = vdwg.mxu0
        %v3188 = vadd.f32 %v2763, %v3169
        %v3189 = vadd.f32 %v2764, %v3171
        %v3190 = vadd.f32 %v2765, %v3174
        %v3191 = vadd.f32 %v2766, %v3176
        %v3192 = vmul.f32 %v3188, %v474
        %v3193 = vmul.f32 %v3189, %v474
        %v3194 = vmul.f32 %v3190, %v474
        %v3195 = vmul.f32 %v3191, %v474
        %v3196 = vadd.f32 %v2750, %v3179
        %v3197 = vadd.f32 %v2752, %v3181
        %v3198 = vadd.f32 %v2755, %v3184
        %v3199 = vadd.f32 %v2757, %v3186
        %v3200 = vpack.c.bf16 %v3192, %v3192
        %v3201 = vpack.c.bf16 %v3193, %v3193
        %v3202 = vpack.c.bf16 %v3194, %v3194
        %v3203 = vpack.c.bf16 %v3195, %v3195
        %3208 = vrot.lane.b32.xlu0 %v3200, 2
        %v3209 = vpop.permute.xlu0 %3208
        %3210 = vrot.lane.b32.xlu0 %v3201, 2
        %v3211 = vpop.permute.xlu0 %3210
        %3212 = vrot.lane.b32.xlu0 %v3202, 2
        %v3213 = vpop.permute.xlu0 %3212
        %3214 = vrot.lane.b32.xlu0 %v3203, 2
        %v3215 = vpop.permute.xlu0 %3214
        %v3216 = vrot.slane %v3209, 4
        %v3217 = vrot.slane %v3211, 4
        %v3218 = vrot.slane %v3213, 4
        %v3219 = vrot.slane %v3215, 4
        %v3220 = vsel %vm575, %v3216, %v3209
        %v3221 = vsel %vm575, %v3217, %v3211
        %v3222 = vsel %vm575, %v3218, %v3213
        %v3223 = vsel %vm575, %v3219, %v3215
        %3228 = vst.msk [vmem:[#allocation2] sm:$0xff] %vm586, %v3220
        %3229 = vst.msk [vmem:[#allocation2 + $0x8] sm:$0xff] %vm586, %v3221
        %3230 = vst.msk [vmem:[#allocation2 + $0x10] sm:$0xff] %vm586, %v3222
        %3231 = vst.msk [vmem:[#allocation2 + $0x18] sm:$0xff] %vm586, %v3223
        %v3232 = vld [vmem:[#allocation2] sm:$0xf]
        %v3233 = vld [vmem:[#allocation2 + $0x8] sm:$0xf]
        %v3234 = vld [vmem:[#allocation2 + $0x10] sm:$0xf]
        %v3235 = vld [vmem:[#allocation2 + $0x18] sm:$0xf]
        %v3236 = vld [vmem:[#allocation2] sm:$0xff]
        %v3237 = vld [vmem:[#allocation2 + $0x8] sm:$0xff]
        %v3238 = vld [vmem:[#allocation2 + $0x10] sm:$0xff]
        %v3239 = vld [vmem:[#allocation2 + $0x18] sm:$0xff]
        %v3244 = vunpack.c.l.b16 %v3232
        %v3245 = vunpack.c.l.b16 %v3233
        %v3246 = vunpack.c.l.b16 %v3234
        %v3247 = vunpack.c.l.b16 %v3235
        %v3248 = vpack.c.b16 %v3245, %v3244
        %v3249 = vpack.c.b16 %v3247, %v3246
        %v3256 = vunpack.c.l.b16 %v3236
        %v3257 = vunpack.c.h.b16 %v3236
        %v3258 = vunpack.c.l.b16 %v3237
        %v3259 = vunpack.c.h.b16 %v3237
        %v3260 = vunpack.c.l.b16 %v3238
        %v3261 = vunpack.c.h.b16 %v3238
        %v3262 = vunpack.c.l.b16 %v3239
        %v3263 = vunpack.c.h.b16 %v3239
        %v3264 = vpack.c.b16 %v3258, %v3256
        %v3265 = vpack.c.b16 %v3259, %v3257
        %v3266 = vpack.c.b16 %v3262, %v3260
        %v3267 = vpack.c.b16 %v3263, %v3261
        %3268 = vrot.lane.b32.xlu0 %v3264, 127
        %v3269 = vpop.permute.xlu0 %3268
        %3270 = vrot.lane.b32.xlu0 %v3265, 127
        %v3271 = vpop.permute.xlu0 %3270
        %3272 = vrot.lane.b32.xlu0 %v3266, 127
        %v3273 = vpop.permute.xlu0 %3272
        %3274 = vrot.lane.b32.xlu0 %v3267, 127
        %v3275 = vpop.permute.xlu0 %3274
        %v3276 = vsel %vm635, %v3269, %v3271
        %v3277 = vsel %vm635, %v3273, %v3275
        %3280 = vrot.lane.b32.xlu0 %v3264, 126
        %v3281 = vpop.permute.xlu0 %3280
        %3282 = vrot.lane.b32.xlu0 %v3265, 126
        %v3283 = vpop.permute.xlu0 %3282
        %3284 = vrot.lane.b32.xlu0 %v3266, 126
        %v3285 = vpop.permute.xlu0 %3284
        %3286 = vrot.lane.b32.xlu0 %v3267, 126
        %v3287 = vpop.permute.xlu0 %3286
        %v3288 = vsel %vm648, %v3281, %v3283
        %v3289 = vsel %vm648, %v3285, %v3287
        %3292 = vrot.lane.b32.xlu0 %v3264, 125
        %v3293 = vpop.permute.xlu0 %3292
        %3294 = vrot.lane.b32.xlu0 %v3265, 125
        %v3295 = vpop.permute.xlu0 %3294
        %3296 = vrot.lane.b32.xlu0 %v3266, 125
        %v3297 = vpop.permute.xlu0 %3296
        %3298 = vrot.lane.b32.xlu0 %v3267, 125
        %v3299 = vpop.permute.xlu0 %3298
        %v3300 = vsel %vm661, %v3293, %v3295
        %v3301 = vsel %vm661, %v3297, %v3299
        %3304 = vrot.lane.b32.xlu0 %v3264, 124
        %v3305 = vpop.permute.xlu0 %3304
        %3306 = vrot.lane.b32.xlu0 %v3265, 124
        %v3307 = vpop.permute.xlu0 %3306
        %3308 = vrot.lane.b32.xlu0 %v3266, 124
        %v3309 = vpop.permute.xlu0 %3308
        %3310 = vrot.lane.b32.xlu0 %v3267, 124
        %v3311 = vpop.permute.xlu0 %3310
        %v3312 = vsel %vm674, %v3305, %v3307
        %v3313 = vsel %vm674, %v3309, %v3311
        %s3316 = scalar_lea.vmem %s5, 384
        %v3317 = vld [vmem:[%s3316] sm:$0xff]
        %v3318 = vld [vmem:[%s3316 + $0x8] sm:$0xff]
        %v3319 = vld [vmem:[%s3316 + $0x10] sm:$0xff]
        %v3320 = vld [vmem:[%s3316 + $0x18] sm:$0xff]
        %v3321 = vld [vmem:[%s3316 + $0x20] sm:$0xff]
        %v3322 = vld [vmem:[%s3316 + $0x28] sm:$0xff]
        %v3323 = vld [vmem:[%s3316 + $0x30] sm:$0xff]
        %v3324 = vld [vmem:[%s3316 + $0x38] sm:$0xff]
        %s3325 = scalar_lea.vmem %s469, 384
        %v3326 = vld [vmem:[%s3325] sm:$0xff]
        %v3327 = vld [vmem:[%s3325 + $0x8] sm:$0xff]
        %v3328 = vld [vmem:[%s3325 + $0x10] sm:$0xff]
        %v3329 = vld [vmem:[%s3325 + $0x18] sm:$0xff]
        %v3330 = vld [vmem:[%s3325 + $0x20] sm:$0xff]
        %v3331 = vld [vmem:[%s3325 + $0x28] sm:$0xff]
        %v3332 = vld [vmem:[%s3325 + $0x30] sm:$0xff]
        %v3333 = vld [vmem:[%s3325 + $0x38] sm:$0xff]
        %3335 = vset.pattern.permute.xlu0 0
        %3336 = vperm.xlu0 %3335, %v3326
        %v3337 = vpop.permute.xlu0 %3336
        %3340 = vset.pattern.permute.xlu0 0
        %3341 = vperm.xlu0 %3340, %v3327
        %v3342 = vpop.permute.xlu0 %3341
        %3345 = vset.pattern.permute.xlu0 0
        %3346 = vperm.xlu0 %3345, %v3328
        %v3347 = vpop.permute.xlu0 %3346
        %3350 = vset.pattern.permute.xlu0 0
        %3351 = vperm.xlu0 %3350, %v3329
        %v3352 = vpop.permute.xlu0 %3351
        %3355 = vset.pattern.permute.xlu0 0
        %3356 = vperm.xlu0 %3355, %v3330
        %v3357 = vpop.permute.xlu0 %3356
        %3360 = vset.pattern.permute.xlu0 0
        %3361 = vperm.xlu0 %3360, %v3331
        %v3362 = vpop.permute.xlu0 %3361
        %3365 = vset.pattern.permute.xlu0 0
        %3366 = vperm.xlu0 %3365, %v3332
        %v3367 = vpop.permute.xlu0 %3366
        %3370 = vset.pattern.permute.xlu0 0
        %3371 = vperm.xlu0 %3370, %v3333
        %v3372 = vpop.permute.xlu0 %3371
        %v3382 = vunpack.c.l.b16 %v3317
        %v3383 = vunpack.c.h.b16 %v3317
        %v3384 = vunpack.c.l.b16 %v3318
        %v3385 = vunpack.c.h.b16 %v3318
        %v3386 = vunpack.c.l.b16 %v3319
        %v3387 = vunpack.c.h.b16 %v3319
        %v3388 = vunpack.c.l.b16 %v3320
        %v3389 = vunpack.c.h.b16 %v3320
        %v3390 = vunpack.c.l.b16 %v3321
        %v3391 = vunpack.c.h.b16 %v3321
        %v3392 = vunpack.c.l.b16 %v3322
        %v3393 = vunpack.c.h.b16 %v3322
        %v3394 = vunpack.c.l.b16 %v3323
        %v3395 = vunpack.c.h.b16 %v3323
        %v3396 = vunpack.c.l.b16 %v3324
        %v3397 = vunpack.c.h.b16 %v3324
        %v3398 = vpack.c.b16 %v3384, %v3382
        %v3399 = vpack.c.b16 %v3385, %v3383
        %v3400 = vpack.c.b16 %v3388, %v3386
        %v3401 = vpack.c.b16 %v3389, %v3387
        %v3402 = vpack.c.b16 %v3392, %v3390
        %v3403 = vpack.c.b16 %v3393, %v3391
        %v3404 = vpack.c.b16 %v3396, %v3394
        %v3405 = vpack.c.b16 %v3397, %v3395
        %v3411 = vsel %vm771, %v3399, 0
        %v3414 = vsel %vm771, %v3401, 0
        %v3417 = vsel %vm771, %v3403, 0
        %v3420 = vsel %vm771, %v3405, 0
        %3422 = vmatpush.bf16.msra.mxu0 %v3301
        %3423 = vmatpush.bf16.msra.mxu0 %v3300
        %3424 = vmatpush.bf16.msra.mxu0 %v3289
        %3425 = vmatpush.bf16.msra.mxu0 %v3288
        %3426 = vmatpush.bf16.msra.mxu0 %v3277
        %3427 = vmatpush.bf16.msra.mxu0 %v3276
        %3428 = vmatpush.bf16.msra.mxu0 %v3249
        %3429 = vmatpush.bf16.msra.mxu0 %v3248
        %3430 = vmatmul.bf16.gmra.mxu0 %v3398
        %v3431 = vpop.f32.mrf.mxu0
        %v3432 = vadd.f32 %v3337, %v3431
        %v3433 = vpop.f32.mrf.mxu0
        %v3434 = vadd.f32 %v3342, %v3433
        %3435 = vmatmul.bf16.gmra.mxu0 %v3400
        %v3436 = vpop.f32.mrf.mxu0
        %v3437 = vadd.f32 %v3347, %v3436
        %v3438 = vpop.f32.mrf.mxu0
        %v3439 = vadd.f32 %v3352, %v3438
        %3440 = vmatmul.bf16.gmra.mxu0 %v3402
        %v3441 = vpop.f32.mrf.mxu0
        %v3442 = vadd.f32 %v3357, %v3441
        %v3443 = vpop.f32.mrf.mxu0
        %v3444 = vadd.f32 %v3362, %v3443
        %3445 = vmatmul.bf16.gmra.mxu0 %v3404
        %v3446 = vpop.f32.mrf.mxu0
        %v3447 = vadd.f32 %v3367, %v3446
        %v3448 = vpop.f32.mrf.mxu0
        %v3449 = vadd.f32 %v3372, %v3448
        %3450 = vdwg.mxu0
        %3451 = vmatpush.bf16.msra.mxu0 0
        %3452 = vmatpush.bf16.msra.mxu0 0
        %3453 = vmatpush.bf16.msra.mxu0 0
        %3454 = vmatpush.bf16.msra.mxu0 0
        %3455 = vmatpush.bf16.msra.mxu0 0
        %3456 = vmatpush.bf16.msra.mxu0 0
        %3457 = vmatpush.bf16.msra.mxu0 %v3313
        %3458 = vmatpush.bf16.msra.mxu0 %v3312
        %3459 = vmatmul.bf16.gmra.mxu0 %v3411
        %v3460 = vpop.f32.mrf.mxu0
        %v3461 = vadd.f32 %v3432, %v3460
        %v3462 = vpop.f32.mrf.mxu0
        %v3463 = vadd.f32 %v3434, %v3462
        %3464 = vmatmul.bf16.gmra.mxu0 %v3414
        %v3465 = vpop.f32.mrf.mxu0
        %v3466 = vadd.f32 %v3437, %v3465
        %v3467 = vpop.f32.mrf.mxu0
        %v3468 = vadd.f32 %v3439, %v3467
        %3469 = vmatmul.bf16.gmra.mxu0 %v3417
        %v3470 = vpop.f32.mrf.mxu0
        %v3471 = vadd.f32 %v3442, %v3470
        %v3472 = vpop.f32.mrf.mxu0
        %v3473 = vadd.f32 %v3444, %v3472
        %3474 = vmatmul.bf16.gmra.mxu0 %v3420
        %v3475 = vpop.f32.mrf.mxu0
        %v3476 = vadd.f32 %v3447, %v3475
        %v3477 = vpop.f32.mrf.mxu0
        %v3478 = vadd.f32 %v3449, %v3477
        %3479 = vdwg.mxu0
        %v3480 = vtanh.pop %v3461
        %v3481 = vtanh.pop %v3463
        %v3482 = vtanh.pop %v3466
        %v3483 = vtanh.pop %v3468
        %v3484 = vtanh.pop %v3471
        %v3485 = vtanh.pop %v3473
        %v3486 = vtanh.pop %v3476
        %v3487 = vtanh.pop %v3478
        %v3488 = vmul.f32 %v3484, 0.5
        %v3489 = vmul.f32 %v3485, 0.5
        %v3490 = vmul.f32 %v3486, 0.5
        %v3491 = vmul.f32 %v3487, 0.5
        %v3492 = vadd.f32 %v3488, 0.5
        %v3493 = vadd.f32 %v3489, 0.5
        %v3494 = vadd.f32 %v3490, 0.5
        %v3495 = vadd.f32 %v3491, 0.5
        %v3496 = vmul.f32 %v3480, %v3492
        %v3497 = vmul.f32 %v3481, %v3493
        %v3498 = vmul.f32 %v3482, %v3494
        %v3499 = vmul.f32 %v3483, %v3495
        %v3500 = vpack.c.bf16 %v3497, %v3496
        %v3501 = vpack.c.bf16 %v3499, %v3498
        %s3502 = scalar_lea.vmem %s6, 160
        %v3503 = vld [vmem:[%s3502] sm:$0xf]
        %v3504 = vld [vmem:[%s3502 + $0x4] sm:$0xf]
        %v3505 = vld [vmem:[%s3502 + $0x8] sm:$0xf]
        %v3506 = vld [vmem:[%s3502 + $0xc] sm:$0xf]
        %v3507 = vld [vmem:[%s3502 + $0x10] sm:$0xf]
        %v3508 = vld [vmem:[%s3502 + $0x14] sm:$0xf]
        %v3509 = vld [vmem:[%s3502 + $0x18] sm:$0xf]
        %v3510 = vld [vmem:[%s3502 + $0x1c] sm:$0xf]
        %s3511 = scalar_lea.vmem %s7, 320
        %v3512 = vld [vmem:[%s3511] sm:$0xff]
        %v3513 = vld [vmem:[%s3511 + $0x8] sm:$0xff]
        %v3514 = vld [vmem:[%s3511 + $0x10] sm:$0xff]
        %v3515 = vld [vmem:[%s3511 + $0x18] sm:$0xff]
        %v3516 = vld [vmem:[%s3511 + $0x20] sm:$0xff]
        %v3517 = vld [vmem:[%s3511 + $0x28] sm:$0xff]
        %v3518 = vld [vmem:[%s3511 + $0x30] sm:$0xff]
        %v3519 = vld [vmem:[%s3511 + $0x38] sm:$0xff]
        %3521 = vset.pattern.permute.xlu0 0
        %3522 = vperm.xlu0 %3521, %v3512
        %v3523 = vpop.permute.xlu0 %3522
        %3526 = vset.pattern.permute.xlu0 0
        %3527 = vperm.xlu0 %3526, %v3513
        %v3528 = vpop.permute.xlu0 %3527
        %3531 = vset.pattern.permute.xlu0 0
        %3532 = vperm.xlu0 %3531, %v3514
        %v3533 = vpop.permute.xlu0 %3532
        %3536 = vset.pattern.permute.xlu0 0
        %3537 = vperm.xlu0 %3536, %v3515
        %v3538 = vpop.permute.xlu0 %3537
        %3541 = vset.pattern.permute.xlu0 0
        %3542 = vperm.xlu0 %3541, %v3516
        %v3543 = vpop.permute.xlu0 %3542
        %3546 = vset.pattern.permute.xlu0 0
        %3547 = vperm.xlu0 %3546, %v3517
        %v3548 = vpop.permute.xlu0 %3547
        %3551 = vset.pattern.permute.xlu0 0
        %3552 = vperm.xlu0 %3551, %v3518
        %v3553 = vpop.permute.xlu0 %3552
        %3556 = vset.pattern.permute.xlu0 0
        %3557 = vperm.xlu0 %3556, %v3519
        %v3558 = vpop.permute.xlu0 %3557
        %v3568 = vunpack.c.l.b16 %v3503
        %v3569 = vunpack.c.l.b16 %v3504
        %v3570 = vunpack.c.l.b16 %v3505
        %v3571 = vunpack.c.l.b16 %v3506
        %v3572 = vunpack.c.l.b16 %v3507
        %v3573 = vunpack.c.l.b16 %v3508
        %v3574 = vunpack.c.l.b16 %v3509
        %v3575 = vunpack.c.l.b16 %v3510
        %v3576 = vpack.c.b16 %v3569, %v3568
        %v3577 = vpack.c.b16 %v3571, %v3570
        %v3578 = vpack.c.b16 %v3573, %v3572
        %v3579 = vpack.c.b16 %v3575, %v3574
        %v3581 = vsel %vm771, %v3576, 0
        %v3584 = vsel %vm771, %v3577, 0
        %v3587 = vsel %vm771, %v3578, 0
        %v3590 = vsel %vm771, %v3579, 0
        %3592 = vmatpush.bf16.msra.mxu0 0
        %3593 = vmatpush.bf16.msra.mxu0 0
        %3594 = vmatpush.bf16.msra.mxu0 0
        %3595 = vmatpush.bf16.msra.mxu0 0
        %3596 = vmatpush.bf16.msra.mxu0 0
        %3597 = vmatpush.bf16.msra.mxu0 0
        %3598 = vmatpush.bf16.msra.mxu0 %v3501
        %3599 = vmatpush.bf16.msra.mxu0 %v3500
        %3600 = vmatmul.bf16.gmra.mxu0 %v3581
        %v3601 = vpop.f32.mrf.mxu0
        %v3602 = vadd.f32 %v3523, %v3601
        %v3603 = vpop.f32.mrf.mxu0
        %v3604 = vadd.f32 %v3528, %v3603
        %3605 = vmatmul.bf16.gmra.mxu0 %v3584
        %v3606 = vpop.f32.mrf.mxu0
        %v3607 = vadd.f32 %v3533, %v3606
        %v3608 = vpop.f32.mrf.mxu0
        %v3609 = vadd.f32 %v3538, %v3608
        %3610 = vmatmul.bf16.gmra.mxu0 %v3587
        %v3611 = vpop.f32.mrf.mxu0
        %v3612 = vadd.f32 %v3543, %v3611
        %v3613 = vpop.f32.mrf.mxu0
        %v3614 = vadd.f32 %v3548, %v3613
        %3615 = vmatmul.bf16.gmra.mxu0 %v3590
        %v3616 = vpop.f32.mrf.mxu0
        %v3617 = vadd.f32 %v3553, %v3616
        %v3618 = vpop.f32.mrf.mxu0
        %v3619 = vadd.f32 %v3558, %v3618
        %3620 = vdwg.mxu0
        %v3621 = vadd.f32 %v3192, %v3602
        %v3622 = vadd.f32 %v3193, %v3604
        %v3623 = vadd.f32 %v3194, %v3607
        %v3624 = vadd.f32 %v3195, %v3609
        %v3625 = vmul.f32 %v3621, %v474
        %v3626 = vmul.f32 %v3622, %v474
        %v3627 = vmul.f32 %v3623, %v474
        %v3628 = vmul.f32 %v3624, %v474
        %v3629 = vadd.f32 %v3196, %v3612
        %v3630 = vadd.f32 %v3197, %v3614
        %v3631 = vadd.f32 %v3198, %v3617
        %v3632 = vadd.f32 %v3199, %v3619
        %v3633 = vpack.c.bf16 %v3625, %v3625
        %v3634 = vpack.c.bf16 %v3626, %v3626
        %v3635 = vpack.c.bf16 %v3627, %v3627
        %v3636 = vpack.c.bf16 %v3628, %v3628
        %3641 = vrot.lane.b32.xlu0 %v3633, 2
        %v3642 = vpop.permute.xlu0 %3641
        %3643 = vrot.lane.b32.xlu0 %v3634, 2
        %v3644 = vpop.permute.xlu0 %3643
        %3645 = vrot.lane.b32.xlu0 %v3635, 2
        %v3646 = vpop.permute.xlu0 %3645
        %3647 = vrot.lane.b32.xlu0 %v3636, 2
        %v3648 = vpop.permute.xlu0 %3647
        %v3649 = vrot.slane %v3642, 4
        %v3650 = vrot.slane %v3644, 4
        %v3651 = vrot.slane %v3646, 4
        %v3652 = vrot.slane %v3648, 4
        %v3653 = vsel %vm575, %v3649, %v3642
        %v3654 = vsel %vm575, %v3650, %v3644
        %v3655 = vsel %vm575, %v3651, %v3646
        %v3656 = vsel %vm575, %v3652, %v3648
        %3661 = vst.msk [vmem:[#allocation2] sm:$0xff] %vm586, %v3653
        %3662 = vst.msk [vmem:[#allocation2 + $0x8] sm:$0xff] %vm586, %v3654
        %3663 = vst.msk [vmem:[#allocation2 + $0x10] sm:$0xff] %vm586, %v3655
        %3664 = vst.msk [vmem:[#allocation2 + $0x18] sm:$0xff] %vm586, %v3656
        %v3665 = vld [vmem:[#allocation2] sm:$0xf]
        %v3666 = vld [vmem:[#allocation2 + $0x8] sm:$0xf]
        %v3667 = vld [vmem:[#allocation2 + $0x10] sm:$0xf]
        %v3668 = vld [vmem:[#allocation2 + $0x18] sm:$0xf]
        %v3669 = vld [vmem:[#allocation2] sm:$0xff]
        %v3670 = vld [vmem:[#allocation2 + $0x8] sm:$0xff]
        %v3671 = vld [vmem:[#allocation2 + $0x10] sm:$0xff]
        %v3672 = vld [vmem:[#allocation2 + $0x18] sm:$0xff]
        %v3677 = vunpack.c.l.b16 %v3665
        %v3678 = vunpack.c.l.b16 %v3666
        %v3679 = vunpack.c.l.b16 %v3667
        %v3680 = vunpack.c.l.b16 %v3668
        %v3681 = vpack.c.b16 %v3678, %v3677
        %v3682 = vpack.c.b16 %v3680, %v3679
        %v3689 = vunpack.c.l.b16 %v3669
        %v3690 = vunpack.c.h.b16 %v3669
        %v3691 = vunpack.c.l.b16 %v3670
        %v3692 = vunpack.c.h.b16 %v3670
        %v3693 = vunpack.c.l.b16 %v3671
        %v3694 = vunpack.c.h.b16 %v3671
        %v3695 = vunpack.c.l.b16 %v3672
        %v3696 = vunpack.c.h.b16 %v3672
        %v3697 = vpack.c.b16 %v3691, %v3689
        %v3698 = vpack.c.b16 %v3692, %v3690
        %v3699 = vpack.c.b16 %v3695, %v3693
        %v3700 = vpack.c.b16 %v3696, %v3694
        %3701 = vrot.lane.b32.xlu0 %v3697, 127
        %v3702 = vpop.permute.xlu0 %3701
        %3703 = vrot.lane.b32.xlu0 %v3698, 127
        %v3704 = vpop.permute.xlu0 %3703
        %3705 = vrot.lane.b32.xlu0 %v3699, 127
        %v3706 = vpop.permute.xlu0 %3705
        %3707 = vrot.lane.b32.xlu0 %v3700, 127
        %v3708 = vpop.permute.xlu0 %3707
        %v3709 = vsel %vm635, %v3702, %v3704
        %v3710 = vsel %vm635, %v3706, %v3708
        %3713 = vrot.lane.b32.xlu0 %v3697, 126
        %v3714 = vpop.permute.xlu0 %3713
        %3715 = vrot.lane.b32.xlu0 %v3698, 126
        %v3716 = vpop.permute.xlu0 %3715
        %3717 = vrot.lane.b32.xlu0 %v3699, 126
        %v3718 = vpop.permute.xlu0 %3717
        %3719 = vrot.lane.b32.xlu0 %v3700, 126
        %v3720 = vpop.permute.xlu0 %3719
        %v3721 = vsel %vm648, %v3714, %v3716
        %v3722 = vsel %vm648, %v3718, %v3720
        %3725 = vrot.lane.b32.xlu0 %v3697, 125
        %v3726 = vpop.permute.xlu0 %3725
        %3727 = vrot.lane.b32.xlu0 %v3698, 125
        %v3728 = vpop.permute.xlu0 %3727
        %3729 = vrot.lane.b32.xlu0 %v3699, 125
        %v3730 = vpop.permute.xlu0 %3729
        %3731 = vrot.lane.b32.xlu0 %v3700, 125
        %v3732 = vpop.permute.xlu0 %3731
        %v3733 = vsel %vm661, %v3726, %v3728
        %v3734 = vsel %vm661, %v3730, %v3732
        %3737 = vrot.lane.b32.xlu0 %v3697, 124
        %v3738 = vpop.permute.xlu0 %3737
        %3739 = vrot.lane.b32.xlu0 %v3698, 124
        %v3740 = vpop.permute.xlu0 %3739
        %3741 = vrot.lane.b32.xlu0 %v3699, 124
        %v3742 = vpop.permute.xlu0 %3741
        %3743 = vrot.lane.b32.xlu0 %v3700, 124
        %v3744 = vpop.permute.xlu0 %3743
        %v3745 = vsel %vm674, %v3738, %v3740
        %v3746 = vsel %vm674, %v3742, %v3744
        %s3749 = scalar_lea.vmem %s5, 448
        %v3750 = vld [vmem:[%s3749] sm:$0xff]
        %v3751 = vld [vmem:[%s3749 + $0x8] sm:$0xff]
        %v3752 = vld [vmem:[%s3749 + $0x10] sm:$0xff]
        %v3753 = vld [vmem:[%s3749 + $0x18] sm:$0xff]
        %v3754 = vld [vmem:[%s3749 + $0x20] sm:$0xff]
        %v3755 = vld [vmem:[%s3749 + $0x28] sm:$0xff]
        %v3756 = vld [vmem:[%s3749 + $0x30] sm:$0xff]
        %v3757 = vld [vmem:[%s3749 + $0x38] sm:$0xff]
        %s3758 = scalar_lea.vmem %s469, 448
        %v3759 = vld [vmem:[%s3758] sm:$0xff]
        %v3760 = vld [vmem:[%s3758 + $0x8] sm:$0xff]
        %v3761 = vld [vmem:[%s3758 + $0x10] sm:$0xff]
        %v3762 = vld [vmem:[%s3758 + $0x18] sm:$0xff]
        %v3763 = vld [vmem:[%s3758 + $0x20] sm:$0xff]
        %v3764 = vld [vmem:[%s3758 + $0x28] sm:$0xff]
        %v3765 = vld [vmem:[%s3758 + $0x30] sm:$0xff]
        %v3766 = vld [vmem:[%s3758 + $0x38] sm:$0xff]
        %3768 = vset.pattern.permute.xlu0 0
        %3769 = vperm.xlu0 %3768, %v3759
        %v3770 = vpop.permute.xlu0 %3769
        %3773 = vset.pattern.permute.xlu0 0
        %3774 = vperm.xlu0 %3773, %v3760
        %v3775 = vpop.permute.xlu0 %3774
        %3778 = vset.pattern.permute.xlu0 0
        %3779 = vperm.xlu0 %3778, %v3761
        %v3780 = vpop.permute.xlu0 %3779
        %3783 = vset.pattern.permute.xlu0 0
        %3784 = vperm.xlu0 %3783, %v3762
        %v3785 = vpop.permute.xlu0 %3784
        %3788 = vset.pattern.permute.xlu0 0
        %3789 = vperm.xlu0 %3788, %v3763
        %v3790 = vpop.permute.xlu0 %3789
        %3793 = vset.pattern.permute.xlu0 0
        %3794 = vperm.xlu0 %3793, %v3764
        %v3795 = vpop.permute.xlu0 %3794
        %3798 = vset.pattern.permute.xlu0 0
        %3799 = vperm.xlu0 %3798, %v3765
        %v3800 = vpop.permute.xlu0 %3799
        %3803 = vset.pattern.permute.xlu0 0
        %3804 = vperm.xlu0 %3803, %v3766
        %v3805 = vpop.permute.xlu0 %3804
        %v3815 = vunpack.c.l.b16 %v3750
        %v3816 = vunpack.c.h.b16 %v3750
        %v3817 = vunpack.c.l.b16 %v3751
        %v3818 = vunpack.c.h.b16 %v3751
        %v3819 = vunpack.c.l.b16 %v3752
        %v3820 = vunpack.c.h.b16 %v3752
        %v3821 = vunpack.c.l.b16 %v3753
        %v3822 = vunpack.c.h.b16 %v3753
        %v3823 = vunpack.c.l.b16 %v3754
        %v3824 = vunpack.c.h.b16 %v3754
        %v3825 = vunpack.c.l.b16 %v3755
        %v3826 = vunpack.c.h.b16 %v3755
        %v3827 = vunpack.c.l.b16 %v3756
        %v3828 = vunpack.c.h.b16 %v3756
        %v3829 = vunpack.c.l.b16 %v3757
        %v3830 = vunpack.c.h.b16 %v3757
        %v3831 = vpack.c.b16 %v3817, %v3815
        %v3832 = vpack.c.b16 %v3818, %v3816
        %v3833 = vpack.c.b16 %v3821, %v3819
        %v3834 = vpack.c.b16 %v3822, %v3820
        %v3835 = vpack.c.b16 %v3825, %v3823
        %v3836 = vpack.c.b16 %v3826, %v3824
        %v3837 = vpack.c.b16 %v3829, %v3827
        %v3838 = vpack.c.b16 %v3830, %v3828
        %v3844 = vsel %vm771, %v3832, 0
        %v3847 = vsel %vm771, %v3834, 0
        %v3850 = vsel %vm771, %v3836, 0
        %v3853 = vsel %vm771, %v3838, 0
        %3855 = vmatpush.bf16.msra.mxu0 %v3734
        %3856 = vmatpush.bf16.msra.mxu0 %v3733
        %3857 = vmatpush.bf16.msra.mxu0 %v3722
        %3858 = vmatpush.bf16.msra.mxu0 %v3721
        %3859 = vmatpush.bf16.msra.mxu0 %v3710
        %3860 = vmatpush.bf16.msra.mxu0 %v3709
        %3861 = vmatpush.bf16.msra.mxu0 %v3682
        %3862 = vmatpush.bf16.msra.mxu0 %v3681
        %3863 = vmatmul.bf16.gmra.mxu0 %v3831
        %v3864 = vpop.f32.mrf.mxu0
        %v3865 = vadd.f32 %v3770, %v3864
        %v3866 = vpop.f32.mrf.mxu0
        %v3867 = vadd.f32 %v3775, %v3866
        %3868 = vmatmul.bf16.gmra.mxu0 %v3833
        %v3869 = vpop.f32.mrf.mxu0
        %v3870 = vadd.f32 %v3780, %v3869
        %v3871 = vpop.f32.mrf.mxu0
        %v3872 = vadd.f32 %v3785, %v3871
        %3873 = vmatmul.bf16.gmra.mxu0 %v3835
        %v3874 = vpop.f32.mrf.mxu0
        %v3875 = vadd.f32 %v3790, %v3874
        %v3876 = vpop.f32.mrf.mxu0
        %v3877 = vadd.f32 %v3795, %v3876
        %3878 = vmatmul.bf16.gmra.mxu0 %v3837
        %v3879 = vpop.f32.mrf.mxu0
        %v3880 = vadd.f32 %v3800, %v3879
        %v3881 = vpop.f32.mrf.mxu0
        %v3882 = vadd.f32 %v3805, %v3881
        %3883 = vdwg.mxu0
        %3884 = vmatpush.bf16.msra.mxu0 0
        %3885 = vmatpush.bf16.msra.mxu0 0
        %3886 = vmatpush.bf16.msra.mxu0 0
        %3887 = vmatpush.bf16.msra.mxu0 0
        %3888 = vmatpush.bf16.msra.mxu0 0
        %3889 = vmatpush.bf16.msra.mxu0 0
        %3890 = vmatpush.bf16.msra.mxu0 %v3746
        %3891 = vmatpush.bf16.msra.mxu0 %v3745
        %3892 = vmatmul.bf16.gmra.mxu0 %v3844
        %v3893 = vpop.f32.mrf.mxu0
        %v3894 = vadd.f32 %v3865, %v3893
        %v3895 = vpop.f32.mrf.mxu0
        %v3896 = vadd.f32 %v3867, %v3895
        %3897 = vmatmul.bf16.gmra.mxu0 %v3847
        %v3898 = vpop.f32.mrf.mxu0
        %v3899 = vadd.f32 %v3870, %v3898
        %v3900 = vpop.f32.mrf.mxu0
        %v3901 = vadd.f32 %v3872, %v3900
        %3902 = vmatmul.bf16.gmra.mxu0 %v3850
        %v3903 = vpop.f32.mrf.mxu0
        %v3904 = vadd.f32 %v3875, %v3903
        %v3905 = vpop.f32.mrf.mxu0
        %v3906 = vadd.f32 %v3877, %v3905
        %3907 = vmatmul.bf16.gmra.mxu0 %v3853
        %v3908 = vpop.f32.mrf.mxu0
        %v3909 = vadd.f32 %v3880, %v3908
        %v3910 = vpop.f32.mrf.mxu0
        %v3911 = vadd.f32 %v3882, %v3910
        %3912 = vdwg.mxu0
        %v3913 = vtanh.pop %v3894
        %v3914 = vtanh.pop %v3896
        %v3915 = vtanh.pop %v3899
        %v3916 = vtanh.pop %v3901
        %v3917 = vtanh.pop %v3904
        %v3918 = vtanh.pop %v3906
        %v3919 = vtanh.pop %v3909
        %v3920 = vtanh.pop %v3911
        %v3921 = vmul.f32 %v3917, 0.5
        %v3922 = vmul.f32 %v3918, 0.5
        %v3923 = vmul.f32 %v3919, 0.5
        %v3924 = vmul.f32 %v3920, 0.5
        %v3925 = vadd.f32 %v3921, 0.5
        %v3926 = vadd.f32 %v3922, 0.5
        %v3927 = vadd.f32 %v3923, 0.5
        %v3928 = vadd.f32 %v3924, 0.5
        %v3929 = vmul.f32 %v3913, %v3925
        %v3930 = vmul.f32 %v3914, %v3926
        %v3931 = vmul.f32 %v3915, %v3927
        %v3932 = vmul.f32 %v3916, %v3928
        %v3933 = vpack.c.bf16 %v3930, %v3929
        %v3934 = vpack.c.bf16 %v3932, %v3931
        %s3935 = scalar_lea.vmem %s8, 16
        %v3936 = vld [vmem:[%s3935] sm:$0xf]
        %v3937 = vld [vmem:[%s3935 + $0x4] sm:$0xf]
        %v3938 = vld [vmem:[%s3935 + $0x8] sm:$0xf]
        %v3939 = vld [vmem:[%s3935 + $0xc] sm:$0xf]
        %s3940 = scalar_lea.vmem %s9, 32
        %v3941 = vld [vmem:[%s3940] sm:$0xff]
        %v3942 = vld [vmem:[%s3940 + $0x8] sm:$0xff]
        %v3943 = vld [vmem:[%s3940 + $0x10] sm:$0xff]
        %v3944 = vld [vmem:[%s3940 + $0x18] sm:$0xff]
        %3946 = vset.pattern.permute.xlu0 0
        %3947 = vperm.xlu0 %3946, %v3941
        %v3948 = vpop.permute.xlu0 %3947
        %3951 = vset.pattern.permute.xlu0 0
        %3952 = vperm.xlu0 %3951, %v3942
        %v3953 = vpop.permute.xlu0 %3952
        %3956 = vset.pattern.permute.xlu0 0
        %3957 = vperm.xlu0 %3956, %v3943
        %v3958 = vpop.permute.xlu0 %3957
        %3961 = vset.pattern.permute.xlu0 0
        %3962 = vperm.xlu0 %3961, %v3944
        %v3963 = vpop.permute.xlu0 %3962
        %v3969 = vunpack.c.l.b16 %v3936
        %v3970 = vunpack.c.l.b16 %v3937
        %v3971 = vunpack.c.l.b16 %v3938
        %v3972 = vunpack.c.l.b16 %v3939
        %v3973 = vpack.c.b16 %v3970, %v3969
        %v3974 = vpack.c.b16 %v3972, %v3971
        %v3976 = vsel %vm771, %v3973, 0
        %v3979 = vsel %vm771, %v3974, 0
        %3981 = vmatpush.bf16.msra.mxu0 0
        %3982 = vmatpush.bf16.msra.mxu0 0
        %3983 = vmatpush.bf16.msra.mxu0 0
        %3984 = vmatpush.bf16.msra.mxu0 0
        %3985 = vmatpush.bf16.msra.mxu0 0
        %3986 = vmatpush.bf16.msra.mxu0 0
        %3987 = vmatpush.bf16.msra.mxu0 %v3934
        %3988 = vmatpush.bf16.msra.mxu0 %v3933
        %3989 = vmatmul.bf16.gmra.mxu0 %v3976
        %v3990 = vpop.f32.mrf.mxu0
        %v3991 = vadd.f32 %v3948, %v3990
        %v3992 = vpop.f32.mrf.mxu0
        %v3993 = vadd.f32 %v3953, %v3992
        %3994 = vmatmul.bf16.gmra.mxu0 %v3979
        %v3995 = vpop.f32.mrf.mxu0
        %v3996 = vadd.f32 %v3958, %v3995
        %v3997 = vpop.f32.mrf.mxu0
        %v3998 = vadd.f32 %v3963, %v3997
        %3999 = vdwg.mxu0
        %v4000 = vadd.f32 %v3629, %v3991
        %v4001 = vadd.f32 %v3630, %v3993
        %v4002 = vadd.f32 %v3631, %v3996
        %v4003 = vadd.f32 %v3632, %v3998
        %v4004 = vmul.f32 %v4000, %v474
        %v4005 = vmul.f32 %v4001, %v474
        %v4006 = vmul.f32 %v4002, %v474
        %v4007 = vmul.f32 %v4003, %v474
        %s4008 = scalar_lea.vmem %s10, 4
        %v4009 = vld [vmem:[%s4008] sm:$0xf]
        %v4010 = vpack.c.bf16 %v4005, %v4004
        %v4011 = vpack.c.bf16 %v4007, %v4006
        %s4012 = scalar_lea.vmem %s11, 8
        %v4013 = vld [vmem:[%s4012] sm:$0xff]
        %4015 = vset.pattern.permute.xlu0 0
        %4016 = vperm.xlu0 %4015, %v4013
        %v4017 = vpop.permute.xlu0 %4016
        %v4020 = vsel %vm771, %v4009, 0
        %4022 = vmatpush.bf16.msra.mxu0 0
        %4023 = vmatpush.bf16.msra.mxu0 0
        %4024 = vmatpush.bf16.msra.mxu0 0
        %4025 = vmatpush.bf16.msra.mxu0 0
        %4026 = vmatpush.bf16.msra.mxu0 0
        %4027 = vmatpush.bf16.msra.mxu0 0
        %4028 = vmatpush.bf16.msra.mxu0 %v4011
        %4029 = vmatpush.bf16.msra.mxu0 %v4010
        %4030 = vmatmul.bf16.gmra.mxu0 %v4020
        %v4031 = vpop.f32.mrf.mxu0
        %v4032 = vadd.f32 %v4017, %v4031
        %v4033 = vpop.f32.mrf.mxu0
        %4034 = vdwg.mxu0
        %v4035 = vmul.f32 %v4032, %v474
        %s4036 = scalar_lea.vmem %s12, 8
        %v4037 = vld [vmem:[%s4036] sm:$0xff]
        %4039 = vset.pattern.permute.xlu0 0
        %4040 = vperm.xlu0 %4039, %v4037
        %v4041 = vpop.permute.xlu0 %4040
        %v4043 = vmul.f32 %v4041, %v2255
        %v4044 = vadd.f32 %v4043, 1.0
        %v4045 = vmul.f32 %v2264, %v4044
        %v4046 = vadd.f32 %v4045, %v4035
        %s4047 = scalar_lea.vmem %s3, 32
        %v4048 = vld [vmem:[%s4047] sm:$0xf]
        %v4049 = vld [vmem:[%s4047 + $0x4] sm:$0xf]
        %v4050 = vld [vmem:[%s4047 + $0x8] sm:$0xf]
        %v4051 = vld [vmem:[%s4047 + $0xc] sm:$0xf]
        %v4052 = vpack.c.bf16 %v4046, %v4046
        %s4053 = scalar_lea.vmem %s4, 64
        %v4054 = vld [vmem:[%s4053] sm:$0xff]
        %v4055 = vld [vmem:[%s4053 + $0x8] sm:$0xff]
        %v4056 = vld [vmem:[%s4053 + $0x10] sm:$0xff]
        %v4057 = vld [vmem:[%s4053 + $0x18] sm:$0xff]
        %4059 = vset.pattern.permute.xlu0 0
        %4060 = vperm.xlu0 %4059, %v4054
        %v4061 = vpop.permute.xlu0 %4060
        %4064 = vset.pattern.permute.xlu0 0
        %4065 = vperm.xlu0 %4064, %v4055
        %v4066 = vpop.permute.xlu0 %4065
        %4069 = vset.pattern.permute.xlu0 0
        %4070 = vperm.xlu0 %4069, %v4056
        %v4071 = vpop.permute.xlu0 %4070
        %4074 = vset.pattern.permute.xlu0 0
        %4075 = vperm.xlu0 %4074, %v4057
        %v4076 = vpop.permute.xlu0 %4075
        %v4082 = vunpack.c.l.b16 %v4048
        %v4083 = vunpack.c.l.b16 %v4049
        %v4084 = vunpack.c.l.b16 %v4050
        %v4085 = vunpack.c.l.b16 %v4051
        %v4086 = vpack.c.b16 %v4083, %v4082
        %v4087 = vpack.c.b16 %v4085, %v4084
        %v4089 = vsel %vm522, %v4086, 0
        %v4092 = vsel %vm522, %v4087, 0
        %v4095 = vsel %vm476, %v4052, 0
        %4097 = vmatpush.bf16.msra.mxu0 0
        %4098 = vmatpush.bf16.msra.mxu0 0
        %4099 = vmatpush.bf16.msra.mxu0 0
        %4100 = vmatpush.bf16.msra.mxu0 0
        %4101 = vmatpush.bf16.msra.mxu0 0
        %4102 = vmatpush.bf16.msra.mxu0 0
        %4103 = vmatpush.bf16.msra.mxu0 0
        %4104 = vmatpush.bf16.msra.mxu0 %v4095
        %4105 = vmatmul.bf16.gmra.mxu0 %v4089
        %v4106 = vpop.f32.mrf.mxu0
        %v4107 = vadd.f32 %v4061, %v4106
        %v4108 = vpop.f32.mrf.mxu0
        %v4109 = vadd.f32 %v4066, %v4108
        %4110 = vmatmul.bf16.gmra.mxu0 %v4092
        %v4111 = vpop.f32.mrf.mxu0
        %v4112 = vadd.f32 %v4071, %v4111
        %v4113 = vpop.f32.mrf.mxu0
        %v4114 = vadd.f32 %v4076, %v4113
        %4115 = vdwg.mxu0
        %v4116 = vmul.f32 %v4107, %v474
        %v4117 = vmul.f32 %v4109, %v474
        %v4118 = vmul.f32 %v4112, %v474
        %v4119 = vmul.f32 %v4114, %v474
        %v4120 = vpack.c.bf16 %v4116, %v4116
        %v4121 = vpack.c.bf16 %v4117, %v4117
        %v4122 = vpack.c.bf16 %v4118, %v4118
        %v4123 = vpack.c.bf16 %v4119, %v4119
        %4128 = vrot.lane.b32.xlu0 %v4120, 2
        %v4129 = vpop.permute.xlu0 %4128
        %4130 = vrot.lane.b32.xlu0 %v4121, 2
        %v4131 = vpop.permute.xlu0 %4130
        %4132 = vrot.lane.b32.xlu0 %v4122, 2
        %v4133 = vpop.permute.xlu0 %4132
        %4134 = vrot.lane.b32.xlu0 %v4123, 2
        %v4135 = vpop.permute.xlu0 %4134
        %v4136 = vrot.slane %v4129, 4
        %v4137 = vrot.slane %v4131, 4
        %v4138 = vrot.slane %v4133, 4
        %v4139 = vrot.slane %v4135, 4
        %v4140 = vsel %vm575, %v4136, %v4129
        %v4141 = vsel %vm575, %v4137, %v4131
        %v4142 = vsel %vm575, %v4138, %v4133
        %v4143 = vsel %vm575, %v4139, %v4135
        %4148 = vst.msk [vmem:[#allocation2] sm:$0xff] %vm586, %v4140
        %4149 = vst.msk [vmem:[#allocation2 + $0x8] sm:$0xff] %vm586, %v4141
        %4150 = vst.msk [vmem:[#allocation2 + $0x10] sm:$0xff] %vm586, %v4142
        %4151 = vst.msk [vmem:[#allocation2 + $0x18] sm:$0xff] %vm586, %v4143
        %v4152 = vld [vmem:[#allocation2] sm:$0xf]
        %v4153 = vld [vmem:[#allocation2 + $0x8] sm:$0xf]
        %v4154 = vld [vmem:[#allocation2 + $0x10] sm:$0xf]
        %v4155 = vld [vmem:[#allocation2 + $0x18] sm:$0xf]
        %v4156 = vld [vmem:[#allocation2] sm:$0xff]
        %v4157 = vld [vmem:[#allocation2 + $0x8] sm:$0xff]
        %v4158 = vld [vmem:[#allocation2 + $0x10] sm:$0xff]
        %v4159 = vld [vmem:[#allocation2 + $0x18] sm:$0xff]
        %v4164 = vunpack.c.l.b16 %v4152
        %v4165 = vunpack.c.l.b16 %v4153
        %v4166 = vunpack.c.l.b16 %v4154
        %v4167 = vunpack.c.l.b16 %v4155
        %v4168 = vpack.c.b16 %v4165, %v4164
        %v4169 = vpack.c.b16 %v4167, %v4166
        %v4176 = vunpack.c.l.b16 %v4156
        %v4177 = vunpack.c.h.b16 %v4156
        %v4178 = vunpack.c.l.b16 %v4157
        %v4179 = vunpack.c.h.b16 %v4157
        %v4180 = vunpack.c.l.b16 %v4158
        %v4181 = vunpack.c.h.b16 %v4158
        %v4182 = vunpack.c.l.b16 %v4159
        %v4183 = vunpack.c.h.b16 %v4159
        %v4184 = vpack.c.b16 %v4178, %v4176
        %v4185 = vpack.c.b16 %v4179, %v4177
        %v4186 = vpack.c.b16 %v4182, %v4180
        %v4187 = vpack.c.b16 %v4183, %v4181
        %4188 = vrot.lane.b32.xlu0 %v4184, 127
        %v4189 = vpop.permute.xlu0 %4188
        %4190 = vrot.lane.b32.xlu0 %v4185, 127
        %v4191 = vpop.permute.xlu0 %4190
        %4192 = vrot.lane.b32.xlu0 %v4186, 127
        %v4193 = vpop.permute.xlu0 %4192
        %4194 = vrot.lane.b32.xlu0 %v4187, 127
        %v4195 = vpop.permute.xlu0 %4194
        %v4196 = vsel %vm635, %v4189, %v4191
        %v4197 = vsel %vm635, %v4193, %v4195
        %4200 = vrot.lane.b32.xlu0 %v4184, 126
        %v4201 = vpop.permute.xlu0 %4200
        %4202 = vrot.lane.b32.xlu0 %v4185, 126
        %v4203 = vpop.permute.xlu0 %4202
        %4204 = vrot.lane.b32.xlu0 %v4186, 126
        %v4205 = vpop.permute.xlu0 %4204
        %4206 = vrot.lane.b32.xlu0 %v4187, 126
        %v4207 = vpop.permute.xlu0 %4206
        %v4208 = vsel %vm648, %v4201, %v4203
        %v4209 = vsel %vm648, %v4205, %v4207
        %4212 = vrot.lane.b32.xlu0 %v4184, 125
        %v4213 = vpop.permute.xlu0 %4212
        %4214 = vrot.lane.b32.xlu0 %v4185, 125
        %v4215 = vpop.permute.xlu0 %4214
        %4216 = vrot.lane.b32.xlu0 %v4186, 125
        %v4217 = vpop.permute.xlu0 %4216
        %4218 = vrot.lane.b32.xlu0 %v4187, 125
        %v4219 = vpop.permute.xlu0 %4218
        %v4220 = vsel %vm661, %v4213, %v4215
        %v4221 = vsel %vm661, %v4217, %v4219
        %4224 = vrot.lane.b32.xlu0 %v4184, 124
        %v4225 = vpop.permute.xlu0 %4224
        %4226 = vrot.lane.b32.xlu0 %v4185, 124
        %v4227 = vpop.permute.xlu0 %4226
        %4228 = vrot.lane.b32.xlu0 %v4186, 124
        %v4229 = vpop.permute.xlu0 %4228
        %4230 = vrot.lane.b32.xlu0 %v4187, 124
        %v4231 = vpop.permute.xlu0 %4230
        %v4232 = vsel %vm674, %v4225, %v4227
        %v4233 = vsel %vm674, %v4229, %v4231
        %s4236 = scalar_lea.vmem %s5, 512
        %v4237 = vld [vmem:[%s4236] sm:$0xff]
        %v4238 = vld [vmem:[%s4236 + $0x8] sm:$0xff]
        %v4239 = vld [vmem:[%s4236 + $0x10] sm:$0xff]
        %v4240 = vld [vmem:[%s4236 + $0x18] sm:$0xff]
        %v4241 = vld [vmem:[%s4236 + $0x20] sm:$0xff]
        %v4242 = vld [vmem:[%s4236 + $0x28] sm:$0xff]
        %v4243 = vld [vmem:[%s4236 + $0x30] sm:$0xff]
        %v4244 = vld [vmem:[%s4236 + $0x38] sm:$0xff]
        %s4245 = scalar_lea.vmem %s469, 512
        %v4246 = vld [vmem:[%s4245] sm:$0xff]
        %v4247 = vld [vmem:[%s4245 + $0x8] sm:$0xff]
        %v4248 = vld [vmem:[%s4245 + $0x10] sm:$0xff]
        %v4249 = vld [vmem:[%s4245 + $0x18] sm:$0xff]
        %v4250 = vld [vmem:[%s4245 + $0x20] sm:$0xff]
        %v4251 = vld [vmem:[%s4245 + $0x28] sm:$0xff]
        %v4252 = vld [vmem:[%s4245 + $0x30] sm:$0xff]
        %v4253 = vld [vmem:[%s4245 + $0x38] sm:$0xff]
        %4255 = vset.pattern.permute.xlu0 0
        %4256 = vperm.xlu0 %4255, %v4246
        %v4257 = vpop.permute.xlu0 %4256
        %4260 = vset.pattern.permute.xlu0 0
        %4261 = vperm.xlu0 %4260, %v4247
        %v4262 = vpop.permute.xlu0 %4261
        %4265 = vset.pattern.permute.xlu0 0
        %4266 = vperm.xlu0 %4265, %v4248
        %v4267 = vpop.permute.xlu0 %4266
        %4270 = vset.pattern.permute.xlu0 0
        %4271 = vperm.xlu0 %4270, %v4249
        %v4272 = vpop.permute.xlu0 %4271
        %4275 = vset.pattern.permute.xlu0 0
        %4276 = vperm.xlu0 %4275, %v4250
        %v4277 = vpop.permute.xlu0 %4276
        %4280 = vset.pattern.permute.xlu0 0
        %4281 = vperm.xlu0 %4280, %v4251
        %v4282 = vpop.permute.xlu0 %4281
        %4285 = vset.pattern.permute.xlu0 0
        %4286 = vperm.xlu0 %4285, %v4252
        %v4287 = vpop.permute.xlu0 %4286
        %4290 = vset.pattern.permute.xlu0 0
        %4291 = vperm.xlu0 %4290, %v4253
        %v4292 = vpop.permute.xlu0 %4291
        %v4302 = vunpack.c.l.b16 %v4237
        %v4303 = vunpack.c.h.b16 %v4237
        %v4304 = vunpack.c.l.b16 %v4238
        %v4305 = vunpack.c.h.b16 %v4238
        %v4306 = vunpack.c.l.b16 %v4239
        %v4307 = vunpack.c.h.b16 %v4239
        %v4308 = vunpack.c.l.b16 %v4240
        %v4309 = vunpack.c.h.b16 %v4240
        %v4310 = vunpack.c.l.b16 %v4241
        %v4311 = vunpack.c.h.b16 %v4241
        %v4312 = vunpack.c.l.b16 %v4242
        %v4313 = vunpack.c.h.b16 %v4242
        %v4314 = vunpack.c.l.b16 %v4243
        %v4315 = vunpack.c.h.b16 %v4243
        %v4316 = vunpack.c.l.b16 %v4244
        %v4317 = vunpack.c.h.b16 %v4244
        %v4318 = vpack.c.b16 %v4304, %v4302
        %v4319 = vpack.c.b16 %v4305, %v4303
        %v4320 = vpack.c.b16 %v4308, %v4306
        %v4321 = vpack.c.b16 %v4309, %v4307
        %v4322 = vpack.c.b16 %v4312, %v4310
        %v4323 = vpack.c.b16 %v4313, %v4311
        %v4324 = vpack.c.b16 %v4316, %v4314
        %v4325 = vpack.c.b16 %v4317, %v4315
        %v4331 = vsel %vm771, %v4319, 0
        %v4334 = vsel %vm771, %v4321, 0
        %v4337 = vsel %vm771, %v4323, 0
        %v4340 = vsel %vm771, %v4325, 0
        %4342 = vmatpush.bf16.msra.mxu0 %v4221
        %4343 = vmatpush.bf16.msra.mxu0 %v4220
        %4344 = vmatpush.bf16.msra.mxu0 %v4209
        %4345 = vmatpush.bf16.msra.mxu0 %v4208
        %4346 = vmatpush.bf16.msra.mxu0 %v4197
        %4347 = vmatpush.bf16.msra.mxu0 %v4196
        %4348 = vmatpush.bf16.msra.mxu0 %v4169
        %4349 = vmatpush.bf16.msra.mxu0 %v4168
        %4350 = vmatmul.bf16.gmra.mxu0 %v4318
        %v4351 = vpop.f32.mrf.mxu0
        %v4352 = vadd.f32 %v4257, %v4351
        %v4353 = vpop.f32.mrf.mxu0
        %v4354 = vadd.f32 %v4262, %v4353
        %4355 = vmatmul.bf16.gmra.mxu0 %v4320
        %v4356 = vpop.f32.mrf.mxu0
        %v4357 = vadd.f32 %v4267, %v4356
        %v4358 = vpop.f32.mrf.mxu0
        %v4359 = vadd.f32 %v4272, %v4358
        %4360 = vmatmul.bf16.gmra.mxu0 %v4322
        %v4361 = vpop.f32.mrf.mxu0
        %v4362 = vadd.f32 %v4277, %v4361
        %v4363 = vpop.f32.mrf.mxu0
        %v4364 = vadd.f32 %v4282, %v4363
        %4365 = vmatmul.bf16.gmra.mxu0 %v4324
        %v4366 = vpop.f32.mrf.mxu0
        %v4367 = vadd.f32 %v4287, %v4366
        %v4368 = vpop.f32.mrf.mxu0
        %v4369 = vadd.f32 %v4292, %v4368
        %4370 = vdwg.mxu0
        %4371 = vmatpush.bf16.msra.mxu0 0
        %4372 = vmatpush.bf16.msra.mxu0 0
        %4373 = vmatpush.bf16.msra.mxu0 0
        %4374 = vmatpush.bf16.msra.mxu0 0
        %4375 = vmatpush.bf16.msra.mxu0 0
        %4376 = vmatpush.bf16.msra.mxu0 0
        %4377 = vmatpush.bf16.msra.mxu0 %v4233
        %4378 = vmatpush.bf16.msra.mxu0 %v4232
        %4379 = vmatmul.bf16.gmra.mxu0 %v4331
        %v4380 = vpop.f32.mrf.mxu0
        %v4381 = vadd.f32 %v4352, %v4380
        %v4382 = vpop.f32.mrf.mxu0
        %v4383 = vadd.f32 %v4354, %v4382
        %4384 = vmatmul.bf16.gmra.mxu0 %v4334
        %v4385 = vpop.f32.mrf.mxu0
        %v4386 = vadd.f32 %v4357, %v4385
        %v4387 = vpop.f32.mrf.mxu0
        %v4388 = vadd.f32 %v4359, %v4387
        %4389 = vmatmul.bf16.gmra.mxu0 %v4337
        %v4390 = vpop.f32.mrf.mxu0
        %v4391 = vadd.f32 %v4362, %v4390
        %v4392 = vpop.f32.mrf.mxu0
        %v4393 = vadd.f32 %v4364, %v4392
        %4394 = vmatmul.bf16.gmra.mxu0 %v4340
        %v4395 = vpop.f32.mrf.mxu0
        %v4396 = vadd.f32 %v4367, %v4395
        %v4397 = vpop.f32.mrf.mxu0
        %v4398 = vadd.f32 %v4369, %v4397
        %4399 = vdwg.mxu0
        %v4400 = vtanh.pop %v4381
        %v4401 = vtanh.pop %v4383
        %v4402 = vtanh.pop %v4386
        %v4403 = vtanh.pop %v4388
        %v4404 = vtanh.pop %v4391
        %v4405 = vtanh.pop %v4393
        %v4406 = vtanh.pop %v4396
        %v4407 = vtanh.pop %v4398
        %v4408 = vmul.f32 %v4404, 0.5
        %v4409 = vmul.f32 %v4405, 0.5
        %v4410 = vmul.f32 %v4406, 0.5
        %v4411 = vmul.f32 %v4407, 0.5
        %v4412 = vadd.f32 %v4408, 0.5
        %v4413 = vadd.f32 %v4409, 0.5
        %v4414 = vadd.f32 %v4410, 0.5
        %v4415 = vadd.f32 %v4411, 0.5
        %v4416 = vmul.f32 %v4400, %v4412
        %v4417 = vmul.f32 %v4401, %v4413
        %v4418 = vmul.f32 %v4402, %v4414
        %v4419 = vmul.f32 %v4403, %v4415
        %v4420 = vpack.c.bf16 %v4417, %v4416
        %v4421 = vpack.c.bf16 %v4419, %v4418
        %s4422 = scalar_lea.vmem %s6, 192
        %v4423 = vld [vmem:[%s4422] sm:$0xf]
        %v4424 = vld [vmem:[%s4422 + $0x4] sm:$0xf]
        %v4425 = vld [vmem:[%s4422 + $0x8] sm:$0xf]
        %v4426 = vld [vmem:[%s4422 + $0xc] sm:$0xf]
        %v4427 = vld [vmem:[%s4422 + $0x10] sm:$0xf]
        %v4428 = vld [vmem:[%s4422 + $0x14] sm:$0xf]
        %v4429 = vld [vmem:[%s4422 + $0x18] sm:$0xf]
        %v4430 = vld [vmem:[%s4422 + $0x1c] sm:$0xf]
        %s4431 = scalar_lea.vmem %s7, 384
        %v4432 = vld [vmem:[%s4431] sm:$0xff]
        %v4433 = vld [vmem:[%s4431 + $0x8] sm:$0xff]
        %v4434 = vld [vmem:[%s4431 + $0x10] sm:$0xff]
        %v4435 = vld [vmem:[%s4431 + $0x18] sm:$0xff]
        %v4436 = vld [vmem:[%s4431 + $0x20] sm:$0xff]
        %v4437 = vld [vmem:[%s4431 + $0x28] sm:$0xff]
        %v4438 = vld [vmem:[%s4431 + $0x30] sm:$0xff]
        %v4439 = vld [vmem:[%s4431 + $0x38] sm:$0xff]
        %4441 = vset.pattern.permute.xlu0 0
        %4442 = vperm.xlu0 %4441, %v4432
        %v4443 = vpop.permute.xlu0 %4442
        %4446 = vset.pattern.permute.xlu0 0
        %4447 = vperm.xlu0 %4446, %v4433
        %v4448 = vpop.permute.xlu0 %4447
        %4451 = vset.pattern.permute.xlu0 0
        %4452 = vperm.xlu0 %4451, %v4434
        %v4453 = vpop.permute.xlu0 %4452
        %4456 = vset.pattern.permute.xlu0 0
        %4457 = vperm.xlu0 %4456, %v4435
        %v4458 = vpop.permute.xlu0 %4457
        %4461 = vset.pattern.permute.xlu0 0
        %4462 = vperm.xlu0 %4461, %v4436
        %v4463 = vpop.permute.xlu0 %4462
        %4466 = vset.pattern.permute.xlu0 0
        %4467 = vperm.xlu0 %4466, %v4437
        %v4468 = vpop.permute.xlu0 %4467
        %4471 = vset.pattern.permute.xlu0 0
        %4472 = vperm.xlu0 %4471, %v4438
        %v4473 = vpop.permute.xlu0 %4472
        %4476 = vset.pattern.permute.xlu0 0
        %4477 = vperm.xlu0 %4476, %v4439
        %v4478 = vpop.permute.xlu0 %4477
        %v4488 = vunpack.c.l.b16 %v4423
        %v4489 = vunpack.c.l.b16 %v4424
        %v4490 = vunpack.c.l.b16 %v4425
        %v4491 = vunpack.c.l.b16 %v4426
        %v4492 = vunpack.c.l.b16 %v4427
        %v4493 = vunpack.c.l.b16 %v4428
        %v4494 = vunpack.c.l.b16 %v4429
        %v4495 = vunpack.c.l.b16 %v4430
        %v4496 = vpack.c.b16 %v4489, %v4488
        %v4497 = vpack.c.b16 %v4491, %v4490
        %v4498 = vpack.c.b16 %v4493, %v4492
        %v4499 = vpack.c.b16 %v4495, %v4494
        %v4501 = vsel %vm771, %v4496, 0
        %v4504 = vsel %vm771, %v4497, 0
        %v4507 = vsel %vm771, %v4498, 0
        %v4510 = vsel %vm771, %v4499, 0
        %4512 = vmatpush.bf16.msra.mxu0 0
        %4513 = vmatpush.bf16.msra.mxu0 0
        %4514 = vmatpush.bf16.msra.mxu0 0
        %4515 = vmatpush.bf16.msra.mxu0 0
        %4516 = vmatpush.bf16.msra.mxu0 0
        %4517 = vmatpush.bf16.msra.mxu0 0
        %4518 = vmatpush.bf16.msra.mxu0 %v4421
        %4519 = vmatpush.bf16.msra.mxu0 %v4420
        %4520 = vmatmul.bf16.gmra.mxu0 %v4501
        %v4521 = vpop.f32.mrf.mxu0
        %v4522 = vadd.f32 %v4443, %v4521
        %v4523 = vpop.f32.mrf.mxu0
        %v4524 = vadd.f32 %v4448, %v4523
        %4525 = vmatmul.bf16.gmra.mxu0 %v4504
        %v4526 = vpop.f32.mrf.mxu0
        %v4527 = vadd.f32 %v4453, %v4526
        %v4528 = vpop.f32.mrf.mxu0
        %v4529 = vadd.f32 %v4458, %v4528
        %4530 = vmatmul.bf16.gmra.mxu0 %v4507
        %v4531 = vpop.f32.mrf.mxu0
        %v4532 = vadd.f32 %v4463, %v4531
        %v4533 = vpop.f32.mrf.mxu0
        %v4534 = vadd.f32 %v4468, %v4533
        %4535 = vmatmul.bf16.gmra.mxu0 %v4510
        %v4536 = vpop.f32.mrf.mxu0
        %v4537 = vadd.f32 %v4473, %v4536
        %v4538 = vpop.f32.mrf.mxu0
        %v4539 = vadd.f32 %v4478, %v4538
        %4540 = vdwg.mxu0
        %v4541 = vadd.f32 %v4116, %v4522
        %v4542 = vadd.f32 %v4117, %v4524
        %v4543 = vadd.f32 %v4118, %v4527
        %v4544 = vadd.f32 %v4119, %v4529
        %v4545 = vmul.f32 %v4541, %v474
        %v4546 = vmul.f32 %v4542, %v474
        %v4547 = vmul.f32 %v4543, %v474
        %v4548 = vmul.f32 %v4544, %v474
        %v4549 = vpack.c.bf16 %v4545, %v4545
        %v4550 = vpack.c.bf16 %v4546, %v4546
        %v4551 = vpack.c.bf16 %v4547, %v4547
        %v4552 = vpack.c.bf16 %v4548, %v4548
        %4557 = vrot.lane.b32.xlu0 %v4549, 2
        %v4558 = vpop.permute.xlu0 %4557
        %4559 = vrot.lane.b32.xlu0 %v4550, 2
        %v4560 = vpop.permute.xlu0 %4559
        %4561 = vrot.lane.b32.xlu0 %v4551, 2
        %v4562 = vpop.permute.xlu0 %4561
        %4563 = vrot.lane.b32.xlu0 %v4552, 2
        %v4564 = vpop.permute.xlu0 %4563
        %v4565 = vrot.slane %v4558, 4
        %v4566 = vrot.slane %v4560, 4
        %v4567 = vrot.slane %v4562, 4
        %v4568 = vrot.slane %v4564, 4
        %v4569 = vsel %vm575, %v4565, %v4558
        %v4570 = vsel %vm575, %v4566, %v4560
        %v4571 = vsel %vm575, %v4567, %v4562
        %v4572 = vsel %vm575, %v4568, %v4564
        %4577 = vst.msk [vmem:[#allocation2] sm:$0xff] %vm586, %v4569
        %4578 = vst.msk [vmem:[#allocation2 + $0x8] sm:$0xff] %vm586, %v4570
        %4579 = vst.msk [vmem:[#allocation2 + $0x10] sm:$0xff] %vm586, %v4571
        %4580 = vst.msk [vmem:[#allocation2 + $0x18] sm:$0xff] %vm586, %v4572
        %v4581 = vld [vmem:[#allocation2] sm:$0xf]
        %v4582 = vld [vmem:[#allocation2 + $0x8] sm:$0xf]
        %v4583 = vld [vmem:[#allocation2 + $0x10] sm:$0xf]
        %v4584 = vld [vmem:[#allocation2 + $0x18] sm:$0xf]
        %v4585 = vld [vmem:[#allocation2] sm:$0xff]
        %v4586 = vld [vmem:[#allocation2 + $0x8] sm:$0xff]
        %v4587 = vld [vmem:[#allocation2 + $0x10] sm:$0xff]
        %v4588 = vld [vmem:[#allocation2 + $0x18] sm:$0xff]
        %v4593 = vunpack.c.l.b16 %v4581
        %v4594 = vunpack.c.l.b16 %v4582
        %v4595 = vunpack.c.l.b16 %v4583
        %v4596 = vunpack.c.l.b16 %v4584
        %v4597 = vpack.c.b16 %v4594, %v4593
        %v4598 = vpack.c.b16 %v4596, %v4595
        %v4605 = vunpack.c.l.b16 %v4585
        %v4606 = vunpack.c.h.b16 %v4585
        %v4607 = vunpack.c.l.b16 %v4586
        %v4608 = vunpack.c.h.b16 %v4586
        %v4609 = vunpack.c.l.b16 %v4587
        %v4610 = vunpack.c.h.b16 %v4587
        %v4611 = vunpack.c.l.b16 %v4588
        %v4612 = vunpack.c.h.b16 %v4588
        %v4613 = vpack.c.b16 %v4607, %v4605
        %v4614 = vpack.c.b16 %v4608, %v4606
        %v4615 = vpack.c.b16 %v4611, %v4609
        %v4616 = vpack.c.b16 %v4612, %v4610
        %4617 = vrot.lane.b32.xlu0 %v4613, 127
        %v4618 = vpop.permute.xlu0 %4617
        %4619 = vrot.lane.b32.xlu0 %v4614, 127
        %v4620 = vpop.permute.xlu0 %4619
        %4621 = vrot.lane.b32.xlu0 %v4615, 127
        %v4622 = vpop.permute.xlu0 %4621
        %4623 = vrot.lane.b32.xlu0 %v4616, 127
        %v4624 = vpop.permute.xlu0 %4623
        %v4625 = vsel %vm635, %v4618, %v4620
        %v4626 = vsel %vm635, %v4622, %v4624
        %4629 = vrot.lane.b32.xlu0 %v4613, 126
        %v4630 = vpop.permute.xlu0 %4629
        %4631 = vrot.lane.b32.xlu0 %v4614, 126
        %v4632 = vpop.permute.xlu0 %4631
        %4633 = vrot.lane.b32.xlu0 %v4615, 126
        %v4634 = vpop.permute.xlu0 %4633
        %4635 = vrot.lane.b32.xlu0 %v4616, 126
        %v4636 = vpop.permute.xlu0 %4635
        %v4637 = vsel %vm648, %v4630, %v4632
        %v4638 = vsel %vm648, %v4634, %v4636
        %4641 = vrot.lane.b32.xlu0 %v4613, 125
        %v4642 = vpop.permute.xlu0 %4641
        %4643 = vrot.lane.b32.xlu0 %v4614, 125
        %v4644 = vpop.permute.xlu0 %4643
        %4645 = vrot.lane.b32.xlu0 %v4615, 125
        %v4646 = vpop.permute.xlu0 %4645
        %4647 = vrot.lane.b32.xlu0 %v4616, 125
        %v4648 = vpop.permute.xlu0 %4647
        %v4649 = vsel %vm661, %v4642, %v4644
        %v4650 = vsel %vm661, %v4646, %v4648
        %4653 = vrot.lane.b32.xlu0 %v4613, 124
        %v4654 = vpop.permute.xlu0 %4653
        %4655 = vrot.lane.b32.xlu0 %v4614, 124
        %v4656 = vpop.permute.xlu0 %4655
        %4657 = vrot.lane.b32.xlu0 %v4615, 124
        %v4658 = vpop.permute.xlu0 %4657
        %4659 = vrot.lane.b32.xlu0 %v4616, 124
        %v4660 = vpop.permute.xlu0 %4659
        %v4661 = vsel %vm674, %v4654, %v4656
        %v4662 = vsel %vm674, %v4658, %v4660
        %s4665 = scalar_lea.vmem %s5, 576
        %v4666 = vld [vmem:[%s4665] sm:$0xff]
        %v4667 = vld [vmem:[%s4665 + $0x8] sm:$0xff]
        %v4668 = vld [vmem:[%s4665 + $0x10] sm:$0xff]
        %v4669 = vld [vmem:[%s4665 + $0x18] sm:$0xff]
        %v4670 = vld [vmem:[%s4665 + $0x20] sm:$0xff]
        %v4671 = vld [vmem:[%s4665 + $0x28] sm:$0xff]
        %v4672 = vld [vmem:[%s4665 + $0x30] sm:$0xff]
        %v4673 = vld [vmem:[%s4665 + $0x38] sm:$0xff]
        %s4674 = scalar_lea.vmem %s469, 576
        %v4675 = vld [vmem:[%s4674] sm:$0xff]
        %v4676 = vld [vmem:[%s4674 + $0x8] sm:$0xff]
        %v4677 = vld [vmem:[%s4674 + $0x10] sm:$0xff]
        %v4678 = vld [vmem:[%s4674 + $0x18] sm:$0xff]
        %v4679 = vld [vmem:[%s4674 + $0x20] sm:$0xff]
        %v4680 = vld [vmem:[%s4674 + $0x28] sm:$0xff]
        %v4681 = vld [vmem:[%s4674 + $0x30] sm:$0xff]
        %v4682 = vld [vmem:[%s4674 + $0x38] sm:$0xff]
        %4684 = vset.pattern.permute.xlu0 0
        %4685 = vperm.xlu0 %4684, %v4675
        %v4686 = vpop.permute.xlu0 %4685
        %4689 = vset.pattern.permute.xlu0 0
        %4690 = vperm.xlu0 %4689, %v4676
        %v4691 = vpop.permute.xlu0 %4690
        %4694 = vset.pattern.permute.xlu0 0
        %4695 = vperm.xlu0 %4694, %v4677
        %v4696 = vpop.permute.xlu0 %4695
        %4699 = vset.pattern.permute.xlu0 0
        %4700 = vperm.xlu0 %4699, %v4678
        %v4701 = vpop.permute.xlu0 %4700
        %4704 = vset.pattern.permute.xlu0 0
        %4705 = vperm.xlu0 %4704, %v4679
        %v4706 = vpop.permute.xlu0 %4705
        %4709 = vset.pattern.permute.xlu0 0
        %4710 = vperm.xlu0 %4709, %v4680
        %v4711 = vpop.permute.xlu0 %4710
        %4714 = vset.pattern.permute.xlu0 0
        %4715 = vperm.xlu0 %4714, %v4681
        %v4716 = vpop.permute.xlu0 %4715
        %4719 = vset.pattern.permute.xlu0 0
        %4720 = vperm.xlu0 %4719, %v4682
        %v4721 = vpop.permute.xlu0 %4720
        %v4731 = vunpack.c.l.b16 %v4666
        %v4732 = vunpack.c.h.b16 %v4666
        %v4733 = vunpack.c.l.b16 %v4667
        %v4734 = vunpack.c.h.b16 %v4667
        %v4735 = vunpack.c.l.b16 %v4668
        %v4736 = vunpack.c.h.b16 %v4668
        %v4737 = vunpack.c.l.b16 %v4669
        %v4738 = vunpack.c.h.b16 %v4669
        %v4739 = vunpack.c.l.b16 %v4670
        %v4740 = vunpack.c.h.b16 %v4670
        %v4741 = vunpack.c.l.b16 %v4671
        %v4742 = vunpack.c.h.b16 %v4671
        %v4743 = vunpack.c.l.b16 %v4672
        %v4744 = vunpack.c.h.b16 %v4672
        %v4745 = vunpack.c.l.b16 %v4673
        %v4746 = vunpack.c.h.b16 %v4673
        %v4747 = vpack.c.b16 %v4733, %v4731
        %v4748 = vpack.c.b16 %v4734, %v4732
        %v4749 = vpack.c.b16 %v4737, %v4735
        %v4750 = vpack.c.b16 %v4738, %v4736
        %v4751 = vpack.c.b16 %v4741, %v4739
        %v4752 = vpack.c.b16 %v4742, %v4740
        %v4753 = vpack.c.b16 %v4745, %v4743
        %v4754 = vpack.c.b16 %v4746, %v4744
        %v4760 = vsel %vm771, %v4748, 0
        %v4763 = vsel %vm771, %v4750, 0
        %v4766 = vsel %vm771, %v4752, 0
        %v4769 = vsel %vm771, %v4754, 0
        %4771 = vmatpush.bf16.msra.mxu0 %v4650
        %4772 = vmatpush.bf16.msra.mxu0 %v4649
        %4773 = vmatpush.bf16.msra.mxu0 %v4638
        %4774 = vmatpush.bf16.msra.mxu0 %v4637
        %4775 = vmatpush.bf16.msra.mxu0 %v4626
        %4776 = vmatpush.bf16.msra.mxu0 %v4625
        %4777 = vmatpush.bf16.msra.mxu0 %v4598
        %4778 = vmatpush.bf16.msra.mxu0 %v4597
        %4779 = vmatmul.bf16.gmra.mxu0 %v4747
        %v4780 = vpop.f32.mrf.mxu0
        %v4781 = vadd.f32 %v4686, %v4780
        %v4782 = vpop.f32.mrf.mxu0
        %v4783 = vadd.f32 %v4691, %v4782
        %4784 = vmatmul.bf16.gmra.mxu0 %v4749
        %v4785 = vpop.f32.mrf.mxu0
        %v4786 = vadd.f32 %v4696, %v4785
        %v4787 = vpop.f32.mrf.mxu0
        %v4788 = vadd.f32 %v4701, %v4787
        %4789 = vmatmul.bf16.gmra.mxu0 %v4751
        %v4790 = vpop.f32.mrf.mxu0
        %v4791 = vadd.f32 %v4706, %v4790
        %v4792 = vpop.f32.mrf.mxu0
        %v4793 = vadd.f32 %v4711, %v4792
        %4794 = vmatmul.bf16.gmra.mxu0 %v4753
        %v4795 = vpop.f32.mrf.mxu0
        %v4796 = vadd.f32 %v4716, %v4795
        %v4797 = vpop.f32.mrf.mxu0
        %v4798 = vadd.f32 %v4721, %v4797
        %4799 = vdwg.mxu0
        %4800 = vmatpush.bf16.msra.mxu0 0
        %4801 = vmatpush.bf16.msra.mxu0 0
        %4802 = vmatpush.bf16.msra.mxu0 0
        %4803 = vmatpush.bf16.msra.mxu0 0
        %4804 = vmatpush.bf16.msra.mxu0 0
        %4805 = vmatpush.bf16.msra.mxu0 0
        %4806 = vmatpush.bf16.msra.mxu0 %v4662
        %4807 = vmatpush.bf16.msra.mxu0 %v4661
        %4808 = vmatmul.bf16.gmra.mxu0 %v4760
        %v4809 = vpop.f32.mrf.mxu0
        %v4810 = vadd.f32 %v4781, %v4809
        %v4811 = vpop.f32.mrf.mxu0
        %v4812 = vadd.f32 %v4783, %v4811
        %4813 = vmatmul.bf16.gmra.mxu0 %v4763
        %v4814 = vpop.f32.mrf.mxu0
        %v4815 = vadd.f32 %v4786, %v4814
        %v4816 = vpop.f32.mrf.mxu0
        %v4817 = vadd.f32 %v4788, %v4816
        %4818 = vmatmul.bf16.gmra.mxu0 %v4766
        %v4819 = vpop.f32.mrf.mxu0
        %v4820 = vadd.f32 %v4791, %v4819
        %v4821 = vpop.f32.mrf.mxu0
        %v4822 = vadd.f32 %v4793, %v4821
        %4823 = vmatmul.bf16.gmra.mxu0 %v4769
        %v4824 = vpop.f32.mrf.mxu0
        %v4825 = vadd.f32 %v4796, %v4824
        %v4826 = vpop.f32.mrf.mxu0
        %v4827 = vadd.f32 %v4798, %v4826
        %4828 = vdwg.mxu0
        %v4829 = vtanh.pop %v4810
        %v4830 = vtanh.pop %v4812
        %v4831 = vtanh.pop %v4815
        %v4832 = vtanh.pop %v4817
        %v4833 = vtanh.pop %v4820
        %v4834 = vtanh.pop %v4822
        %v4835 = vtanh.pop %v4825
        %v4836 = vtanh.pop %v4827
        %v4837 = vmul.f32 %v4833, 0.5
        %v4838 = vmul.f32 %v4834, 0.5
        %v4839 = vmul.f32 %v4835, 0.5
        %v4840 = vmul.f32 %v4836, 0.5
        %v4841 = vadd.f32 %v4837, 0.5
        %v4842 = vadd.f32 %v4838, 0.5
        %v4843 = vadd.f32 %v4839, 0.5
        %v4844 = vadd.f32 %v4840, 0.5
        %v4845 = vmul.f32 %v4829, %v4841
        %v4846 = vmul.f32 %v4830, %v4842
        %v4847 = vmul.f32 %v4831, %v4843
        %v4848 = vmul.f32 %v4832, %v4844
        %v4849 = vpack.c.bf16 %v4846, %v4845
        %v4850 = vpack.c.bf16 %v4848, %v4847
        %s4851 = scalar_lea.vmem %s6, 224
        %v4852 = vld [vmem:[%s4851] sm:$0xf]
        %v4853 = vld [vmem:[%s4851 + $0x4] sm:$0xf]
        %v4854 = vld [vmem:[%s4851 + $0x8] sm:$0xf]
        %v4855 = vld [vmem:[%s4851 + $0xc] sm:$0xf]
        %v4856 = vld [vmem:[%s4851 + $0x10] sm:$0xf]
        %v4857 = vld [vmem:[%s4851 + $0x14] sm:$0xf]
        %v4858 = vld [vmem:[%s4851 + $0x18] sm:$0xf]
        %v4859 = vld [vmem:[%s4851 + $0x1c] sm:$0xf]
        %s4860 = scalar_lea.vmem %s7, 448
        %v4861 = vld [vmem:[%s4860] sm:$0xff]
        %v4862 = vld [vmem:[%s4860 + $0x8] sm:$0xff]
        %v4863 = vld [vmem:[%s4860 + $0x10] sm:$0xff]
        %v4864 = vld [vmem:[%s4860 + $0x18] sm:$0xff]
        %v4865 = vld [vmem:[%s4860 + $0x20] sm:$0xff]
        %v4866 = vld [vmem:[%s4860 + $0x28] sm:$0xff]
        %v4867 = vld [vmem:[%s4860 + $0x30] sm:$0xff]
        %v4868 = vld [vmem:[%s4860 + $0x38] sm:$0xff]
        %4870 = vset.pattern.permute.xlu0 0
        %4871 = vperm.xlu0 %4870, %v4861
        %v4872 = vpop.permute.xlu0 %4871
        %4875 = vset.pattern.permute.xlu0 0
        %4876 = vperm.xlu0 %4875, %v4862
        %v4877 = vpop.permute.xlu0 %4876
        %4880 = vset.pattern.permute.xlu0 0
        %4881 = vperm.xlu0 %4880, %v4863
        %v4882 = vpop.permute.xlu0 %4881
        %4885 = vset.pattern.permute.xlu0 0
        %4886 = vperm.xlu0 %4885, %v4864
        %v4887 = vpop.permute.xlu0 %4886
        %4890 = vset.pattern.permute.xlu0 0
        %4891 = vperm.xlu0 %4890, %v4865
        %v4892 = vpop.permute.xlu0 %4891
        %4895 = vset.pattern.permute.xlu0 0
        %4896 = vperm.xlu0 %4895, %v4866
        %v4897 = vpop.permute.xlu0 %4896
        %4900 = vset.pattern.permute.xlu0 0
        %4901 = vperm.xlu0 %4900, %v4867
        %v4902 = vpop.permute.xlu0 %4901
        %4905 = vset.pattern.permute.xlu0 0
        %4906 = vperm.xlu0 %4905, %v4868
        %v4907 = vpop.permute.xlu0 %4906
        %v4917 = vunpack.c.l.b16 %v4852
        %v4918 = vunpack.c.l.b16 %v4853
        %v4919 = vunpack.c.l.b16 %v4854
        %v4920 = vunpack.c.l.b16 %v4855
        %v4921 = vunpack.c.l.b16 %v4856
        %v4922 = vunpack.c.l.b16 %v4857
        %v4923 = vunpack.c.l.b16 %v4858
        %v4924 = vunpack.c.l.b16 %v4859
        %v4925 = vpack.c.b16 %v4918, %v4917
        %v4926 = vpack.c.b16 %v4920, %v4919
        %v4927 = vpack.c.b16 %v4922, %v4921
        %v4928 = vpack.c.b16 %v4924, %v4923
        %v4930 = vsel %vm771, %v4925, 0
        %v4933 = vsel %vm771, %v4926, 0
        %v4936 = vsel %vm771, %v4927, 0
        %v4939 = vsel %vm771, %v4928, 0
        %4941 = vmatpush.bf16.msra.mxu0 0
        %4942 = vmatpush.bf16.msra.mxu0 0
        %4943 = vmatpush.bf16.msra.mxu0 0
        %4944 = vmatpush.bf16.msra.mxu0 0
        %4945 = vmatpush.bf16.msra.mxu0 0
        %4946 = vmatpush.bf16.msra.mxu0 0
        %4947 = vmatpush.bf16.msra.mxu0 %v4850
        %4948 = vmatpush.bf16.msra.mxu0 %v4849
        %4949 = vmatmul.bf16.gmra.mxu0 %v4930
        %v4950 = vpop.f32.mrf.mxu0
        %v4951 = vadd.f32 %v4872, %v4950
        %v4952 = vpop.f32.mrf.mxu0
        %v4953 = vadd.f32 %v4877, %v4952
        %4954 = vmatmul.bf16.gmra.mxu0 %v4933
        %v4955 = vpop.f32.mrf.mxu0
        %v4956 = vadd.f32 %v4882, %v4955
        %v4957 = vpop.f32.mrf.mxu0
        %v4958 = vadd.f32 %v4887, %v4957
        %4959 = vmatmul.bf16.gmra.mxu0 %v4936
        %v4960 = vpop.f32.mrf.mxu0
        %v4961 = vadd.f32 %v4892, %v4960
        %v4962 = vpop.f32.mrf.mxu0
        %v4963 = vadd.f32 %v4897, %v4962
        %4964 = vmatmul.bf16.gmra.mxu0 %v4939
        %v4965 = vpop.f32.mrf.mxu0
        %v4966 = vadd.f32 %v4902, %v4965
        %v4967 = vpop.f32.mrf.mxu0
        %v4968 = vadd.f32 %v4907, %v4967
        %4969 = vdwg.mxu0
        %v4970 = vadd.f32 %v4545, %v4951
        %v4971 = vadd.f32 %v4546, %v4953
        %v4972 = vadd.f32 %v4547, %v4956
        %v4973 = vadd.f32 %v4548, %v4958
        %v4974 = vmul.f32 %v4970, %v474
        %v4975 = vmul.f32 %v4971, %v474
        %v4976 = vmul.f32 %v4972, %v474
        %v4977 = vmul.f32 %v4973, %v474
        %v4978 = vadd.f32 %v4532, %v4961
        %v4979 = vadd.f32 %v4534, %v4963
        %v4980 = vadd.f32 %v4537, %v4966
        %v4981 = vadd.f32 %v4539, %v4968
        %v4982 = vpack.c.bf16 %v4974, %v4974
        %v4983 = vpack.c.bf16 %v4975, %v4975
        %v4984 = vpack.c.bf16 %v4976, %v4976
        %v4985 = vpack.c.bf16 %v4977, %v4977
        %4990 = vrot.lane.b32.xlu0 %v4982, 2
        %v4991 = vpop.permute.xlu0 %4990
        %4992 = vrot.lane.b32.xlu0 %v4983, 2
        %v4993 = vpop.permute.xlu0 %4992
        %4994 = vrot.lane.b32.xlu0 %v4984, 2
        %v4995 = vpop.permute.xlu0 %4994
        %4996 = vrot.lane.b32.xlu0 %v4985, 2
        %v4997 = vpop.permute.xlu0 %4996
        %v4998 = vrot.slane %v4991, 4
        %v4999 = vrot.slane %v4993, 4
        %v5000 = vrot.slane %v4995, 4
        %v5001 = vrot.slane %v4997, 4
        %v5002 = vsel %vm575, %v4998, %v4991
        %v5003 = vsel %vm575, %v4999, %v4993
        %v5004 = vsel %vm575, %v5000, %v4995
        %v5005 = vsel %vm575, %v5001, %v4997
        %5010 = vst.msk [vmem:[#allocation2] sm:$0xff] %vm586, %v5002
        %5011 = vst.msk [vmem:[#allocation2 + $0x8] sm:$0xff] %vm586, %v5003
        %5012 = vst.msk [vmem:[#allocation2 + $0x10] sm:$0xff] %vm586, %v5004
        %5013 = vst.msk [vmem:[#allocation2 + $0x18] sm:$0xff] %vm586, %v5005
        %v5014 = vld [vmem:[#allocation2] sm:$0xf]
        %v5015 = vld [vmem:[#allocation2 + $0x8] sm:$0xf]
        %v5016 = vld [vmem:[#allocation2 + $0x10] sm:$0xf]
        %v5017 = vld [vmem:[#allocation2 + $0x18] sm:$0xf]
        %v5018 = vld [vmem:[#allocation2] sm:$0xff]
        %v5019 = vld [vmem:[#allocation2 + $0x8] sm:$0xff]
        %v5020 = vld [vmem:[#allocation2 + $0x10] sm:$0xff]
        %v5021 = vld [vmem:[#allocation2 + $0x18] sm:$0xff]
        %v5026 = vunpack.c.l.b16 %v5014
        %v5027 = vunpack.c.l.b16 %v5015
        %v5028 = vunpack.c.l.b16 %v5016
        %v5029 = vunpack.c.l.b16 %v5017
        %v5030 = vpack.c.b16 %v5027, %v5026
        %v5031 = vpack.c.b16 %v5029, %v5028
        %v5038 = vunpack.c.l.b16 %v5018
        %v5039 = vunpack.c.h.b16 %v5018
        %v5040 = vunpack.c.l.b16 %v5019
        %v5041 = vunpack.c.h.b16 %v5019
        %v5042 = vunpack.c.l.b16 %v5020
        %v5043 = vunpack.c.h.b16 %v5020
        %v5044 = vunpack.c.l.b16 %v5021
        %v5045 = vunpack.c.h.b16 %v5021
        %v5046 = vpack.c.b16 %v5040, %v5038
        %v5047 = vpack.c.b16 %v5041, %v5039
        %v5048 = vpack.c.b16 %v5044, %v5042
        %v5049 = vpack.c.b16 %v5045, %v5043
        %5050 = vrot.lane.b32.xlu0 %v5046, 127
        %v5051 = vpop.permute.xlu0 %5050
        %5052 = vrot.lane.b32.xlu0 %v5047, 127
        %v5053 = vpop.permute.xlu0 %5052
        %5054 = vrot.lane.b32.xlu0 %v5048, 127
        %v5055 = vpop.permute.xlu0 %5054
        %5056 = vrot.lane.b32.xlu0 %v5049, 127
        %v5057 = vpop.permute.xlu0 %5056
        %v5058 = vsel %vm635, %v5051, %v5053
        %v5059 = vsel %vm635, %v5055, %v5057
        %5062 = vrot.lane.b32.xlu0 %v5046, 126
        %v5063 = vpop.permute.xlu0 %5062
        %5064 = vrot.lane.b32.xlu0 %v5047, 126
        %v5065 = vpop.permute.xlu0 %5064
        %5066 = vrot.lane.b32.xlu0 %v5048, 126
        %v5067 = vpop.permute.xlu0 %5066
        %5068 = vrot.lane.b32.xlu0 %v5049, 126
        %v5069 = vpop.permute.xlu0 %5068
        %v5070 = vsel %vm648, %v5063, %v5065
        %v5071 = vsel %vm648, %v5067, %v5069
        %5074 = vrot.lane.b32.xlu0 %v5046, 125
        %v5075 = vpop.permute.xlu0 %5074
        %5076 = vrot.lane.b32.xlu0 %v5047, 125
        %v5077 = vpop.permute.xlu0 %5076
        %5078 = vrot.lane.b32.xlu0 %v5048, 125
        %v5079 = vpop.permute.xlu0 %5078
        %5080 = vrot.lane.b32.xlu0 %v5049, 125
        %v5081 = vpop.permute.xlu0 %5080
        %v5082 = vsel %vm661, %v5075, %v5077
        %v5083 = vsel %vm661, %v5079, %v5081
        %5086 = vrot.lane.b32.xlu0 %v5046, 124
        %v5087 = vpop.permute.xlu0 %5086
        %5088 = vrot.lane.b32.xlu0 %v5047, 124
        %v5089 = vpop.permute.xlu0 %5088
        %5090 = vrot.lane.b32.xlu0 %v5048, 124
        %v5091 = vpop.permute.xlu0 %5090
        %5092 = vrot.lane.b32.xlu0 %v5049, 124
        %v5093 = vpop.permute.xlu0 %5092
        %v5094 = vsel %vm674, %v5087, %v5089
        %v5095 = vsel %vm674, %v5091, %v5093
        %s5098 = scalar_lea.vmem %s5, 640
        %v5099 = vld [vmem:[%s5098] sm:$0xff]
        %v5100 = vld [vmem:[%s5098 + $0x8] sm:$0xff]
        %v5101 = vld [vmem:[%s5098 + $0x10] sm:$0xff]
        %v5102 = vld [vmem:[%s5098 + $0x18] sm:$0xff]
        %v5103 = vld [vmem:[%s5098 + $0x20] sm:$0xff]
        %v5104 = vld [vmem:[%s5098 + $0x28] sm:$0xff]
        %v5105 = vld [vmem:[%s5098 + $0x30] sm:$0xff]
        %v5106 = vld [vmem:[%s5098 + $0x38] sm:$0xff]
        %s5107 = scalar_lea.vmem %s469, 640
        %v5108 = vld [vmem:[%s5107] sm:$0xff]
        %v5109 = vld [vmem:[%s5107 + $0x8] sm:$0xff]
        %v5110 = vld [vmem:[%s5107 + $0x10] sm:$0xff]
        %v5111 = vld [vmem:[%s5107 + $0x18] sm:$0xff]
        %v5112 = vld [vmem:[%s5107 + $0x20] sm:$0xff]
        %v5113 = vld [vmem:[%s5107 + $0x28] sm:$0xff]
        %v5114 = vld [vmem:[%s5107 + $0x30] sm:$0xff]
        %v5115 = vld [vmem:[%s5107 + $0x38] sm:$0xff]
        %5117 = vset.pattern.permute.xlu0 0
        %5118 = vperm.xlu0 %5117, %v5108
        %v5119 = vpop.permute.xlu0 %5118
        %5122 = vset.pattern.permute.xlu0 0
        %5123 = vperm.xlu0 %5122, %v5109
        %v5124 = vpop.permute.xlu0 %5123
        %5127 = vset.pattern.permute.xlu0 0
        %5128 = vperm.xlu0 %5127, %v5110
        %v5129 = vpop.permute.xlu0 %5128
        %5132 = vset.pattern.permute.xlu0 0
        %5133 = vperm.xlu0 %5132, %v5111
        %v5134 = vpop.permute.xlu0 %5133
        %5137 = vset.pattern.permute.xlu0 0
        %5138 = vperm.xlu0 %5137, %v5112
        %v5139 = vpop.permute.xlu0 %5138
        %5142 = vset.pattern.permute.xlu0 0
        %5143 = vperm.xlu0 %5142, %v5113
        %v5144 = vpop.permute.xlu0 %5143
        %5147 = vset.pattern.permute.xlu0 0
        %5148 = vperm.xlu0 %5147, %v5114
        %v5149 = vpop.permute.xlu0 %5148
        %5152 = vset.pattern.permute.xlu0 0
        %5153 = vperm.xlu0 %5152, %v5115
        %v5154 = vpop.permute.xlu0 %5153
        %v5164 = vunpack.c.l.b16 %v5099
        %v5165 = vunpack.c.h.b16 %v5099
        %v5166 = vunpack.c.l.b16 %v5100
        %v5167 = vunpack.c.h.b16 %v5100
        %v5168 = vunpack.c.l.b16 %v5101
        %v5169 = vunpack.c.h.b16 %v5101
        %v5170 = vunpack.c.l.b16 %v5102
        %v5171 = vunpack.c.h.b16 %v5102
        %v5172 = vunpack.c.l.b16 %v5103
        %v5173 = vunpack.c.h.b16 %v5103
        %v5174 = vunpack.c.l.b16 %v5104
        %v5175 = vunpack.c.h.b16 %v5104
        %v5176 = vunpack.c.l.b16 %v5105
        %v5177 = vunpack.c.h.b16 %v5105
        %v5178 = vunpack.c.l.b16 %v5106
        %v5179 = vunpack.c.h.b16 %v5106
        %v5180 = vpack.c.b16 %v5166, %v5164
        %v5181 = vpack.c.b16 %v5167, %v5165
        %v5182 = vpack.c.b16 %v5170, %v5168
        %v5183 = vpack.c.b16 %v5171, %v5169
        %v5184 = vpack.c.b16 %v5174, %v5172
        %v5185 = vpack.c.b16 %v5175, %v5173
        %v5186 = vpack.c.b16 %v5178, %v5176
        %v5187 = vpack.c.b16 %v5179, %v5177
        %v5193 = vsel %vm771, %v5181, 0
        %v5196 = vsel %vm771, %v5183, 0
        %v5199 = vsel %vm771, %v5185, 0
        %v5202 = vsel %vm771, %v5187, 0
        %5204 = vmatpush.bf16.msra.mxu0 %v5083
        %5205 = vmatpush.bf16.msra.mxu0 %v5082
        %5206 = vmatpush.bf16.msra.mxu0 %v5071
        %5207 = vmatpush.bf16.msra.mxu0 %v5070
        %5208 = vmatpush.bf16.msra.mxu0 %v5059
        %5209 = vmatpush.bf16.msra.mxu0 %v5058
        %5210 = vmatpush.bf16.msra.mxu0 %v5031
        %5211 = vmatpush.bf16.msra.mxu0 %v5030
        %5212 = vmatmul.bf16.gmra.mxu0 %v5180
        %v5213 = vpop.f32.mrf.mxu0
        %v5214 = vadd.f32 %v5119, %v5213
        %v5215 = vpop.f32.mrf.mxu0
        %v5216 = vadd.f32 %v5124, %v5215
        %5217 = vmatmul.bf16.gmra.mxu0 %v5182
        %v5218 = vpop.f32.mrf.mxu0
        %v5219 = vadd.f32 %v5129, %v5218
        %v5220 = vpop.f32.mrf.mxu0
        %v5221 = vadd.f32 %v5134, %v5220
        %5222 = vmatmul.bf16.gmra.mxu0 %v5184
        %v5223 = vpop.f32.mrf.mxu0
        %v5224 = vadd.f32 %v5139, %v5223
        %v5225 = vpop.f32.mrf.mxu0
        %v5226 = vadd.f32 %v5144, %v5225
        %5227 = vmatmul.bf16.gmra.mxu0 %v5186
        %v5228 = vpop.f32.mrf.mxu0
        %v5229 = vadd.f32 %v5149, %v5228
        %v5230 = vpop.f32.mrf.mxu0
        %v5231 = vadd.f32 %v5154, %v5230
        %5232 = vdwg.mxu0
        %5233 = vmatpush.bf16.msra.mxu0 0
        %5234 = vmatpush.bf16.msra.mxu0 0
        %5235 = vmatpush.bf16.msra.mxu0 0
        %5236 = vmatpush.bf16.msra.mxu0 0
        %5237 = vmatpush.bf16.msra.mxu0 0
        %5238 = vmatpush.bf16.msra.mxu0 0
        %5239 = vmatpush.bf16.msra.mxu0 %v5095
        %5240 = vmatpush.bf16.msra.mxu0 %v5094
        %5241 = vmatmul.bf16.gmra.mxu0 %v5193
        %v5242 = vpop.f32.mrf.mxu0
        %v5243 = vadd.f32 %v5214, %v5242
        %v5244 = vpop.f32.mrf.mxu0
        %v5245 = vadd.f32 %v5216, %v5244
        %5246 = vmatmul.bf16.gmra.mxu0 %v5196
        %v5247 = vpop.f32.mrf.mxu0
        %v5248 = vadd.f32 %v5219, %v5247
        %v5249 = vpop.f32.mrf.mxu0
        %v5250 = vadd.f32 %v5221, %v5249
        %5251 = vmatmul.bf16.gmra.mxu0 %v5199
        %v5252 = vpop.f32.mrf.mxu0
        %v5253 = vadd.f32 %v5224, %v5252
        %v5254 = vpop.f32.mrf.mxu0
        %v5255 = vadd.f32 %v5226, %v5254
        %5256 = vmatmul.bf16.gmra.mxu0 %v5202
        %v5257 = vpop.f32.mrf.mxu0
        %v5258 = vadd.f32 %v5229, %v5257
        %v5259 = vpop.f32.mrf.mxu0
        %v5260 = vadd.f32 %v5231, %v5259
        %5261 = vdwg.mxu0
        %v5262 = vtanh.pop %v5243
        %v5263 = vtanh.pop %v5245
        %v5264 = vtanh.pop %v5248
        %v5265 = vtanh.pop %v5250
        %v5266 = vtanh.pop %v5253
        %v5267 = vtanh.pop %v5255
        %v5268 = vtanh.pop %v5258
        %v5269 = vtanh.pop %v5260
        %v5270 = vmul.f32 %v5266, 0.5
        %v5271 = vmul.f32 %v5267, 0.5
        %v5272 = vmul.f32 %v5268, 0.5
        %v5273 = vmul.f32 %v5269, 0.5
        %v5274 = vadd.f32 %v5270, 0.5
        %v5275 = vadd.f32 %v5271, 0.5
        %v5276 = vadd.f32 %v5272, 0.5
        %v5277 = vadd.f32 %v5273, 0.5
        %v5278 = vmul.f32 %v5262, %v5274
        %v5279 = vmul.f32 %v5263, %v5275
        %v5280 = vmul.f32 %v5264, %v5276
        %v5281 = vmul.f32 %v5265, %v5277
        %v5282 = vpack.c.bf16 %v5279, %v5278
        %v5283 = vpack.c.bf16 %v5281, %v5280
        %s5284 = scalar_lea.vmem %s6, 256
        %v5285 = vld [vmem:[%s5284] sm:$0xf]
        %v5286 = vld [vmem:[%s5284 + $0x4] sm:$0xf]
        %v5287 = vld [vmem:[%s5284 + $0x8] sm:$0xf]
        %v5288 = vld [vmem:[%s5284 + $0xc] sm:$0xf]
        %v5289 = vld [vmem:[%s5284 + $0x10] sm:$0xf]
        %v5290 = vld [vmem:[%s5284 + $0x14] sm:$0xf]
        %v5291 = vld [vmem:[%s5284 + $0x18] sm:$0xf]
        %v5292 = vld [vmem:[%s5284 + $0x1c] sm:$0xf]
        %s5293 = scalar_lea.vmem %s7, 512
        %v5294 = vld [vmem:[%s5293] sm:$0xff]
        %v5295 = vld [vmem:[%s5293 + $0x8] sm:$0xff]
        %v5296 = vld [vmem:[%s5293 + $0x10] sm:$0xff]
        %v5297 = vld [vmem:[%s5293 + $0x18] sm:$0xff]
        %v5298 = vld [vmem:[%s5293 + $0x20] sm:$0xff]
        %v5299 = vld [vmem:[%s5293 + $0x28] sm:$0xff]
        %v5300 = vld [vmem:[%s5293 + $0x30] sm:$0xff]
        %v5301 = vld [vmem:[%s5293 + $0x38] sm:$0xff]
        %5303 = vset.pattern.permute.xlu0 0
        %5304 = vperm.xlu0 %5303, %v5294
        %v5305 = vpop.permute.xlu0 %5304
        %5308 = vset.pattern.permute.xlu0 0
        %5309 = vperm.xlu0 %5308, %v5295
        %v5310 = vpop.permute.xlu0 %5309
        %5313 = vset.pattern.permute.xlu0 0
        %5314 = vperm.xlu0 %5313, %v5296
        %v5315 = vpop.permute.xlu0 %5314
        %5318 = vset.pattern.permute.xlu0 0
        %5319 = vperm.xlu0 %5318, %v5297
        %v5320 = vpop.permute.xlu0 %5319
        %5323 = vset.pattern.permute.xlu0 0
        %5324 = vperm.xlu0 %5323, %v5298
        %v5325 = vpop.permute.xlu0 %5324
        %5328 = vset.pattern.permute.xlu0 0
        %5329 = vperm.xlu0 %5328, %v5299
        %v5330 = vpop.permute.xlu0 %5329
        %5333 = vset.pattern.permute.xlu0 0
        %5334 = vperm.xlu0 %5333, %v5300
        %v5335 = vpop.permute.xlu0 %5334
        %5338 = vset.pattern.permute.xlu0 0
        %5339 = vperm.xlu0 %5338, %v5301
        %v5340 = vpop.permute.xlu0 %5339
        %v5350 = vunpack.c.l.b16 %v5285
        %v5351 = vunpack.c.l.b16 %v5286
        %v5352 = vunpack.c.l.b16 %v5287
        %v5353 = vunpack.c.l.b16 %v5288
        %v5354 = vunpack.c.l.b16 %v5289
        %v5355 = vunpack.c.l.b16 %v5290
        %v5356 = vunpack.c.l.b16 %v5291
        %v5357 = vunpack.c.l.b16 %v5292
        %v5358 = vpack.c.b16 %v5351, %v5350
        %v5359 = vpack.c.b16 %v5353, %v5352
        %v5360 = vpack.c.b16 %v5355, %v5354
        %v5361 = vpack.c.b16 %v5357, %v5356
        %v5363 = vsel %vm771, %v5358, 0
        %v5366 = vsel %vm771, %v5359, 0
        %v5369 = vsel %vm771, %v5360, 0
        %v5372 = vsel %vm771, %v5361, 0
        %5374 = vmatpush.bf16.msra.mxu0 0
        %5375 = vmatpush.bf16.msra.mxu0 0
        %5376 = vmatpush.bf16.msra.mxu0 0
        %5377 = vmatpush.bf16.msra.mxu0 0
        %5378 = vmatpush.bf16.msra.mxu0 0
        %5379 = vmatpush.bf16.msra.mxu0 0
        %5380 = vmatpush.bf16.msra.mxu0 %v5283
        %5381 = vmatpush.bf16.msra.mxu0 %v5282
        %5382 = vmatmul.bf16.gmra.mxu0 %v5363
        %v5383 = vpop.f32.mrf.mxu0
        %v5384 = vadd.f32 %v5305, %v5383
        %v5385 = vpop.f32.mrf.mxu0
        %v5386 = vadd.f32 %v5310, %v5385
        %5387 = vmatmul.bf16.gmra.mxu0 %v5366
        %v5388 = vpop.f32.mrf.mxu0
        %v5389 = vadd.f32 %v5315, %v5388
        %v5390 = vpop.f32.mrf.mxu0
        %v5391 = vadd.f32 %v5320, %v5390
        %5392 = vmatmul.bf16.gmra.mxu0 %v5369
        %v5393 = vpop.f32.mrf.mxu0
        %v5394 = vadd.f32 %v5325, %v5393
        %v5395 = vpop.f32.mrf.mxu0
        %v5396 = vadd.f32 %v5330, %v5395
        %5397 = vmatmul.bf16.gmra.mxu0 %v5372
        %v5398 = vpop.f32.mrf.mxu0
        %v5399 = vadd.f32 %v5335, %v5398
        %v5400 = vpop.f32.mrf.mxu0
        %v5401 = vadd.f32 %v5340, %v5400
        %5402 = vdwg.mxu0
        %v5403 = vadd.f32 %v4974, %v5384
        %v5404 = vadd.f32 %v4975, %v5386
        %v5405 = vadd.f32 %v4976, %v5389
        %v5406 = vadd.f32 %v4977, %v5391
        %v5407 = vmul.f32 %v5403, %v474
        %v5408 = vmul.f32 %v5404, %v474
        %v5409 = vmul.f32 %v5405, %v474
        %v5410 = vmul.f32 %v5406, %v474
        %v5411 = vadd.f32 %v4978, %v5394
        %v5412 = vadd.f32 %v4979, %v5396
        %v5413 = vadd.f32 %v4980, %v5399
        %v5414 = vadd.f32 %v4981, %v5401
        %v5415 = vpack.c.bf16 %v5407, %v5407
        %v5416 = vpack.c.bf16 %v5408, %v5408
        %v5417 = vpack.c.bf16 %v5409, %v5409
        %v5418 = vpack.c.bf16 %v5410, %v5410
        %5423 = vrot.lane.b32.xlu0 %v5415, 2
        %v5424 = vpop.permute.xlu0 %5423
        %5425 = vrot.lane.b32.xlu0 %v5416, 2
        %v5426 = vpop.permute.xlu0 %5425
        %5427 = vrot.lane.b32.xlu0 %v5417, 2
        %v5428 = vpop.permute.xlu0 %5427
        %5429 = vrot.lane.b32.xlu0 %v5418, 2
        %v5430 = vpop.permute.xlu0 %5429
        %v5431 = vrot.slane %v5424, 4
        %v5432 = vrot.slane %v5426, 4
        %v5433 = vrot.slane %v5428, 4
        %v5434 = vrot.slane %v5430, 4
        %v5435 = vsel %vm575, %v5431, %v5424
        %v5436 = vsel %vm575, %v5432, %v5426
        %v5437 = vsel %vm575, %v5433, %v5428
        %v5438 = vsel %vm575, %v5434, %v5430
        %5443 = vst.msk [vmem:[#allocation2] sm:$0xff] %vm586, %v5435
        %5444 = vst.msk [vmem:[#allocation2 + $0x8] sm:$0xff] %vm586, %v5436
        %5445 = vst.msk [vmem:[#allocation2 + $0x10] sm:$0xff] %vm586, %v5437
        %5446 = vst.msk [vmem:[#allocation2 + $0x18] sm:$0xff] %vm586, %v5438
        %v5447 = vld [vmem:[#allocation2] sm:$0xf]
        %v5448 = vld [vmem:[#allocation2 + $0x8] sm:$0xf]
        %v5449 = vld [vmem:[#allocation2 + $0x10] sm:$0xf]
        %v5450 = vld [vmem:[#allocation2 + $0x18] sm:$0xf]
        %v5451 = vld [vmem:[#allocation2] sm:$0xff]
        %v5452 = vld [vmem:[#allocation2 + $0x8] sm:$0xff]
        %v5453 = vld [vmem:[#allocation2 + $0x10] sm:$0xff]
        %v5454 = vld [vmem:[#allocation2 + $0x18] sm:$0xff]
        %v5459 = vunpack.c.l.b16 %v5447
        %v5460 = vunpack.c.l.b16 %v5448
        %v5461 = vunpack.c.l.b16 %v5449
        %v5462 = vunpack.c.l.b16 %v5450
        %v5463 = vpack.c.b16 %v5460, %v5459
        %v5464 = vpack.c.b16 %v5462, %v5461
        %v5471 = vunpack.c.l.b16 %v5451
        %v5472 = vunpack.c.h.b16 %v5451
        %v5473 = vunpack.c.l.b16 %v5452
        %v5474 = vunpack.c.h.b16 %v5452
        %v5475 = vunpack.c.l.b16 %v5453
        %v5476 = vunpack.c.h.b16 %v5453
        %v5477 = vunpack.c.l.b16 %v5454
        %v5478 = vunpack.c.h.b16 %v5454
        %v5479 = vpack.c.b16 %v5473, %v5471
        %v5480 = vpack.c.b16 %v5474, %v5472
        %v5481 = vpack.c.b16 %v5477, %v5475
        %v5482 = vpack.c.b16 %v5478, %v5476
        %5483 = vrot.lane.b32.xlu0 %v5479, 127
        %v5484 = vpop.permute.xlu0 %5483
        %5485 = vrot.lane.b32.xlu0 %v5480, 127
        %v5486 = vpop.permute.xlu0 %5485
        %5487 = vrot.lane.b32.xlu0 %v5481, 127
        %v5488 = vpop.permute.xlu0 %5487
        %5489 = vrot.lane.b32.xlu0 %v5482, 127
        %v5490 = vpop.permute.xlu0 %5489
        %v5491 = vsel %vm635, %v5484, %v5486
        %v5492 = vsel %vm635, %v5488, %v5490
        %5495 = vrot.lane.b32.xlu0 %v5479, 126
        %v5496 = vpop.permute.xlu0 %5495
        %5497 = vrot.lane.b32.xlu0 %v5480, 126
        %v5498 = vpop.permute.xlu0 %5497
        %5499 = vrot.lane.b32.xlu0 %v5481, 126
        %v5500 = vpop.permute.xlu0 %5499
        %5501 = vrot.lane.b32.xlu0 %v5482, 126
        %v5502 = vpop.permute.xlu0 %5501
        %v5503 = vsel %vm648, %v5496, %v5498
        %v5504 = vsel %vm648, %v5500, %v5502
        %5507 = vrot.lane.b32.xlu0 %v5479, 125
        %v5508 = vpop.permute.xlu0 %5507
        %5509 = vrot.lane.b32.xlu0 %v5480, 125
        %v5510 = vpop.permute.xlu0 %5509
        %5511 = vrot.lane.b32.xlu0 %v5481, 125
        %v5512 = vpop.permute.xlu0 %5511
        %5513 = vrot.lane.b32.xlu0 %v5482, 125
        %v5514 = vpop.permute.xlu0 %5513
        %v5515 = vsel %vm661, %v5508, %v5510
        %v5516 = vsel %vm661, %v5512, %v5514
        %5519 = vrot.lane.b32.xlu0 %v5479, 124
        %v5520 = vpop.permute.xlu0 %5519
        %5521 = vrot.lane.b32.xlu0 %v5480, 124
        %v5522 = vpop.permute.xlu0 %5521
        %5523 = vrot.lane.b32.xlu0 %v5481, 124
        %v5524 = vpop.permute.xlu0 %5523
        %5525 = vrot.lane.b32.xlu0 %v5482, 124
        %v5526 = vpop.permute.xlu0 %5525
        %v5527 = vsel %vm674, %v5520, %v5522
        %v5528 = vsel %vm674, %v5524, %v5526
        %s5531 = scalar_lea.vmem %s5, 704
        %v5532 = vld [vmem:[%s5531] sm:$0xff]
        %v5533 = vld [vmem:[%s5531 + $0x8] sm:$0xff]
        %v5534 = vld [vmem:[%s5531 + $0x10] sm:$0xff]
        %v5535 = vld [vmem:[%s5531 + $0x18] sm:$0xff]
        %v5536 = vld [vmem:[%s5531 + $0x20] sm:$0xff]
        %v5537 = vld [vmem:[%s5531 + $0x28] sm:$0xff]
        %v5538 = vld [vmem:[%s5531 + $0x30] sm:$0xff]
        %v5539 = vld [vmem:[%s5531 + $0x38] sm:$0xff]
        %s5540 = scalar_lea.vmem %s469, 704
        %v5541 = vld [vmem:[%s5540] sm:$0xff]
        %v5542 = vld [vmem:[%s5540 + $0x8] sm:$0xff]
        %v5543 = vld [vmem:[%s5540 + $0x10] sm:$0xff]
        %v5544 = vld [vmem:[%s5540 + $0x18] sm:$0xff]
        %v5545 = vld [vmem:[%s5540 + $0x20] sm:$0xff]
        %v5546 = vld [vmem:[%s5540 + $0x28] sm:$0xff]
        %v5547 = vld [vmem:[%s5540 + $0x30] sm:$0xff]
        %v5548 = vld [vmem:[%s5540 + $0x38] sm:$0xff]
        %5550 = vset.pattern.permute.xlu0 0
        %5551 = vperm.xlu0 %5550, %v5541
        %v5552 = vpop.permute.xlu0 %5551
        %5555 = vset.pattern.permute.xlu0 0
        %5556 = vperm.xlu0 %5555, %v5542
        %v5557 = vpop.permute.xlu0 %5556
        %5560 = vset.pattern.permute.xlu0 0
        %5561 = vperm.xlu0 %5560, %v5543
        %v5562 = vpop.permute.xlu0 %5561
        %5565 = vset.pattern.permute.xlu0 0
        %5566 = vperm.xlu0 %5565, %v5544
        %v5567 = vpop.permute.xlu0 %5566
        %5570 = vset.pattern.permute.xlu0 0
        %5571 = vperm.xlu0 %5570, %v5545
        %v5572 = vpop.permute.xlu0 %5571
        %5575 = vset.pattern.permute.xlu0 0
        %5576 = vperm.xlu0 %5575, %v5546
        %v5577 = vpop.permute.xlu0 %5576
        %5580 = vset.pattern.permute.xlu0 0
        %5581 = vperm.xlu0 %5580, %v5547
        %v5582 = vpop.permute.xlu0 %5581
        %5585 = vset.pattern.permute.xlu0 0
        %5586 = vperm.xlu0 %5585, %v5548
        %v5587 = vpop.permute.xlu0 %5586
        %v5597 = vunpack.c.l.b16 %v5532
        %v5598 = vunpack.c.h.b16 %v5532
        %v5599 = vunpack.c.l.b16 %v5533
        %v5600 = vunpack.c.h.b16 %v5533
        %v5601 = vunpack.c.l.b16 %v5534
        %v5602 = vunpack.c.h.b16 %v5534
        %v5603 = vunpack.c.l.b16 %v5535
        %v5604 = vunpack.c.h.b16 %v5535
        %v5605 = vunpack.c.l.b16 %v5536
        %v5606 = vunpack.c.h.b16 %v5536
        %v5607 = vunpack.c.l.b16 %v5537
        %v5608 = vunpack.c.h.b16 %v5537
        %v5609 = vunpack.c.l.b16 %v5538
        %v5610 = vunpack.c.h.b16 %v5538
        %v5611 = vunpack.c.l.b16 %v5539
        %v5612 = vunpack.c.h.b16 %v5539
        %v5613 = vpack.c.b16 %v5599, %v5597
        %v5614 = vpack.c.b16 %v5600, %v5598
        %v5615 = vpack.c.b16 %v5603, %v5601
        %v5616 = vpack.c.b16 %v5604, %v5602
        %v5617 = vpack.c.b16 %v5607, %v5605
        %v5618 = vpack.c.b16 %v5608, %v5606
        %v5619 = vpack.c.b16 %v5611, %v5609
        %v5620 = vpack.c.b16 %v5612, %v5610
        %v5626 = vsel %vm771, %v5614, 0
        %v5629 = vsel %vm771, %v5616, 0
        %v5632 = vsel %vm771, %v5618, 0
        %v5635 = vsel %vm771, %v5620, 0
        %5637 = vmatpush.bf16.msra.mxu0 %v5516
        %5638 = vmatpush.bf16.msra.mxu0 %v5515
        %5639 = vmatpush.bf16.msra.mxu0 %v5504
        %5640 = vmatpush.bf16.msra.mxu0 %v5503
        %5641 = vmatpush.bf16.msra.mxu0 %v5492
        %5642 = vmatpush.bf16.msra.mxu0 %v5491
        %5643 = vmatpush.bf16.msra.mxu0 %v5464
        %5644 = vmatpush.bf16.msra.mxu0 %v5463
        %5645 = vmatmul.bf16.gmra.mxu0 %v5613
        %v5646 = vpop.f32.mrf.mxu0
        %v5647 = vadd.f32 %v5552, %v5646
        %v5648 = vpop.f32.mrf.mxu0
        %v5649 = vadd.f32 %v5557, %v5648
        %5650 = vmatmul.bf16.gmra.mxu0 %v5615
        %v5651 = vpop.f32.mrf.mxu0
        %v5652 = vadd.f32 %v5562, %v5651
        %v5653 = vpop.f32.mrf.mxu0
        %v5654 = vadd.f32 %v5567, %v5653
        %5655 = vmatmul.bf16.gmra.mxu0 %v5617
        %v5656 = vpop.f32.mrf.mxu0
        %v5657 = vadd.f32 %v5572, %v5656
        %v5658 = vpop.f32.mrf.mxu0
        %v5659 = vadd.f32 %v5577, %v5658
        %5660 = vmatmul.bf16.gmra.mxu0 %v5619
        %v5661 = vpop.f32.mrf.mxu0
        %v5662 = vadd.f32 %v5582, %v5661
        %v5663 = vpop.f32.mrf.mxu0
        %v5664 = vadd.f32 %v5587, %v5663
        %5665 = vdwg.mxu0
        %5666 = vmatpush.bf16.msra.mxu0 0
        %5667 = vmatpush.bf16.msra.mxu0 0
        %5668 = vmatpush.bf16.msra.mxu0 0
        %5669 = vmatpush.bf16.msra.mxu0 0
        %5670 = vmatpush.bf16.msra.mxu0 0
        %5671 = vmatpush.bf16.msra.mxu0 0
        %5672 = vmatpush.bf16.msra.mxu0 %v5528
        %5673 = vmatpush.bf16.msra.mxu0 %v5527
        %5674 = vmatmul.bf16.gmra.mxu0 %v5626
        %v5675 = vpop.f32.mrf.mxu0
        %v5676 = vadd.f32 %v5647, %v5675
        %v5677 = vpop.f32.mrf.mxu0
        %v5678 = vadd.f32 %v5649, %v5677
        %5679 = vmatmul.bf16.gmra.mxu0 %v5629
        %v5680 = vpop.f32.mrf.mxu0
        %v5681 = vadd.f32 %v5652, %v5680
        %v5682 = vpop.f32.mrf.mxu0
        %v5683 = vadd.f32 %v5654, %v5682
        %5684 = vmatmul.bf16.gmra.mxu0 %v5632
        %v5685 = vpop.f32.mrf.mxu0
        %v5686 = vadd.f32 %v5657, %v5685
        %v5687 = vpop.f32.mrf.mxu0
        %v5688 = vadd.f32 %v5659, %v5687
        %5689 = vmatmul.bf16.gmra.mxu0 %v5635
        %v5690 = vpop.f32.mrf.mxu0
        %v5691 = vadd.f32 %v5662, %v5690
        %v5692 = vpop.f32.mrf.mxu0
        %v5693 = vadd.f32 %v5664, %v5692
        %5694 = vdwg.mxu0
        %v5695 = vtanh.pop %v5676
        %v5696 = vtanh.pop %v5678
        %v5697 = vtanh.pop %v5681
        %v5698 = vtanh.pop %v5683
        %v5699 = vtanh.pop %v5686
        %v5700 = vtanh.pop %v5688
        %v5701 = vtanh.pop %v5691
        %v5702 = vtanh.pop %v5693
        %v5703 = vmul.f32 %v5699, 0.5
        %v5704 = vmul.f32 %v5700, 0.5
        %v5705 = vmul.f32 %v5701, 0.5
        %v5706 = vmul.f32 %v5702, 0.5
        %v5707 = vadd.f32 %v5703, 0.5
        %v5708 = vadd.f32 %v5704, 0.5
        %v5709 = vadd.f32 %v5705, 0.5
        %v5710 = vadd.f32 %v5706, 0.5
        %v5711 = vmul.f32 %v5695, %v5707
        %v5712 = vmul.f32 %v5696, %v5708
        %v5713 = vmul.f32 %v5697, %v5709
        %v5714 = vmul.f32 %v5698, %v5710
        %v5715 = vpack.c.bf16 %v5712, %v5711
        %v5716 = vpack.c.bf16 %v5714, %v5713
        %s5717 = scalar_lea.vmem %s8, 32
        %v5718 = vld [vmem:[%s5717] sm:$0xf]
        %v5719 = vld [vmem:[%s5717 + $0x4] sm:$0xf]
        %v5720 = vld [vmem:[%s5717 + $0x8] sm:$0xf]
        %v5721 = vld [vmem:[%s5717 + $0xc] sm:$0xf]
        %s5722 = scalar_lea.vmem %s9, 64
        %v5723 = vld [vmem:[%s5722] sm:$0xff]
        %v5724 = vld [vmem:[%s5722 + $0x8] sm:$0xff]
        %v5725 = vld [vmem:[%s5722 + $0x10] sm:$0xff]
        %v5726 = vld [vmem:[%s5722 + $0x18] sm:$0xff]
        %5728 = vset.pattern.permute.xlu0 0
        %5729 = vperm.xlu0 %5728, %v5723
        %v5730 = vpop.permute.xlu0 %5729
        %5733 = vset.pattern.permute.xlu0 0
        %5734 = vperm.xlu0 %5733, %v5724
        %v5735 = vpop.permute.xlu0 %5734
        %5738 = vset.pattern.permute.xlu0 0
        %5739 = vperm.xlu0 %5738, %v5725
        %v5740 = vpop.permute.xlu0 %5739
        %5743 = vset.pattern.permute.xlu0 0
        %5744 = vperm.xlu0 %5743, %v5726
        %v5745 = vpop.permute.xlu0 %5744
        %v5751 = vunpack.c.l.b16 %v5718
        %v5752 = vunpack.c.l.b16 %v5719
        %v5753 = vunpack.c.l.b16 %v5720
        %v5754 = vunpack.c.l.b16 %v5721
        %v5755 = vpack.c.b16 %v5752, %v5751
        %v5756 = vpack.c.b16 %v5754, %v5753
        %v5758 = vsel %vm771, %v5755, 0
        %v5761 = vsel %vm771, %v5756, 0
        %5763 = vmatpush.bf16.msra.mxu0 0
        %5764 = vmatpush.bf16.msra.mxu0 0
        %5765 = vmatpush.bf16.msra.mxu0 0
        %5766 = vmatpush.bf16.msra.mxu0 0
        %5767 = vmatpush.bf16.msra.mxu0 0
        %5768 = vmatpush.bf16.msra.mxu0 0
        %5769 = vmatpush.bf16.msra.mxu0 %v5716
        %5770 = vmatpush.bf16.msra.mxu0 %v5715
        %5771 = vmatmul.bf16.gmra.mxu0 %v5758
        %v5772 = vpop.f32.mrf.mxu0
        %v5773 = vadd.f32 %v5730, %v5772
        %v5774 = vpop.f32.mrf.mxu0
        %v5775 = vadd.f32 %v5735, %v5774
        %5776 = vmatmul.bf16.gmra.mxu0 %v5761
        %v5777 = vpop.f32.mrf.mxu0
        %v5778 = vadd.f32 %v5740, %v5777
        %v5779 = vpop.f32.mrf.mxu0
        %v5780 = vadd.f32 %v5745, %v5779
        %5781 = vdwg.mxu0
        %v5782 = vadd.f32 %v5411, %v5773
        %v5783 = vadd.f32 %v5412, %v5775
        %v5784 = vadd.f32 %v5413, %v5778
        %v5785 = vadd.f32 %v5414, %v5780
        %v5786 = vmul.f32 %v5782, %v474
        %v5787 = vmul.f32 %v5783, %v474
        %v5788 = vmul.f32 %v5784, %v474
        %v5789 = vmul.f32 %v5785, %v474
        %s5790 = scalar_lea.vmem %s10, 8
        %v5791 = vld [vmem:[%s5790] sm:$0xf]
        %v5792 = vpack.c.bf16 %v5787, %v5786
        %v5793 = vpack.c.bf16 %v5789, %v5788
        %s5794 = scalar_lea.vmem %s11, 16
        %v5795 = vld [vmem:[%s5794] sm:$0xff]
        %5797 = vset.pattern.permute.xlu0 0
        %5798 = vperm.xlu0 %5797, %v5795
        %v5799 = vpop.permute.xlu0 %5798
        %v5802 = vsel %vm771, %v5791, 0
        %5804 = vmatpush.bf16.msra.mxu0 0
        %5805 = vmatpush.bf16.msra.mxu0 0
        %5806 = vmatpush.bf16.msra.mxu0 0
        %5807 = vmatpush.bf16.msra.mxu0 0
        %5808 = vmatpush.bf16.msra.mxu0 0
        %5809 = vmatpush.bf16.msra.mxu0 0
        %5810 = vmatpush.bf16.msra.mxu0 %v5793
        %5811 = vmatpush.bf16.msra.mxu0 %v5792
        %5812 = vmatmul.bf16.gmra.mxu0 %v5802
        %v5813 = vpop.f32.mrf.mxu0
        %v5814 = vadd.f32 %v5799, %v5813
        %v5815 = vpop.f32.mrf.mxu0
        %5816 = vdwg.mxu0
        %v5817 = vmul.f32 %v5814, %v474
        %s5818 = scalar_lea.vmem %s12, 16
        %v5819 = vld [vmem:[%s5818] sm:$0xff]
        %5821 = vset.pattern.permute.xlu0 0
        %5822 = vperm.xlu0 %5821, %v5819
        %v5823 = vpop.permute.xlu0 %5822
        %v5825 = vmul.f32 %v5823, %v2255
        %v5826 = vadd.f32 %v5825, 1.0
        %v5827 = vmul.f32 %v4046, %v5826
        %v5828 = vadd.f32 %v5827, %v5817
        %s5829 = scalar_lea.vmem %s3, 48
        %v5830 = vld [vmem:[%s5829] sm:$0xf]
        %v5831 = vld [vmem:[%s5829 + $0x4] sm:$0xf]
        %v5832 = vld [vmem:[%s5829 + $0x8] sm:$0xf]
        %v5833 = vld [vmem:[%s5829 + $0xc] sm:$0xf]
        %v5834 = vpack.c.bf16 %v5828, %v5828
        %s5835 = scalar_lea.vmem %s4, 96
        %v5836 = vld [vmem:[%s5835] sm:$0xff]
        %v5837 = vld [vmem:[%s5835 + $0x8] sm:$0xff]
        %v5838 = vld [vmem:[%s5835 + $0x10] sm:$0xff]
        %v5839 = vld [vmem:[%s5835 + $0x18] sm:$0xff]
        %5841 = vset.pattern.permute.xlu0 0
        %5842 = vperm.xlu0 %5841, %v5836
        %v5843 = vpop.permute.xlu0 %5842
        %5846 = vset.pattern.permute.xlu0 0
        %5847 = vperm.xlu0 %5846, %v5837
        %v5848 = vpop.permute.xlu0 %5847
        %5851 = vset.pattern.permute.xlu0 0
        %5852 = vperm.xlu0 %5851, %v5838
        %v5853 = vpop.permute.xlu0 %5852
        %5856 = vset.pattern.permute.xlu0 0
        %5857 = vperm.xlu0 %5856, %v5839
        %v5858 = vpop.permute.xlu0 %5857
        %v5864 = vunpack.c.l.b16 %v5830
        %v5865 = vunpack.c.l.b16 %v5831
        %v5866 = vunpack.c.l.b16 %v5832
        %v5867 = vunpack.c.l.b16 %v5833
        %v5868 = vpack.c.b16 %v5865, %v5864
        %v5869 = vpack.c.b16 %v5867, %v5866
        %v5871 = vsel %vm522, %v5868, 0
        %v5874 = vsel %vm522, %v5869, 0
        %v5877 = vsel %vm476, %v5834, 0
        %5879 = vmatpush.bf16.msra.mxu0 0
        %5880 = vmatpush.bf16.msra.mxu0 0
        %5881 = vmatpush.bf16.msra.mxu0 0
        %5882 = vmatpush.bf16.msra.mxu0 0
        %5883 = vmatpush.bf16.msra.mxu0 0
        %5884 = vmatpush.bf16.msra.mxu0 0
        %5885 = vmatpush.bf16.msra.mxu0 0
        %5886 = vmatpush.bf16.msra.mxu0 %v5877
        %5887 = vmatmul.bf16.gmra.mxu0 %v5871
        %v5888 = vpop.f32.mrf.mxu0
        %v5889 = vadd.f32 %v5843, %v5888
        %v5890 = vpop.f32.mrf.mxu0
        %v5891 = vadd.f32 %v5848, %v5890
        %5892 = vmatmul.bf16.gmra.mxu0 %v5874
        %v5893 = vpop.f32.mrf.mxu0
        %v5894 = vadd.f32 %v5853, %v5893
        %v5895 = vpop.f32.mrf.mxu0
        %v5896 = vadd.f32 %v5858, %v5895
        %5897 = vdwg.mxu0
        %v5898 = vmul.f32 %v5889, %v474
        %v5899 = vmul.f32 %v5891, %v474
        %v5900 = vmul.f32 %v5894, %v474
        %v5901 = vmul.f32 %v5896, %v474
        %v5902 = vpack.c.bf16 %v5898, %v5898
        %v5903 = vpack.c.bf16 %v5899, %v5899
        %v5904 = vpack.c.bf16 %v5900, %v5900
        %v5905 = vpack.c.bf16 %v5901, %v5901
        %5910 = vrot.lane.b32.xlu0 %v5902, 2
        %v5911 = vpop.permute.xlu0 %5910
        %5912 = vrot.lane.b32.xlu0 %v5903, 2
        %v5913 = vpop.permute.xlu0 %5912
        %5914 = vrot.lane.b32.xlu0 %v5904, 2
        %v5915 = vpop.permute.xlu0 %5914
        %5916 = vrot.lane.b32.xlu0 %v5905, 2
        %v5917 = vpop.permute.xlu0 %5916
        %v5918 = vrot.slane %v5911, 4
        %v5919 = vrot.slane %v5913, 4
        %v5920 = vrot.slane %v5915, 4
        %v5921 = vrot.slane %v5917, 4
        %v5922 = vsel %vm575, %v5918, %v5911
        %v5923 = vsel %vm575, %v5919, %v5913
        %v5924 = vsel %vm575, %v5920, %v5915
        %v5925 = vsel %vm575, %v5921, %v5917
        %5930 = vst.msk [vmem:[#allocation2] sm:$0xff] %vm586, %v5922
        %5931 = vst.msk [vmem:[#allocation2 + $0x8] sm:$0xff] %vm586, %v5923
        %5932 = vst.msk [vmem:[#allocation2 + $0x10] sm:$0xff] %vm586, %v5924
        %5933 = vst.msk [vmem:[#allocation2 + $0x18] sm:$0xff] %vm586, %v5925
        %v5934 = vld [vmem:[#allocation2] sm:$0xf]
        %v5935 = vld [vmem:[#allocation2 + $0x8] sm:$0xf]
        %v5936 = vld [vmem:[#allocation2 + $0x10] sm:$0xf]
        %v5937 = vld [vmem:[#allocation2 + $0x18] sm:$0xf]
        %v5938 = vld [vmem:[#allocation2] sm:$0xff]
        %v5939 = vld [vmem:[#allocation2 + $0x8] sm:$0xff]
        %v5940 = vld [vmem:[#allocation2 + $0x10] sm:$0xff]
        %v5941 = vld [vmem:[#allocation2 + $0x18] sm:$0xff]
        %v5946 = vunpack.c.l.b16 %v5934
        %v5947 = vunpack.c.l.b16 %v5935
        %v5948 = vunpack.c.l.b16 %v5936
        %v5949 = vunpack.c.l.b16 %v5937
        %v5950 = vpack.c.b16 %v5947, %v5946
        %v5951 = vpack.c.b16 %v5949, %v5948
        %v5958 = vunpack.c.l.b16 %v5938
        %v5959 = vunpack.c.h.b16 %v5938
        %v5960 = vunpack.c.l.b16 %v5939
        %v5961 = vunpack.c.h.b16 %v5939
        %v5962 = vunpack.c.l.b16 %v5940
        %v5963 = vunpack.c.h.b16 %v5940
        %v5964 = vunpack.c.l.b16 %v5941
        %v5965 = vunpack.c.h.b16 %v5941
        %v5966 = vpack.c.b16 %v5960, %v5958
        %v5967 = vpack.c.b16 %v5961, %v5959
        %v5968 = vpack.c.b16 %v5964, %v5962
        %v5969 = vpack.c.b16 %v5965, %v5963
        %5970 = vrot.lane.b32.xlu0 %v5966, 127
        %v5971 = vpop.permute.xlu0 %5970
        %5972 = vrot.lane.b32.xlu0 %v5967, 127
        %v5973 = vpop.permute.xlu0 %5972
        %5974 = vrot.lane.b32.xlu0 %v5968, 127
        %v5975 = vpop.permute.xlu0 %5974
        %5976 = vrot.lane.b32.xlu0 %v5969, 127
        %v5977 = vpop.permute.xlu0 %5976
        %v5978 = vsel %vm635, %v5971, %v5973
        %v5979 = vsel %vm635, %v5975, %v5977
        %5982 = vrot.lane.b32.xlu0 %v5966, 126
        %v5983 = vpop.permute.xlu0 %5982
        %5984 = vrot.lane.b32.xlu0 %v5967, 126
        %v5985 = vpop.permute.xlu0 %5984
        %5986 = vrot.lane.b32.xlu0 %v5968, 126
        %v5987 = vpop.permute.xlu0 %5986
        %5988 = vrot.lane.b32.xlu0 %v5969, 126
        %v5989 = vpop.permute.xlu0 %5988
        %v5990 = vsel %vm648, %v5983, %v5985
        %v5991 = vsel %vm648, %v5987, %v5989
        %5994 = vrot.lane.b32.xlu0 %v5966, 125
        %v5995 = vpop.permute.xlu0 %5994
        %5996 = vrot.lane.b32.xlu0 %v5967, 125
        %v5997 = vpop.permute.xlu0 %5996
        %5998 = vrot.lane.b32.xlu0 %v5968, 125
        %v5999 = vpop.permute.xlu0 %5998
        %6000 = vrot.lane.b32.xlu0 %v5969, 125
        %v6001 = vpop.permute.xlu0 %6000
        %v6002 = vsel %vm661, %v5995, %v5997
        %v6003 = vsel %vm661, %v5999, %v6001
        %6006 = vrot.lane.b32.xlu0 %v5966, 124
        %v6007 = vpop.permute.xlu0 %6006
        %6008 = vrot.lane.b32.xlu0 %v5967, 124
        %v6009 = vpop.permute.xlu0 %6008
        %6010 = vrot.lane.b32.xlu0 %v5968, 124
        %v6011 = vpop.permute.xlu0 %6010
        %6012 = vrot.lane.b32.xlu0 %v5969, 124
        %v6013 = vpop.permute.xlu0 %6012
        %v6014 = vsel %vm674, %v6007, %v6009
        %v6015 = vsel %vm674, %v6011, %v6013
        %s6018 = scalar_lea.vmem %s5, 768
        %v6019 = vld [vmem:[%s6018] sm:$0xff]
        %v6020 = vld [vmem:[%s6018 + $0x8] sm:$0xff]
        %v6021 = vld [vmem:[%s6018 + $0x10] sm:$0xff]
        %v6022 = vld [vmem:[%s6018 + $0x18] sm:$0xff]
        %v6023 = vld [vmem:[%s6018 + $0x20] sm:$0xff]
        %v6024 = vld [vmem:[%s6018 + $0x28] sm:$0xff]
        %v6025 = vld [vmem:[%s6018 + $0x30] sm:$0xff]
        %v6026 = vld [vmem:[%s6018 + $0x38] sm:$0xff]
        %s6027 = scalar_lea.vmem %s469, 768
        %v6028 = vld [vmem:[%s6027] sm:$0xff]
        %v6029 = vld [vmem:[%s6027 + $0x8] sm:$0xff]
        %v6030 = vld [vmem:[%s6027 + $0x10] sm:$0xff]
        %v6031 = vld [vmem:[%s6027 + $0x18] sm:$0xff]
        %v6032 = vld [vmem:[%s6027 + $0x20] sm:$0xff]
        %v6033 = vld [vmem:[%s6027 + $0x28] sm:$0xff]
        %v6034 = vld [vmem:[%s6027 + $0x30] sm:$0xff]
        %v6035 = vld [vmem:[%s6027 + $0x38] sm:$0xff]
        %6037 = vset.pattern.permute.xlu0 0
        %6038 = vperm.xlu0 %6037, %v6028
        %v6039 = vpop.permute.xlu0 %6038
        %6042 = vset.pattern.permute.xlu0 0
        %6043 = vperm.xlu0 %6042, %v6029
        %v6044 = vpop.permute.xlu0 %6043
        %6047 = vset.pattern.permute.xlu0 0
        %6048 = vperm.xlu0 %6047, %v6030
        %v6049 = vpop.permute.xlu0 %6048
        %6052 = vset.pattern.permute.xlu0 0
        %6053 = vperm.xlu0 %6052, %v6031
        %v6054 = vpop.permute.xlu0 %6053
        %6057 = vset.pattern.permute.xlu0 0
        %6058 = vperm.xlu0 %6057, %v6032
        %v6059 = vpop.permute.xlu0 %6058
        %6062 = vset.pattern.permute.xlu0 0
        %6063 = vperm.xlu0 %6062, %v6033
        %v6064 = vpop.permute.xlu0 %6063
        %6067 = vset.pattern.permute.xlu0 0
        %6068 = vperm.xlu0 %6067, %v6034
        %v6069 = vpop.permute.xlu0 %6068
        %6072 = vset.pattern.permute.xlu0 0
        %6073 = vperm.xlu0 %6072, %v6035
        %v6074 = vpop.permute.xlu0 %6073
        %v6084 = vunpack.c.l.b16 %v6019
        %v6085 = vunpack.c.h.b16 %v6019
        %v6086 = vunpack.c.l.b16 %v6020
        %v6087 = vunpack.c.h.b16 %v6020
        %v6088 = vunpack.c.l.b16 %v6021
        %v6089 = vunpack.c.h.b16 %v6021
        %v6090 = vunpack.c.l.b16 %v6022
        %v6091 = vunpack.c.h.b16 %v6022
        %v6092 = vunpack.c.l.b16 %v6023
        %v6093 = vunpack.c.h.b16 %v6023
        %v6094 = vunpack.c.l.b16 %v6024
        %v6095 = vunpack.c.h.b16 %v6024
        %v6096 = vunpack.c.l.b16 %v6025
        %v6097 = vunpack.c.h.b16 %v6025
        %v6098 = vunpack.c.l.b16 %v6026
        %v6099 = vunpack.c.h.b16 %v6026
        %v6100 = vpack.c.b16 %v6086, %v6084
        %v6101 = vpack.c.b16 %v6087, %v6085
        %v6102 = vpack.c.b16 %v6090, %v6088
        %v6103 = vpack.c.b16 %v6091, %v6089
        %v6104 = vpack.c.b16 %v6094, %v6092
        %v6105 = vpack.c.b16 %v6095, %v6093
        %v6106 = vpack.c.b16 %v6098, %v6096
        %v6107 = vpack.c.b16 %v6099, %v6097
        %v6113 = vsel %vm771, %v6101, 0
        %v6116 = vsel %vm771, %v6103, 0
        %v6119 = vsel %vm771, %v6105, 0
        %v6122 = vsel %vm771, %v6107, 0
        %6124 = vmatpush.bf16.msra.mxu0 %v6003
        %6125 = vmatpush.bf16.msra.mxu0 %v6002
        %6126 = vmatpush.bf16.msra.mxu0 %v5991
        %6127 = vmatpush.bf16.msra.mxu0 %v5990
        %6128 = vmatpush.bf16.msra.mxu0 %v5979
        %6129 = vmatpush.bf16.msra.mxu0 %v5978
        %6130 = vmatpush.bf16.msra.mxu0 %v5951
        %6131 = vmatpush.bf16.msra.mxu0 %v5950
        %6132 = vmatmul.bf16.gmra.mxu0 %v6100
        %v6133 = vpop.f32.mrf.mxu0
        %v6134 = vadd.f32 %v6039, %v6133
        %v6135 = vpop.f32.mrf.mxu0
        %v6136 = vadd.f32 %v6044, %v6135
        %6137 = vmatmul.bf16.gmra.mxu0 %v6102
        %v6138 = vpop.f32.mrf.mxu0
        %v6139 = vadd.f32 %v6049, %v6138
        %v6140 = vpop.f32.mrf.mxu0
        %v6141 = vadd.f32 %v6054, %v6140
        %6142 = vmatmul.bf16.gmra.mxu0 %v6104
        %v6143 = vpop.f32.mrf.mxu0
        %v6144 = vadd.f32 %v6059, %v6143
        %v6145 = vpop.f32.mrf.mxu0
        %v6146 = vadd.f32 %v6064, %v6145
        %6147 = vmatmul.bf16.gmra.mxu0 %v6106
        %v6148 = vpop.f32.mrf.mxu0
        %v6149 = vadd.f32 %v6069, %v6148
        %v6150 = vpop.f32.mrf.mxu0
        %v6151 = vadd.f32 %v6074, %v6150
        %6152 = vdwg.mxu0
        %6153 = vmatpush.bf16.msra.mxu0 0
        %6154 = vmatpush.bf16.msra.mxu0 0
        %6155 = vmatpush.bf16.msra.mxu0 0
        %6156 = vmatpush.bf16.msra.mxu0 0
        %6157 = vmatpush.bf16.msra.mxu0 0
        %6158 = vmatpush.bf16.msra.mxu0 0
        %6159 = vmatpush.bf16.msra.mxu0 %v6015
        %6160 = vmatpush.bf16.msra.mxu0 %v6014
        %6161 = vmatmul.bf16.gmra.mxu0 %v6113
        %v6162 = vpop.f32.mrf.mxu0
        %v6163 = vadd.f32 %v6134, %v6162
        %v6164 = vpop.f32.mrf.mxu0
        %v6165 = vadd.f32 %v6136, %v6164
        %6166 = vmatmul.bf16.gmra.mxu0 %v6116
        %v6167 = vpop.f32.mrf.mxu0
        %v6168 = vadd.f32 %v6139, %v6167
        %v6169 = vpop.f32.mrf.mxu0
        %v6170 = vadd.f32 %v6141, %v6169
        %6171 = vmatmul.bf16.gmra.mxu0 %v6119
        %v6172 = vpop.f32.mrf.mxu0
        %v6173 = vadd.f32 %v6144, %v6172
        %v6174 = vpop.f32.mrf.mxu0
        %v6175 = vadd.f32 %v6146, %v6174
        %6176 = vmatmul.bf16.gmra.mxu0 %v6122
        %v6177 = vpop.f32.mrf.mxu0
        %v6178 = vadd.f32 %v6149, %v6177
        %v6179 = vpop.f32.mrf.mxu0
        %v6180 = vadd.f32 %v6151, %v6179
        %6181 = vdwg.mxu0
        %v6182 = vtanh.pop %v6163
        %v6183 = vtanh.pop %v6165
        %v6184 = vtanh.pop %v6168
        %v6185 = vtanh.pop %v6170
        %v6186 = vtanh.pop %v6173
        %v6187 = vtanh.pop %v6175
        %v6188 = vtanh.pop %v6178
        %v6189 = vtanh.pop %v6180
        %v6190 = vmul.f32 %v6186, 0.5
        %v6191 = vmul.f32 %v6187, 0.5
        %v6192 = vmul.f32 %v6188, 0.5
        %v6193 = vmul.f32 %v6189, 0.5
        %v6194 = vadd.f32 %v6190, 0.5
        %v6195 = vadd.f32 %v6191, 0.5
        %v6196 = vadd.f32 %v6192, 0.5
        %v6197 = vadd.f32 %v6193, 0.5
        %v6198 = vmul.f32 %v6182, %v6194
        %v6199 = vmul.f32 %v6183, %v6195
        %v6200 = vmul.f32 %v6184, %v6196
        %v6201 = vmul.f32 %v6185, %v6197
        %v6202 = vpack.c.bf16 %v6199, %v6198
        %v6203 = vpack.c.bf16 %v6201, %v6200
        %s6204 = scalar_lea.vmem %s6, 288
        %v6205 = vld [vmem:[%s6204] sm:$0xf]
        %v6206 = vld [vmem:[%s6204 + $0x4] sm:$0xf]
        %v6207 = vld [vmem:[%s6204 + $0x8] sm:$0xf]
        %v6208 = vld [vmem:[%s6204 + $0xc] sm:$0xf]
        %v6209 = vld [vmem:[%s6204 + $0x10] sm:$0xf]
        %v6210 = vld [vmem:[%s6204 + $0x14] sm:$0xf]
        %v6211 = vld [vmem:[%s6204 + $0x18] sm:$0xf]
        %v6212 = vld [vmem:[%s6204 + $0x1c] sm:$0xf]
        %s6213 = scalar_lea.vmem %s7, 576
        %v6214 = vld [vmem:[%s6213] sm:$0xff]
        %v6215 = vld [vmem:[%s6213 + $0x8] sm:$0xff]
        %v6216 = vld [vmem:[%s6213 + $0x10] sm:$0xff]
        %v6217 = vld [vmem:[%s6213 + $0x18] sm:$0xff]
        %v6218 = vld [vmem:[%s6213 + $0x20] sm:$0xff]
        %v6219 = vld [vmem:[%s6213 + $0x28] sm:$0xff]
        %v6220 = vld [vmem:[%s6213 + $0x30] sm:$0xff]
        %v6221 = vld [vmem:[%s6213 + $0x38] sm:$0xff]
        %6223 = vset.pattern.permute.xlu0 0
        %6224 = vperm.xlu0 %6223, %v6214
        %v6225 = vpop.permute.xlu0 %6224
        %6228 = vset.pattern.permute.xlu0 0
        %6229 = vperm.xlu0 %6228, %v6215
        %v6230 = vpop.permute.xlu0 %6229
        %6233 = vset.pattern.permute.xlu0 0
        %6234 = vperm.xlu0 %6233, %v6216
        %v6235 = vpop.permute.xlu0 %6234
        %6238 = vset.pattern.permute.xlu0 0
        %6239 = vperm.xlu0 %6238, %v6217
        %v6240 = vpop.permute.xlu0 %6239
        %6243 = vset.pattern.permute.xlu0 0
        %6244 = vperm.xlu0 %6243, %v6218
        %v6245 = vpop.permute.xlu0 %6244
        %6248 = vset.pattern.permute.xlu0 0
        %6249 = vperm.xlu0 %6248, %v6219
        %v6250 = vpop.permute.xlu0 %6249
        %6253 = vset.pattern.permute.xlu0 0
        %6254 = vperm.xlu0 %6253, %v6220
        %v6255 = vpop.permute.xlu0 %6254
        %6258 = vset.pattern.permute.xlu0 0
        %6259 = vperm.xlu0 %6258, %v6221
        %v6260 = vpop.permute.xlu0 %6259
        %v6270 = vunpack.c.l.b16 %v6205
        %v6271 = vunpack.c.l.b16 %v6206
        %v6272 = vunpack.c.l.b16 %v6207
        %v6273 = vunpack.c.l.b16 %v6208
        %v6274 = vunpack.c.l.b16 %v6209
        %v6275 = vunpack.c.l.b16 %v6210
        %v6276 = vunpack.c.l.b16 %v6211
        %v6277 = vunpack.c.l.b16 %v6212
        %v6278 = vpack.c.b16 %v6271, %v6270
        %v6279 = vpack.c.b16 %v6273, %v6272
        %v6280 = vpack.c.b16 %v6275, %v6274
        %v6281 = vpack.c.b16 %v6277, %v6276
        %v6283 = vsel %vm771, %v6278, 0
        %v6286 = vsel %vm771, %v6279, 0
        %v6289 = vsel %vm771, %v6280, 0
        %v6292 = vsel %vm771, %v6281, 0
        %6294 = vmatpush.bf16.msra.mxu0 0
        %6295 = vmatpush.bf16.msra.mxu0 0
        %6296 = vmatpush.bf16.msra.mxu0 0
        %6297 = vmatpush.bf16.msra.mxu0 0
        %6298 = vmatpush.bf16.msra.mxu0 0
        %6299 = vmatpush.bf16.msra.mxu0 0
        %6300 = vmatpush.bf16.msra.mxu0 %v6203
        %6301 = vmatpush.bf16.msra.mxu0 %v6202
        %6302 = vmatmul.bf16.gmra.mxu0 %v6283
        %v6303 = vpop.f32.mrf.mxu0
        %v6304 = vadd.f32 %v6225, %v6303
        %v6305 = vpop.f32.mrf.mxu0
        %v6306 = vadd.f32 %v6230, %v6305
        %6307 = vmatmul.bf16.gmra.mxu0 %v6286
        %v6308 = vpop.f32.mrf.mxu0
        %v6309 = vadd.f32 %v6235, %v6308
        %v6310 = vpop.f32.mrf.mxu0
        %v6311 = vadd.f32 %v6240, %v6310
        %6312 = vmatmul.bf16.gmra.mxu0 %v6289
        %v6313 = vpop.f32.mrf.mxu0
        %v6314 = vadd.f32 %v6245, %v6313
        %v6315 = vpop.f32.mrf.mxu0
        %v6316 = vadd.f32 %v6250, %v6315
        %6317 = vmatmul.bf16.gmra.mxu0 %v6292
        %v6318 = vpop.f32.mrf.mxu0
        %v6319 = vadd.f32 %v6255, %v6318
        %v6320 = vpop.f32.mrf.mxu0
        %v6321 = vadd.f32 %v6260, %v6320
        %6322 = vdwg.mxu0
        %v6323 = vadd.f32 %v5898, %v6304
        %v6324 = vadd.f32 %v5899, %v6306
        %v6325 = vadd.f32 %v5900, %v6309
        %v6326 = vadd.f32 %v5901, %v6311
        %v6327 = vmul.f32 %v6323, %v474
        %v6328 = vmul.f32 %v6324, %v474
        %v6329 = vmul.f32 %v6325, %v474
        %v6330 = vmul.f32 %v6326, %v474
        %v6331 = vpack.c.bf16 %v6327, %v6327
        %v6332 = vpack.c.bf16 %v6328, %v6328
        %v6333 = vpack.c.bf16 %v6329, %v6329
        %v6334 = vpack.c.bf16 %v6330, %v6330
        %6339 = vrot.lane.b32.xlu0 %v6331, 2
        %v6340 = vpop.permute.xlu0 %6339
        %6341 = vrot.lane.b32.xlu0 %v6332, 2
        %v6342 = vpop.permute.xlu0 %6341
        %6343 = vrot.lane.b32.xlu0 %v6333, 2
        %v6344 = vpop.permute.xlu0 %6343
        %6345 = vrot.lane.b32.xlu0 %v6334, 2
        %v6346 = vpop.permute.xlu0 %6345
        %v6347 = vrot.slane %v6340, 4
        %v6348 = vrot.slane %v6342, 4
        %v6349 = vrot.slane %v6344, 4
        %v6350 = vrot.slane %v6346, 4
        %v6351 = vsel %vm575, %v6347, %v6340
        %v6352 = vsel %vm575, %v6348, %v6342
        %v6353 = vsel %vm575, %v6349, %v6344
        %v6354 = vsel %vm575, %v6350, %v6346
        %6359 = vst.msk [vmem:[#allocation2] sm:$0xff] %vm586, %v6351
        %6360 = vst.msk [vmem:[#allocation2 + $0x8] sm:$0xff] %vm586, %v6352
        %6361 = vst.msk [vmem:[#allocation2 + $0x10] sm:$0xff] %vm586, %v6353
        %6362 = vst.msk [vmem:[#allocation2 + $0x18] sm:$0xff] %vm586, %v6354
        %v6363 = vld [vmem:[#allocation2] sm:$0xf]
        %v6364 = vld [vmem:[#allocation2 + $0x8] sm:$0xf]
        %v6365 = vld [vmem:[#allocation2 + $0x10] sm:$0xf]
        %v6366 = vld [vmem:[#allocation2 + $0x18] sm:$0xf]
        %v6367 = vld [vmem:[#allocation2] sm:$0xff]
        %v6368 = vld [vmem:[#allocation2 + $0x8] sm:$0xff]
        %v6369 = vld [vmem:[#allocation2 + $0x10] sm:$0xff]
        %v6370 = vld [vmem:[#allocation2 + $0x18] sm:$0xff]
        %v6375 = vunpack.c.l.b16 %v6363
        %v6376 = vunpack.c.l.b16 %v6364
        %v6377 = vunpack.c.l.b16 %v6365
        %v6378 = vunpack.c.l.b16 %v6366
        %v6379 = vpack.c.b16 %v6376, %v6375
        %v6380 = vpack.c.b16 %v6378, %v6377
        %v6387 = vunpack.c.l.b16 %v6367
        %v6388 = vunpack.c.h.b16 %v6367
        %v6389 = vunpack.c.l.b16 %v6368
        %v6390 = vunpack.c.h.b16 %v6368
        %v6391 = vunpack.c.l.b16 %v6369
        %v6392 = vunpack.c.h.b16 %v6369
        %v6393 = vunpack.c.l.b16 %v6370
        %v6394 = vunpack.c.h.b16 %v6370
        %v6395 = vpack.c.b16 %v6389, %v6387
        %v6396 = vpack.c.b16 %v6390, %v6388
        %v6397 = vpack.c.b16 %v6393, %v6391
        %v6398 = vpack.c.b16 %v6394, %v6392
        %6399 = vrot.lane.b32.xlu0 %v6395, 127
        %v6400 = vpop.permute.xlu0 %6399
        %6401 = vrot.lane.b32.xlu0 %v6396, 127
        %v6402 = vpop.permute.xlu0 %6401
        %6403 = vrot.lane.b32.xlu0 %v6397, 127
        %v6404 = vpop.permute.xlu0 %6403
        %6405 = vrot.lane.b32.xlu0 %v6398, 127
        %v6406 = vpop.permute.xlu0 %6405
        %v6407 = vsel %vm635, %v6400, %v6402
        %v6408 = vsel %vm635, %v6404, %v6406
        %6411 = vrot.lane.b32.xlu0 %v6395, 126
        %v6412 = vpop.permute.xlu0 %6411
        %6413 = vrot.lane.b32.xlu0 %v6396, 126
        %v6414 = vpop.permute.xlu0 %6413
        %6415 = vrot.lane.b32.xlu0 %v6397, 126
        %v6416 = vpop.permute.xlu0 %6415
        %6417 = vrot.lane.b32.xlu0 %v6398, 126
        %v6418 = vpop.permute.xlu0 %6417
        %v6419 = vsel %vm648, %v6412, %v6414
        %v6420 = vsel %vm648, %v6416, %v6418
        %6423 = vrot.lane.b32.xlu0 %v6395, 125
        %v6424 = vpop.permute.xlu0 %6423
        %6425 = vrot.lane.b32.xlu0 %v6396, 125
        %v6426 = vpop.permute.xlu0 %6425
        %6427 = vrot.lane.b32.xlu0 %v6397, 125
        %v6428 = vpop.permute.xlu0 %6427
        %6429 = vrot.lane.b32.xlu0 %v6398, 125
        %v6430 = vpop.permute.xlu0 %6429
        %v6431 = vsel %vm661, %v6424, %v6426
        %v6432 = vsel %vm661, %v6428, %v6430
        %6435 = vrot.lane.b32.xlu0 %v6395, 124
        %v6436 = vpop.permute.xlu0 %6435
        %6437 = vrot.lane.b32.xlu0 %v6396, 124
        %v6438 = vpop.permute.xlu0 %6437
        %6439 = vrot.lane.b32.xlu0 %v6397, 124
        %v6440 = vpop.permute.xlu0 %6439
        %6441 = vrot.lane.b32.xlu0 %v6398, 124
        %v6442 = vpop.permute.xlu0 %6441
        %v6443 = vsel %vm674, %v6436, %v6438
        %v6444 = vsel %vm674, %v6440, %v6442
        %s6447 = scalar_lea.vmem %s5, 832
        %v6448 = vld [vmem:[%s6447] sm:$0xff]
        %v6449 = vld [vmem:[%s6447 + $0x8] sm:$0xff]
        %v6450 = vld [vmem:[%s6447 + $0x10] sm:$0xff]
        %v6451 = vld [vmem:[%s6447 + $0x18] sm:$0xff]
        %v6452 = vld [vmem:[%s6447 + $0x20] sm:$0xff]
        %v6453 = vld [vmem:[%s6447 + $0x28] sm:$0xff]
        %v6454 = vld [vmem:[%s6447 + $0x30] sm:$0xff]
        %v6455 = vld [vmem:[%s6447 + $0x38] sm:$0xff]
        %s6456 = scalar_lea.vmem %s469, 832
        %v6457 = vld [vmem:[%s6456] sm:$0xff]
        %v6458 = vld [vmem:[%s6456 + $0x8] sm:$0xff]
        %v6459 = vld [vmem:[%s6456 + $0x10] sm:$0xff]
        %v6460 = vld [vmem:[%s6456 + $0x18] sm:$0xff]
        %v6461 = vld [vmem:[%s6456 + $0x20] sm:$0xff]
        %v6462 = vld [vmem:[%s6456 + $0x28] sm:$0xff]
        %v6463 = vld [vmem:[%s6456 + $0x30] sm:$0xff]
        %v6464 = vld [vmem:[%s6456 + $0x38] sm:$0xff]
        %6466 = vset.pattern.permute.xlu0 0
        %6467 = vperm.xlu0 %6466, %v6457
        %v6468 = vpop.permute.xlu0 %6467
        %6471 = vset.pattern.permute.xlu0 0
        %6472 = vperm.xlu0 %6471, %v6458
        %v6473 = vpop.permute.xlu0 %6472
        %6476 = vset.pattern.permute.xlu0 0
        %6477 = vperm.xlu0 %6476, %v6459
        %v6478 = vpop.permute.xlu0 %6477
        %6481 = vset.pattern.permute.xlu0 0
        %6482 = vperm.xlu0 %6481, %v6460
        %v6483 = vpop.permute.xlu0 %6482
        %6486 = vset.pattern.permute.xlu0 0
        %6487 = vperm.xlu0 %6486, %v6461
        %v6488 = vpop.permute.xlu0 %6487
        %6491 = vset.pattern.permute.xlu0 0
        %6492 = vperm.xlu0 %6491, %v6462
        %v6493 = vpop.permute.xlu0 %6492
        %6496 = vset.pattern.permute.xlu0 0
        %6497 = vperm.xlu0 %6496, %v6463
        %v6498 = vpop.permute.xlu0 %6497
        %6501 = vset.pattern.permute.xlu0 0
        %6502 = vperm.xlu0 %6501, %v6464
        %v6503 = vpop.permute.xlu0 %6502
        %v6513 = vunpack.c.l.b16 %v6448
        %v6514 = vunpack.c.h.b16 %v6448
        %v6515 = vunpack.c.l.b16 %v6449
        %v6516 = vunpack.c.h.b16 %v6449
        %v6517 = vunpack.c.l.b16 %v6450
        %v6518 = vunpack.c.h.b16 %v6450
        %v6519 = vunpack.c.l.b16 %v6451
        %v6520 = vunpack.c.h.b16 %v6451
        %v6521 = vunpack.c.l.b16 %v6452
        %v6522 = vunpack.c.h.b16 %v6452
        %v6523 = vunpack.c.l.b16 %v6453
        %v6524 = vunpack.c.h.b16 %v6453
        %v6525 = vunpack.c.l.b16 %v6454
        %v6526 = vunpack.c.h.b16 %v6454
        %v6527 = vunpack.c.l.b16 %v6455
        %v6528 = vunpack.c.h.b16 %v6455
        %v6529 = vpack.c.b16 %v6515, %v6513
        %v6530 = vpack.c.b16 %v6516, %v6514
        %v6531 = vpack.c.b16 %v6519, %v6517
        %v6532 = vpack.c.b16 %v6520, %v6518
        %v6533 = vpack.c.b16 %v6523, %v6521
        %v6534 = vpack.c.b16 %v6524, %v6522
        %v6535 = vpack.c.b16 %v6527, %v6525
        %v6536 = vpack.c.b16 %v6528, %v6526
        %v6542 = vsel %vm771, %v6530, 0
        %v6545 = vsel %vm771, %v6532, 0
        %v6548 = vsel %vm771, %v6534, 0
        %v6551 = vsel %vm771, %v6536, 0
        %6553 = vmatpush.bf16.msra.mxu0 %v6432
        %6554 = vmatpush.bf16.msra.mxu0 %v6431
        %6555 = vmatpush.bf16.msra.mxu0 %v6420
        %6556 = vmatpush.bf16.msra.mxu0 %v6419
        %6557 = vmatpush.bf16.msra.mxu0 %v6408
        %6558 = vmatpush.bf16.msra.mxu0 %v6407
        %6559 = vmatpush.bf16.msra.mxu0 %v6380
        %6560 = vmatpush.bf16.msra.mxu0 %v6379
        %6561 = vmatmul.bf16.gmra.mxu0 %v6529
        %v6562 = vpop.f32.mrf.mxu0
        %v6563 = vadd.f32 %v6468, %v6562
        %v6564 = vpop.f32.mrf.mxu0
        %v6565 = vadd.f32 %v6473, %v6564
        %6566 = vmatmul.bf16.gmra.mxu0 %v6531
        %v6567 = vpop.f32.mrf.mxu0
        %v6568 = vadd.f32 %v6478, %v6567
        %v6569 = vpop.f32.mrf.mxu0
        %v6570 = vadd.f32 %v6483, %v6569
        %6571 = vmatmul.bf16.gmra.mxu0 %v6533
        %v6572 = vpop.f32.mrf.mxu0
        %v6573 = vadd.f32 %v6488, %v6572
        %v6574 = vpop.f32.mrf.mxu0
        %v6575 = vadd.f32 %v6493, %v6574
        %6576 = vmatmul.bf16.gmra.mxu0 %v6535
        %v6577 = vpop.f32.mrf.mxu0
        %v6578 = vadd.f32 %v6498, %v6577
        %v6579 = vpop.f32.mrf.mxu0
        %v6580 = vadd.f32 %v6503, %v6579
        %6581 = vdwg.mxu0
        %6582 = vmatpush.bf16.msra.mxu0 0
        %6583 = vmatpush.bf16.msra.mxu0 0
        %6584 = vmatpush.bf16.msra.mxu0 0
        %6585 = vmatpush.bf16.msra.mxu0 0
        %6586 = vmatpush.bf16.msra.mxu0 0
        %6587 = vmatpush.bf16.msra.mxu0 0
        %6588 = vmatpush.bf16.msra.mxu0 %v6444
        %6589 = vmatpush.bf16.msra.mxu0 %v6443
        %6590 = vmatmul.bf16.gmra.mxu0 %v6542
        %v6591 = vpop.f32.mrf.mxu0
        %v6592 = vadd.f32 %v6563, %v6591
        %v6593 = vpop.f32.mrf.mxu0
        %v6594 = vadd.f32 %v6565, %v6593
        %6595 = vmatmul.bf16.gmra.mxu0 %v6545
        %v6596 = vpop.f32.mrf.mxu0
        %v6597 = vadd.f32 %v6568, %v6596
        %v6598 = vpop.f32.mrf.mxu0
        %v6599 = vadd.f32 %v6570, %v6598
        %6600 = vmatmul.bf16.gmra.mxu0 %v6548
        %v6601 = vpop.f32.mrf.mxu0
        %v6602 = vadd.f32 %v6573, %v6601
        %v6603 = vpop.f32.mrf.mxu0
        %v6604 = vadd.f32 %v6575, %v6603
        %6605 = vmatmul.bf16.gmra.mxu0 %v6551
        %v6606 = vpop.f32.mrf.mxu0
        %v6607 = vadd.f32 %v6578, %v6606
        %v6608 = vpop.f32.mrf.mxu0
        %v6609 = vadd.f32 %v6580, %v6608
        %6610 = vdwg.mxu0
        %v6611 = vtanh.pop %v6592
        %v6612 = vtanh.pop %v6594
        %v6613 = vtanh.pop %v6597
        %v6614 = vtanh.pop %v6599
        %v6615 = vtanh.pop %v6602
        %v6616 = vtanh.pop %v6604
        %v6617 = vtanh.pop %v6607
        %v6618 = vtanh.pop %v6609
        %v6619 = vmul.f32 %v6615, 0.5
        %v6620 = vmul.f32 %v6616, 0.5
        %v6621 = vmul.f32 %v6617, 0.5
        %v6622 = vmul.f32 %v6618, 0.5
        %v6623 = vadd.f32 %v6619, 0.5
        %v6624 = vadd.f32 %v6620, 0.5
        %v6625 = vadd.f32 %v6621, 0.5
        %v6626 = vadd.f32 %v6622, 0.5
        %v6627 = vmul.f32 %v6611, %v6623
        %v6628 = vmul.f32 %v6612, %v6624
        %v6629 = vmul.f32 %v6613, %v6625
        %v6630 = vmul.f32 %v6614, %v6626
        %v6631 = vpack.c.bf16 %v6628, %v6627
        %v6632 = vpack.c.bf16 %v6630, %v6629
        %s6633 = scalar_lea.vmem %s6, 320
        %v6634 = vld [vmem:[%s6633] sm:$0xf]
        %v6635 = vld [vmem:[%s6633 + $0x4] sm:$0xf]
        %v6636 = vld [vmem:[%s6633 + $0x8] sm:$0xf]
        %v6637 = vld [vmem:[%s6633 + $0xc] sm:$0xf]
        %v6638 = vld [vmem:[%s6633 + $0x10] sm:$0xf]
        %v6639 = vld [vmem:[%s6633 + $0x14] sm:$0xf]
        %v6640 = vld [vmem:[%s6633 + $0x18] sm:$0xf]
        %v6641 = vld [vmem:[%s6633 + $0x1c] sm:$0xf]
        %s6642 = scalar_lea.vmem %s7, 640
        %v6643 = vld [vmem:[%s6642] sm:$0xff]
        %v6644 = vld [vmem:[%s6642 + $0x8] sm:$0xff]
        %v6645 = vld [vmem:[%s6642 + $0x10] sm:$0xff]
        %v6646 = vld [vmem:[%s6642 + $0x18] sm:$0xff]
        %v6647 = vld [vmem:[%s6642 + $0x20] sm:$0xff]
        %v6648 = vld [vmem:[%s6642 + $0x28] sm:$0xff]
        %v6649 = vld [vmem:[%s6642 + $0x30] sm:$0xff]
        %v6650 = vld [vmem:[%s6642 + $0x38] sm:$0xff]
        %6652 = vset.pattern.permute.xlu0 0
        %6653 = vperm.xlu0 %6652, %v6643
        %v6654 = vpop.permute.xlu0 %6653
        %6657 = vset.pattern.permute.xlu0 0
        %6658 = vperm.xlu0 %6657, %v6644
        %v6659 = vpop.permute.xlu0 %6658
        %6662 = vset.pattern.permute.xlu0 0
        %6663 = vperm.xlu0 %6662, %v6645
        %v6664 = vpop.permute.xlu0 %6663
        %6667 = vset.pattern.permute.xlu0 0
        %6668 = vperm.xlu0 %6667, %v6646
        %v6669 = vpop.permute.xlu0 %6668
        %6672 = vset.pattern.permute.xlu0 0
        %6673 = vperm.xlu0 %6672, %v6647
        %v6674 = vpop.permute.xlu0 %6673
        %6677 = vset.pattern.permute.xlu0 0
        %6678 = vperm.xlu0 %6677, %v6648
        %v6679 = vpop.permute.xlu0 %6678
        %6682 = vset.pattern.permute.xlu0 0
        %6683 = vperm.xlu0 %6682, %v6649
        %v6684 = vpop.permute.xlu0 %6683
        %6687 = vset.pattern.permute.xlu0 0
        %6688 = vperm.xlu0 %6687, %v6650
        %v6689 = vpop.permute.xlu0 %6688
        %v6699 = vunpack.c.l.b16 %v6634
        %v6700 = vunpack.c.l.b16 %v6635
        %v6701 = vunpack.c.l.b16 %v6636
        %v6702 = vunpack.c.l.b16 %v6637
        %v6703 = vunpack.c.l.b16 %v6638
        %v6704 = vunpack.c.l.b16 %v6639
        %v6705 = vunpack.c.l.b16 %v6640
        %v6706 = vunpack.c.l.b16 %v6641
        %v6707 = vpack.c.b16 %v6700, %v6699
        %v6708 = vpack.c.b16 %v6702, %v6701
        %v6709 = vpack.c.b16 %v6704, %v6703
        %v6710 = vpack.c.b16 %v6706, %v6705
        %v6712 = vsel %vm771, %v6707, 0
        %v6715 = vsel %vm771, %v6708, 0
        %v6718 = vsel %vm771, %v6709, 0
        %v6721 = vsel %vm771, %v6710, 0
        %6723 = vmatpush.bf16.msra.mxu0 0
        %6724 = vmatpush.bf16.msra.mxu0 0
        %6725 = vmatpush.bf16.msra.mxu0 0
        %6726 = vmatpush.bf16.msra.mxu0 0
        %6727 = vmatpush.bf16.msra.mxu0 0
        %6728 = vmatpush.bf16.msra.mxu0 0
        %6729 = vmatpush.bf16.msra.mxu0 %v6632
        %6730 = vmatpush.bf16.msra.mxu0 %v6631
        %6731 = vmatmul.bf16.gmra.mxu0 %v6712
        %v6732 = vpop.f32.mrf.mxu0
        %v6733 = vadd.f32 %v6654, %v6732
        %v6734 = vpop.f32.mrf.mxu0
        %v6735 = vadd.f32 %v6659, %v6734
        %6736 = vmatmul.bf16.gmra.mxu0 %v6715
        %v6737 = vpop.f32.mrf.mxu0
        %v6738 = vadd.f32 %v6664, %v6737
        %v6739 = vpop.f32.mrf.mxu0
        %v6740 = vadd.f32 %v6669, %v6739
        %6741 = vmatmul.bf16.gmra.mxu0 %v6718
        %v6742 = vpop.f32.mrf.mxu0
        %v6743 = vadd.f32 %v6674, %v6742
        %v6744 = vpop.f32.mrf.mxu0
        %v6745 = vadd.f32 %v6679, %v6744
        %6746 = vmatmul.bf16.gmra.mxu0 %v6721
        %v6747 = vpop.f32.mrf.mxu0
        %v6748 = vadd.f32 %v6684, %v6747
        %v6749 = vpop.f32.mrf.mxu0
        %v6750 = vadd.f32 %v6689, %v6749
        %6751 = vdwg.mxu0
        %v6752 = vadd.f32 %v6327, %v6733
        %v6753 = vadd.f32 %v6328, %v6735
        %v6754 = vadd.f32 %v6329, %v6738
        %v6755 = vadd.f32 %v6330, %v6740
        %v6756 = vmul.f32 %v6752, %v474
        %v6757 = vmul.f32 %v6753, %v474
        %v6758 = vmul.f32 %v6754, %v474
        %v6759 = vmul.f32 %v6755, %v474
        %v6760 = vadd.f32 %v6314, %v6743
        %v6761 = vadd.f32 %v6316, %v6745
        %v6762 = vadd.f32 %v6319, %v6748
        %v6763 = vadd.f32 %v6321, %v6750
        %v6764 = vpack.c.bf16 %v6756, %v6756
        %v6765 = vpack.c.bf16 %v6757, %v6757
        %v6766 = vpack.c.bf16 %v6758, %v6758
        %v6767 = vpack.c.bf16 %v6759, %v6759
        %6772 = vrot.lane.b32.xlu0 %v6764, 2
        %v6773 = vpop.permute.xlu0 %6772
        %6774 = vrot.lane.b32.xlu0 %v6765, 2
        %v6775 = vpop.permute.xlu0 %6774
        %6776 = vrot.lane.b32.xlu0 %v6766, 2
        %v6777 = vpop.permute.xlu0 %6776
        %6778 = vrot.lane.b32.xlu0 %v6767, 2
        %v6779 = vpop.permute.xlu0 %6778
        %v6780 = vrot.slane %v6773, 4
        %v6781 = vrot.slane %v6775, 4
        %v6782 = vrot.slane %v6777, 4
        %v6783 = vrot.slane %v6779, 4
        %v6784 = vsel %vm575, %v6780, %v6773
        %v6785 = vsel %vm575, %v6781, %v6775
        %v6786 = vsel %vm575, %v6782, %v6777
        %v6787 = vsel %vm575, %v6783, %v6779
        %6792 = vst.msk [vmem:[#allocation2] sm:$0xff] %vm586, %v6784
        %6793 = vst.msk [vmem:[#allocation2 + $0x8] sm:$0xff] %vm586, %v6785
        %6794 = vst.msk [vmem:[#allocation2 + $0x10] sm:$0xff] %vm586, %v6786
        %6795 = vst.msk [vmem:[#allocation2 + $0x18] sm:$0xff] %vm586, %v6787
        %v6796 = vld [vmem:[#allocation2] sm:$0xf]
        %v6797 = vld [vmem:[#allocation2 + $0x8] sm:$0xf]
        %v6798 = vld [vmem:[#allocation2 + $0x10] sm:$0xf]
        %v6799 = vld [vmem:[#allocation2 + $0x18] sm:$0xf]
        %v6800 = vld [vmem:[#allocation2] sm:$0xff]
        %v6801 = vld [vmem:[#allocation2 + $0x8] sm:$0xff]
        %v6802 = vld [vmem:[#allocation2 + $0x10] sm:$0xff]
        %v6803 = vld [vmem:[#allocation2 + $0x18] sm:$0xff]
        %v6808 = vunpack.c.l.b16 %v6796
        %v6809 = vunpack.c.l.b16 %v6797
        %v6810 = vunpack.c.l.b16 %v6798
        %v6811 = vunpack.c.l.b16 %v6799
        %v6812 = vpack.c.b16 %v6809, %v6808
        %v6813 = vpack.c.b16 %v6811, %v6810
        %v6820 = vunpack.c.l.b16 %v6800
        %v6821 = vunpack.c.h.b16 %v6800
        %v6822 = vunpack.c.l.b16 %v6801
        %v6823 = vunpack.c.h.b16 %v6801
        %v6824 = vunpack.c.l.b16 %v6802
        %v6825 = vunpack.c.h.b16 %v6802
        %v6826 = vunpack.c.l.b16 %v6803
        %v6827 = vunpack.c.h.b16 %v6803
        %v6828 = vpack.c.b16 %v6822, %v6820
        %v6829 = vpack.c.b16 %v6823, %v6821
        %v6830 = vpack.c.b16 %v6826, %v6824
        %v6831 = vpack.c.b16 %v6827, %v6825
        %6832 = vrot.lane.b32.xlu0 %v6828, 127
        %v6833 = vpop.permute.xlu0 %6832
        %6834 = vrot.lane.b32.xlu0 %v6829, 127
        %v6835 = vpop.permute.xlu0 %6834
        %6836 = vrot.lane.b32.xlu0 %v6830, 127
        %v6837 = vpop.permute.xlu0 %6836
        %6838 = vrot.lane.b32.xlu0 %v6831, 127
        %v6839 = vpop.permute.xlu0 %6838
        %v6840 = vsel %vm635, %v6833, %v6835
        %v6841 = vsel %vm635, %v6837, %v6839
        %6844 = vrot.lane.b32.xlu0 %v6828, 126
        %v6845 = vpop.permute.xlu0 %6844
        %6846 = vrot.lane.b32.xlu0 %v6829, 126
        %v6847 = vpop.permute.xlu0 %6846
        %6848 = vrot.lane.b32.xlu0 %v6830, 126
        %v6849 = vpop.permute.xlu0 %6848
        %6850 = vrot.lane.b32.xlu0 %v6831, 126
        %v6851 = vpop.permute.xlu0 %6850
        %v6852 = vsel %vm648, %v6845, %v6847
        %v6853 = vsel %vm648, %v6849, %v6851
        %6856 = vrot.lane.b32.xlu0 %v6828, 125
        %v6857 = vpop.permute.xlu0 %6856
        %6858 = vrot.lane.b32.xlu0 %v6829, 125
        %v6859 = vpop.permute.xlu0 %6858
        %6860 = vrot.lane.b32.xlu0 %v6830, 125
        %v6861 = vpop.permute.xlu0 %6860
        %6862 = vrot.lane.b32.xlu0 %v6831, 125
        %v6863 = vpop.permute.xlu0 %6862
        %v6864 = vsel %vm661, %v6857, %v6859
        %v6865 = vsel %vm661, %v6861, %v6863
        %6868 = vrot.lane.b32.xlu0 %v6828, 124
        %v6869 = vpop.permute.xlu0 %6868
        %6870 = vrot.lane.b32.xlu0 %v6829, 124
        %v6871 = vpop.permute.xlu0 %6870
        %6872 = vrot.lane.b32.xlu0 %v6830, 124
        %v6873 = vpop.permute.xlu0 %6872
        %6874 = vrot.lane.b32.xlu0 %v6831, 124
        %v6875 = vpop.permute.xlu0 %6874
        %v6876 = vsel %vm674, %v6869, %v6871
        %v6877 = vsel %vm674, %v6873, %v6875
        %s6880 = scalar_lea.vmem %s5, 896
        %v6881 = vld [vmem:[%s6880] sm:$0xff]
        %v6882 = vld [vmem:[%s6880 + $0x8] sm:$0xff]
        %v6883 = vld [vmem:[%s6880 + $0x10] sm:$0xff]
        %v6884 = vld [vmem:[%s6880 + $0x18] sm:$0xff]
        %v6885 = vld [vmem:[%s6880 + $0x20] sm:$0xff]
        %v6886 = vld [vmem:[%s6880 + $0x28] sm:$0xff]
        %v6887 = vld [vmem:[%s6880 + $0x30] sm:$0xff]
        %v6888 = vld [vmem:[%s6880 + $0x38] sm:$0xff]
        %s6889 = scalar_lea.vmem %s469, 896
        %v6890 = vld [vmem:[%s6889] sm:$0xff]
        %v6891 = vld [vmem:[%s6889 + $0x8] sm:$0xff]
        %v6892 = vld [vmem:[%s6889 + $0x10] sm:$0xff]
        %v6893 = vld [vmem:[%s6889 + $0x18] sm:$0xff]
        %v6894 = vld [vmem:[%s6889 + $0x20] sm:$0xff]
        %v6895 = vld [vmem:[%s6889 + $0x28] sm:$0xff]
        %v6896 = vld [vmem:[%s6889 + $0x30] sm:$0xff]
        %v6897 = vld [vmem:[%s6889 + $0x38] sm:$0xff]
        %6899 = vset.pattern.permute.xlu0 0
        %6900 = vperm.xlu0 %6899, %v6890
        %v6901 = vpop.permute.xlu0 %6900
        %6904 = vset.pattern.permute.xlu0 0
        %6905 = vperm.xlu0 %6904, %v6891
        %v6906 = vpop.permute.xlu0 %6905
        %6909 = vset.pattern.permute.xlu0 0
        %6910 = vperm.xlu0 %6909, %v6892
        %v6911 = vpop.permute.xlu0 %6910
        %6914 = vset.pattern.permute.xlu0 0
        %6915 = vperm.xlu0 %6914, %v6893
        %v6916 = vpop.permute.xlu0 %6915
        %6919 = vset.pattern.permute.xlu0 0
        %6920 = vperm.xlu0 %6919, %v6894
        %v6921 = vpop.permute.xlu0 %6920
        %6924 = vset.pattern.permute.xlu0 0
        %6925 = vperm.xlu0 %6924, %v6895
        %v6926 = vpop.permute.xlu0 %6925
        %6929 = vset.pattern.permute.xlu0 0
        %6930 = vperm.xlu0 %6929, %v6896
        %v6931 = vpop.permute.xlu0 %6930
        %6934 = vset.pattern.permute.xlu0 0
        %6935 = vperm.xlu0 %6934, %v6897
        %v6936 = vpop.permute.xlu0 %6935
        %v6946 = vunpack.c.l.b16 %v6881
        %v6947 = vunpack.c.h.b16 %v6881
        %v6948 = vunpack.c.l.b16 %v6882
        %v6949 = vunpack.c.h.b16 %v6882
        %v6950 = vunpack.c.l.b16 %v6883
        %v6951 = vunpack.c.h.b16 %v6883
        %v6952 = vunpack.c.l.b16 %v6884
        %v6953 = vunpack.c.h.b16 %v6884
        %v6954 = vunpack.c.l.b16 %v6885
        %v6955 = vunpack.c.h.b16 %v6885
        %v6956 = vunpack.c.l.b16 %v6886
        %v6957 = vunpack.c.h.b16 %v6886
        %v6958 = vunpack.c.l.b16 %v6887
        %v6959 = vunpack.c.h.b16 %v6887
        %v6960 = vunpack.c.l.b16 %v6888
        %v6961 = vunpack.c.h.b16 %v6888
        %v6962 = vpack.c.b16 %v6948, %v6946
        %v6963 = vpack.c.b16 %v6949, %v6947
        %v6964 = vpack.c.b16 %v6952, %v6950
        %v6965 = vpack.c.b16 %v6953, %v6951
        %v6966 = vpack.c.b16 %v6956, %v6954
        %v6967 = vpack.c.b16 %v6957, %v6955
        %v6968 = vpack.c.b16 %v6960, %v6958
        %v6969 = vpack.c.b16 %v6961, %v6959
        %v6975 = vsel %vm771, %v6963, 0
        %v6978 = vsel %vm771, %v6965, 0
        %v6981 = vsel %vm771, %v6967, 0
        %v6984 = vsel %vm771, %v6969, 0
        %6986 = vmatpush.bf16.msra.mxu0 %v6865
        %6987 = vmatpush.bf16.msra.mxu0 %v6864
        %6988 = vmatpush.bf16.msra.mxu0 %v6853
        %6989 = vmatpush.bf16.msra.mxu0 %v6852
        %6990 = vmatpush.bf16.msra.mxu0 %v6841
        %6991 = vmatpush.bf16.msra.mxu0 %v6840
        %6992 = vmatpush.bf16.msra.mxu0 %v6813
        %6993 = vmatpush.bf16.msra.mxu0 %v6812
        %6994 = vmatmul.bf16.gmra.mxu0 %v6962
        %v6995 = vpop.f32.mrf.mxu0
        %v6996 = vadd.f32 %v6901, %v6995
        %v6997 = vpop.f32.mrf.mxu0
        %v6998 = vadd.f32 %v6906, %v6997
        %6999 = vmatmul.bf16.gmra.mxu0 %v6964
        %v7000 = vpop.f32.mrf.mxu0
        %v7001 = vadd.f32 %v6911, %v7000
        %v7002 = vpop.f32.mrf.mxu0
        %v7003 = vadd.f32 %v6916, %v7002
        %7004 = vmatmul.bf16.gmra.mxu0 %v6966
        %v7005 = vpop.f32.mrf.mxu0
        %v7006 = vadd.f32 %v6921, %v7005
        %v7007 = vpop.f32.mrf.mxu0
        %v7008 = vadd.f32 %v6926, %v7007
        %7009 = vmatmul.bf16.gmra.mxu0 %v6968
        %v7010 = vpop.f32.mrf.mxu0
        %v7011 = vadd.f32 %v6931, %v7010
        %v7012 = vpop.f32.mrf.mxu0
        %v7013 = vadd.f32 %v6936, %v7012
        %7014 = vdwg.mxu0
        %7015 = vmatpush.bf16.msra.mxu0 0
        %7016 = vmatpush.bf16.msra.mxu0 0
        %7017 = vmatpush.bf16.msra.mxu0 0
        %7018 = vmatpush.bf16.msra.mxu0 0
        %7019 = vmatpush.bf16.msra.mxu0 0
        %7020 = vmatpush.bf16.msra.mxu0 0
        %7021 = vmatpush.bf16.msra.mxu0 %v6877
        %7022 = vmatpush.bf16.msra.mxu0 %v6876
        %7023 = vmatmul.bf16.gmra.mxu0 %v6975
        %v7024 = vpop.f32.mrf.mxu0
        %v7025 = vadd.f32 %v6996, %v7024
        %v7026 = vpop.f32.mrf.mxu0
        %v7027 = vadd.f32 %v6998, %v7026
        %7028 = vmatmul.bf16.gmra.mxu0 %v6978
        %v7029 = vpop.f32.mrf.mxu0
        %v7030 = vadd.f32 %v7001, %v7029
        %v7031 = vpop.f32.mrf.mxu0
        %v7032 = vadd.f32 %v7003, %v7031
        %7033 = vmatmul.bf16.gmra.mxu0 %v6981
        %v7034 = vpop.f32.mrf.mxu0
        %v7035 = vadd.f32 %v7006, %v7034
        %v7036 = vpop.f32.mrf.mxu0
        %v7037 = vadd.f32 %v7008, %v7036
        %7038 = vmatmul.bf16.gmra.mxu0 %v6984
        %v7039 = vpop.f32.mrf.mxu0
        %v7040 = vadd.f32 %v7011, %v7039
        %v7041 = vpop.f32.mrf.mxu0
        %v7042 = vadd.f32 %v7013, %v7041
        %7043 = vdwg.mxu0
        %v7044 = vtanh.pop %v7025
        %v7045 = vtanh.pop %v7027
        %v7046 = vtanh.pop %v7030
        %v7047 = vtanh.pop %v7032
        %v7048 = vtanh.pop %v7035
        %v7049 = vtanh.pop %v7037
        %v7050 = vtanh.pop %v7040
        %v7051 = vtanh.pop %v7042
        %v7052 = vmul.f32 %v7048, 0.5
        %v7053 = vmul.f32 %v7049, 0.5
        %v7054 = vmul.f32 %v7050, 0.5
        %v7055 = vmul.f32 %v7051, 0.5
        %v7056 = vadd.f32 %v7052, 0.5
        %v7057 = vadd.f32 %v7053, 0.5
        %v7058 = vadd.f32 %v7054, 0.5
        %v7059 = vadd.f32 %v7055, 0.5
        %v7060 = vmul.f32 %v7044, %v7056
        %v7061 = vmul.f32 %v7045, %v7057
        %v7062 = vmul.f32 %v7046, %v7058
        %v7063 = vmul.f32 %v7047, %v7059
        %v7064 = vpack.c.bf16 %v7061, %v7060
        %v7065 = vpack.c.bf16 %v7063, %v7062
        %s7066 = scalar_lea.vmem %s6, 352
        %v7067 = vld [vmem:[%s7066] sm:$0xf]
        %v7068 = vld [vmem:[%s7066 + $0x4] sm:$0xf]
        %v7069 = vld [vmem:[%s7066 + $0x8] sm:$0xf]
        %v7070 = vld [vmem:[%s7066 + $0xc] sm:$0xf]
        %v7071 = vld [vmem:[%s7066 + $0x10] sm:$0xf]
        %v7072 = vld [vmem:[%s7066 + $0x14] sm:$0xf]
        %v7073 = vld [vmem:[%s7066 + $0x18] sm:$0xf]
        %v7074 = vld [vmem:[%s7066 + $0x1c] sm:$0xf]
        %s7075 = scalar_lea.vmem %s7, 704
        %v7076 = vld [vmem:[%s7075] sm:$0xff]
        %v7077 = vld [vmem:[%s7075 + $0x8] sm:$0xff]
        %v7078 = vld [vmem:[%s7075 + $0x10] sm:$0xff]
        %v7079 = vld [vmem:[%s7075 + $0x18] sm:$0xff]
        %v7080 = vld [vmem:[%s7075 + $0x20] sm:$0xff]
        %v7081 = vld [vmem:[%s7075 + $0x28] sm:$0xff]
        %v7082 = vld [vmem:[%s7075 + $0x30] sm:$0xff]
        %v7083 = vld [vmem:[%s7075 + $0x38] sm:$0xff]
        %7085 = vset.pattern.permute.xlu0 0
        %7086 = vperm.xlu0 %7085, %v7076
        %v7087 = vpop.permute.xlu0 %7086
        %7090 = vset.pattern.permute.xlu0 0
        %7091 = vperm.xlu0 %7090, %v7077
        %v7092 = vpop.permute.xlu0 %7091
        %7095 = vset.pattern.permute.xlu0 0
        %7096 = vperm.xlu0 %7095, %v7078
        %v7097 = vpop.permute.xlu0 %7096
        %7100 = vset.pattern.permute.xlu0 0
        %7101 = vperm.xlu0 %7100, %v7079
        %v7102 = vpop.permute.xlu0 %7101
        %7105 = vset.pattern.permute.xlu0 0
        %7106 = vperm.xlu0 %7105, %v7080
        %v7107 = vpop.permute.xlu0 %7106
        %7110 = vset.pattern.permute.xlu0 0
        %7111 = vperm.xlu0 %7110, %v7081
        %v7112 = vpop.permute.xlu0 %7111
        %7115 = vset.pattern.permute.xlu0 0
        %7116 = vperm.xlu0 %7115, %v7082
        %v7117 = vpop.permute.xlu0 %7116
        %7120 = vset.pattern.permute.xlu0 0
        %7121 = vperm.xlu0 %7120, %v7083
        %v7122 = vpop.permute.xlu0 %7121
        %v7132 = vunpack.c.l.b16 %v7067
        %v7133 = vunpack.c.l.b16 %v7068
        %v7134 = vunpack.c.l.b16 %v7069
        %v7135 = vunpack.c.l.b16 %v7070
        %v7136 = vunpack.c.l.b16 %v7071
        %v7137 = vunpack.c.l.b16 %v7072
        %v7138 = vunpack.c.l.b16 %v7073
        %v7139 = vunpack.c.l.b16 %v7074
        %v7140 = vpack.c.b16 %v7133, %v7132
        %v7141 = vpack.c.b16 %v7135, %v7134
        %v7142 = vpack.c.b16 %v7137, %v7136
        %v7143 = vpack.c.b16 %v7139, %v7138
        %v7145 = vsel %vm771, %v7140, 0
        %v7148 = vsel %vm771, %v7141, 0
        %v7151 = vsel %vm771, %v7142, 0
        %v7154 = vsel %vm771, %v7143, 0
        %7156 = vmatpush.bf16.msra.mxu0 0
        %7157 = vmatpush.bf16.msra.mxu0 0
        %7158 = vmatpush.bf16.msra.mxu0 0
        %7159 = vmatpush.bf16.msra.mxu0 0
        %7160 = vmatpush.bf16.msra.mxu0 0
        %7161 = vmatpush.bf16.msra.mxu0 0
        %7162 = vmatpush.bf16.msra.mxu0 %v7065
        %7163 = vmatpush.bf16.msra.mxu0 %v7064
        %7164 = vmatmul.bf16.gmra.mxu0 %v7145
        %v7165 = vpop.f32.mrf.mxu0
        %v7166 = vadd.f32 %v7087, %v7165
        %v7167 = vpop.f32.mrf.mxu0
        %v7168 = vadd.f32 %v7092, %v7167
        %7169 = vmatmul.bf16.gmra.mxu0 %v7148
        %v7170 = vpop.f32.mrf.mxu0
        %v7171 = vadd.f32 %v7097, %v7170
        %v7172 = vpop.f32.mrf.mxu0
        %v7173 = vadd.f32 %v7102, %v7172
        %7174 = vmatmul.bf16.gmra.mxu0 %v7151
        %v7175 = vpop.f32.mrf.mxu0
        %v7176 = vadd.f32 %v7107, %v7175
        %v7177 = vpop.f32.mrf.mxu0
        %v7178 = vadd.f32 %v7112, %v7177
        %7179 = vmatmul.bf16.gmra.mxu0 %v7154
        %v7180 = vpop.f32.mrf.mxu0
        %v7181 = vadd.f32 %v7117, %v7180
        %v7182 = vpop.f32.mrf.mxu0
        %v7183 = vadd.f32 %v7122, %v7182
        %7184 = vdwg.mxu0
        %v7185 = vadd.f32 %v6756, %v7166
        %v7186 = vadd.f32 %v6757, %v7168
        %v7187 = vadd.f32 %v6758, %v7171
        %v7188 = vadd.f32 %v6759, %v7173
        %v7189 = vmul.f32 %v7185, %v474
        %v7190 = vmul.f32 %v7186, %v474
        %v7191 = vmul.f32 %v7187, %v474
        %v7192 = vmul.f32 %v7188, %v474
        %v7193 = vadd.f32 %v6760, %v7176
        %v7194 = vadd.f32 %v6761, %v7178
        %v7195 = vadd.f32 %v6762, %v7181
        %v7196 = vadd.f32 %v6763, %v7183
        %v7197 = vpack.c.bf16 %v7189, %v7189
        %v7198 = vpack.c.bf16 %v7190, %v7190
        %v7199 = vpack.c.bf16 %v7191, %v7191
        %v7200 = vpack.c.bf16 %v7192, %v7192
        %7205 = vrot.lane.b32.xlu0 %v7197, 2
        %v7206 = vpop.permute.xlu0 %7205
        %7207 = vrot.lane.b32.xlu0 %v7198, 2
        %v7208 = vpop.permute.xlu0 %7207
        %7209 = vrot.lane.b32.xlu0 %v7199, 2
        %v7210 = vpop.permute.xlu0 %7209
        %7211 = vrot.lane.b32.xlu0 %v7200, 2
        %v7212 = vpop.permute.xlu0 %7211
        %v7213 = vrot.slane %v7206, 4
        %v7214 = vrot.slane %v7208, 4
        %v7215 = vrot.slane %v7210, 4
        %v7216 = vrot.slane %v7212, 4
        %v7217 = vsel %vm575, %v7213, %v7206
        %v7218 = vsel %vm575, %v7214, %v7208
        %v7219 = vsel %vm575, %v7215, %v7210
        %v7220 = vsel %vm575, %v7216, %v7212
        %7225 = vst.msk [vmem:[#allocation2] sm:$0xff] %vm586, %v7217
        %7226 = vst.msk [vmem:[#allocation2 + $0x8] sm:$0xff] %vm586, %v7218
        %7227 = vst.msk [vmem:[#allocation2 + $0x10] sm:$0xff] %vm586, %v7219
        %7228 = vst.msk [vmem:[#allocation2 + $0x18] sm:$0xff] %vm586, %v7220
        %v7229 = vld [vmem:[#allocation2] sm:$0xf]
        %v7230 = vld [vmem:[#allocation2 + $0x8] sm:$0xf]
        %v7231 = vld [vmem:[#allocation2 + $0x10] sm:$0xf]
        %v7232 = vld [vmem:[#allocation2 + $0x18] sm:$0xf]
        %v7233 = vld [vmem:[#allocation2] sm:$0xff]
        %v7234 = vld [vmem:[#allocation2 + $0x8] sm:$0xff]
        %v7235 = vld [vmem:[#allocation2 + $0x10] sm:$0xff]
        %v7236 = vld [vmem:[#allocation2 + $0x18] sm:$0xff]
        %v7241 = vunpack.c.l.b16 %v7229
        %v7242 = vunpack.c.l.b16 %v7230
        %v7243 = vunpack.c.l.b16 %v7231
        %v7244 = vunpack.c.l.b16 %v7232
        %v7245 = vpack.c.b16 %v7242, %v7241
        %v7246 = vpack.c.b16 %v7244, %v7243
        %v7253 = vunpack.c.l.b16 %v7233
        %v7254 = vunpack.c.h.b16 %v7233
        %v7255 = vunpack.c.l.b16 %v7234
        %v7256 = vunpack.c.h.b16 %v7234
        %v7257 = vunpack.c.l.b16 %v7235
        %v7258 = vunpack.c.h.b16 %v7235
        %v7259 = vunpack.c.l.b16 %v7236
        %v7260 = vunpack.c.h.b16 %v7236
        %v7261 = vpack.c.b16 %v7255, %v7253
        %v7262 = vpack.c.b16 %v7256, %v7254
        %v7263 = vpack.c.b16 %v7259, %v7257
        %v7264 = vpack.c.b16 %v7260, %v7258
        %7265 = vrot.lane.b32.xlu0 %v7261, 127
        %v7266 = vpop.permute.xlu0 %7265
        %7267 = vrot.lane.b32.xlu0 %v7262, 127
        %v7268 = vpop.permute.xlu0 %7267
        %7269 = vrot.lane.b32.xlu0 %v7263, 127
        %v7270 = vpop.permute.xlu0 %7269
        %7271 = vrot.lane.b32.xlu0 %v7264, 127
        %v7272 = vpop.permute.xlu0 %7271
        %v7273 = vsel %vm635, %v7266, %v7268
        %v7274 = vsel %vm635, %v7270, %v7272
        %7277 = vrot.lane.b32.xlu0 %v7261, 126
        %v7278 = vpop.permute.xlu0 %7277
        %7279 = vrot.lane.b32.xlu0 %v7262, 126
        %v7280 = vpop.permute.xlu0 %7279
        %7281 = vrot.lane.b32.xlu0 %v7263, 126
        %v7282 = vpop.permute.xlu0 %7281
        %7283 = vrot.lane.b32.xlu0 %v7264, 126
        %v7284 = vpop.permute.xlu0 %7283
        %v7285 = vsel %vm648, %v7278, %v7280
        %v7286 = vsel %vm648, %v7282, %v7284
        %7289 = vrot.lane.b32.xlu0 %v7261, 125
        %v7290 = vpop.permute.xlu0 %7289
        %7291 = vrot.lane.b32.xlu0 %v7262, 125
        %v7292 = vpop.permute.xlu0 %7291
        %7293 = vrot.lane.b32.xlu0 %v7263, 125
        %v7294 = vpop.permute.xlu0 %7293
        %7295 = vrot.lane.b32.xlu0 %v7264, 125
        %v7296 = vpop.permute.xlu0 %7295
        %v7297 = vsel %vm661, %v7290, %v7292
        %v7298 = vsel %vm661, %v7294, %v7296
        %7301 = vrot.lane.b32.xlu0 %v7261, 124
        %v7302 = vpop.permute.xlu0 %7301
        %7303 = vrot.lane.b32.xlu0 %v7262, 124
        %v7304 = vpop.permute.xlu0 %7303
        %7305 = vrot.lane.b32.xlu0 %v7263, 124
        %v7306 = vpop.permute.xlu0 %7305
        %7307 = vrot.lane.b32.xlu0 %v7264, 124
        %v7308 = vpop.permute.xlu0 %7307
        %v7309 = vsel %vm674, %v7302, %v7304
        %v7310 = vsel %vm674, %v7306, %v7308
        %s7313 = scalar_lea.vmem %s5, 960
        %v7314 = vld [vmem:[%s7313] sm:$0xff]
        %v7315 = vld [vmem:[%s7313 + $0x8] sm:$0xff]
        %v7316 = vld [vmem:[%s7313 + $0x10] sm:$0xff]
        %v7317 = vld [vmem:[%s7313 + $0x18] sm:$0xff]
        %v7318 = vld [vmem:[%s7313 + $0x20] sm:$0xff]
        %v7319 = vld [vmem:[%s7313 + $0x28] sm:$0xff]
        %v7320 = vld [vmem:[%s7313 + $0x30] sm:$0xff]
        %v7321 = vld [vmem:[%s7313 + $0x38] sm:$0xff]
        %s7322 = scalar_lea.vmem %s469, 960
        %v7323 = vld [vmem:[%s7322] sm:$0xff]
        %v7324 = vld [vmem:[%s7322 + $0x8] sm:$0xff]
        %v7325 = vld [vmem:[%s7322 + $0x10] sm:$0xff]
        %v7326 = vld [vmem:[%s7322 + $0x18] sm:$0xff]
        %v7327 = vld [vmem:[%s7322 + $0x20] sm:$0xff]
        %v7328 = vld [vmem:[%s7322 + $0x28] sm:$0xff]
        %v7329 = vld [vmem:[%s7322 + $0x30] sm:$0xff]
        %v7330 = vld [vmem:[%s7322 + $0x38] sm:$0xff]
        %7332 = vset.pattern.permute.xlu0 0
        %7333 = vperm.xlu0 %7332, %v7323
        %v7334 = vpop.permute.xlu0 %7333
        %7337 = vset.pattern.permute.xlu0 0
        %7338 = vperm.xlu0 %7337, %v7324
        %v7339 = vpop.permute.xlu0 %7338
        %7342 = vset.pattern.permute.xlu0 0
        %7343 = vperm.xlu0 %7342, %v7325
        %v7344 = vpop.permute.xlu0 %7343
        %7347 = vset.pattern.permute.xlu0 0
        %7348 = vperm.xlu0 %7347, %v7326
        %v7349 = vpop.permute.xlu0 %7348
        %7352 = vset.pattern.permute.xlu0 0
        %7353 = vperm.xlu0 %7352, %v7327
        %v7354 = vpop.permute.xlu0 %7353
        %7357 = vset.pattern.permute.xlu0 0
        %7358 = vperm.xlu0 %7357, %v7328
        %v7359 = vpop.permute.xlu0 %7358
        %7362 = vset.pattern.permute.xlu0 0
        %7363 = vperm.xlu0 %7362, %v7329
        %v7364 = vpop.permute.xlu0 %7363
        %7367 = vset.pattern.permute.xlu0 0
        %7368 = vperm.xlu0 %7367, %v7330
        %v7369 = vpop.permute.xlu0 %7368
        %v7379 = vunpack.c.l.b16 %v7314
        %v7380 = vunpack.c.h.b16 %v7314
        %v7381 = vunpack.c.l.b16 %v7315
        %v7382 = vunpack.c.h.b16 %v7315
        %v7383 = vunpack.c.l.b16 %v7316
        %v7384 = vunpack.c.h.b16 %v7316
        %v7385 = vunpack.c.l.b16 %v7317
        %v7386 = vunpack.c.h.b16 %v7317
        %v7387 = vunpack.c.l.b16 %v7318
        %v7388 = vunpack.c.h.b16 %v7318
        %v7389 = vunpack.c.l.b16 %v7319
        %v7390 = vunpack.c.h.b16 %v7319
        %v7391 = vunpack.c.l.b16 %v7320
        %v7392 = vunpack.c.h.b16 %v7320
        %v7393 = vunpack.c.l.b16 %v7321
        %v7394 = vunpack.c.h.b16 %v7321
        %v7395 = vpack.c.b16 %v7381, %v7379
        %v7396 = vpack.c.b16 %v7382, %v7380
        %v7397 = vpack.c.b16 %v7385, %v7383
        %v7398 = vpack.c.b16 %v7386, %v7384
        %v7399 = vpack.c.b16 %v7389, %v7387
        %v7400 = vpack.c.b16 %v7390, %v7388
        %v7401 = vpack.c.b16 %v7393, %v7391
        %v7402 = vpack.c.b16 %v7394, %v7392
        %v7408 = vsel %vm771, %v7396, 0
        %v7411 = vsel %vm771, %v7398, 0
        %v7414 = vsel %vm771, %v7400, 0
        %v7417 = vsel %vm771, %v7402, 0
        %7419 = vmatpush.bf16.msra.mxu0 %v7298
        %7420 = vmatpush.bf16.msra.mxu0 %v7297
        %7421 = vmatpush.bf16.msra.mxu0 %v7286
        %7422 = vmatpush.bf16.msra.mxu0 %v7285
        %7423 = vmatpush.bf16.msra.mxu0 %v7274
        %7424 = vmatpush.bf16.msra.mxu0 %v7273
        %7425 = vmatpush.bf16.msra.mxu0 %v7246
        %7426 = vmatpush.bf16.msra.mxu0 %v7245
        %7427 = vmatmul.bf16.gmra.mxu0 %v7395
        %v7428 = vpop.f32.mrf.mxu0
        %v7429 = vadd.f32 %v7334, %v7428
        %v7430 = vpop.f32.mrf.mxu0
        %v7431 = vadd.f32 %v7339, %v7430
        %7432 = vmatmul.bf16.gmra.mxu0 %v7397
        %v7433 = vpop.f32.mrf.mxu0
        %v7434 = vadd.f32 %v7344, %v7433
        %v7435 = vpop.f32.mrf.mxu0
        %v7436 = vadd.f32 %v7349, %v7435
        %7437 = vmatmul.bf16.gmra.mxu0 %v7399
        %v7438 = vpop.f32.mrf.mxu0
        %v7439 = vadd.f32 %v7354, %v7438
        %v7440 = vpop.f32.mrf.mxu0
        %v7441 = vadd.f32 %v7359, %v7440
        %7442 = vmatmul.bf16.gmra.mxu0 %v7401
        %v7443 = vpop.f32.mrf.mxu0
        %v7444 = vadd.f32 %v7364, %v7443
        %v7445 = vpop.f32.mrf.mxu0
        %v7446 = vadd.f32 %v7369, %v7445
        %7447 = vdwg.mxu0
        %7448 = vmatpush.bf16.msra.mxu0 0
        %7449 = vmatpush.bf16.msra.mxu0 0
        %7450 = vmatpush.bf16.msra.mxu0 0
        %7451 = vmatpush.bf16.msra.mxu0 0
        %7452 = vmatpush.bf16.msra.mxu0 0
        %7453 = vmatpush.bf16.msra.mxu0 0
        %7454 = vmatpush.bf16.msra.mxu0 %v7310
        %7455 = vmatpush.bf16.msra.mxu0 %v7309
        %7456 = vmatmul.bf16.gmra.mxu0 %v7408
        %v7457 = vpop.f32.mrf.mxu0
        %v7458 = vadd.f32 %v7429, %v7457
        %v7459 = vpop.f32.mrf.mxu0
        %v7460 = vadd.f32 %v7431, %v7459
        %7461 = vmatmul.bf16.gmra.mxu0 %v7411
        %v7462 = vpop.f32.mrf.mxu0
        %v7463 = vadd.f32 %v7434, %v7462
        %v7464 = vpop.f32.mrf.mxu0
        %v7465 = vadd.f32 %v7436, %v7464
        %7466 = vmatmul.bf16.gmra.mxu0 %v7414
        %v7467 = vpop.f32.mrf.mxu0
        %v7468 = vadd.f32 %v7439, %v7467
        %v7469 = vpop.f32.mrf.mxu0
        %v7470 = vadd.f32 %v7441, %v7469
        %7471 = vmatmul.bf16.gmra.mxu0 %v7417
        %v7472 = vpop.f32.mrf.mxu0
        %v7473 = vadd.f32 %v7444, %v7472
        %v7474 = vpop.f32.mrf.mxu0
        %v7475 = vadd.f32 %v7446, %v7474
        %7476 = vdwg.mxu0
        %v7477 = vtanh.pop %v7458
        %v7478 = vtanh.pop %v7460
        %v7479 = vtanh.pop %v7463
        %v7480 = vtanh.pop %v7465
        %v7481 = vtanh.pop %v7468
        %v7482 = vtanh.pop %v7470
        %v7483 = vtanh.pop %v7473
        %v7484 = vtanh.pop %v7475
        %v7485 = vmul.f32 %v7481, 0.5
        %v7486 = vmul.f32 %v7482, 0.5
        %v7487 = vmul.f32 %v7483, 0.5
        %v7488 = vmul.f32 %v7484, 0.5
        %v7489 = vadd.f32 %v7485, 0.5
        %v7490 = vadd.f32 %v7486, 0.5
        %v7491 = vadd.f32 %v7487, 0.5
        %v7492 = vadd.f32 %v7488, 0.5
        %v7493 = vmul.f32 %v7477, %v7489
        %v7494 = vmul.f32 %v7478, %v7490
        %v7495 = vmul.f32 %v7479, %v7491
        %v7496 = vmul.f32 %v7480, %v7492
        %v7497 = vpack.c.bf16 %v7494, %v7493
        %v7498 = vpack.c.bf16 %v7496, %v7495
        %s7499 = scalar_lea.vmem %s8, 48
        %v7500 = vld [vmem:[%s7499] sm:$0xf]
        %v7501 = vld [vmem:[%s7499 + $0x4] sm:$0xf]
        %v7502 = vld [vmem:[%s7499 + $0x8] sm:$0xf]
        %v7503 = vld [vmem:[%s7499 + $0xc] sm:$0xf]
        %s7504 = scalar_lea.vmem %s9, 96
        %v7505 = vld [vmem:[%s7504] sm:$0xff]
        %v7506 = vld [vmem:[%s7504 + $0x8] sm:$0xff]
        %v7507 = vld [vmem:[%s7504 + $0x10] sm:$0xff]
        %v7508 = vld [vmem:[%s7504 + $0x18] sm:$0xff]
        %7510 = vset.pattern.permute.xlu0 0
        %7511 = vperm.xlu0 %7510, %v7505
        %v7512 = vpop.permute.xlu0 %7511
        %7515 = vset.pattern.permute.xlu0 0
        %7516 = vperm.xlu0 %7515, %v7506
        %v7517 = vpop.permute.xlu0 %7516
        %7520 = vset.pattern.permute.xlu0 0
        %7521 = vperm.xlu0 %7520, %v7507
        %v7522 = vpop.permute.xlu0 %7521
        %7525 = vset.pattern.permute.xlu0 0
        %7526 = vperm.xlu0 %7525, %v7508
        %v7527 = vpop.permute.xlu0 %7526
        %v7533 = vunpack.c.l.b16 %v7500
        %v7534 = vunpack.c.l.b16 %v7501
        %v7535 = vunpack.c.l.b16 %v7502
        %v7536 = vunpack.c.l.b16 %v7503
        %v7537 = vpack.c.b16 %v7534, %v7533
        %v7538 = vpack.c.b16 %v7536, %v7535
        %v7540 = vsel %vm771, %v7537, 0
        %v7543 = vsel %vm771, %v7538, 0
        %7545 = vmatpush.bf16.msra.mxu0 0
        %7546 = vmatpush.bf16.msra.mxu0 0
        %7547 = vmatpush.bf16.msra.mxu0 0
        %7548 = vmatpush.bf16.msra.mxu0 0
        %7549 = vmatpush.bf16.msra.mxu0 0
        %7550 = vmatpush.bf16.msra.mxu0 0
        %7551 = vmatpush.bf16.msra.mxu0 %v7498
        %7552 = vmatpush.bf16.msra.mxu0 %v7497
        %7553 = vmatmul.bf16.gmra.mxu0 %v7540
        %v7554 = vpop.f32.mrf.mxu0
        %v7555 = vadd.f32 %v7512, %v7554
        %v7556 = vpop.f32.mrf.mxu0
        %v7557 = vadd.f32 %v7517, %v7556
        %7558 = vmatmul.bf16.gmra.mxu0 %v7543
        %v7559 = vpop.f32.mrf.mxu0
        %v7560 = vadd.f32 %v7522, %v7559
        %v7561 = vpop.f32.mrf.mxu0
        %v7562 = vadd.f32 %v7527, %v7561
        %7563 = vdwg.mxu0
        %v7564 = vadd.f32 %v7193, %v7555
        %v7565 = vadd.f32 %v7194, %v7557
        %v7566 = vadd.f32 %v7195, %v7560
        %v7567 = vadd.f32 %v7196, %v7562
        %v7568 = vmul.f32 %v7564, %v474
        %v7569 = vmul.f32 %v7565, %v474
        %v7570 = vmul.f32 %v7566, %v474
        %v7571 = vmul.f32 %v7567, %v474
        %s7572 = scalar_lea.vmem %s10, 12
        %v7573 = vld [vmem:[%s7572] sm:$0xf]
        %v7574 = vpack.c.bf16 %v7569, %v7568
        %v7575 = vpack.c.bf16 %v7571, %v7570
        %s7576 = scalar_lea.vmem %s11, 24
        %v7577 = vld [vmem:[%s7576] sm:$0xff]
        %7579 = vset.pattern.permute.xlu0 0
        %7580 = vperm.xlu0 %7579, %v7577
        %v7581 = vpop.permute.xlu0 %7580
        %v7584 = vsel %vm771, %v7573, 0
        %7586 = vmatpush.bf16.msra.mxu0 0
        %7587 = vmatpush.bf16.msra.mxu0 0
        %7588 = vmatpush.bf16.msra.mxu0 0
        %7589 = vmatpush.bf16.msra.mxu0 0
        %7590 = vmatpush.bf16.msra.mxu0 0
        %7591 = vmatpush.bf16.msra.mxu0 0
        %7592 = vmatpush.bf16.msra.mxu0 %v7575
        %7593 = vmatpush.bf16.msra.mxu0 %v7574
        %7594 = vmatmul.bf16.gmra.mxu0 %v7584
        %v7595 = vpop.f32.mrf.mxu0
        %v7596 = vadd.f32 %v7581, %v7595
        %v7597 = vpop.f32.mrf.mxu0
        %7598 = vdwg.mxu0
        %v7599 = vmul.f32 %v7596, %v474
        %s7600 = scalar_lea.vmem %s12, 24
        %v7601 = vld [vmem:[%s7600] sm:$0xff]
        %7603 = vset.pattern.permute.xlu0 0
        %7604 = vperm.xlu0 %7603, %v7601
        %v7605 = vpop.permute.xlu0 %7604
        %v7607 = vmul.f32 %v7605, %v2255
        %v7608 = vadd.f32 %v7607, 1.0
        %v7609 = vmul.f32 %v5828, %v7608
        %v7610 = vadd.f32 %v7609, %v7599
        %7611 = vst [vmem:[%s457] sm:$0xff] %v7610
        %s7612 = sand.u32 %s323, 1
        %s7613 = scalar_lea.sflag [#allocation4], %s7612
        %s7614 = sand.u32 %s323, 1
        %s7615 = smul.addr %s7614, 8
        %s7616 = scalar_lea.vmem [#allocation3], %s7615
        // Predicated region
        $region73: #{tpu_custom_call.1} parent=71 // pred_check
          %p7617 = pneg %p333
        $region74: #{tpu_custom_call.1} parent=71 // pred_check_branch
          %7619 = sbr.rel (%p7617) target = $region76
        $region75: #{tpu_custom_call.1} parent=71 // pred_region
          %7621 = vsyncadd %s7613, 0
          %s7622 = smul.addr %s27, 8
          %s7623 = scalar_lea.hbm %s13, %s7622
          %s7625 = sshll.u32 %s7616, 4
          %s7626 = int_to_ptr.vmem [resolvable:$true] %s7625
          %s7627 = sshll.u32 %s7623, 4
          %s7628 = int_to_ptr.hbm [resolvable:$true] %s7627
          %7630 = dma.vmem_to_hbm [thread:$0]  %s7626, 128, %s7628, %s7613
        $region76: #{tpu_custom_call.1} parent=71 // pred_fallthru
          _
      $region72: #{tpu_custom_call.1} parent=5 // pred_fallthru
        _
      %p7631 = scmp.le.s32.totalorder 2, %s22
      // Predicated region
      $region77: #{tpu_custom_call.1} parent=5 // pred_check
        %p7632 = pneg %p7631
      $region78: #{tpu_custom_call.1} parent=5 // pred_check_branch
        %7634 = sbr.rel (%p7632) target = $region80
      $region79: #{tpu_custom_call.1} parent=5 // pred_region
        %s7635 = ssub.s32 %s22, 2
        // Predicated region
        $region81: #{tpu_custom_call.1} parent=79 // pred_check
          %p7636 = pneg %p339
        $region82: #{tpu_custom_call.1} parent=79 // pred_check_branch
          %7638 = sbr.rel (%p7636) target = $region84
        $region83: #{tpu_custom_call.1} parent=79 // pred_region
          %s7639 = sand.u32 %s324, 1
          %s7640 = scalar_lea.sflag [#allocation4], %s7639
          %s7641 = sand.u32 %s324, 1
          %s7642 = smul.addr %s7641, 8
          %s7643 = scalar_lea.vmem [#allocation3], %s7642
          %7645 = dma.done %s7640, 128
        $region84: #{tpu_custom_call.1} parent=79 // pred_fallthru
          _
      $region80: #{tpu_custom_call.1} parent=5 // pred_fallthru
        _
    $region6: #{tpu_custom_call.1} parent=1 // loop_footer
      %s26 = sadd.s32 1, %s22
    $region7: #{tpu_custom_call.1} parent=1 // loop_footer_branch
      %21 = sbr.rel target = $region3
    $region8: #{tpu_custom_call.1} parent=1 // loop_exit
      _
    %7646 = vsyncpa [#allocation4], 1
    %s7647 = scalar_lea.sflag [#allocation4], 1
    %7648 = vsyncpa %s7647, 1

</llo_original>
